<compile_context>
chip_gen: v6e
topology: v6e:2x2x1
jax: 0.10.0
libtpu: 0.0.40
codegen_flags: <defaults>
</compile_context>

<pallas_src>
import functools

import jax
import jax.numpy as jnp
from jax.experimental import pallas as pl
from jax.experimental.pallas import tpu as pltpu

_BN_EPS = 1e-5
_LANE = 128
_MAX_CHAN_TILE = 512                      # v7x-safe channel tile cap
_VMEM_LIMIT = 48 * 1024 * 1024


def _pad_to_lane(n):
    return ((n + _LANE - 1) // _LANE) * _LANE


def _pad_channels(n):
    """Pad a channel count to a lane multiple that also admits a large even
    channel tile (fewer grid steps, bigger MXU tiles) at <=1 extra lane-block
    of padding waste."""
    base = _pad_to_lane(n)
    if base <= 256 or base % _MAX_CHAN_TILE == 0:
        return base
    b256 = ((n + 255) // 256) * 256
    if b256 - base <= _LANE:
        return b256
    return base


def _pick_tile(n_pad, max_tile=_MAX_CHAN_TILE):
    t = min(n_pad, max_tile)
    while n_pad % t:
        t -= _LANE
    return t


# ---------------------------------------------------------------------------
# Pallas kernels
# ---------------------------------------------------------------------------
def _conv_bn_relu_kernel(x_ref, w_ref, b_ref, o_ref, acc_ref, *,
                         num_kh, num_kw, dh, dw, ph, pw, h_in, w_in, ho, wo):
    """BasicConv2d (BN folded) on one (batch, Cout-tile, Cin-tile) grid cell.

    x_ref: (1, Hp, Wp, cin_t)  spatially padded activation slab (bf16)
    w_ref: (T, cin_t, cout_t)  per-tap, BN-scale-folded weights (bf16)
    b_ref: (1, cout_t)         folded BN bias (f32)
    o_ref: (1, Ho, Wo, cout_t)
    acc_ref: VMEM (Ho, Wo, cout_t) f32 accumulator, persists over Cin tiles.

    Taps whose receptive window lies entirely inside the zero padding are
    skipped statically (their contribution is exactly zero).
    """
    ci = pl.program_id(2)

    @pl.when(ci == 0)
    def _init():
        acc_ref[...] = jnp.zeros_like(acc_ref)

    cout_t = o_ref.shape[3]
    for hh in range(ho):                       # h_s is tiny (2) -> static unroll
        acc = jnp.zeros((wo, cout_t), jnp.float32)
        any_tap = False
        for r in range(num_kh):
            row_real = r * dh + hh - ph        # unpadded input row for this tap
            if row_real < 0 or row_real >= h_in:
                continue                       # whole tap row is zero padding
            for c in range(num_kw):
                col_lo = c * dw - pw           # first unpadded input column
                if col_lo >= w_in or col_lo + wo <= 0:
                    continue                   # whole tap window is padding
                x_row = x_ref[0, r * dh + hh, pl.ds(c * dw, wo), :]   # (wo, cin_t)
                acc = acc + jnp.dot(x_row, w_ref[r * num_kw + c],
                                    preferred_element_type=jnp.float32)
                any_tap = True
        if any_tap:
            acc_ref[hh] += acc

    @pl.when(ci == pl.num_programs(2) - 1)
    def _finalize():
        y = jnp.maximum(acc_ref[...] + b_ref[...], 0.0)
        o_ref[0] = y.astype(o_ref.dtype)


def _gated_cat_conv_kernel(a_ref, g_ref, wn_ref, wt_ref, b_ref, o_ref, acc_ref,
                           *, ksz, h_in, w_in, ho, wo):
    """Fused: relu(a*g) -> concat([., a]) -> 3x3 conv -> BN(bias) -> ReLU.

    a_ref/g_ref: (1, Hp, Wp, cin_t)  padded activation / gate (bf16)
    wn_ref:      (T, cin_t, cout_t)  weights for the gated half of Cin
    wt_ref:      (T, cin_t, cout_t)  weights for the passthrough half of Cin
    """
    ci = pl.program_id(2)

    @pl.when(ci == 0)
    def _init():
        acc_ref[...] = jnp.zeros_like(acc_ref)

    cout_t = o_ref.shape[3]
    pad = (ksz - 1) // 2
    for hh in range(ho):
        acc = jnp.zeros((wo, cout_t), jnp.float32)
        any_tap = False
        for r in range(ksz):
            row_real = r + hh - pad
            if row_real < 0 or row_real >= h_in:
                continue                       # tap row entirely zero padding
            for c in range(ksz):
                col_lo = c - pad
                if col_lo >= w_in or col_lo + wo <= 0:
                    continue
                t = r * ksz + c
                a_row = a_ref[0, r + hh, pl.ds(c, wo), :]          # (wo, cin_t) bf16
                g_row = g_ref[0, r + hh, pl.ds(c, wo), :]
                gated = jnp.maximum(
                    a_row.astype(jnp.float32) * g_row.astype(jnp.float32), 0.0)
                acc = acc + jnp.dot(gated.astype(jnp.bfloat16), wn_ref[t],
                                    preferred_element_type=jnp.float32)
                acc = acc + jnp.dot(a_row, wt_ref[t],
                                    preferred_element_type=jnp.float32)
                any_tap = True
        if any_tap:
            acc_ref[hh] += acc

    @pl.when(ci == pl.num_programs(2) - 1)
    def _finalize():
        y = jnp.maximum(acc_ref[...] + b_ref[...], 0.0)
        o_ref[0] = y.astype(o_ref.dtype)


def _sparse_gate_conv_kernel(sp_ref, up_ref, w_ref, b_ref, o_ref, *, h, w):
    """Fused sparse path, pure VPU (no MXU for a Cin=2/Cout=1 conv).

    relu(sp*up) -> concat([., sp]) -> 3x3 conv (18 MACs/px) -> bias -> ReLU.
    sp_ref/up_ref: (1, h+2, w+2) f32; w_ref: SMEM (18,) f32; b_ref: SMEM (1,).
    """
    acc = jnp.zeros((h, w), jnp.float32)
    for r in range(3):
        for c in range(3):
            s_win = sp_ref[0, pl.ds(r, h), pl.ds(c, w)]
            u_win = up_ref[0, pl.ds(r, h), pl.ds(c, w)]
            g_win = jnp.maximum(s_win * u_win, 0.0)
            acc = acc + g_win * w_ref[r * 3 + c]
            acc = acc + s_win * w_ref[9 + r * 3 + c]
    o_ref[0] = jnp.maximum(acc + b_ref[0], 0.0)


# ---------------------------------------------------------------------------
# Wrappers
# ---------------------------------------------------------------------------
def conv_bn_relu(x_nhwc, w_taps, bias2, *, ksize, padding=(0, 0),
                 dilation=(1, 1), out_dtype=jnp.bfloat16):
    """BasicConv2d equivalent (stride=1, no conv bias, eval-mode BN, ReLU)."""
    N, H, W, cin_pad = x_nhwc.shape
    T, cin_w, cout_pad = w_taps.shape
    KH, KW = ksize
    ph, pw = padding
    dh, dw = dilation
    assert cin_w == cin_pad and T == KH * KW
    Ho = H + 2 * ph - dh * (KH - 1)
    Wo = W + 2 * pw - dw * (KW - 1)

    xp = jnp.pad(x_nhwc, ((0, 0), (ph, ph), (pw, pw), (0, 0)))
    Hp, Wp = H + 2 * ph, W + 2 * pw

    cin_t = _pick_tile(cin_pad)
    cout_t = _pick_tile(cout_pad)
    n_ci = cin_pad // cin_t
    n_co = cout_pad // cout_t

    kern = functools.partial(_conv_bn_relu_kernel, num_kh=KH, num_kw=KW,
                             dh=dh, dw=dw, ph=ph, pw=pw, h_in=H, w_in=W,
                             ho=Ho, wo=Wo)
    return pl.pallas_call(
        kern,
        out_shape=jax.ShapeDtypeStruct((N, Ho, Wo, cout_pad), out_dtype),
        grid=(N, n_co, n_ci),
        in_specs=[
            pl.BlockSpec((1, Hp, Wp, cin_t), lambda n, co, ci: (n, 0, 0, ci)),
            pl.BlockSpec((T, cin_t, cout_t), lambda n, co, ci: (0, ci, co)),
            pl.BlockSpec((1, cout_t), lambda n, co, ci: (0, co)),
        ],
        out_specs=pl.BlockSpec((1, Ho, Wo, cout_t),
                               lambda n, co, ci: (n, 0, 0, co)),
        scratch_shapes=[pltpu.VMEM((Ho, Wo, cout_t), jnp.float32)],
        compiler_params=pltpu.CompilerParams(
            dimension_semantics=("parallel", "parallel", "arbitrary"),
            vmem_limit_bytes=_VMEM_LIMIT),
    )(xp, w_taps, bias2)


def gated_cat_conv(a_nhwc, g_nhwc, wn_taps, wt_taps, bias2, *,
                   out_dtype=jnp.float32):
    """Fused relu(a*g) + concat([., a], channel) + 3x3/pad1 conv + BN + ReLU."""
    N, H, W, cin_pad = a_nhwc.shape
    T, cin_w, cout_pad = wn_taps.shape
    assert cin_w == cin_pad and T == 9 and g_nhwc.shape == a_nhwc.shape

    ap = jnp.pad(a_nhwc, ((0, 0), (1, 1), (1, 1), (0, 0)))
    gp = jnp.pad(g_nhwc, ((0, 0), (1, 1), (1, 1), (0, 0)))
    Hp, Wp = H + 2, W + 2

    cin_t = _pick_tile(cin_pad)
    cout_t = _pick_tile(cout_pad)
    n_ci = cin_pad // cin_t
    n_co = cout_pad // cout_t

    kern = functools.partial(_gated_cat_conv_kernel, ksz=3, h_in=H, w_in=W,
                             ho=H, wo=W)
    return pl.pallas_call(
        kern,
        out_shape=jax.ShapeDtypeStruct((N, H, W, cout_pad), out_dtype),
        grid=(N, n_co, n_ci),
        in_specs=[
            pl.BlockSpec((1, Hp, Wp, cin_t), lambda n, co, ci: (n, 0, 0, ci)),
            pl.BlockSpec((1, Hp, Wp, cin_t), lambda n, co, ci: (n, 0, 0, ci)),
            pl.BlockSpec((T, cin_t, cout_t), lambda n, co, ci: (0, ci, co)),
            pl.BlockSpec((T, cin_t, cout_t), lambda n, co, ci: (0, ci, co)),
            pl.BlockSpec((1, cout_t), lambda n, co, ci: (0, co)),
        ],
        out_specs=pl.BlockSpec((1, H, W, cout_t),
                               lambda n, co, ci: (n, 0, 0, co)),
        scratch_shapes=[pltpu.VMEM((H, W, cout_t), jnp.float32)],
        compiler_params=pltpu.CompilerParams(
            dimension_semantics=("parallel", "parallel", "arbitrary"),
            vmem_limit_bytes=_VMEM_LIMIT),
    )(ap, gp, wn_taps, wt_taps, bias2)


def sparse_gate_conv(sp_pad, up_pad, w_flat, bias1, *, h, w):
    """Fused sparse gating + conv_sparse_cat, VPU-only."""
    bs, hp, wp = sp_pad.shape
    kern = functools.partial(_sparse_gate_conv_kernel, h=h, w=w)
    return pl.pallas_call(
        kern,
        out_shape=jax.ShapeDtypeStruct((bs, h, w), jnp.float32),
        grid=(bs,),
        in_specs=[
            pl.BlockSpec((1, hp, wp), lambda b: (b, 0, 0)),
            pl.BlockSpec((1, hp, wp), lambda b: (b, 0, 0)),
            pl.BlockSpec(memory_space=pltpu.MemorySpace.SMEM),
            pl.BlockSpec(memory_space=pltpu.MemorySpace.SMEM),
        ],
        out_specs=pl.BlockSpec((1, h, w), lambda b: (b, 0, 0)),
        compiler_params=pltpu.CompilerParams(
            dimension_semantics=("parallel",)),
    )(sp_pad, up_pad, w_flat, bias1)


# ---------------------------------------------------------------------------
# Parameter construction (deterministic, synthetic; BN scale folded offline)
# ---------------------------------------------------------------------------
def _xavier_conv(key, cin, cout, kh, kw):
    fan_in = cin * kh * kw
    fan_out = cout * kh * kw
    limit = (6.0 / (fan_in + fan_out)) ** 0.5
    return jax.random.uniform(key, (cout, cin, kh, kw), jnp.float32, -limit, limit)


def _bn_affine(cout):
    gamma = jnp.ones((cout,), jnp.float32)
    beta = jnp.zeros((cout,), jnp.float32)
    running_mean = jnp.zeros((cout,), jnp.float32)
    running_var = jnp.ones((cout,), jnp.float32)
    scale = gamma / jnp.sqrt(running_var + _BN_EPS)
    bias = beta - running_mean * scale
    return scale, bias


def _pack_conv(w_oihw, scale, bias, cin_pad, cout_pad):
    """Fold BN scale into weights, transpose to per-tap (T,Cin,Cout), pad to
    lane-multiples and cast matmul operands to bf16."""
    cout, cin, kh, kw = w_oihw.shape
    wf = w_oihw * scale[:, None, None, None]
    w_taps = jnp.transpose(wf, (2, 3, 1, 0)).reshape(kh * kw, cin, cout)
    w_taps = jnp.pad(w_taps, ((0, 0), (0, cin_pad - cin),
                              (0, cout_pad - cout))).astype(jnp.bfloat16)
    b = jnp.pad(bias, (0, cout_pad - cout)).reshape(1, cout_pad)
    return w_taps, b.astype(jnp.float32)


def init_mds_params(key, in_channels, out_channels):
    # The forward-pass gating requires out_channels*8 == in_channels*8.
    assert in_channels == out_channels, "MDS gating requires in == out channels"
    sparse_in = 1
    dense_in = in_channels * 8
    real_in = dense_in + sparse_in
    real_out = out_channels * 8 + sparse_in
    cin0_pad = _pad_channels(real_in)
    cmid_pad = _pad_channels(real_out)
    cd_pad = _pad_channels(dense_in)

    keys = jax.random.split(key, 6)
    p = {}
    # branch1 (branch2 / conv_cat are never used by MDS.forward() -> omitted)
    layer_defs = [
        ("b1_0", real_in, real_out, 1, 1, cin0_pad, cmid_pad),
        ("b1_1", real_out, real_out, 1, 3, cmid_pad, cmid_pad),
        ("b1_2", real_out, real_out, 3, 1, cmid_pad, cmid_pad),
        ("b1_3", real_out, real_out, 3, 3, cmid_pad, cmid_pad),
    ]
    for i, (name, ci, co, kh, kw, cip, cop) in enumerate(layer_defs):
        w = _xavier_conv(keys[i], ci, co, kh, kw)
        scale, bias = _bn_affine(co)
        p[name] = _pack_conv(w, scale, bias, cip, cop)

    # conv_dense_cat, fused as a gated-cat conv: split Cin into (gated, tmp).
    w = _xavier_conv(keys[4], 2 * dense_in, dense_in, 3, 3)
    scale, bias = _bn_affine(dense_in)
    wn, db = _pack_conv(w[:, :dense_in], scale, bias, cd_pad, cd_pad)
    wt, _ = _pack_conv(w[:, dense_in:], scale, bias, cd_pad, cd_pad)
    p["dense_cat"] = (wn, wt, db)

    # conv_spares_cat (sic): tiny 2->1 3x3 conv, stored as 18 SMEM scalars.
    w = _xavier_conv(keys[5], 2 * sparse_in, sparse_in, 3, 3)
    scale, bias = _bn_affine(sparse_in)
    wf = (w * scale[:, None, None, None])[0]                     # (2, 3, 3)
    p["sparse_cat"] = (wf.reshape(18).astype(jnp.float32),
                       bias.astype(jnp.float32))
    return p


# ---------------------------------------------------------------------------
# MDS forward
# ---------------------------------------------------------------------------
def mds_forward(params, sparse_embeddings, dense_embeddings):
    """sparse_embeddings: (bs, h_s, w_s)   dense_embeddings: (bs, c_d, h_d, w_d) NCHW."""
    bs, c_d, h_d, w_d = dense_embeddings.shape
    _, h_s, w_s = sparse_embeddings.shape
    n = (h_d * w_d) // (h_s * w_s)
    c_dense = n * c_d
    c_in = c_dense + 1
    c_in_pad = _pad_channels(c_in)
    c_d_pad = _pad_channels(c_dense)
    assert params["b1_0"][0].shape[1] == c_in_pad

    dense4 = dense_embeddings.reshape(bs, c_dense, h_s, w_s)     # NCHW view
    de = jnp.transpose(dense4, (0, 2, 3, 1))                     # (bs,h,w,c_dense) f32
    sp = sparse_embeddings                                       # (bs,h,w)

    # branch1 input: concat + pad channels to a lane multiple, cast to bf16.
    x = jnp.concatenate([sp[..., None], de], axis=-1)
    x = jnp.pad(x, ((0, 0), (0, 0), (0, 0), (0, c_in_pad - c_in)))
    x = x.astype(jnp.bfloat16)

    x = conv_bn_relu(x, *params["b1_0"], ksize=(1, 1), padding=(0, 0))
    x = conv_bn_relu(x, *params["b1_1"], ksize=(1, 3), padding=(0, 1))
    x = conv_bn_relu(x, *params["b1_2"], ksize=(3, 1), padding=(1, 0))
    x = conv_bn_relu(x, *params["b1_3"], ksize=(3, 3), padding=(3, 3),
                     dilation=(3, 3))
    # x: (bs, h, w, cmid_pad); channel 0 = sparse_up, 1..c_dense = dense_down.

    # ---- dense path: fused relu(de*dense_down) + concat + conv_dense_cat ----
    gate = x[..., 1:1 + c_dense]
    gate = jnp.pad(gate, ((0, 0), (0, 0), (0, 0), (0, c_d_pad - c_dense)))
    a = jnp.pad(de, ((0, 0), (0, 0), (0, 0),
                     (0, c_d_pad - c_dense))).astype(jnp.bfloat16)
    wn, wt, db = params["dense_cat"]
    dense_out = gated_cat_conv(a, gate, wn, wt, db)              # (bs,h,w,c_d_pad) f32
    dense_out = dense_out[..., :c_dense]
    dense_out = jnp.transpose(dense_out, (0, 3, 1, 2)).reshape(bs, c_d, h_d, w_d)

    # ---- sparse path: fused relu(sp*up) + concat + conv_spares_cat (VPU) ----
    up = x[..., 0].astype(jnp.float32)                           # (bs,h,w)
    sp_p = jnp.pad(sp, ((0, 0), (1, 1), (1, 1)))
    up_p = jnp.pad(up, ((0, 0), (1, 1), (1, 1)))
    sw, sb = params["sparse_cat"]
    sparse_out = sparse_gate_conv(sp_p, up_p, sw, sb, h=h_s, w=w_s)

    return sparse_out, dense_out


# ---------------------------------------------------------------------------
if __name__ == "__main__":
    key = jax.random.PRNGKey(0)
    k_sp, k_de, k_p = jax.random.split(key, 3)

    # Small shapes consistent with the module's hard-coded factor 8:
    #   sparse: (bs, 2, 16)         (PyTorch: (bs, 2, 256))
    #   dense:  (bs, 4, 16, 16)     (PyTorch: (bs, 256, 64, 64))
    #   h_d*w_d / (h_s*w_s) = 256 / 32 = 8
    in_channels = out_channels = 4
    bs, h_s, w_s = 2, 2, 16
    h_d = w_d = 16

    sparse = jax.random.normal(k_sp, (bs, h_s, w_s), jnp.float32)
    dense = jax.random.normal(k_de, (bs, in_channels, h_d, w_d), jnp.float32)
    params = init_mds_params(k_p, in_channels, out_channels)

    fwd = jax.jit(mds_forward)
    sparse_out, dense_out = fwd(params, sparse, dense)
    jax.block_until_ready((sparse_out, dense_out))

    assert sparse_out.shape == (bs, h_s, w_s), sparse_out.shape
    assert dense_out.shape == (bs, in_channels, h_d, w_d), dense_out.shape
    print("KERNEL_OK")
</pallas_src>

<mosaic_0001>
module attributes {stable_mosaic.version = 11 : i64} {
  func.func @_conv_bn_relu_kernel(%arg0: i32, %arg1: i32, %arg2: i32, %arg3: memref<1x2x16x128xbf16, #tpu.memory_space<vmem>>, %arg4: memref<1x128x128xbf16, #tpu.memory_space<vmem>>, %arg5: memref<1x128xf32, #tpu.memory_space<vmem>>, %arg6: memref<1x2x16x128xbf16, #tpu.memory_space<vmem>>, %arg7: memref<2x16x128xf32, #tpu.memory_space<vmem>>) attributes {dimension_semantics = [#tpu.dimension_semantics<parallel>, #tpu.dimension_semantics<parallel>, #tpu.dimension_semantics<arbitrary>], iteration_bounds = array<i64: 2, 1, 1>, scalar_prefetch = 0 : i64, scratch_operands = 1 : i64, tpu.core_type = #tpu.core_type<tc>, window_params = [{transform_indices = @transform_0, window_bounds = array<i64: 1, 2, 16, 128>}, {transform_indices = @transform_1, window_bounds = array<i64: 1, 128, 128>}, {transform_indices = @transform_2, window_bounds = array<i64: 1, 128>}, {transform_indices = @transform_3, window_bounds = array<i64: 1, 2, 16, 128>}]} {
    %c0_i32 = arith.constant 0 : i32
    %0 = arith.cmpi eq, %arg2, %c0_i32 : i32
    %1 = arith.extui %0 : i1 to i32
    %c0_i32_0 = arith.constant 0 : i32
    %2 = arith.cmpi ne, %1, %c0_i32_0 : i32
    scf.if %2 {
      %cst_30 = arith.constant 0.000000e+00 : f32
      %32 = vector.broadcast %cst_30 : f32 to vector<2x16x128xf32>
      %c0_31 = arith.constant 0 : index
      %c0_32 = arith.constant 0 : index
      %c0_33 = arith.constant 0 : index
      %33 = vector.load %arg7[%c0_31, %c0_32, %c0_33] : memref<2x16x128xf32, #tpu.memory_space<vmem>>, vector<2x16x128xf32>
      tpu.vector_store %arg7[%c0_31, %c0_32, %c0_33], %32 {strides = array<i32>} : memref<2x16x128xf32, #tpu.memory_space<vmem>>, vector<2x16x128xf32>,
    } else {
    }
    %cst = arith.constant 0.000000e+00 : f32
    %3 = vector.broadcast %cst : f32 to vector<16x128xf32>
    %c0 = arith.constant 0 : index
    %c0_1 = arith.constant 0 : index
    %c0_2 = arith.constant 0 : index
    %c0_3 = arith.constant 0 : index
    %4 = vector.load %arg3[%c0, %c0_1, %c0_2, %c0_3] : memref<1x2x16x128xbf16, #tpu.memory_space<vmem>>, vector<1x1x16x128xbf16>
    %5 = vector.shape_cast %4 : vector<1x1x16x128xbf16> to vector<16x128xbf16>
    %c0_4 = arith.constant 0 : index
    %c0_5 = arith.constant 0 : index
    %c0_6 = arith.constant 0 : index
    %6 = vector.load %arg4[%c0_4, %c0_5, %c0_6] : memref<1x128x128xbf16, #tpu.memory_space<vmem>>, vector<1x128x128xbf16>
    %7 = vector.shape_cast %6 : vector<1x128x128xbf16> to vector<128x128xbf16>
    %cst_7 = arith.constant dense<0.000000e+00> : vector<16x128xf32>
    %8 = tpu.matmul %5, %7, %cst_7 {dimension_numbers = #tpu.dot_dimension_numbers<[1], [0], [0], [1], [0, 0, 1, 1], [], []>} : vector<16x128xbf16>, vector<128x128xbf16>, vector<16x128xf32> -> vector<16x128xf32>
    %9 = arith.addf %3, %8 : vector<16x128xf32>
    %c0_8 = arith.constant 0 : index
    %c0_9 = arith.constant 0 : index
    %c0_10 = arith.constant 0 : index
    %10 = vector.load %arg7[%c0_8, %c0_9, %c0_10] : memref<2x16x128xf32, #tpu.memory_space<vmem>>, vector<1x16x128xf32>
    %11 = vector.shape_cast %10 : vector<1x16x128xf32> to vector<16x128xf32>
    %12 = arith.addf %11, %9 : vector<16x128xf32>
    %c0_11 = arith.constant 0 : index
    %c0_12 = arith.constant 0 : index
    %c0_13 = arith.constant 0 : index
    %13 = vector.load %arg7[%c0_11, %c0_12, %c0_13] : memref<2x16x128xf32, #tpu.memory_space<vmem>>, vector<1x16x128xf32>
    %14 = vector.shape_cast %13 : vector<1x16x128xf32> to vector<16x128xf32>
    %15 = vector.shape_cast %12 : vector<16x128xf32> to vector<1x16x128xf32>
    tpu.vector_store %arg7[%c0_11, %c0_12, %c0_13], %15 {strides = array<i32>} : memref<2x16x128xf32, #tpu.memory_space<vmem>>, vector<1x16x128xf32>,
    %cst_14 = arith.constant 0.000000e+00 : f32
    %16 = vector.broadcast %cst_14 : f32 to vector<16x128xf32>
    %c0_15 = arith.constant 0 : index
    %c1 = arith.constant 1 : index
    %c0_16 = arith.constant 0 : index
    %c0_17 = arith.constant 0 : index
    %17 = vector.load %arg3[%c0_15, %c1, %c0_16, %c0_17] : memref<1x2x16x128xbf16, #tpu.memory_space<vmem>>, vector<1x1x16x128xbf16>
    %18 = vector.shape_cast %17 : vector<1x1x16x128xbf16> to vector<16x128xbf16>
    %c0_18 = arith.constant 0 : index
    %c0_19 = arith.constant 0 : index
    %c0_20 = arith.constant 0 : index
    %19 = vector.load %arg4[%c0_18, %c0_19, %c0_20] : memref<1x128x128xbf16, #tpu.memory_space<vmem>>, vector<1x128x128xbf16>
    %20 = vector.shape_cast %19 : vector<1x128x128xbf16> to vector<128x128xbf16>
    %cst_21 = arith.constant dense<0.000000e+00> : vector<16x128xf32>
    %21 = tpu.matmul %18, %20, %cst_21 {dimension_numbers = #tpu.dot_dimension_numbers<[1], [0], [0], [1], [0, 0, 1, 1], [], []>} : vector<16x128xbf16>, vector<128x128xbf16>, vector<16x128xf32> -> vector<16x128xf32>
    %22 = arith.addf %16, %21 : vector<16x128xf32>
    %c1_22 = arith.constant 1 : index
    %c0_23 = arith.constant 0 : index
    %c0_24 = arith.constant 0 : index
    %23 = vector.load %arg7[%c1_22, %c0_23, %c0_24] : memref<2x16x128xf32, #tpu.memory_space<vmem>>, vector<1x16x128xf32>
    %24 = vector.shape_cast %23 : vector<1x16x128xf32> to vector<16x128xf32>
    %25 = arith.addf %24, %22 : vector<16x128xf32>
    %c1_25 = arith.constant 1 : index
    %c0_26 = arith.constant 0 : index
    %c0_27 = arith.constant 0 : index
    %26 = vector.load %arg7[%c1_25, %c0_26, %c0_27] : memref<2x16x128xf32, #tpu.memory_space<vmem>>, vector<1x16x128xf32>
    %27 = vector.shape_cast %26 : vector<1x16x128xf32> to vector<16x128xf32>
    %28 = vector.shape_cast %25 : vector<16x128xf32> to vector<1x16x128xf32>
    tpu.vector_store %arg7[%c1_25, %c0_26, %c0_27], %28 {strides = array<i32>} : memref<2x16x128xf32, #tpu.memory_space<vmem>>, vector<1x16x128xf32>,
    %c0_i32_28 = arith.constant 0 : i32
    %29 = arith.cmpi eq, %arg2, %c0_i32_28 : i32
    %30 = arith.extui %29 : i1 to i32
    %c0_i32_29 = arith.constant 0 : i32
    %31 = arith.cmpi ne, %30, %c0_i32_29 : i32
    scf.if %31 {
      %c0_30 = arith.constant 0 : index
      %c0_31 = arith.constant 0 : index
      %c0_32 = arith.constant 0 : index
      %32 = vector.load %arg7[%c0_30, %c0_31, %c0_32] : memref<2x16x128xf32, #tpu.memory_space<vmem>>, vector<2x16x128xf32>
      %c0_33 = arith.constant 0 : index
      %c0_34 = arith.constant 0 : index
      %33 = vector.load %arg5[%c0_33, %c0_34] : memref<1x128xf32, #tpu.memory_space<vmem>>, vector<1x128xf32>
      %34 = vector.shape_cast %33 : vector<1x128xf32> to vector<1x1x128xf32>
      %35 = vector.broadcast %34 : vector<1x1x128xf32> to vector<2x16x128xf32>
      %36 = arith.addf %32, %35 : vector<2x16x128xf32>
      %cst_35 = arith.constant 0.000000e+00 : f32
      %37 = vector.broadcast %cst_35 : f32 to vector<2x16x128xf32>
      %38 = arith.maximumf %36, %37 : vector<2x16x128xf32>
      %39 = arith.truncf %38 : vector<2x16x128xf32> to vector<2x16x128xbf16>
      %c0_36 = arith.constant 0 : index
      %c0_37 = arith.constant 0 : index
      %c0_38 = arith.constant 0 : index
      %c0_39 = arith.constant 0 : index
      %40 = vector.load %arg6[%c0_36, %c0_37, %c0_38, %c0_39] : memref<1x2x16x128xbf16, #tpu.memory_space<vmem>>, vector<1x2x16x128xbf16>
      %41 = vector.shape_cast %40 : vector<1x2x16x128xbf16> to vector<2x16x128xbf16>
      %42 = vector.shape_cast %39 : vector<2x16x128xbf16> to vector<1x2x16x128xbf16>
      tpu.vector_store %arg6[%c0_36, %c0_37, %c0_38, %c0_39], %42 {strides = array<i32>} : memref<1x2x16x128xbf16, #tpu.memory_space<vmem>>, vector<1x2x16x128xbf16>,
    } else {
    }
    return
  }
  func.func @transform_0(%arg0: i32, %arg1: i32, %arg2: i32) -> (i32, i32, i32, i32) {
    %c0_i32 = arith.constant 0 : i32
    %c0_i32_0 = arith.constant 0 : i32
    %c0_i32_1 = arith.constant 0 : i32
    return %arg0, %c0_i32, %c0_i32_0, %arg2 : i32, i32, i32, i32
  }
  func.func @transform_1(%arg0: i32, %arg1: i32, %arg2: i32) -> (i32, i32, i32) {
    %c0_i32 = arith.constant 0 : i32
    %c0_i32_0 = arith.constant 0 : i32
    return %c0_i32, %arg2, %arg1 : i32, i32, i32
  }
  func.func @transform_2(%arg0: i32, %arg1: i32, %arg2: i32) -> (i32, i32) {
    %c0_i32 = arith.constant 0 : i32
    %c0_i32_0 = arith.constant 0 : i32
    return %c0_i32, %arg1 : i32, i32
  }
  func.func @transform_3(%arg0: i32, %arg1: i32, %arg2: i32) -> (i32, i32, i32, i32) {
    %c0_i32 = arith.constant 0 : i32
    %c0_i32_0 = arith.constant 0 : i32
    %c0_i32_1 = arith.constant 0 : i32
    return %arg0, %c0_i32, %c0_i32_0, %arg1 : i32, i32, i32, i32
  }
}

module attributes {stable_mosaic.version = 11 : i64} {
  func.func @_conv_bn_relu_kernel(%arg0: i32, %arg1: i32, %arg2: i32, %arg3: memref<1x2x18x128xbf16, #tpu.memory_space<vmem>>, %arg4: memref<3x128x128xbf16, #tpu.memory_space<vmem>>, %arg5: memref<1x128xf32, #tpu.memory_space<vmem>>, %arg6: memref<1x2x16x128xbf16, #tpu.memory_space<vmem>>, %arg7: memref<2x16x128xf32, #tpu.memory_space<vmem>>) attributes {dimension_semantics = [#tpu.dimension_semantics<parallel>, #tpu.dimension_semantics<parallel>, #tpu.dimension_semantics<arbitrary>], iteration_bounds = array<i64: 2, 1, 1>, scalar_prefetch = 0 : i64, scratch_operands = 1 : i64, tpu.core_type = #tpu.core_type<tc>, window_params = [{transform_indices = @transform_0, window_bounds = array<i64: 1, 2, 18, 128>}, {transform_indices = @transform_1, window_bounds = array<i64: 3, 128, 128>}, {transform_indices = @transform_2, window_bounds = array<i64: 1, 128>}, {transform_indices = @transform_3, window_bounds = array<i64: 1, 2, 16, 128>}]} {
    %c0_i32 = arith.constant 0 : i32
    %0 = arith.cmpi eq, %arg2, %c0_i32 : i32
    %1 = arith.extui %0 : i1 to i32
    %c0_i32_0 = arith.constant 0 : i32
    %2 = arith.cmpi ne, %1, %c0_i32_0 : i32
    scf.if %2 {
      %cst_61 = arith.constant 0.000000e+00 : f32
      %56 = vector.broadcast %cst_61 : f32 to vector<2x16x128xf32>
      %c0_62 = arith.constant 0 : index
      %c0_63 = arith.constant 0 : index
      %c0_64 = arith.constant 0 : index
      %57 = vector.load %arg7[%c0_62, %c0_63, %c0_64] : memref<2x16x128xf32, #tpu.memory_space<vmem>>, vector<2x16x128xf32>
      tpu.vector_store %arg7[%c0_62, %c0_63, %c0_64], %56 {strides = array<i32>} : memref<2x16x128xf32, #tpu.memory_space<vmem>>, vector<2x16x128xf32>,
    } else {
    }
    %cst = arith.constant 0.000000e+00 : f32
    %3 = vector.broadcast %cst : f32 to vector<16x128xf32>
    %c0 = arith.constant 0 : index
    %c0_1 = arith.constant 0 : index
    %c0_2 = arith.constant 0 : index
    %c0_3 = arith.constant 0 : index
    %4 = vector.load %arg3[%c0, %c0_1, %c0_2, %c0_3] : memref<1x2x18x128xbf16, #tpu.memory_space<vmem>>, vector<1x1x16x128xbf16>
    %5 = vector.shape_cast %4 : vector<1x1x16x128xbf16> to vector<16x128xbf16>
    %c0_4 = arith.constant 0 : index
    %c0_5 = arith.constant 0 : index
    %c0_6 = arith.constant 0 : index
    %6 = vector.load %arg4[%c0_4, %c0_5, %c0_6] : memref<3x128x128xbf16, #tpu.memory_space<vmem>>, vector<1x128x128xbf16>
    %7 = vector.shape_cast %6 : vector<1x128x128xbf16> to vector<128x128xbf16>
    %cst_7 = arith.constant dense<0.000000e+00> : vector<16x128xf32>
    %8 = tpu.matmul %5, %7, %cst_7 {dimension_numbers = #tpu.dot_dimension_numbers<[1], [0], [0], [1], [0, 0, 1, 1], [], []>} : vector<16x128xbf16>, vector<128x128xbf16>, vector<16x128xf32> -> vector<16x128xf32>
    %9 = arith.addf %3, %8 : vector<16x128xf32>
    %c0_8 = arith.constant 0 : index
    %c0_9 = arith.constant 0 : index
    %c1 = arith.constant 1 : index
    %c0_10 = arith.constant 0 : index
    %10 = vector.load %arg3[%c0_8, %c0_9, %c1, %c0_10] : memref<1x2x18x128xbf16, #tpu.memory_space<vmem>>, vector<1x1x16x128xbf16>
    %11 = vector.shape_cast %10 : vector<1x1x16x128xbf16> to vector<16x128xbf16>
    %c1_11 = arith.constant 1 : index
    %c0_12 = arith.constant 0 : index
    %c0_13 = arith.constant 0 : index
    %12 = vector.load %arg4[%c1_11, %c0_12, %c0_13] : memref<3x128x128xbf16, #tpu.memory_space<vmem>>, vector<1x128x128xbf16>
    %13 = vector.shape_cast %12 : vector<1x128x128xbf16> to vector<128x128xbf16>
    %cst_14 = arith.constant dense<0.000000e+00> : vector<16x128xf32>
    %14 = tpu.matmul %11, %13, %cst_14 {dimension_numbers = #tpu.dot_dimension_numbers<[1], [0], [0], [1], [0, 0, 1, 1], [], []>} : vector<16x128xbf16>, vector<128x128xbf16>, vector<16x128xf32> -> vector<16x128xf32>
    %15 = arith.addf %9, %14 : vector<16x128xf32>
    %c0_15 = arith.constant 0 : index
    %c0_16 = arith.constant 0 : index
    %c2 = arith.constant 2 : index
    %c0_17 = arith.constant 0 : index
    %16 = vector.load %arg3[%c0_15, %c0_16, %c2, %c0_17] : memref<1x2x18x128xbf16, #tpu.memory_space<vmem>>, vector<1x1x16x128xbf16>
    %17 = vector.shape_cast %16 : vector<1x1x16x128xbf16> to vector<16x128xbf16>
    %c2_18 = arith.constant 2 : index
    %c0_19 = arith.constant 0 : index
    %c0_20 = arith.constant 0 : index
    %18 = vector.load %arg4[%c2_18, %c0_19, %c0_20] : memref<3x128x128xbf16, #tpu.memory_space<vmem>>, vector<1x128x128xbf16>
    %19 = vector.shape_cast %18 : vector<1x128x128xbf16> to vector<128x128xbf16>
    %cst_21 = arith.constant dense<0.000000e+00> : vector<16x128xf32>
    %20 = tpu.matmul %17, %19, %cst_21 {dimension_numbers = #tpu.dot_dimension_numbers<[1], [0], [0], [1], [0, 0, 1, 1], [], []>} : vector<16x128xbf16>, vector<128x128xbf16>, vector<16x128xf32> -> vector<16x128xf32>
    %21 = arith.addf %15, %20 : vector<16x128xf32>
    %c0_22 = arith.constant 0 : index
    %c0_23 = arith.constant 0 : index
    %c0_24 = arith.constant 0 : index
    %22 = vector.load %arg7[%c0_22, %c0_23, %c0_24] : memref<2x16x128xf32, #tpu.memory_space<vmem>>, vector<1x16x128xf32>
    %23 = vector.shape_cast %22 : vector<1x16x128xf32> to vector<16x128xf32>
    %24 = arith.addf %23, %21 : vector<16x128xf32>
    %c0_25 = arith.constant 0 : index
    %c0_26 = arith.constant 0 : index
    %c0_27 = arith.constant 0 : index
    %25 = vector.load %arg7[%c0_25, %c0_26, %c0_27] : memref<2x16x128xf32, #tpu.memory_space<vmem>>, vector<1x16x128xf32>
    %26 = vector.shape_cast %25 : vector<1x16x128xf32> to vector<16x128xf32>
    %27 = vector.shape_cast %24 : vector<16x128xf32> to vector<1x16x128xf32>
    tpu.vector_store %arg7[%c0_25, %c0_26, %c0_27], %27 {strides = array<i32>} : memref<2x16x128xf32, #tpu.memory_space<vmem>>, vector<1x16x128xf32>,
    %cst_28 = arith.constant 0.000000e+00 : f32
    %28 = vector.broadcast %cst_28 : f32 to vector<16x128xf32>
    %c0_29 = arith.constant 0 : index
    %c1_30 = arith.constant 1 : index
    %c0_31 = arith.constant 0 : index
    %c0_32 = arith.constant 0 : index
    %29 = vector.load %arg3[%c0_29, %c1_30, %c0_31, %c0_32] : memref<1x2x18x128xbf16, #tpu.memory_space<vmem>>, vector<1x1x16x128xbf16>
    %30 = vector.shape_cast %29 : vector<1x1x16x128xbf16> to vector<16x128xbf16>
    %c0_33 = arith.constant 0 : index
    %c0_34 = arith.constant 0 : index
    %c0_35 = arith.constant 0 : index
    %31 = vector.load %arg4[%c0_33, %c0_34, %c0_35] : memref<3x128x128xbf16, #tpu.memory_space<vmem>>, vector<1x128x128xbf16>
    %32 = vector.shape_cast %31 : vector<1x128x128xbf16> to vector<128x128xbf16>
    %cst_36 = arith.constant dense<0.000000e+00> : vector<16x128xf32>
    %33 = tpu.matmul %30, %32, %cst_36 {dimension_numbers = #tpu.dot_dimension_numbers<[1], [0], [0], [1], [0, 0, 1, 1], [], []>} : vector<16x128xbf16>, vector<128x128xbf16>, vector<16x128xf32> -> vector<16x128xf32>
    %34 = arith.addf %28, %33 : vector<16x128xf32>
    %c0_37 = arith.constant 0 : index
    %c1_38 = arith.constant 1 : index
    %c1_39 = arith.constant 1 : index
    %c0_40 = arith.constant 0 : index
    %35 = vector.load %arg3[%c0_37, %c1_38, %c1_39, %c0_40] : memref<1x2x18x128xbf16, #tpu.memory_space<vmem>>, vector<1x1x16x128xbf16>
    %36 = vector.shape_cast %35 : vector<1x1x16x128xbf16> to vector<16x128xbf16>
    %c1_41 = arith.constant 1 : index
    %c0_42 = arith.constant 0 : index
    %c0_43 = arith.constant 0 : index
    %37 = vector.load %arg4[%c1_41, %c0_42, %c0_43] : memref<3x128x128xbf16, #tpu.memory_space<vmem>>, vector<1x128x128xbf16>
    %38 = vector.shape_cast %37 : vector<1x128x128xbf16> to vector<128x128xbf16>
    %cst_44 = arith.constant dense<0.000000e+00> : vector<16x128xf32>
    %39 = tpu.matmul %36, %38, %cst_44 {dimension_numbers = #tpu.dot_dimension_numbers<[1], [0], [0], [1], [0, 0, 1, 1], [], []>} : vector<16x128xbf16>, vector<128x128xbf16>, vector<16x128xf32> -> vector<16x128xf32>
    %40 = arith.addf %34, %39 : vector<16x128xf32>
    %c0_45 = arith.constant 0 : index
    %c1_46 = arith.constant 1 : index
    %c2_47 = arith.constant 2 : index
    %c0_48 = arith.constant 0 : index
    %41 = vector.load %arg3[%c0_45, %c1_46, %c2_47, %c0_48] : memref<1x2x18x128xbf16, #tpu.memory_space<vmem>>, vector<1x1x16x128xbf16>
    %42 = vector.shape_cast %41 : vector<1x1x16x128xbf16> to vector<16x128xbf16>
    %c2_49 = arith.constant 2 : index
    %c0_50 = arith.constant 0 : index
    %c0_51 = arith.constant 0 : index
    %43 = vector.load %arg4[%c2_49, %c0_50, %c0_51] : memref<3x128x128xbf16, #tpu.memory_space<vmem>>, vector<1x128x128xbf16>
    %44 = vector.shape_cast %43 : vector<1x128x128xbf16> to vector<128x128xbf16>
    %cst_52 = arith.constant dense<0.000000e+00> : vector<16x128xf32>
    %45 = tpu.matmul %42, %44, %cst_52 {dimension_numbers = #tpu.dot_dimension_numbers<[1], [0], [0], [1], [0, 0, 1, 1], [], []>} : vector<16x128xbf16>, vector<128x128xbf16>, vector<16x128xf32> -> vector<16x128xf32>
    %46 = arith.addf %40, %45 : vector<16x128xf32>
    %c1_53 = arith.constant 1 : index
    %c0_54 = arith.constant 0 : index
    %c0_55 = arith.constant 0 : index
    %47 = vector.load %arg7[%c1_53, %c0_54, %c0_55] : memref<2x16x128xf32, #tpu.memory_space<vmem>>, vector<1x16x128xf32>
    %48 = vector.shape_cast %47 : vector<1x16x128xf32> to vector<16x128xf32>
    %49 = arith.addf %48, %46 : vector<16x128xf32>
    %c1_56 = arith.constant 1 : index
    %c0_57 = arith.constant 0 : index
    %c0_58 = arith.constant 0 : index
    %50 = vector.load %arg7[%c1_56, %c0_57, %c0_58] : memref<2x16x128xf32, #tpu.memory_space<vmem>>, vector<1x16x128xf32>
    %51 = vector.shape_cast %50 : vector<1x16x128xf32> to vector<16x128xf32>
    %52 = vector.shape_cast %49 : vector<16x128xf32> to vector<1x16x128xf32>
    tpu.vector_store %arg7[%c1_56, %c0_57, %c0_58], %52 {strides = array<i32>} : memref<2x16x128xf32, #tpu.memory_space<vmem>>, vector<1x16x128xf32>,
    %c0_i32_59 = arith.constant 0 : i32
    %53 = arith.cmpi eq, %arg2, %c0_i32_59 : i32
    %54 = arith.extui %53 : i1 to i32
    %c0_i32_60 = arith.constant 0 : i32
    %55 = arith.cmpi ne, %54, %c0_i32_60 : i32
    scf.if %55 {
      %c0_61 = arith.constant 0 : index
      %c0_62 = arith.constant 0 : index
      %c0_63 = arith.constant 0 : index
      %56 = vector.load %arg7[%c0_61, %c0_62, %c0_63] : memref<2x16x128xf32, #tpu.memory_space<vmem>>, vector<2x16x128xf32>
      %c0_64 = arith.constant 0 : index
      %c0_65 = arith.constant 0 : index
      %57 = vector.load %arg5[%c0_64, %c0_65] : memref<1x128xf32, #tpu.memory_space<vmem>>, vector<1x128xf32>
      %58 = vector.shape_cast %57 : vector<1x128xf32> to vector<1x1x128xf32>
      %59 = vector.broadcast %58 : vector<1x1x128xf32> to vector<2x16x128xf32>
      %60 = arith.addf %56, %59 : vector<2x16x128xf32>
      %cst_66 = arith.constant 0.000000e+00 : f32
      %61 = vector.broadcast %cst_66 : f32 to vector<2x16x128xf32>
      %62 = arith.maximumf %60, %61 : vector<2x16x128xf32>
      %63 = arith.truncf %62 : vector<2x16x128xf32> to vector<2x16x128xbf16>
      %c0_67 = arith.constant 0 : index
      %c0_68 = arith.constant 0 : index
      %c0_69 = arith.constant 0 : index
      %c0_70 = arith.constant 0 : index
      %64 = vector.load %arg6[%c0_67, %c0_68, %c0_69, %c0_70] : memref<1x2x16x128xbf16, #tpu.memory_space<vmem>>, vector<1x2x16x128xbf16>
      %65 = vector.shape_cast %64 : vector<1x2x16x128xbf16> to vector<2x16x128xbf16>
      %66 = vector.shape_cast %63 : vector<2x16x128xbf16> to vector<1x2x16x128xbf16>
      tpu.vector_store %arg6[%c0_67, %c0_68, %c0_69, %c0_70], %66 {strides = array<i32>} : memref<1x2x16x128xbf16, #tpu.memory_space<vmem>>, vector<1x2x16x128xbf16>,
    } else {
    }
    return
  }
  func.func @transform_0(%arg0: i32, %arg1: i32, %arg2: i32) -> (i32, i32, i32, i32) {
    %c0_i32 = arith.constant 0 : i32
    %c0_i32_0 = arith.constant 0 : i32
    %c0_i32_1 = arith.constant 0 : i32
    return %arg0, %c0_i32, %c0_i32_0, %arg2 : i32, i32, i32, i32
  }
  func.func @transform_1(%arg0: i32, %arg1: i32, %arg2: i32) -> (i32, i32, i32) {
    %c0_i32 = arith.constant 0 : i32
    %c0_i32_0 = arith.constant 0 : i32
    return %c0_i32, %arg2, %arg1 : i32, i32, i32
  }
  func.func @transform_2(%arg0: i32, %arg1: i32, %arg2: i32) -> (i32, i32) {
    %c0_i32 = arith.constant 0 : i32
    %c0_i32_0 = arith.constant 0 : i32
    return %c0_i32, %arg1 : i32, i32
  }
  func.func @transform_3(%arg0: i32, %arg1: i32, %arg2: i32) -> (i32, i32, i32, i32) {
    %c0_i32 = arith.constant 0 : i32
    %c0_i32_0 = arith.constant 0 : i32
    %c0_i32_1 = arith.constant 0 : i32
    return %arg0, %c0_i32, %c0_i32_0, %arg1 : i32, i32, i32, i32
  }
}

module attributes {stable_mosaic.version = 11 : i64} {
  func.func @_conv_bn_relu_kernel(%arg0: i32, %arg1: i32, %arg2: i32, %arg3: memref<1x4x16x128xbf16, #tpu.memory_space<vmem>>, %arg4: memref<3x128x128xbf16, #tpu.memory_space<vmem>>, %arg5: memref<1x128xf32, #tpu.memory_space<vmem>>, %arg6: memref<1x2x16x128xbf16, #tpu.memory_space<vmem>>, %arg7: memref<2x16x128xf32, #tpu.memory_space<vmem>>) attributes {dimension_semantics = [#tpu.dimension_semantics<parallel>, #tpu.dimension_semantics<parallel>, #tpu.dimension_semantics<arbitrary>], iteration_bounds = array<i64: 2, 1, 1>, scalar_prefetch = 0 : i64, scratch_operands = 1 : i64, tpu.core_type = #tpu.core_type<tc>, window_params = [{transform_indices = @transform_0, window_bounds = array<i64: 1, 4, 16, 128>}, {transform_indices = @transform_1, window_bounds = array<i64: 3, 128, 128>}, {transform_indices = @transform_2, window_bounds = array<i64: 1, 128>}, {transform_indices = @transform_3, window_bounds = array<i64: 1, 2, 16, 128>}]} {
    %c0_i32 = arith.constant 0 : i32
    %0 = arith.cmpi eq, %arg2, %c0_i32 : i32
    %1 = arith.extui %0 : i1 to i32
    %c0_i32_0 = arith.constant 0 : i32
    %2 = arith.cmpi ne, %1, %c0_i32_0 : i32
    scf.if %2 {
      %cst_45 = arith.constant 0.000000e+00 : f32
      %44 = vector.broadcast %cst_45 : f32 to vector<2x16x128xf32>
      %c0_46 = arith.constant 0 : index
      %c0_47 = arith.constant 0 : index
      %c0_48 = arith.constant 0 : index
      %45 = vector.load %arg7[%c0_46, %c0_47, %c0_48] : memref<2x16x128xf32, #tpu.memory_space<vmem>>, vector<2x16x128xf32>
      tpu.vector_store %arg7[%c0_46, %c0_47, %c0_48], %44 {strides = array<i32>} : memref<2x16x128xf32, #tpu.memory_space<vmem>>, vector<2x16x128xf32>,
    } else {
    }
    %cst = arith.constant 0.000000e+00 : f32
    %3 = vector.broadcast %cst : f32 to vector<16x128xf32>
    %c0 = arith.constant 0 : index
    %c1 = arith.constant 1 : index
    %c0_1 = arith.constant 0 : index
    %c0_2 = arith.constant 0 : index
    %4 = vector.load %arg3[%c0, %c1, %c0_1, %c0_2] : memref<1x4x16x128xbf16, #tpu.memory_space<vmem>>, vector<1x1x16x128xbf16>
    %5 = vector.shape_cast %4 : vector<1x1x16x128xbf16> to vector<16x128xbf16>
    %c1_3 = arith.constant 1 : index
    %c0_4 = arith.constant 0 : index
    %c0_5 = arith.constant 0 : index
    %6 = vector.load %arg4[%c1_3, %c0_4, %c0_5] : memref<3x128x128xbf16, #tpu.memory_space<vmem>>, vector<1x128x128xbf16>
    %7 = vector.shape_cast %6 : vector<1x128x128xbf16> to vector<128x128xbf16>
    %cst_6 = arith.constant dense<0.000000e+00> : vector<16x128xf32>
    %8 = tpu.matmul %5, %7, %cst_6 {dimension_numbers = #tpu.dot_dimension_numbers<[1], [0], [0], [1], [0, 0, 1, 1], [], []>} : vector<16x128xbf16>, vector<128x128xbf16>, vector<16x128xf32> -> vector<16x128xf32>
    %9 = arith.addf %3, %8 : vector<16x128xf32>
    %c0_7 = arith.constant 0 : index
    %c2 = arith.constant 2 : index
    %c0_8 = arith.constant 0 : index
    %c0_9 = arith.constant 0 : index
    %10 = vector.load %arg3[%c0_7, %c2, %c0_8, %c0_9] : memref<1x4x16x128xbf16, #tpu.memory_space<vmem>>, vector<1x1x16x128xbf16>
    %11 = vector.shape_cast %10 : vector<1x1x16x128xbf16> to vector<16x128xbf16>
    %c2_10 = arith.constant 2 : index
    %c0_11 = arith.constant 0 : index
    %c0_12 = arith.constant 0 : index
    %12 = vector.load %arg4[%c2_10, %c0_11, %c0_12] : memref<3x128x128xbf16, #tpu.memory_space<vmem>>, vector<1x128x128xbf16>
    %13 = vector.shape_cast %12 : vector<1x128x128xbf16> to vector<128x128xbf16>
    %cst_13 = arith.constant dense<0.000000e+00> : vector<16x128xf32>
    %14 = tpu.matmul %11, %13, %cst_13 {dimension_numbers = #tpu.dot_dimension_numbers<[1], [0], [0], [1], [0, 0, 1, 1], [], []>} : vector<16x128xbf16>, vector<128x128xbf16>, vector<16x128xf32> -> vector<16x128xf32>
    %15 = arith.addf %9, %14 : vector<16x128xf32>
    %c0_14 = arith.constant 0 : index
    %c0_15 = arith.constant 0 : index
    %c0_16 = arith.constant 0 : index
    %16 = vector.load %arg7[%c0_14, %c0_15, %c0_16] : memref<2x16x128xf32, #tpu.memory_space<vmem>>, vector<1x16x128xf32>
    %17 = vector.shape_cast %16 : vector<1x16x128xf32> to vector<16x128xf32>
    %18 = arith.addf %17, %15 : vector<16x128xf32>
    %c0_17 = arith.constant 0 : index
    %c0_18 = arith.constant 0 : index
    %c0_19 = arith.constant 0 : index
    %19 = vector.load %arg7[%c0_17, %c0_18, %c0_19] : memref<2x16x128xf32, #tpu.memory_space<vmem>>, vector<1x16x128xf32>
    %20 = vector.shape_cast %19 : vector<1x16x128xf32> to vector<16x128xf32>
    %21 = vector.shape_cast %18 : vector<16x128xf32> to vector<1x16x128xf32>
    tpu.vector_store %arg7[%c0_17, %c0_18, %c0_19], %21 {strides = array<i32>} : memref<2x16x128xf32, #tpu.memory_space<vmem>>, vector<1x16x128xf32>,
    %cst_20 = arith.constant 0.000000e+00 : f32
    %22 = vector.broadcast %cst_20 : f32 to vector<16x128xf32>
    %c0_21 = arith.constant 0 : index
    %c1_22 = arith.constant 1 : index
    %c0_23 = arith.constant 0 : index
    %c0_24 = arith.constant 0 : index
    %23 = vector.load %arg3[%c0_21, %c1_22, %c0_23, %c0_24] : memref<1x4x16x128xbf16, #tpu.memory_space<vmem>>, vector<1x1x16x128xbf16>
    %24 = vector.shape_cast %23 : vector<1x1x16x128xbf16> to vector<16x128xbf16>
    %c0_25 = arith.constant 0 : index
    %c0_26 = arith.constant 0 : index
    %c0_27 = arith.constant 0 : index
    %25 = vector.load %arg4[%c0_25, %c0_26, %c0_27] : memref<3x128x128xbf16, #tpu.memory_space<vmem>>, vector<1x128x128xbf16>
    %26 = vector.shape_cast %25 : vector<1x128x128xbf16> to vector<128x128xbf16>
    %cst_28 = arith.constant dense<0.000000e+00> : vector<16x128xf32>
    %27 = tpu.matmul %24, %26, %cst_28 {dimension_numbers = #tpu.dot_dimension_numbers<[1], [0], [0], [1], [0, 0, 1, 1], [], []>} : vector<16x128xbf16>, vector<128x128xbf16>, vector<16x128xf32> -> vector<16x128xf32>
    %28 = arith.addf %22, %27 : vector<16x128xf32>
    %c0_29 = arith.constant 0 : index
    %c2_30 = arith.constant 2 : index
    %c0_31 = arith.constant 0 : index
    %c0_32 = arith.constant 0 : index
    %29 = vector.load %arg3[%c0_29, %c2_30, %c0_31, %c0_32] : memref<1x4x16x128xbf16, #tpu.memory_space<vmem>>, vector<1x1x16x128xbf16>
    %30 = vector.shape_cast %29 : vector<1x1x16x128xbf16> to vector<16x128xbf16>
    %c1_33 = arith.constant 1 : index
    %c0_34 = arith.constant 0 : index
    %c0_35 = arith.constant 0 : index
    %31 = vector.load %arg4[%c1_33, %c0_34, %c0_35] : memref<3x128x128xbf16, #tpu.memory_space<vmem>>, vector<1x128x128xbf16>
    %32 = vector.shape_cast %31 : vector<1x128x128xbf16> to vector<128x128xbf16>
    %cst_36 = arith.constant dense<0.000000e+00> : vector<16x128xf32>
    %33 = tpu.matmul %30, %32, %cst_36 {dimension_numbers = #tpu.dot_dimension_numbers<[1], [0], [0], [1], [0, 0, 1, 1], [], []>} : vector<16x128xbf16>, vector<128x128xbf16>, vector<16x128xf32> -> vector<16x128xf32>
    %34 = arith.addf %28, %33 : vector<16x128xf32>
    %c1_37 = arith.constant 1 : index
    %c0_38 = arith.constant 0 : index
    %c0_39 = arith.constant 0 : index
    %35 = vector.load %arg7[%c1_37, %c0_38, %c0_39] : memref<2x16x128xf32, #tpu.memory_space<vmem>>, vector<1x16x128xf32>
    %36 = vector.shape_cast %35 : vector<1x16x128xf32> to vector<16x128xf32>
    %37 = arith.addf %36, %34 : vector<16x128xf32>
    %c1_40 = arith.constant 1 : index
    %c0_41 = arith.constant 0 : index
    %c0_42 = arith.constant 0 : index
    %38 = vector.load %arg7[%c1_40, %c0_41, %c0_42] : memref<2x16x128xf32, #tpu.memory_space<vmem>>, vector<1x16x128xf32>
    %39 = vector.shape_cast %38 : vector<1x16x128xf32> to vector<16x128xf32>
    %40 = vector.shape_cast %37 : vector<16x128xf32> to vector<1x16x128xf32>
    tpu.vector_store %arg7[%c1_40, %c0_41, %c0_42], %40 {strides = array<i32>} : memref<2x16x128xf32, #tpu.memory_space<vmem>>, vector<1x16x128xf32>,
    %c0_i32_43 = arith.constant 0 : i32
    %41 = arith.cmpi eq, %arg2, %c0_i32_43 : i32
    %42 = arith.extui %41 : i1 to i32
    %c0_i32_44 = arith.constant 0 : i32
    %43 = arith.cmpi ne, %42, %c0_i32_44 : i32
    scf.if %43 {
      %c0_45 = arith.constant 0 : index
      %c0_46 = arith.constant 0 : index
      %c0_47 = arith.constant 0 : index
      %44 = vector.load %arg7[%c0_45, %c0_46, %c0_47] : memref<2x16x128xf32, #tpu.memory_space<vmem>>, vector<2x16x128xf32>
      %c0_48 = arith.constant 0 : index
      %c0_49 = arith.constant 0 : index
      %45 = vector.load %arg5[%c0_48, %c0_49] : memref<1x128xf32, #tpu.memory_space<vmem>>, vector<1x128xf32>
      %46 = vector.shape_cast %45 : vector<1x128xf32> to vector<1x1x128xf32>
      %47 = vector.broadcast %46 : vector<1x1x128xf32> to vector<2x16x128xf32>
      %48 = arith.addf %44, %47 : vector<2x16x128xf32>
      %cst_50 = arith.constant 0.000000e+00 : f32
      %49 = vector.broadcast %cst_50 : f32 to vector<2x16x128xf32>
      %50 = arith.maximumf %48, %49 : vector<2x16x128xf32>
      %51 = arith.truncf %50 : vector<2x16x128xf32> to vector<2x16x128xbf16>
      %c0_51 = arith.constant 0 : index
      %c0_52 = arith.constant 0 : index
      %c0_53 = arith.constant 0 : index
      %c0_54 = arith.constant 0 : index
      %52 = vector.load %arg6[%c0_51, %c0_52, %c0_53, %c0_54] : memref<1x2x16x128xbf16, #tpu.memory_space<vmem>>, vector<1x2x16x128xbf16>
      %53 = vector.shape_cast %52 : vector<1x2x16x128xbf16> to vector<2x16x128xbf16>
      %54 = vector.shape_cast %51 : vector<2x16x128xbf16> to vector<1x2x16x128xbf16>
      tpu.vector_store %arg6[%c0_51, %c0_52, %c0_53, %c0_54], %54 {strides = array<i32>} : memref<1x2x16x128xbf16, #tpu.memory_space<vmem>>, vector<1x2x16x128xbf16>,
    } else {
    }
    return
  }
  func.func @transform_0(%arg0: i32, %arg1: i32, %arg2: i32) -> (i32, i32, i32, i32) {
    %c0_i32 = arith.constant 0 : i32
    %c0_i32_0 = arith.constant 0 : i32
    %c0_i32_1 = arith.constant 0 : i32
    return %arg0, %c0_i32, %c0_i32_0, %arg2 : i32, i32, i32, i32
  }
  func.func @transform_1(%arg0: i32, %arg1: i32, %arg2: i32) -> (i32, i32, i32) {
    %c0_i32 = arith.constant 0 : i32
    %c0_i32_0 = arith.constant 0 : i32
    return %c0_i32, %arg2, %arg1 : i32, i32, i32
  }
  func.func @transform_2(%arg0: i32, %arg1: i32, %arg2: i32) -> (i32, i32) {
    %c0_i32 = arith.constant 0 : i32
    %c0_i32_0 = arith.constant 0 : i32
    return %c0_i32, %arg1 : i32, i32
  }
  func.func @transform_3(%arg0: i32, %arg1: i32, %arg2: i32) -> (i32, i32, i32, i32) {
    %c0_i32 = arith.constant 0 : i32
    %c0_i32_0 = arith.constant 0 : i32
    %c0_i32_1 = arith.constant 0 : i32
    return %arg0, %c0_i32, %c0_i32_0, %arg1 : i32, i32, i32, i32
  }
}

module attributes {stable_mosaic.version = 11 : i64} {
  func.func @_conv_bn_relu_kernel(%arg0: i32, %arg1: i32, %arg2: i32, %arg3: memref<1x8x22x128xbf16, #tpu.memory_space<vmem>>, %arg4: memref<9x128x128xbf16, #tpu.memory_space<vmem>>, %arg5: memref<1x128xf32, #tpu.memory_space<vmem>>, %arg6: memref<1x2x16x128xbf16, #tpu.memory_space<vmem>>, %arg7: memref<2x16x128xf32, #tpu.memory_space<vmem>>) attributes {dimension_semantics = [#tpu.dimension_semantics<parallel>, #tpu.dimension_semantics<parallel>, #tpu.dimension_semantics<arbitrary>], iteration_bounds = array<i64: 2, 1, 1>, scalar_prefetch = 0 : i64, scratch_operands = 1 : i64, tpu.core_type = #tpu.core_type<tc>, window_params = [{transform_indices = @transform_0, window_bounds = array<i64: 1, 8, 22, 128>}, {transform_indices = @transform_1, window_bounds = array<i64: 9, 128, 128>}, {transform_indices = @transform_2, window_bounds = array<i64: 1, 128>}, {transform_indices = @transform_3, window_bounds = array<i64: 1, 2, 16, 128>}]} {
    %c0_i32 = arith.constant 0 : i32
    %0 = arith.cmpi eq, %arg2, %c0_i32 : i32
    %1 = arith.extui %0 : i1 to i32
    %c0_i32_0 = arith.constant 0 : i32
    %2 = arith.cmpi ne, %1, %c0_i32_0 : i32
    scf.if %2 {
      %cst_58 = arith.constant 0.000000e+00 : f32
      %56 = vector.broadcast %cst_58 : f32 to vector<2x16x128xf32>
      %c0_59 = arith.constant 0 : index
      %c0_60 = arith.constant 0 : index
      %c0_61 = arith.constant 0 : index
      %57 = vector.load %arg7[%c0_59, %c0_60, %c0_61] : memref<2x16x128xf32, #tpu.memory_space<vmem>>, vector<2x16x128xf32>
      tpu.vector_store %arg7[%c0_59, %c0_60, %c0_61], %56 {strides = array<i32>} : memref<2x16x128xf32, #tpu.memory_space<vmem>>, vector<2x16x128xf32>,
    } else {
    }
    %cst = arith.constant 0.000000e+00 : f32
    %3 = vector.broadcast %cst : f32 to vector<16x128xf32>
    %c0 = arith.constant 0 : index
    %c3 = arith.constant 3 : index
    %c0_1 = arith.constant 0 : index
    %c0_2 = arith.constant 0 : index
    %4 = vector.load %arg3[%c0, %c3, %c0_1, %c0_2] : memref<1x8x22x128xbf16, #tpu.memory_space<vmem>>, vector<1x1x16x128xbf16>
    %5 = vector.shape_cast %4 : vector<1x1x16x128xbf16> to vector<16x128xbf16>
    %c3_3 = arith.constant 3 : index
    %c0_4 = arith.constant 0 : index
    %c0_5 = arith.constant 0 : index
    %6 = vector.load %arg4[%c3_3, %c0_4, %c0_5] : memref<9x128x128xbf16, #tpu.memory_space<vmem>>, vector<1x128x128xbf16>
    %7 = vector.shape_cast %6 : vector<1x128x128xbf16> to vector<128x128xbf16>
    %cst_6 = arith.constant dense<0.000000e+00> : vector<16x128xf32>
    %8 = tpu.matmul %5, %7, %cst_6 {dimension_numbers = #tpu.dot_dimension_numbers<[1], [0], [0], [1], [0, 0, 1, 1], [], []>} : vector<16x128xbf16>, vector<128x128xbf16>, vector<16x128xf32> -> vector<16x128xf32>
    %9 = arith.addf %3, %8 : vector<16x128xf32>
    %c0_7 = arith.constant 0 : index
    %c3_8 = arith.constant 3 : index
    %c3_9 = arith.constant 3 : index
    %c0_10 = arith.constant 0 : index
    %10 = vector.load %arg3[%c0_7, %c3_8, %c3_9, %c0_10] : memref<1x8x22x128xbf16, #tpu.memory_space<vmem>>, vector<1x1x16x128xbf16>
    %11 = vector.shape_cast %10 : vector<1x1x16x128xbf16> to vector<16x128xbf16>
    %c4 = arith.constant 4 : index
    %c0_11 = arith.constant 0 : index
    %c0_12 = arith.constant 0 : index
    %12 = vector.load %arg4[%c4, %c0_11, %c0_12] : memref<9x128x128xbf16, #tpu.memory_space<vmem>>, vector<1x128x128xbf16>
    %13 = vector.shape_cast %12 : vector<1x128x128xbf16> to vector<128x128xbf16>
    %cst_13 = arith.constant dense<0.000000e+00> : vector<16x128xf32>
    %14 = tpu.matmul %11, %13, %cst_13 {dimension_numbers = #tpu.dot_dimension_numbers<[1], [0], [0], [1], [0, 0, 1, 1], [], []>} : vector<16x128xbf16>, vector<128x128xbf16>, vector<16x128xf32> -> vector<16x128xf32>
    %15 = arith.addf %9, %14 : vector<16x128xf32>
    %c0_14 = arith.constant 0 : index
    %c3_15 = arith.constant 3 : index
    %c6 = arith.constant 6 : index
    %c0_16 = arith.constant 0 : index
    %16 = vector.load %arg3[%c0_14, %c3_15, %c6, %c0_16] : memref<1x8x22x128xbf16, #tpu.memory_space<vmem>>, vector<1x1x16x128xbf16>
    %17 = vector.shape_cast %16 : vector<1x1x16x128xbf16> to vector<16x128xbf16>
    %c5 = arith.constant 5 : index
    %c0_17 = arith.constant 0 : index
    %c0_18 = arith.constant 0 : index
    %18 = vector.load %arg4[%c5, %c0_17, %c0_18] : memref<9x128x128xbf16, #tpu.memory_space<vmem>>, vector<1x128x128xbf16>
    %19 = vector.shape_cast %18 : vector<1x128x128xbf16> to vector<128x128xbf16>
    %cst_19 = arith.constant dense<0.000000e+00> : vector<16x128xf32>
    %20 = tpu.matmul %17, %19, %cst_19 {dimension_numbers = #tpu.dot_dimension_numbers<[1], [0], [0], [1], [0, 0, 1, 1], [], []>} : vector<16x128xbf16>, vector<128x128xbf16>, vector<16x128xf32> -> vector<16x128xf32>
    %21 = arith.addf %15, %20 : vector<16x128xf32>
    %c0_20 = arith.constant 0 : index
    %c0_21 = arith.constant 0 : index
    %c0_22 = arith.constant 0 : index
    %22 = vector.load %arg7[%c0_20, %c0_21, %c0_22] : memref<2x16x128xf32, #tpu.memory_space<vmem>>, vector<1x16x128xf32>
    %23 = vector.shape_cast %22 : vector<1x16x128xf32> to vector<16x128xf32>
    %24 = arith.addf %23, %21 : vector<16x128xf32>
    %c0_23 = arith.constant 0 : index
    %c0_24 = arith.constant 0 : index
    %c0_25 = arith.constant 0 : index
    %25 = vector.load %arg7[%c0_23, %c0_24, %c0_25] : memref<2x16x128xf32, #tpu.memory_space<vmem>>, vector<1x16x128xf32>
    %26 = vector.shape_cast %25 : vector<1x16x128xf32> to vector<16x128xf32>
    %27 = vector.shape_cast %24 : vector<16x128xf32> to vector<1x16x128xf32>
    tpu.vector_store %arg7[%c0_23, %c0_24, %c0_25], %27 {strides = array<i32>} : memref<2x16x128xf32, #tpu.memory_space<vmem>>, vector<1x16x128xf32>,
    %cst_26 = arith.constant 0.000000e+00 : f32
    %28 = vector.broadcast %cst_26 : f32 to vector<16x128xf32>
    %c0_27 = arith.constant 0 : index
    %c4_28 = arith.constant 4 : index
    %c0_29 = arith.constant 0 : index
    %c0_30 = arith.constant 0 : index
    %29 = vector.load %arg3[%c0_27, %c4_28, %c0_29, %c0_30] : memref<1x8x22x128xbf16, #tpu.memory_space<vmem>>, vector<1x1x16x128xbf16>
    %30 = vector.shape_cast %29 : vector<1x1x16x128xbf16> to vector<16x128xbf16>
    %c3_31 = arith.constant 3 : index
    %c0_32 = arith.constant 0 : index
    %c0_33 = arith.constant 0 : index
    %31 = vector.load %arg4[%c3_31, %c0_32, %c0_33] : memref<9x128x128xbf16, #tpu.memory_space<vmem>>, vector<1x128x128xbf16>
    %32 = vector.shape_cast %31 : vector<1x128x128xbf16> to vector<128x128xbf16>
    %cst_34 = arith.constant dense<0.000000e+00> : vector<16x128xf32>
    %33 = tpu.matmul %30, %32, %cst_34 {dimension_numbers = #tpu.dot_dimension_numbers<[1], [0], [0], [1], [0, 0, 1, 1], [], []>} : vector<16x128xbf16>, vector<128x128xbf16>, vector<16x128xf32> -> vector<16x128xf32>
    %34 = arith.addf %28, %33 : vector<16x128xf32>
    %c0_35 = arith.constant 0 : index
    %c4_36 = arith.constant 4 : index
    %c3_37 = arith.constant 3 : index
    %c0_38 = arith.constant 0 : index
    %35 = vector.load %arg3[%c0_35, %c4_36, %c3_37, %c0_38] : memref<1x8x22x128xbf16, #tpu.memory_space<vmem>>, vector<1x1x16x128xbf16>
    %36 = vector.shape_cast %35 : vector<1x1x16x128xbf16> to vector<16x128xbf16>
    %c4_39 = arith.constant 4 : index
    %c0_40 = arith.constant 0 : index
    %c0_41 = arith.constant 0 : index
    %37 = vector.load %arg4[%c4_39, %c0_40, %c0_41] : memref<9x128x128xbf16, #tpu.memory_space<vmem>>, vector<1x128x128xbf16>
    %38 = vector.shape_cast %37 : vector<1x128x128xbf16> to vector<128x128xbf16>
    %cst_42 = arith.constant dense<0.000000e+00> : vector<16x128xf32>
    %39 = tpu.matmul %36, %38, %cst_42 {dimension_numbers = #tpu.dot_dimension_numbers<[1], [0], [0], [1], [0, 0, 1, 1], [], []>} : vector<16x128xbf16>, vector<128x128xbf16>, vector<16x128xf32> -> vector<16x128xf32>
    %40 = arith.addf %34, %39 : vector<16x128xf32>
    %c0_43 = arith.constant 0 : index
    %c4_44 = arith.constant 4 : index
    %c6_45 = arith.constant 6 : index
    %c0_46 = arith.constant 0 : index
    %41 = vector.load %arg3[%c0_43, %c4_44, %c6_45, %c0_46] : memref<1x8x22x128xbf16, #tpu.memory_space<vmem>>, vector<1x1x16x128xbf16>
    %42 = vector.shape_cast %41 : vector<1x1x16x128xbf16> to vector<16x128xbf16>
    %c5_47 = arith.constant 5 : index
    %c0_48 = arith.constant 0 : index
    %c0_49 = arith.constant 0 : index
    %43 = vector.load %arg4[%c5_47, %c0_48, %c0_49] : memref<9x128x128xbf16, #tpu.memory_space<vmem>>, vector<1x128x128xbf16>
    %44 = vector.shape_cast %43 : vector<1x128x128xbf16> to vector<128x128xbf16>
    %cst_50 = arith.constant dense<0.000000e+00> : vector<16x128xf32>
    %45 = tpu.matmul %42, %44, %cst_50 {dimension_numbers = #tpu.dot_dimension_numbers<[1], [0], [0], [1], [0, 0, 1, 1], [], []>} : vector<16x128xbf16>, vector<128x128xbf16>, vector<16x128xf32> -> vector<16x128xf32>
    %46 = arith.addf %40, %45 : vector<16x128xf32>
    %c1 = arith.constant 1 : index
    %c0_51 = arith.constant 0 : index
    %c0_52 = arith.constant 0 : index
    %47 = vector.load %arg7[%c1, %c0_51, %c0_52] : memref<2x16x128xf32, #tpu.memory_space<vmem>>, vector<1x16x128xf32>
    %48 = vector.shape_cast %47 : vector<1x16x128xf32> to vector<16x128xf32>
    %49 = arith.addf %48, %46 : vector<16x128xf32>
    %c1_53 = arith.constant 1 : index
    %c0_54 = arith.constant 0 : index
    %c0_55 = arith.constant 0 : index
    %50 = vector.load %arg7[%c1_53, %c0_54, %c0_55] : memref<2x16x128xf32, #tpu.memory_space<vmem>>, vector<1x16x128xf32>
    %51 = vector.shape_cast %50 : vector<1x16x128xf32> to vector<16x128xf32>
    %52 = vector.shape_cast %49 : vector<16x128xf32> to vector<1x16x128xf32>
    tpu.vector_store %arg7[%c1_53, %c0_54, %c0_55], %52 {strides = array<i32>} : memref<2x16x128xf32, #tpu.memory_space<vmem>>, vector<1x16x128xf32>,
    %c0_i32_56 = arith.constant 0 : i32
    %53 = arith.cmpi eq, %arg2, %c0_i32_56 : i32
    %54 = arith.extui %53 : i1 to i32
    %c0_i32_57 = arith.constant 0 : i32
    %55 = arith.cmpi ne, %54, %c0_i32_57 : i32
    scf.if %55 {
      %c0_58 = arith.constant 0 : index
      %c0_59 = arith.constant 0 : index
      %c0_60 = arith.constant 0 : index
      %56 = vector.load %arg7[%c0_58, %c0_59, %c0_60] : memref<2x16x128xf32, #tpu.memory_space<vmem>>, vector<2x16x128xf32>
      %c0_61 = arith.constant 0 : index
      %c0_62 = arith.constant 0 : index
      %57 = vector.load %arg5[%c0_61, %c0_62] : memref<1x128xf32, #tpu.memory_space<vmem>>, vector<1x128xf32>
      %58 = vector.shape_cast %57 : vector<1x128xf32> to vector<1x1x128xf32>
      %59 = vector.broadcast %58 : vector<1x1x128xf32> to vector<2x16x128xf32>
      %60 = arith.addf %56, %59 : vector<2x16x128xf32>
      %cst_63 = arith.constant 0.000000e+00 : f32
      %61 = vector.broadcast %cst_63 : f32 to vector<2x16x128xf32>
      %62 = arith.maximumf %60, %61 : vector<2x16x128xf32>
      %63 = arith.truncf %62 : vector<2x16x128xf32> to vector<2x16x128xbf16>
      %c0_64 = arith.constant 0 : index
      %c0_65 = arith.constant 0 : index
      %c0_66 = arith.constant 0 : index
      %c0_67 = arith.constant 0 : index
      %64 = vector.load %arg6[%c0_64, %c0_65, %c0_66, %c0_67] : memref<1x2x16x128xbf16, #tpu.memory_space<vmem>>, vector<1x2x16x128xbf16>
      %65 = vector.shape_cast %64 : vector<1x2x16x128xbf16> to vector<2x16x128xbf16>
      %66 = vector.shape_cast %63 : vector<2x16x128xbf16> to vector<1x2x16x128xbf16>
      tpu.vector_store %arg6[%c0_64, %c0_65, %c0_66, %c0_67], %66 {strides = array<i32>} : memref<1x2x16x128xbf16, #tpu.memory_space<vmem>>, vector<1x2x16x128xbf16>,
    } else {
    }
    return
  }
  func.func @transform_0(%arg0: i32, %arg1: i32, %arg2: i32) -> (i32, i32, i32, i32) {
    %c0_i32 = arith.constant 0 : i32
    %c0_i32_0 = arith.constant 0 : i32
    %c0_i32_1 = arith.constant 0 : i32
    return %arg0, %c0_i32, %c0_i32_0, %arg2 : i32, i32, i32, i32
  }
  func.func @transform_1(%arg0: i32, %arg1: i32, %arg2: i32) -> (i32, i32, i32) {
    %c0_i32 = arith.constant 0 : i32
    %c0_i32_0 = arith.constant 0 : i32
    return %c0_i32, %arg2, %arg1 : i32, i32, i32
  }
  func.func @transform_2(%arg0: i32, %arg1: i32, %arg2: i32) -> (i32, i32) {
    %c0_i32 = arith.constant 0 : i32
    %c0_i32_0 = arith.constant 0 : i32
    return %c0_i32, %arg1 : i32, i32
  }
  func.func @transform_3(%arg0: i32, %arg1: i32, %arg2: i32) -> (i32, i32, i32, i32) {
    %c0_i32 = arith.constant 0 : i32
    %c0_i32_0 = arith.constant 0 : i32
    %c0_i32_1 = arith.constant 0 : i32
    return %arg0, %c0_i32, %c0_i32_0, %arg1 : i32, i32, i32, i32
  }
}

module attributes {stable_mosaic.version = 11 : i64} {
  func.func @_sparse_gate_conv_kernel(%arg0: i32, %arg1: memref<1x4x18xf32, #tpu.memory_space<vmem>>, %arg2: memref<1x4x18xf32, #tpu.memory_space<vmem>>, %arg3: memref<18xf32, #tpu.memory_space<smem>>, %arg4: memref<1xf32, #tpu.memory_space<smem>>, %arg5: memref<1x2x16xf32, #tpu.memory_space<vmem>>) attributes {dimension_semantics = [#tpu.dimension_semantics<parallel>], iteration_bounds = array<i64: 2>, scalar_prefetch = 0 : i64, scratch_operands = 0 : i64, tpu.core_type = #tpu.core_type<tc>, window_params = [{transform_indices = @transform_0, window_bounds = array<i64: 1, 4, 18>}, {transform_indices = @transform_1, window_bounds = array<i64: 1, 4, 18>}, {transform_indices = @transform_2, window_bounds = array<i64: 18>}, {transform_indices = @transform_3, window_bounds = array<i64: 1>}, {transform_indices = @transform_4, window_bounds = array<i64: 1, 2, 16>}]} {
    %cst = arith.constant 0.000000e+00 : f32
    %0 = vector.broadcast %cst : f32 to vector<2x16xf32>
    %c0 = arith.constant 0 : index
    %c0_0 = arith.constant 0 : index
    %c0_1 = arith.constant 0 : index
    %1 = vector.load %arg1[%c0, %c0_0, %c0_1] : memref<1x4x18xf32, #tpu.memory_space<vmem>>, vector<1x2x16xf32>
    %2 = vector.shape_cast %1 : vector<1x2x16xf32> to vector<2x16xf32>
    %c0_2 = arith.constant 0 : index
    %c0_3 = arith.constant 0 : index
    %c0_4 = arith.constant 0 : index
    %3 = vector.load %arg2[%c0_2, %c0_3, %c0_4] : memref<1x4x18xf32, #tpu.memory_space<vmem>>, vector<1x2x16xf32>
    %4 = vector.shape_cast %3 : vector<1x2x16xf32> to vector<2x16xf32>
    %5 = arith.mulf %2, %4 : vector<2x16xf32>
    %cst_5 = arith.constant 0.000000e+00 : f32
    %6 = vector.broadcast %cst_5 : f32 to vector<2x16xf32>
    %7 = arith.maximumf %5, %6 : vector<2x16xf32>
    %c0_6 = arith.constant 0 : index
    %8 = memref.load %arg3[%c0_6] : memref<18xf32, #tpu.memory_space<smem>>
    %9 = vector.broadcast %8 : f32 to vector<2x16xf32>
    %10 = arith.mulf %7, %9 : vector<2x16xf32>
    %11 = arith.addf %0, %10 : vector<2x16xf32>
    %c9 = arith.constant 9 : index
    %12 = memref.load %arg3[%c9] : memref<18xf32, #tpu.memory_space<smem>>
    %13 = vector.broadcast %12 : f32 to vector<2x16xf32>
    %14 = arith.mulf %2, %13 : vector<2x16xf32>
    %15 = arith.addf %11, %14 : vector<2x16xf32>
    %c0_7 = arith.constant 0 : index
    %c0_8 = arith.constant 0 : index
    %c1 = arith.constant 1 : index
    %16 = vector.load %arg1[%c0_7, %c0_8, %c1] : memref<1x4x18xf32, #tpu.memory_space<vmem>>, vector<1x2x16xf32>
    %17 = vector.shape_cast %16 : vector<1x2x16xf32> to vector<2x16xf32>
    %c0_9 = arith.constant 0 : index
    %c0_10 = arith.constant 0 : index
    %c1_11 = arith.constant 1 : index
    %18 = vector.load %arg2[%c0_9, %c0_10, %c1_11] : memref<1x4x18xf32, #tpu.memory_space<vmem>>, vector<1x2x16xf32>
    %19 = vector.shape_cast %18 : vector<1x2x16xf32> to vector<2x16xf32>
    %20 = arith.mulf %17, %19 : vector<2x16xf32>
    %cst_12 = arith.constant 0.000000e+00 : f32
    %21 = vector.broadcast %cst_12 : f32 to vector<2x16xf32>
    %22 = arith.maximumf %20, %21 : vector<2x16xf32>
    %c1_13 = arith.constant 1 : index
    %23 = memref.load %arg3[%c1_13] : memref<18xf32, #tpu.memory_space<smem>>
    %24 = vector.broadcast %23 : f32 to vector<2x16xf32>
    %25 = arith.mulf %22, %24 : vector<2x16xf32>
    %26 = arith.addf %15, %25 : vector<2x16xf32>
    %c10 = arith.constant 10 : index
    %27 = memref.load %arg3[%c10] : memref<18xf32, #tpu.memory_space<smem>>
    %28 = vector.broadcast %27 : f32 to vector<2x16xf32>
    %29 = arith.mulf %17, %28 : vector<2x16xf32>
    %30 = arith.addf %26, %29 : vector<2x16xf32>
    %c0_14 = arith.constant 0 : index
    %c0_15 = arith.constant 0 : index
    %c2 = arith.constant 2 : index
    %31 = vector.load %arg1[%c0_14, %c0_15, %c2] : memref<1x4x18xf32, #tpu.memory_space<vmem>>, vector<1x2x16xf32>
    %32 = vector.shape_cast %31 : vector<1x2x16xf32> to vector<2x16xf32>
    %c0_16 = arith.constant 0 : index
    %c0_17 = arith.constant 0 : index
    %c2_18 = arith.constant 2 : index
    %33 = vector.load %arg2[%c0_16, %c0_17, %c2_18] : memref<1x4x18xf32, #tpu.memory_space<vmem>>, vector<1x2x16xf32>
    %34 = vector.shape_cast %33 : vector<1x2x16xf32> to vector<2x16xf32>
    %35 = arith.mulf %32, %34 : vector<2x16xf32>
    %cst_19 = arith.constant 0.000000e+00 : f32
    %36 = vector.broadcast %cst_19 : f32 to vector<2x16xf32>
    %37 = arith.maximumf %35, %36 : vector<2x16xf32>
    %c2_20 = arith.constant 2 : index
    %38 = memref.load %arg3[%c2_20] : memref<18xf32, #tpu.memory_space<smem>>
    %39 = vector.broadcast %38 : f32 to vector<2x16xf32>
    %40 = arith.mulf %37, %39 : vector<2x16xf32>
    %41 = arith.addf %30, %40 : vector<2x16xf32>
    %c11 = arith.constant 11 : index
    %42 = memref.load %arg3[%c11] : memref<18xf32, #tpu.memory_space<smem>>
    %43 = vector.broadcast %42 : f32 to vector<2x16xf32>
    %44 = arith.mulf %32, %43 : vector<2x16xf32>
    %45 = arith.addf %41, %44 : vector<2x16xf32>
    %c0_21 = arith.constant 0 : index
    %c1_22 = arith.constant 1 : index
    %c0_23 = arith.constant 0 : index
    %46 = vector.load %arg1[%c0_21, %c1_22, %c0_23] : memref<1x4x18xf32, #tpu.memory_space<vmem>>, vector<1x2x16xf32>
    %47 = vector.shape_cast %46 : vector<1x2x16xf32> to vector<2x16xf32>
    %c0_24 = arith.constant 0 : index
    %c1_25 = arith.constant 1 : index
    %c0_26 = arith.constant 0 : index
    %48 = vector.load %arg2[%c0_24, %c1_25, %c0_26] : memref<1x4x18xf32, #tpu.memory_space<vmem>>, vector<1x2x16xf32>
    %49 = vector.shape_cast %48 : vector<1x2x16xf32> to vector<2x16xf32>
    %50 = arith.mulf %47, %49 : vector<2x16xf32>
    %cst_27 = arith.constant 0.000000e+00 : f32
    %51 = vector.broadcast %cst_27 : f32 to vector<2x16xf32>
    %52 = arith.maximumf %50, %51 : vector<2x16xf32>
    %c3 = arith.constant 3 : index
    %53 = memref.load %arg3[%c3] : memref<18xf32, #tpu.memory_space<smem>>
    %54 = vector.broadcast %53 : f32 to vector<2x16xf32>
    %55 = arith.mulf %52, %54 : vector<2x16xf32>
    %56 = arith.addf %45, %55 : vector<2x16xf32>
    %c12 = arith.constant 12 : index
    %57 = memref.load %arg3[%c12] : memref<18xf32, #tpu.memory_space<smem>>
    %58 = vector.broadcast %57 : f32 to vector<2x16xf32>
    %59 = arith.mulf %47, %58 : vector<2x16xf32>
    %60 = arith.addf %56, %59 : vector<2x16xf32>
    %c0_28 = arith.constant 0 : index
    %c1_29 = arith.constant 1 : index
    %c1_30 = arith.constant 1 : index
    %61 = vector.load %arg1[%c0_28, %c1_29, %c1_30] : memref<1x4x18xf32, #tpu.memory_space<vmem>>, vector<1x2x16xf32>
    %62 = vector.shape_cast %61 : vector<1x2x16xf32> to vector<2x16xf32>
    %c0_31 = arith.constant 0 : index
    %c1_32 = arith.constant 1 : index
    %c1_33 = arith.constant 1 : index
    %63 = vector.load %arg2[%c0_31, %c1_32, %c1_33] : memref<1x4x18xf32, #tpu.memory_space<vmem>>, vector<1x2x16xf32>
    %64 = vector.shape_cast %63 : vector<1x2x16xf32> to vector<2x16xf32>
    %65 = arith.mulf %62, %64 : vector<2x16xf32>
    %cst_34 = arith.constant 0.000000e+00 : f32
    %66 = vector.broadcast %cst_34 : f32 to vector<2x16xf32>
    %67 = arith.maximumf %65, %66 : vector<2x16xf32>
    %c4 = arith.constant 4 : index
    %68 = memref.load %arg3[%c4] : memref<18xf32, #tpu.memory_space<smem>>
    %69 = vector.broadcast %68 : f32 to vector<2x16xf32>
    %70 = arith.mulf %67, %69 : vector<2x16xf32>
    %71 = arith.addf %60, %70 : vector<2x16xf32>
    %c13 = arith.constant 13 : index
    %72 = memref.load %arg3[%c13] : memref<18xf32, #tpu.memory_space<smem>>
    %73 = vector.broadcast %72 : f32 to vector<2x16xf32>
    %74 = arith.mulf %62, %73 : vector<2x16xf32>
    %75 = arith.addf %71, %74 : vector<2x16xf32>
    %c0_35 = arith.constant 0 : index
    %c1_36 = arith.constant 1 : index
    %c2_37 = arith.constant 2 : index
    %76 = vector.load %arg1[%c0_35, %c1_36, %c2_37] : memref<1x4x18xf32, #tpu.memory_space<vmem>>, vector<1x2x16xf32>
    %77 = vector.shape_cast %76 : vector<1x2x16xf32> to vector<2x16xf32>
    %c0_38 = arith.constant 0 : index
    %c1_39 = arith.constant 1 : index
    %c2_40 = arith.constant 2 : index
    %78 = vector.load %arg2[%c0_38, %c1_39, %c2_40] : memref<1x4x18xf32, #tpu.memory_space<vmem>>, vector<1x2x16xf32>
    %79 = vector.shape_cast %78 : vector<1x2x16xf32> to vector<2x16xf32>
    %80 = arith.mulf %77, %79 : vector<2x16xf32>
    %cst_41 = arith.constant 0.000000e+00 : f32
    %81 = vector.broadcast %cst_41 : f32 to vector<2x16xf32>
    %82 = arith.maximumf %80, %81 : vector<2x16xf32>
    %c5 = arith.constant 5 : index
    %83 = memref.load %arg3[%c5] : memref<18xf32, #tpu.memory_space<smem>>
    %84 = vector.broadcast %83 : f32 to vector<2x16xf32>
    %85 = arith.mulf %82, %84 : vector<2x16xf32>
    %86 = arith.addf %75, %85 : vector<2x16xf32>
    %c14 = arith.constant 14 : index
    %87 = memref.load %arg3[%c14] : memref<18xf32, #tpu.memory_space<smem>>
    %88 = vector.broadcast %87 : f32 to vector<2x16xf32>
    %89 = arith.mulf %77, %88 : vector<2x16xf32>
    %90 = arith.addf %86, %89 : vector<2x16xf32>
    %c0_42 = arith.constant 0 : index
    %c2_43 = arith.constant 2 : index
    %c0_44 = arith.constant 0 : index
    %91 = vector.load %arg1[%c0_42, %c2_43, %c0_44] : memref<1x4x18xf32, #tpu.memory_space<vmem>>, vector<1x2x16xf32>
    %92 = vector.shape_cast %91 : vector<1x2x16xf32> to vector<2x16xf32>
    %c0_45 = arith.constant 0 : index
    %c2_46 = arith.constant 2 : index
    %c0_47 = arith.constant 0 : index
    %93 = vector.load %arg2[%c0_45, %c2_46, %c0_47] : memref<1x4x18xf32, #tpu.memory_space<vmem>>, vector<1x2x16xf32>
    %94 = vector.shape_cast %93 : vector<1x2x16xf32> to vector<2x16xf32>
    %95 = arith.mulf %92, %94 : vector<2x16xf32>
    %cst_48 = arith.constant 0.000000e+00 : f32
    %96 = vector.broadcast %cst_48 : f32 to vector<2x16xf32>
    %97 = arith.maximumf %95, %96 : vector<2x16xf32>
    %c6 = arith.constant 6 : index
    %98 = memref.load %arg3[%c6] : memref<18xf32, #tpu.memory_space<smem>>
    %99 = vector.broadcast %98 : f32 to vector<2x16xf32>
    %100 = arith.mulf %97, %99 : vector<2x16xf32>
    %101 = arith.addf %90, %100 : vector<2x16xf32>
    %c15 = arith.constant 15 : index
    %102 = memref.load %arg3[%c15] : memref<18xf32, #tpu.memory_space<smem>>
    %103 = vector.broadcast %102 : f32 to vector<2x16xf32>
    %104 = arith.mulf %92, %103 : vector<2x16xf32>
    %105 = arith.addf %101, %104 : vector<2x16xf32>
    %c0_49 = arith.constant 0 : index
    %c2_50 = arith.constant 2 : index
    %c1_51 = arith.constant 1 : index
    %106 = vector.load %arg1[%c0_49, %c2_50, %c1_51] : memref<1x4x18xf32, #tpu.memory_space<vmem>>, vector<1x2x16xf32>
    %107 = vector.shape_cast %106 : vector<1x2x16xf32> to vector<2x16xf32>
    %c0_52 = arith.constant 0 : index
    %c2_53 = arith.constant 2 : index
    %c1_54 = arith.constant 1 : index
    %108 = vector.load %arg2[%c0_52, %c2_53, %c1_54] : memref<1x4x18xf32, #tpu.memory_space<vmem>>, vector<1x2x16xf32>
    %109 = vector.shape_cast %108 : vector<1x2x16xf32> to vector<2x16xf32>
    %110 = arith.mulf %107, %109 : vector<2x16xf32>
    %cst_55 = arith.constant 0.000000e+00 : f32
    %111 = vector.broadcast %cst_55 : f32 to vector<2x16xf32>
    %112 = arith.maximumf %110, %111 : vector<2x16xf32>
    %c7 = arith.constant 7 : index
    %113 = memref.load %arg3[%c7] : memref<18xf32, #tpu.memory_space<smem>>
    %114 = vector.broadcast %113 : f32 to vector<2x16xf32>
    %115 = arith.mulf %112, %114 : vector<2x16xf32>
    %116 = arith.addf %105, %115 : vector<2x16xf32>
    %c16 = arith.constant 16 : index
    %117 = memref.load %arg3[%c16] : memref<18xf32, #tpu.memory_space<smem>>
    %118 = vector.broadcast %117 : f32 to vector<2x16xf32>
    %119 = arith.mulf %107, %118 : vector<2x16xf32>
    %120 = arith.addf %116, %119 : vector<2x16xf32>
    %c0_56 = arith.constant 0 : index
    %c2_57 = arith.constant 2 : index
    %c2_58 = arith.constant 2 : index
    %121 = vector.load %arg1[%c0_56, %c2_57, %c2_58] : memref<1x4x18xf32, #tpu.memory_space<vmem>>, vector<1x2x16xf32>
    %122 = vector.shape_cast %121 : vector<1x2x16xf32> to vector<2x16xf32>
    %c0_59 = arith.constant 0 : index
    %c2_60 = arith.constant 2 : index
    %c2_61 = arith.constant 2 : index
    %123 = vector.load %arg2[%c0_59, %c2_60, %c2_61] : memref<1x4x18xf32, #tpu.memory_space<vmem>>, vector<1x2x16xf32>
    %124 = vector.shape_cast %123 : vector<1x2x16xf32> to vector<2x16xf32>
    %125 = arith.mulf %122, %124 : vector<2x16xf32>
    %cst_62 = arith.constant 0.000000e+00 : f32
    %126 = vector.broadcast %cst_62 : f32 to vector<2x16xf32>
    %127 = arith.maximumf %125, %126 : vector<2x16xf32>
    %c8 = arith.constant 8 : index
    %128 = memref.load %arg3[%c8] : memref<18xf32, #tpu.memory_space<smem>>
    %129 = vector.broadcast %128 : f32 to vector<2x16xf32>
    %130 = arith.mulf %127, %129 : vector<2x16xf32>
    %131 = arith.addf %120, %130 : vector<2x16xf32>
    %c17 = arith.constant 17 : index
    %132 = memref.load %arg3[%c17] : memref<18xf32, #tpu.memory_space<smem>>
    %133 = vector.broadcast %132 : f32 to vector<2x16xf32>
    %134 = arith.mulf %122, %133 : vector<2x16xf32>
    %135 = arith.addf %131, %134 : vector<2x16xf32>
    %c0_63 = arith.constant 0 : index
    %136 = memref.load %arg4[%c0_63] : memref<1xf32, #tpu.memory_space<smem>>
    %137 = vector.broadcast %136 : f32 to vector<2x16xf32>
    %138 = arith.addf %135, %137 : vector<2x16xf32>
    %cst_64 = arith.constant 0.000000e+00 : f32
    %139 = vector.broadcast %cst_64 : f32 to vector<2x16xf32>
    %140 = arith.maximumf %138, %139 : vector<2x16xf32>
    %c0_65 = arith.constant 0 : index
    %c0_66 = arith.constant 0 : index
    %c0_67 = arith.constant 0 : index
    %141 = vector.load %arg5[%c0_65, %c0_66, %c0_67] : memref<1x2x16xf32, #tpu.memory_space<vmem>>, vector<1x2x16xf32>
    %142 = vector.shape_cast %141 : vector<1x2x16xf32> to vector<2x16xf32>
    %143 = vector.shape_cast %140 : vector<2x16xf32> to vector<1x2x16xf32>
    tpu.vector_store %arg5[%c0_65, %c0_66, %c0_67], %143 {strides = array<i32>} : memref<1x2x16xf32, #tpu.memory_space<vmem>>, vector<1x2x16xf32>,
    return
  }
  func.func @transform_0(%arg0: i32) -> (i32, i32, i32) {
    %c0_i32 = arith.constant 0 : i32
    %c0_i32_0 = arith.constant 0 : i32
    %c0_i32_1 = arith.constant 0 : i32
    return %arg0, %c0_i32, %c0_i32_0 : i32, i32, i32
  }
  func.func @transform_1(%arg0: i32) -> (i32, i32, i32) {
    %c0_i32 = arith.constant 0 : i32
    %c0_i32_0 = arith.constant 0 : i32
    %c0_i32_1 = arith.constant 0 : i32
    return %arg0, %c0_i32, %c0_i32_0 : i32, i32, i32
  }
  func.func @transform_2(%arg0: i32) -> i32 {
    %c0_i32 = arith.constant 0 : i32
    %c0_i32_0 = arith.constant 0 : i32
    return %c0_i32 : i32
  }
  func.func @transform_3(%arg0: i32) -> i32 {
    %c0_i32 = arith.constant 0 : i32
    %c0_i32_0 = arith.constant 0 : i32
    return %c0_i32 : i32
  }
  func.func @transform_4(%arg0: i32) -> (i32, i32, i32) {
    %c0_i32 = arith.constant 0 : i32
    %c0_i32_0 = arith.constant 0 : i32
    %c0_i32_1 = arith.constant 0 : i32
    return %arg0, %c0_i32, %c0_i32_0 : i32, i32, i32
  }
}

module attributes {stable_mosaic.version = 11 : i64} {
  func.func @_gated_cat_conv_kernel(%arg0: i32, %arg1: i32, %arg2: i32, %arg3: memref<1x4x18x128xbf16, #tpu.memory_space<vmem>>, %arg4: memref<1x4x18x128xbf16, #tpu.memory_space<vmem>>, %arg5: memref<9x128x128xbf16, #tpu.memory_space<vmem>>, %arg6: memref<9x128x128xbf16, #tpu.memory_space<vmem>>, %arg7: memref<1x128xf32, #tpu.memory_space<vmem>>, %arg8: memref<1x2x16x128xf32, #tpu.memory_space<vmem>>, %arg9: memref<2x16x128xf32, #tpu.memory_space<vmem>>) attributes {dimension_semantics = [#tpu.dimension_semantics<parallel>, #tpu.dimension_semantics<parallel>, #tpu.dimension_semantics<arbitrary>], iteration_bounds = array<i64: 2, 1, 1>, scalar_prefetch = 0 : i64, scratch_operands = 1 : i64, tpu.core_type = #tpu.core_type<tc>, window_params = [{transform_indices = @transform_0, window_bounds = array<i64: 1, 4, 18, 128>}, {transform_indices = @transform_1, window_bounds = array<i64: 1, 4, 18, 128>}, {transform_indices = @transform_2, window_bounds = array<i64: 9, 128, 128>}, {transform_indices = @transform_3, window_bounds = array<i64: 9, 128, 128>}, {transform_indices = @transform_4, window_bounds = array<i64: 1, 128>}, {transform_indices = @transform_5, window_bounds = array<i64: 1, 2, 16, 128>}]} {
    %c0_i32 = arith.constant 0 : i32
    %0 = arith.cmpi eq, %arg2, %c0_i32 : i32
    %1 = arith.extui %0 : i1 to i32
    %c0_i32_0 = arith.constant 0 : i32
    %2 = arith.cmpi ne, %1, %c0_i32_0 : i32
    scf.if %2 {
      %cst_211 = arith.constant 0.000000e+00 : f32
      %236 = vector.broadcast %cst_211 : f32 to vector<2x16x128xf32>
      %c0_212 = arith.constant 0 : index
      %c0_213 = arith.constant 0 : index
      %c0_214 = arith.constant 0 : index
      %237 = vector.load %arg9[%c0_212, %c0_213, %c0_214] : memref<2x16x128xf32, #tpu.memory_space<vmem>>, vector<2x16x128xf32>
      tpu.vector_store %arg9[%c0_212, %c0_213, %c0_214], %236 {strides = array<i32>} : memref<2x16x128xf32, #tpu.memory_space<vmem>>, vector<2x16x128xf32>,
    } else {
    }
    %cst = arith.constant 0.000000e+00 : f32
    %3 = vector.broadcast %cst : f32 to vector<16x128xf32>
    %c0 = arith.constant 0 : index
    %c1 = arith.constant 1 : index
    %c0_1 = arith.constant 0 : index
    %c0_2 = arith.constant 0 : index
    %4 = vector.load %arg3[%c0, %c1, %c0_1, %c0_2] : memref<1x4x18x128xbf16, #tpu.memory_space<vmem>>, vector<1x1x16x128xbf16>
    %5 = vector.shape_cast %4 : vector<1x1x16x128xbf16> to vector<16x128xbf16>
    %c0_3 = arith.constant 0 : index
    %c1_4 = arith.constant 1 : index
    %c0_5 = arith.constant 0 : index
    %c0_6 = arith.constant 0 : index
    %6 = vector.load %arg4[%c0_3, %c1_4, %c0_5, %c0_6] : memref<1x4x18x128xbf16, #tpu.memory_space<vmem>>, vector<1x1x16x128xbf16>
    %7 = vector.shape_cast %6 : vector<1x1x16x128xbf16> to vector<16x128xbf16>
    %8 = arith.extf %5 : vector<16x128xbf16> to vector<16x128xf32>
    %9 = arith.extf %7 : vector<16x128xbf16> to vector<16x128xf32>
    %10 = arith.mulf %8, %9 : vector<16x128xf32>
    %cst_7 = arith.constant 0.000000e+00 : f32
    %11 = vector.broadcast %cst_7 : f32 to vector<16x128xf32>
    %12 = arith.maximumf %10, %11 : vector<16x128xf32>
    %13 = arith.truncf %12 : vector<16x128xf32> to vector<16x128xbf16>
    %c3 = arith.constant 3 : index
    %c0_8 = arith.constant 0 : index
    %c0_9 = arith.constant 0 : index
    %14 = vector.load %arg5[%c3, %c0_8, %c0_9] : memref<9x128x128xbf16, #tpu.memory_space<vmem>>, vector<1x128x128xbf16>
    %15 = vector.shape_cast %14 : vector<1x128x128xbf16> to vector<128x128xbf16>
    %cst_10 = arith.constant dense<0.000000e+00> : vector<16x128xf32>
    %16 = tpu.matmul %13, %15, %cst_10 {dimension_numbers = #tpu.dot_dimension_numbers<[1], [0], [0], [1], [0, 0, 1, 1], [], []>} : vector<16x128xbf16>, vector<128x128xbf16>, vector<16x128xf32> -> vector<16x128xf32>
    %17 = arith.addf %3, %16 : vector<16x128xf32>
    %c3_11 = arith.constant 3 : index
    %c0_12 = arith.constant 0 : index
    %c0_13 = arith.constant 0 : index
    %18 = vector.load %arg6[%c3_11, %c0_12, %c0_13] : memref<9x128x128xbf16, #tpu.memory_space<vmem>>, vector<1x128x128xbf16>
    %19 = vector.shape_cast %18 : vector<1x128x128xbf16> to vector<128x128xbf16>
    %cst_14 = arith.constant dense<0.000000e+00> : vector<16x128xf32>
    %20 = tpu.matmul %5, %19, %cst_14 {dimension_numbers = #tpu.dot_dimension_numbers<[1], [0], [0], [1], [0, 0, 1, 1], [], []>} : vector<16x128xbf16>, vector<128x128xbf16>, vector<16x128xf32> -> vector<16x128xf32>
    %21 = arith.addf %17, %20 : vector<16x128xf32>
    %c0_15 = arith.constant 0 : index
    %c1_16 = arith.constant 1 : index
    %c1_17 = arith.constant 1 : index
    %c0_18 = arith.constant 0 : index
    %22 = vector.load %arg3[%c0_15, %c1_16, %c1_17, %c0_18] : memref<1x4x18x128xbf16, #tpu.memory_space<vmem>>, vector<1x1x16x128xbf16>
    %23 = vector.shape_cast %22 : vector<1x1x16x128xbf16> to vector<16x128xbf16>
    %c0_19 = arith.constant 0 : index
    %c1_20 = arith.constant 1 : index
    %c1_21 = arith.constant 1 : index
    %c0_22 = arith.constant 0 : index
    %24 = vector.load %arg4[%c0_19, %c1_20, %c1_21, %c0_22] : memref<1x4x18x128xbf16, #tpu.memory_space<vmem>>, vector<1x1x16x128xbf16>
    %25 = vector.shape_cast %24 : vector<1x1x16x128xbf16> to vector<16x128xbf16>
    %26 = arith.extf %23 : vector<16x128xbf16> to vector<16x128xf32>
    %27 = arith.extf %25 : vector<16x128xbf16> to vector<16x128xf32>
    %28 = arith.mulf %26, %27 : vector<16x128xf32>
    %cst_23 = arith.constant 0.000000e+00 : f32
    %29 = vector.broadcast %cst_23 : f32 to vector<16x128xf32>
    %30 = arith.maximumf %28, %29 : vector<16x128xf32>
    %31 = arith.truncf %30 : vector<16x128xf32> to vector<16x128xbf16>
    %c4 = arith.constant 4 : index
    %c0_24 = arith.constant 0 : index
    %c0_25 = arith.constant 0 : index
    %32 = vector.load %arg5[%c4, %c0_24, %c0_25] : memref<9x128x128xbf16, #tpu.memory_space<vmem>>, vector<1x128x128xbf16>
    %33 = vector.shape_cast %32 : vector<1x128x128xbf16> to vector<128x128xbf16>
    %cst_26 = arith.constant dense<0.000000e+00> : vector<16x128xf32>
    %34 = tpu.matmul %31, %33, %cst_26 {dimension_numbers = #tpu.dot_dimension_numbers<[1], [0], [0], [1], [0, 0, 1, 1], [], []>} : vector<16x128xbf16>, vector<128x128xbf16>, vector<16x128xf32> -> vector<16x128xf32>
    %35 = arith.addf %21, %34 : vector<16x128xf32>
    %c4_27 = arith.constant 4 : index
    %c0_28 = arith.constant 0 : index
    %c0_29 = arith.constant 0 : index
    %36 = vector.load %arg6[%c4_27, %c0_28, %c0_29] : memref<9x128x128xbf16, #tpu.memory_space<vmem>>, vector<1x128x128xbf16>
    %37 = vector.shape_cast %36 : vector<1x128x128xbf16> to vector<128x128xbf16>
    %cst_30 = arith.constant dense<0.000000e+00> : vector<16x128xf32>
    %38 = tpu.matmul %23, %37, %cst_30 {dimension_numbers = #tpu.dot_dimension_numbers<[1], [0], [0], [1], [0, 0, 1, 1], [], []>} : vector<16x128xbf16>, vector<128x128xbf16>, vector<16x128xf32> -> vector<16x128xf32>
    %39 = arith.addf %35, %38 : vector<16x128xf32>
    %c0_31 = arith.constant 0 : index
    %c1_32 = arith.constant 1 : index
    %c2 = arith.constant 2 : index
    %c0_33 = arith.constant 0 : index
    %40 = vector.load %arg3[%c0_31, %c1_32, %c2, %c0_33] : memref<1x4x18x128xbf16, #tpu.memory_space<vmem>>, vector<1x1x16x128xbf16>
    %41 = vector.shape_cast %40 : vector<1x1x16x128xbf16> to vector<16x128xbf16>
    %c0_34 = arith.constant 0 : index
    %c1_35 = arith.constant 1 : index
    %c2_36 = arith.constant 2 : index
    %c0_37 = arith.constant 0 : index
    %42 = vector.load %arg4[%c0_34, %c1_35, %c2_36, %c0_37] : memref<1x4x18x128xbf16, #tpu.memory_space<vmem>>, vector<1x1x16x128xbf16>
    %43 = vector.shape_cast %42 : vector<1x1x16x128xbf16> to vector<16x128xbf16>
    %44 = arith.extf %41 : vector<16x128xbf16> to vector<16x128xf32>
    %45 = arith.extf %43 : vector<16x128xbf16> to vector<16x128xf32>
    %46 = arith.mulf %44, %45 : vector<16x128xf32>
    %cst_38 = arith.constant 0.000000e+00 : f32
    %47 = vector.broadcast %cst_38 : f32 to vector<16x128xf32>
    %48 = arith.maximumf %46, %47 : vector<16x128xf32>
    %49 = arith.truncf %48 : vector<16x128xf32> to vector<16x128xbf16>
    %c5 = arith.constant 5 : index
    %c0_39 = arith.constant 0 : index
    %c0_40 = arith.constant 0 : index
    %50 = vector.load %arg5[%c5, %c0_39, %c0_40] : memref<9x128x128xbf16, #tpu.memory_space<vmem>>, vector<1x128x128xbf16>
    %51 = vector.shape_cast %50 : vector<1x128x128xbf16> to vector<128x128xbf16>
    %cst_41 = arith.constant dense<0.000000e+00> : vector<16x128xf32>
    %52 = tpu.matmul %49, %51, %cst_41 {dimension_numbers = #tpu.dot_dimension_numbers<[1], [0], [0], [1], [0, 0, 1, 1], [], []>} : vector<16x128xbf16>, vector<128x128xbf16>, vector<16x128xf32> -> vector<16x128xf32>
    %53 = arith.addf %39, %52 : vector<16x128xf32>
    %c5_42 = arith.constant 5 : index
    %c0_43 = arith.constant 0 : index
    %c0_44 = arith.constant 0 : index
    %54 = vector.load %arg6[%c5_42, %c0_43, %c0_44] : memref<9x128x128xbf16, #tpu.memory_space<vmem>>, vector<1x128x128xbf16>
    %55 = vector.shape_cast %54 : vector<1x128x128xbf16> to vector<128x128xbf16>
    %cst_45 = arith.constant dense<0.000000e+00> : vector<16x128xf32>
    %56 = tpu.matmul %41, %55, %cst_45 {dimension_numbers = #tpu.dot_dimension_numbers<[1], [0], [0], [1], [0, 0, 1, 1], [], []>} : vector<16x128xbf16>, vector<128x128xbf16>, vector<16x128xf32> -> vector<16x128xf32>
    %57 = arith.addf %53, %56 : vector<16x128xf32>
    %c0_46 = arith.constant 0 : index
    %c2_47 = arith.constant 2 : index
    %c0_48 = arith.constant 0 : index
    %c0_49 = arith.constant 0 : index
    %58 = vector.load %arg3[%c0_46, %c2_47, %c0_48, %c0_49] : memref<1x4x18x128xbf16, #tpu.memory_space<vmem>>, vector<1x1x16x128xbf16>
    %59 = vector.shape_cast %58 : vector<1x1x16x128xbf16> to vector<16x128xbf16>
    %c0_50 = arith.constant 0 : index
    %c2_51 = arith.constant 2 : index
    %c0_52 = arith.constant 0 : index
    %c0_53 = arith.constant 0 : index
    %60 = vector.load %arg4[%c0_50, %c2_51, %c0_52, %c0_53] : memref<1x4x18x128xbf16, #tpu.memory_space<vmem>>, vector<1x1x16x128xbf16>
    %61 = vector.shape_cast %60 : vector<1x1x16x128xbf16> to vector<16x128xbf16>
    %62 = arith.extf %59 : vector<16x128xbf16> to vector<16x128xf32>
    %63 = arith.extf %61 : vector<16x128xbf16> to vector<16x128xf32>
    %64 = arith.mulf %62, %63 : vector<16x128xf32>
    %cst_54 = arith.constant 0.000000e+00 : f32
    %65 = vector.broadcast %cst_54 : f32 to vector<16x128xf32>
    %66 = arith.maximumf %64, %65 : vector<16x128xf32>
    %67 = arith.truncf %66 : vector<16x128xf32> to vector<16x128xbf16>
    %c6 = arith.constant 6 : index
    %c0_55 = arith.constant 0 : index
    %c0_56 = arith.constant 0 : index
    %68 = vector.load %arg5[%c6, %c0_55, %c0_56] : memref<9x128x128xbf16, #tpu.memory_space<vmem>>, vector<1x128x128xbf16>
    %69 = vector.shape_cast %68 : vector<1x128x128xbf16> to vector<128x128xbf16>
    %cst_57 = arith.constant dense<0.000000e+00> : vector<16x128xf32>
    %70 = tpu.matmul %67, %69, %cst_57 {dimension_numbers = #tpu.dot_dimension_numbers<[1], [0], [0], [1], [0, 0, 1, 1], [], []>} : vector<16x128xbf16>, vector<128x128xbf16>, vector<16x128xf32> -> vector<16x128xf32>
    %71 = arith.addf %57, %70 : vector<16x128xf32>
    %c6_58 = arith.constant 6 : index
    %c0_59 = arith.constant 0 : index
    %c0_60 = arith.constant 0 : index
    %72 = vector.load %arg6[%c6_58, %c0_59, %c0_60] : memref<9x128x128xbf16, #tpu.memory_space<vmem>>, vector<1x128x128xbf16>
    %73 = vector.shape_cast %72 : vector<1x128x128xbf16> to vector<128x128xbf16>
    %cst_61 = arith.constant dense<0.000000e+00> : vector<16x128xf32>
    %74 = tpu.matmul %59, %73, %cst_61 {dimension_numbers = #tpu.dot_dimension_numbers<[1], [0], [0], [1], [0, 0, 1, 1], [], []>} : vector<16x128xbf16>, vector<128x128xbf16>, vector<16x128xf32> -> vector<16x128xf32>
    %75 = arith.addf %71, %74 : vector<16x128xf32>
    %c0_62 = arith.constant 0 : index
    %c2_63 = arith.constant 2 : index
    %c1_64 = arith.constant 1 : index
    %c0_65 = arith.constant 0 : index
    %76 = vector.load %arg3[%c0_62, %c2_63, %c1_64, %c0_65] : memref<1x4x18x128xbf16, #tpu.memory_space<vmem>>, vector<1x1x16x128xbf16>
    %77 = vector.shape_cast %76 : vector<1x1x16x128xbf16> to vector<16x128xbf16>
    %c0_66 = arith.constant 0 : index
    %c2_67 = arith.constant 2 : index
    %c1_68 = arith.constant 1 : index
    %c0_69 = arith.constant 0 : index
    %78 = vector.load %arg4[%c0_66, %c2_67, %c1_68, %c0_69] : memref<1x4x18x128xbf16, #tpu.memory_space<vmem>>, vector<1x1x16x128xbf16>
    %79 = vector.shape_cast %78 : vector<1x1x16x128xbf16> to vector<16x128xbf16>
    %80 = arith.extf %77 : vector<16x128xbf16> to vector<16x128xf32>
    %81 = arith.extf %79 : vector<16x128xbf16> to vector<16x128xf32>
    %82 = arith.mulf %80, %81 : vector<16x128xf32>
    %cst_70 = arith.constant 0.000000e+00 : f32
    %83 = vector.broadcast %cst_70 : f32 to vector<16x128xf32>
    %84 = arith.maximumf %82, %83 : vector<16x128xf32>
    %85 = arith.truncf %84 : vector<16x128xf32> to vector<16x128xbf16>
    %c7 = arith.constant 7 : index
    %c0_71 = arith.constant 0 : index
    %c0_72 = arith.constant 0 : index
    %86 = vector.load %arg5[%c7, %c0_71, %c0_72] : memref<9x128x128xbf16, #tpu.memory_space<vmem>>, vector<1x128x128xbf16>
    %87 = vector.shape_cast %86 : vector<1x128x128xbf16> to vector<128x128xbf16>
    %cst_73 = arith.constant dense<0.000000e+00> : vector<16x128xf32>
    %88 = tpu.matmul %85, %87, %cst_73 {dimension_numbers = #tpu.dot_dimension_numbers<[1], [0], [0], [1], [0, 0, 1, 1], [], []>} : vector<16x128xbf16>, vector<128x128xbf16>, vector<16x128xf32> -> vector<16x128xf32>
    %89 = arith.addf %75, %88 : vector<16x128xf32>
    %c7_74 = arith.constant 7 : index
    %c0_75 = arith.constant 0 : index
    %c0_76 = arith.constant 0 : index
    %90 = vector.load %arg6[%c7_74, %c0_75, %c0_76] : memref<9x128x128xbf16, #tpu.memory_space<vmem>>, vector<1x128x128xbf16>
    %91 = vector.shape_cast %90 : vector<1x128x128xbf16> to vector<128x128xbf16>
    %cst_77 = arith.constant dense<0.000000e+00> : vector<16x128xf32>
    %92 = tpu.matmul %77, %91, %cst_77 {dimension_numbers = #tpu.dot_dimension_numbers<[1], [0], [0], [1], [0, 0, 1, 1], [], []>} : vector<16x128xbf16>, vector<128x128xbf16>, vector<16x128xf32> -> vector<16x128xf32>
    %93 = arith.addf %89, %92 : vector<16x128xf32>
    %c0_78 = arith.constant 0 : index
    %c2_79 = arith.constant 2 : index
    %c2_80 = arith.constant 2 : index
    %c0_81 = arith.constant 0 : index
    %94 = vector.load %arg3[%c0_78, %c2_79, %c2_80, %c0_81] : memref<1x4x18x128xbf16, #tpu.memory_space<vmem>>, vector<1x1x16x128xbf16>
    %95 = vector.shape_cast %94 : vector<1x1x16x128xbf16> to vector<16x128xbf16>
    %c0_82 = arith.constant 0 : index
    %c2_83 = arith.constant 2 : index
    %c2_84 = arith.constant 2 : index
    %c0_85 = arith.constant 0 : index
    %96 = vector.load %arg4[%c0_82, %c2_83, %c2_84, %c0_85] : memref<1x4x18x128xbf16, #tpu.memory_space<vmem>>, vector<1x1x16x128xbf16>
    %97 = vector.shape_cast %96 : vector<1x1x16x128xbf16> to vector<16x128xbf16>
    %98 = arith.extf %95 : vector<16x128xbf16> to vector<16x128xf32>
    %99 = arith.extf %97 : vector<16x128xbf16> to vector<16x128xf32>
    %100 = arith.mulf %98, %99 : vector<16x128xf32>
    %cst_86 = arith.constant 0.000000e+00 : f32
    %101 = vector.broadcast %cst_86 : f32 to vector<16x128xf32>
    %102 = arith.maximumf %100, %101 : vector<16x128xf32>
    %103 = arith.truncf %102 : vector<16x128xf32> to vector<16x128xbf16>
    %c8 = arith.constant 8 : index
    %c0_87 = arith.constant 0 : index
    %c0_88 = arith.constant 0 : index
    %104 = vector.load %arg5[%c8, %c0_87, %c0_88] : memref<9x128x128xbf16, #tpu.memory_space<vmem>>, vector<1x128x128xbf16>
    %105 = vector.shape_cast %104 : vector<1x128x128xbf16> to vector<128x128xbf16>
    %cst_89 = arith.constant dense<0.000000e+00> : vector<16x128xf32>
    %106 = tpu.matmul %103, %105, %cst_89 {dimension_numbers = #tpu.dot_dimension_numbers<[1], [0], [0], [1], [0, 0, 1, 1], [], []>} : vector<16x128xbf16>, vector<128x128xbf16>, vector<16x128xf32> -> vector<16x128xf32>
    %107 = arith.addf %93, %106 : vector<16x128xf32>
    %c8_90 = arith.constant 8 : index
    %c0_91 = arith.constant 0 : index
    %c0_92 = arith.constant 0 : index
    %108 = vector.load %arg6[%c8_90, %c0_91, %c0_92] : memref<9x128x128xbf16, #tpu.memory_space<vmem>>, vector<1x128x128xbf16>
    %109 = vector.shape_cast %108 : vector<1x128x128xbf16> to vector<128x128xbf16>
    %cst_93 = arith.constant dense<0.000000e+00> : vector<16x128xf32>
    %110 = tpu.matmul %95, %109, %cst_93 {dimension_numbers = #tpu.dot_dimension_numbers<[1], [0], [0], [1], [0, 0, 1, 1], [], []>} : vector<16x128xbf16>, vector<128x128xbf16>, vector<16x128xf32> -> vector<16x128xf32>
    %111 = arith.addf %107, %110 : vector<16x128xf32>
    %c0_94 = arith.constant 0 : index
    %c0_95 = arith.constant 0 : index
    %c0_96 = arith.constant 0 : index
    %112 = vector.load %arg9[%c0_94, %c0_95, %c0_96] : memref<2x16x128xf32, #tpu.memory_space<vmem>>, vector<1x16x128xf32>
    %113 = vector.shape_cast %112 : vector<1x16x128xf32> to vector<16x128xf32>
    %114 = arith.addf %113, %111 : vector<16x128xf32>
    %c0_97 = arith.constant 0 : index
    %c0_98 = arith.constant 0 : index
    %c0_99 = arith.constant 0 : index
    %115 = vector.load %arg9[%c0_97, %c0_98, %c0_99] : memref<2x16x128xf32, #tpu.memory_space<vmem>>, vector<1x16x128xf32>
    %116 = vector.shape_cast %115 : vector<1x16x128xf32> to vector<16x128xf32>
    %117 = vector.shape_cast %114 : vector<16x128xf32> to vector<1x16x128xf32>
    tpu.vector_store %arg9[%c0_97, %c0_98, %c0_99], %117 {strides = array<i32>} : memref<2x16x128xf32, #tpu.memory_space<vmem>>, vector<1x16x128xf32>,
    %cst_100 = arith.constant 0.000000e+00 : f32
    %118 = vector.broadcast %cst_100 : f32 to vector<16x128xf32>
    %c0_101 = arith.constant 0 : index
    %c1_102 = arith.constant 1 : index
    %c0_103 = arith.constant 0 : index
    %c0_104 = arith.constant 0 : index
    %119 = vector.load %arg3[%c0_101, %c1_102, %c0_103, %c0_104] : memref<1x4x18x128xbf16, #tpu.memory_space<vmem>>, vector<1x1x16x128xbf16>
    %120 = vector.shape_cast %119 : vector<1x1x16x128xbf16> to vector<16x128xbf16>
    %c0_105 = arith.constant 0 : index
    %c1_106 = arith.constant 1 : index
    %c0_107 = arith.constant 0 : index
    %c0_108 = arith.constant 0 : index
    %121 = vector.load %arg4[%c0_105, %c1_106, %c0_107, %c0_108] : memref<1x4x18x128xbf16, #tpu.memory_space<vmem>>, vector<1x1x16x128xbf16>
    %122 = vector.shape_cast %121 : vector<1x1x16x128xbf16> to vector<16x128xbf16>
    %123 = arith.extf %120 : vector<16x128xbf16> to vector<16x128xf32>
    %124 = arith.extf %122 : vector<16x128xbf16> to vector<16x128xf32>
    %125 = arith.mulf %123, %124 : vector<16x128xf32>
    %cst_109 = arith.constant 0.000000e+00 : f32
    %126 = vector.broadcast %cst_109 : f32 to vector<16x128xf32>
    %127 = arith.maximumf %125, %126 : vector<16x128xf32>
    %128 = arith.truncf %127 : vector<16x128xf32> to vector<16x128xbf16>
    %c0_110 = arith.constant 0 : index
    %c0_111 = arith.constant 0 : index
    %c0_112 = arith.constant 0 : index
    %129 = vector.load %arg5[%c0_110, %c0_111, %c0_112] : memref<9x128x128xbf16, #tpu.memory_space<vmem>>, vector<1x128x128xbf16>
    %130 = vector.shape_cast %129 : vector<1x128x128xbf16> to vector<128x128xbf16>
    %cst_113 = arith.constant dense<0.000000e+00> : vector<16x128xf32>
    %131 = tpu.matmul %128, %130, %cst_113 {dimension_numbers = #tpu.dot_dimension_numbers<[1], [0], [0], [1], [0, 0, 1, 1], [], []>} : vector<16x128xbf16>, vector<128x128xbf16>, vector<16x128xf32> -> vector<16x128xf32>
    %132 = arith.addf %118, %131 : vector<16x128xf32>
    %c0_114 = arith.constant 0 : index
    %c0_115 = arith.constant 0 : index
    %c0_116 = arith.constant 0 : index
    %133 = vector.load %arg6[%c0_114, %c0_115, %c0_116] : memref<9x128x128xbf16, #tpu.memory_space<vmem>>, vector<1x128x128xbf16>
    %134 = vector.shape_cast %133 : vector<1x128x128xbf16> to vector<128x128xbf16>
    %cst_117 = arith.constant dense<0.000000e+00> : vector<16x128xf32>
    %135 = tpu.matmul %120, %134, %cst_117 {dimension_numbers = #tpu.dot_dimension_numbers<[1], [0], [0], [1], [0, 0, 1, 1], [], []>} : vector<16x128xbf16>, vector<128x128xbf16>, vector<16x128xf32> -> vector<16x128xf32>
    %136 = arith.addf %132, %135 : vector<16x128xf32>
    %c0_118 = arith.constant 0 : index
    %c1_119 = arith.constant 1 : index
    %c1_120 = arith.constant 1 : index
    %c0_121 = arith.constant 0 : index
    %137 = vector.load %arg3[%c0_118, %c1_119, %c1_120, %c0_121] : memref<1x4x18x128xbf16, #tpu.memory_space<vmem>>, vector<1x1x16x128xbf16>
    %138 = vector.shape_cast %137 : vector<1x1x16x128xbf16> to vector<16x128xbf16>
    %c0_122 = arith.constant 0 : index
    %c1_123 = arith.constant 1 : index
    %c1_124 = arith.constant 1 : index
    %c0_125 = arith.constant 0 : index
    %139 = vector.load %arg4[%c0_122, %c1_123, %c1_124, %c0_125] : memref<1x4x18x128xbf16, #tpu.memory_space<vmem>>, vector<1x1x16x128xbf16>
    %140 = vector.shape_cast %139 : vector<1x1x16x128xbf16> to vector<16x128xbf16>
    %141 = arith.extf %138 : vector<16x128xbf16> to vector<16x128xf32>
    %142 = arith.extf %140 : vector<16x128xbf16> to vector<16x128xf32>
    %143 = arith.mulf %141, %142 : vector<16x128xf32>
    %cst_126 = arith.constant 0.000000e+00 : f32
    %144 = vector.broadcast %cst_126 : f32 to vector<16x128xf32>
    %145 = arith.maximumf %143, %144 : vector<16x128xf32>
    %146 = arith.truncf %145 : vector<16x128xf32> to vector<16x128xbf16>
    %c1_127 = arith.constant 1 : index
    %c0_128 = arith.constant 0 : index
    %c0_129 = arith.constant 0 : index
    %147 = vector.load %arg5[%c1_127, %c0_128, %c0_129] : memref<9x128x128xbf16, #tpu.memory_space<vmem>>, vector<1x128x128xbf16>
    %148 = vector.shape_cast %147 : vector<1x128x128xbf16> to vector<128x128xbf16>
    %cst_130 = arith.constant dense<0.000000e+00> : vector<16x128xf32>
    %149 = tpu.matmul %146, %148, %cst_130 {dimension_numbers = #tpu.dot_dimension_numbers<[1], [0], [0], [1], [0, 0, 1, 1], [], []>} : vector<16x128xbf16>, vector<128x128xbf16>, vector<16x128xf32> -> vector<16x128xf32>
    %150 = arith.addf %136, %149 : vector<16x128xf32>
    %c1_131 = arith.constant 1 : index
    %c0_132 = arith.constant 0 : index
    %c0_133 = arith.constant 0 : index
    %151 = vector.load %arg6[%c1_131, %c0_132, %c0_133] : memref<9x128x128xbf16, #tpu.memory_space<vmem>>, vector<1x128x128xbf16>
    %152 = vector.shape_cast %151 : vector<1x128x128xbf16> to vector<128x128xbf16>
    %cst_134 = arith.constant dense<0.000000e+00> : vector<16x128xf32>
    %153 = tpu.matmul %138, %152, %cst_134 {dimension_numbers = #tpu.dot_dimension_numbers<[1], [0], [0], [1], [0, 0, 1, 1], [], []>} : vector<16x128xbf16>, vector<128x128xbf16>, vector<16x128xf32> -> vector<16x128xf32>
    %154 = arith.addf %150, %153 : vector<16x128xf32>
    %c0_135 = arith.constant 0 : index
    %c1_136 = arith.constant 1 : index
    %c2_137 = arith.constant 2 : index
    %c0_138 = arith.constant 0 : index
    %155 = vector.load %arg3[%c0_135, %c1_136, %c2_137, %c0_138] : memref<1x4x18x128xbf16, #tpu.memory_space<vmem>>, vector<1x1x16x128xbf16>
    %156 = vector.shape_cast %155 : vector<1x1x16x128xbf16> to vector<16x128xbf16>
    %c0_139 = arith.constant 0 : index
    %c1_140 = arith.constant 1 : index
    %c2_141 = arith.constant 2 : index
    %c0_142 = arith.constant 0 : index
    %157 = vector.load %arg4[%c0_139, %c1_140, %c2_141, %c0_142] : memref<1x4x18x128xbf16, #tpu.memory_space<vmem>>, vector<1x1x16x128xbf16>
    %158 = vector.shape_cast %157 : vector<1x1x16x128xbf16> to vector<16x128xbf16>
    %159 = arith.extf %156 : vector<16x128xbf16> to vector<16x128xf32>
    %160 = arith.extf %158 : vector<16x128xbf16> to vector<16x128xf32>
    %161 = arith.mulf %159, %160 : vector<16x128xf32>
    %cst_143 = arith.constant 0.000000e+00 : f32
    %162 = vector.broadcast %cst_143 : f32 to vector<16x128xf32>
    %163 = arith.maximumf %161, %162 : vector<16x128xf32>
    %164 = arith.truncf %163 : vector<16x128xf32> to vector<16x128xbf16>
    %c2_144 = arith.constant 2 : index
    %c0_145 = arith.constant 0 : index
    %c0_146 = arith.constant 0 : index
    %165 = vector.load %arg5[%c2_144, %c0_145, %c0_146] : memref<9x128x128xbf16, #tpu.memory_space<vmem>>, vector<1x128x128xbf16>
    %166 = vector.shape_cast %165 : vector<1x128x128xbf16> to vector<128x128xbf16>
    %cst_147 = arith.constant dense<0.000000e+00> : vector<16x128xf32>
    %167 = tpu.matmul %164, %166, %cst_147 {dimension_numbers = #tpu.dot_dimension_numbers<[1], [0], [0], [1], [0, 0, 1, 1], [], []>} : vector<16x128xbf16>, vector<128x128xbf16>, vector<16x128xf32> -> vector<16x128xf32>
    %168 = arith.addf %154, %167 : vector<16x128xf32>
    %c2_148 = arith.constant 2 : index
    %c0_149 = arith.constant 0 : index
    %c0_150 = arith.constant 0 : index
    %169 = vector.load %arg6[%c2_148, %c0_149, %c0_150] : memref<9x128x128xbf16, #tpu.memory_space<vmem>>, vector<1x128x128xbf16>
    %170 = vector.shape_cast %169 : vector<1x128x128xbf16> to vector<128x128xbf16>
    %cst_151 = arith.constant dense<0.000000e+00> : vector<16x128xf32>
    %171 = tpu.matmul %156, %170, %cst_151 {dimension_numbers = #tpu.dot_dimension_numbers<[1], [0], [0], [1], [0, 0, 1, 1], [], []>} : vector<16x128xbf16>, vector<128x128xbf16>, vector<16x128xf32> -> vector<16x128xf32>
    %172 = arith.addf %168, %171 : vector<16x128xf32>
    %c0_152 = arith.constant 0 : index
    %c2_153 = arith.constant 2 : index
    %c0_154 = arith.constant 0 : index
    %c0_155 = arith.constant 0 : index
    %173 = vector.load %arg3[%c0_152, %c2_153, %c0_154, %c0_155] : memref<1x4x18x128xbf16, #tpu.memory_space<vmem>>, vector<1x1x16x128xbf16>
    %174 = vector.shape_cast %173 : vector<1x1x16x128xbf16> to vector<16x128xbf16>
    %c0_156 = arith.constant 0 : index
    %c2_157 = arith.constant 2 : index
    %c0_158 = arith.constant 0 : index
    %c0_159 = arith.constant 0 : index
    %175 = vector.load %arg4[%c0_156, %c2_157, %c0_158, %c0_159] : memref<1x4x18x128xbf16, #tpu.memory_space<vmem>>, vector<1x1x16x128xbf16>
    %176 = vector.shape_cast %175 : vector<1x1x16x128xbf16> to vector<16x128xbf16>
    %177 = arith.extf %174 : vector<16x128xbf16> to vector<16x128xf32>
    %178 = arith.extf %176 : vector<16x128xbf16> to vector<16x128xf32>
    %179 = arith.mulf %177, %178 : vector<16x128xf32>
    %cst_160 = arith.constant 0.000000e+00 : f32
    %180 = vector.broadcast %cst_160 : f32 to vector<16x128xf32>
    %181 = arith.maximumf %179, %180 : vector<16x128xf32>
    %182 = arith.truncf %181 : vector<16x128xf32> to vector<16x128xbf16>
    %c3_161 = arith.constant 3 : index
    %c0_162 = arith.constant 0 : index
    %c0_163 = arith.constant 0 : index
    %183 = vector.load %arg5[%c3_161, %c0_162, %c0_163] : memref<9x128x128xbf16, #tpu.memory_space<vmem>>, vector<1x128x128xbf16>
    %184 = vector.shape_cast %183 : vector<1x128x128xbf16> to vector<128x128xbf16>
    %cst_164 = arith.constant dense<0.000000e+00> : vector<16x128xf32>
    %185 = tpu.matmul %182, %184, %cst_164 {dimension_numbers = #tpu.dot_dimension_numbers<[1], [0], [0], [1], [0, 0, 1, 1], [], []>} : vector<16x128xbf16>, vector<128x128xbf16>, vector<16x128xf32> -> vector<16x128xf32>
    %186 = arith.addf %172, %185 : vector<16x128xf32>
    %c3_165 = arith.constant 3 : index
    %c0_166 = arith.constant 0 : index
    %c0_167 = arith.constant 0 : index
    %187 = vector.load %arg6[%c3_165, %c0_166, %c0_167] : memref<9x128x128xbf16, #tpu.memory_space<vmem>>, vector<1x128x128xbf16>
    %188 = vector.shape_cast %187 : vector<1x128x128xbf16> to vector<128x128xbf16>
    %cst_168 = arith.constant dense<0.000000e+00> : vector<16x128xf32>
    %189 = tpu.matmul %174, %188, %cst_168 {dimension_numbers = #tpu.dot_dimension_numbers<[1], [0], [0], [1], [0, 0, 1, 1], [], []>} : vector<16x128xbf16>, vector<128x128xbf16>, vector<16x128xf32> -> vector<16x128xf32>
    %190 = arith.addf %186, %189 : vector<16x128xf32>
    %c0_169 = arith.constant 0 : index
    %c2_170 = arith.constant 2 : index
    %c1_171 = arith.constant 1 : index
    %c0_172 = arith.constant 0 : index
    %191 = vector.load %arg3[%c0_169, %c2_170, %c1_171, %c0_172] : memref<1x4x18x128xbf16, #tpu.memory_space<vmem>>, vector<1x1x16x128xbf16>
    %192 = vector.shape_cast %191 : vector<1x1x16x128xbf16> to vector<16x128xbf16>
    %c0_173 = arith.constant 0 : index
    %c2_174 = arith.constant 2 : index
    %c1_175 = arith.constant 1 : index
    %c0_176 = arith.constant 0 : index
    %193 = vector.load %arg4[%c0_173, %c2_174, %c1_175, %c0_176] : memref<1x4x18x128xbf16, #tpu.memory_space<vmem>>, vector<1x1x16x128xbf16>
    %194 = vector.shape_cast %193 : vector<1x1x16x128xbf16> to vector<16x128xbf16>
    %195 = arith.extf %192 : vector<16x128xbf16> to vector<16x128xf32>
    %196 = arith.extf %194 : vector<16x128xbf16> to vector<16x128xf32>
    %197 = arith.mulf %195, %196 : vector<16x128xf32>
    %cst_177 = arith.constant 0.000000e+00 : f32
    %198 = vector.broadcast %cst_177 : f32 to vector<16x128xf32>
    %199 = arith.maximumf %197, %198 : vector<16x128xf32>
    %200 = arith.truncf %199 : vector<16x128xf32> to vector<16x128xbf16>
    %c4_178 = arith.constant 4 : index
    %c0_179 = arith.constant 0 : index
    %c0_180 = arith.constant 0 : index
    %201 = vector.load %arg5[%c4_178, %c0_179, %c0_180] : memref<9x128x128xbf16, #tpu.memory_space<vmem>>, vector<1x128x128xbf16>
    %202 = vector.shape_cast %201 : vector<1x128x128xbf16> to vector<128x128xbf16>
    %cst_181 = arith.constant dense<0.000000e+00> : vector<16x128xf32>
    %203 = tpu.matmul %200, %202, %cst_181 {dimension_numbers = #tpu.dot_dimension_numbers<[1], [0], [0], [1], [0, 0, 1, 1], [], []>} : vector<16x128xbf16>, vector<128x128xbf16>, vector<16x128xf32> -> vector<16x128xf32>
    %204 = arith.addf %190, %203 : vector<16x128xf32>
    %c4_182 = arith.constant 4 : index
    %c0_183 = arith.constant 0 : index
    %c0_184 = arith.constant 0 : index
    %205 = vector.load %arg6[%c4_182, %c0_183, %c0_184] : memref<9x128x128xbf16, #tpu.memory_space<vmem>>, vector<1x128x128xbf16>
    %206 = vector.shape_cast %205 : vector<1x128x128xbf16> to vector<128x128xbf16>
    %cst_185 = arith.constant dense<0.000000e+00> : vector<16x128xf32>
    %207 = tpu.matmul %192, %206, %cst_185 {dimension_numbers = #tpu.dot_dimension_numbers<[1], [0], [0], [1], [0, 0, 1, 1], [], []>} : vector<16x128xbf16>, vector<128x128xbf16>, vector<16x128xf32> -> vector<16x128xf32>
    %208 = arith.addf %204, %207 : vector<16x128xf32>
    %c0_186 = arith.constant 0 : index
    %c2_187 = arith.constant 2 : index
    %c2_188 = arith.constant 2 : index
    %c0_189 = arith.constant 0 : index
    %209 = vector.load %arg3[%c0_186, %c2_187, %c2_188, %c0_189] : memref<1x4x18x128xbf16, #tpu.memory_space<vmem>>, vector<1x1x16x128xbf16>
    %210 = vector.shape_cast %209 : vector<1x1x16x128xbf16> to vector<16x128xbf16>
    %c0_190 = arith.constant 0 : index
    %c2_191 = arith.constant 2 : index
    %c2_192 = arith.constant 2 : index
    %c0_193 = arith.constant 0 : index
    %211 = vector.load %arg4[%c0_190, %c2_191, %c2_192, %c0_193] : memref<1x4x18x128xbf16, #tpu.memory_space<vmem>>, vector<1x1x16x128xbf16>
    %212 = vector.shape_cast %211 : vector<1x1x16x128xbf16> to vector<16x128xbf16>
    %213 = arith.extf %210 : vector<16x128xbf16> to vector<16x128xf32>
    %214 = arith.extf %212 : vector<16x128xbf16> to vector<16x128xf32>
    %215 = arith.mulf %213, %214 : vector<16x128xf32>
    %cst_194 = arith.constant 0.000000e+00 : f32
    %216 = vector.broadcast %cst_194 : f32 to vector<16x128xf32>
    %217 = arith.maximumf %215, %216 : vector<16x128xf32>
    %218 = arith.truncf %217 : vector<16x128xf32> to vector<16x128xbf16>
    %c5_195 = arith.constant 5 : index
    %c0_196 = arith.constant 0 : index
    %c0_197 = arith.constant 0 : index
    %219 = vector.load %arg5[%c5_195, %c0_196, %c0_197] : memref<9x128x128xbf16, #tpu.memory_space<vmem>>, vector<1x128x128xbf16>
    %220 = vector.shape_cast %219 : vector<1x128x128xbf16> to vector<128x128xbf16>
    %cst_198 = arith.constant dense<0.000000e+00> : vector<16x128xf32>
    %221 = tpu.matmul %218, %220, %cst_198 {dimension_numbers = #tpu.dot_dimension_numbers<[1], [0], [0], [1], [0, 0, 1, 1], [], []>} : vector<16x128xbf16>, vector<128x128xbf16>, vector<16x128xf32> -> vector<16x128xf32>
    %222 = arith.addf %208, %221 : vector<16x128xf32>
    %c5_199 = arith.constant 5 : index
    %c0_200 = arith.constant 0 : index
    %c0_201 = arith.constant 0 : index
    %223 = vector.load %arg6[%c5_199, %c0_200, %c0_201] : memref<9x128x128xbf16, #tpu.memory_space<vmem>>, vector<1x128x128xbf16>
    %224 = vector.shape_cast %223 : vector<1x128x128xbf16> to vector<128x128xbf16>
    %cst_202 = arith.constant dense<0.000000e+00> : vector<16x128xf32>
    %225 = tpu.matmul %210, %224, %cst_202 {dimension_numbers = #tpu.dot_dimension_numbers<[1], [0], [0], [1], [0, 0, 1, 1], [], []>} : vector<16x128xbf16>, vector<128x128xbf16>, vector<16x128xf32> -> vector<16x128xf32>
    %226 = arith.addf %222, %225 : vector<16x128xf32>
    %c1_203 = arith.constant 1 : index
    %c0_204 = arith.constant 0 : index
    %c0_205 = arith.constant 0 : index
    %227 = vector.load %arg9[%c1_203, %c0_204, %c0_205] : memref<2x16x128xf32, #tpu.memory_space<vmem>>, vector<1x16x128xf32>
    %228 = vector.shape_cast %227 : vector<1x16x128xf32> to vector<16x128xf32>
    %229 = arith.addf %228, %226 : vector<16x128xf32>
    %c1_206 = arith.constant 1 : index
    %c0_207 = arith.constant 0 : index
    %c0_208 = arith.constant 0 : index
    %230 = vector.load %arg9[%c1_206, %c0_207, %c0_208] : memref<2x16x128xf32, #tpu.memory_space<vmem>>, vector<1x16x128xf32>
    %231 = vector.shape_cast %230 : vector<1x16x128xf32> to vector<16x128xf32>
    %232 = vector.shape_cast %229 : vector<16x128xf32> to vector<1x16x128xf32>
    tpu.vector_store %arg9[%c1_206, %c0_207, %c0_208], %232 {strides = array<i32>} : memref<2x16x128xf32, #tpu.memory_space<vmem>>, vector<1x16x128xf32>,
    %c0_i32_209 = arith.constant 0 : i32
    %233 = arith.cmpi eq, %arg2, %c0_i32_209 : i32
    %234 = arith.extui %233 : i1 to i32
    %c0_i32_210 = arith.constant 0 : i32
    %235 = arith.cmpi ne, %234, %c0_i32_210 : i32
    scf.if %235 {
      %c0_211 = arith.constant 0 : index
      %c0_212 = arith.constant 0 : index
      %c0_213 = arith.constant 0 : index
      %236 = vector.load %arg9[%c0_211, %c0_212, %c0_213] : memref<2x16x128xf32, #tpu.memory_space<vmem>>, vector<2x16x128xf32>
      %c0_214 = arith.constant 0 : index
      %c0_215 = arith.constant 0 : index
      %237 = vector.load %arg7[%c0_214, %c0_215] : memref<1x128xf32, #tpu.memory_space<vmem>>, vector<1x128xf32>
      %238 = vector.shape_cast %237 : vector<1x128xf32> to vector<1x1x128xf32>
      %239 = vector.broadcast %238 : vector<1x1x128xf32> to vector<2x16x128xf32>
      %240 = arith.addf %236, %239 : vector<2x16x128xf32>
      %cst_216 = arith.constant 0.000000e+00 : f32
      %241 = vector.broadcast %cst_216 : f32 to vector<2x16x128xf32>
      %242 = arith.maximumf %240, %241 : vector<2x16x128xf32>
      %c0_217 = arith.constant 0 : index
      %c0_218 = arith.constant 0 : index
      %c0_219 = arith.constant 0 : index
      %c0_220 = arith.constant 0 : index
      %243 = vector.load %arg8[%c0_217, %c0_218, %c0_219, %c0_220] : memref<1x2x16x128xf32, #tpu.memory_space<vmem>>, vector<1x2x16x128xf32>
      %244 = vector.shape_cast %243 : vector<1x2x16x128xf32> to vector<2x16x128xf32>
      %245 = vector.shape_cast %242 : vector<2x16x128xf32> to vector<1x2x16x128xf32>
      tpu.vector_store %arg8[%c0_217, %c0_218, %c0_219, %c0_220], %245 {strides = array<i32>} : memref<1x2x16x128xf32, #tpu.memory_space<vmem>>, vector<1x2x16x128xf32>,
    } else {
    }
    return
  }
  func.func @transform_0(%arg0: i32, %arg1: i32, %arg2: i32) -> (i32, i32, i32, i32) {
    %c0_i32 = arith.constant 0 : i32
    %c0_i32_0 = arith.constant 0 : i32
    %c0_i32_1 = arith.constant 0 : i32
    return %arg0, %c0_i32, %c0_i32_0, %arg2 : i32, i32, i32, i32
  }
  func.func @transform_1(%arg0: i32, %arg1: i32, %arg2: i32) -> (i32, i32, i32, i32) {
    %c0_i32 = arith.constant 0 : i32
    %c0_i32_0 = arith.constant 0 : i32
    %c0_i32_1 = arith.constant 0 : i32
    return %arg0, %c0_i32, %c0_i32_0, %arg2 : i32, i32, i32, i32
  }
  func.func @transform_2(%arg0: i32, %arg1: i32, %arg2: i32) -> (i32, i32, i32) {
    %c0_i32 = arith.constant 0 : i32
    %c0_i32_0 = arith.constant 0 : i32
    return %c0_i32, %arg2, %arg1 : i32, i32, i32
  }
  func.func @transform_3(%arg0: i32, %arg1: i32, %arg2: i32) -> (i32, i32, i32) {
    %c0_i32 = arith.constant 0 : i32
    %c0_i32_0 = arith.constant 0 : i32
    return %c0_i32, %arg2, %arg1 : i32, i32, i32
  }
  func.func @transform_4(%arg0: i32, %arg1: i32, %arg2: i32) -> (i32, i32) {
    %c0_i32 = arith.constant 0 : i32
    %c0_i32_0 = arith.constant 0 : i32
    return %c0_i32, %arg1 : i32, i32
  }
  func.func @transform_5(%arg0: i32, %arg1: i32, %arg2: i32) -> (i32, i32, i32, i32) {
    %c0_i32 = arith.constant 0 : i32
    %c0_i32_0 = arith.constant 0 : i32
    %c0_i32_1 = arith.constant 0 : i32
    return %arg0, %c0_i32, %c0_i32_0, %arg1 : i32, i32, i32, i32
  }
}

</mosaic_0001>

<llo_original>
// kernel: mds_forward.6
$region0: #{mds_forward.6}
  #allocation0 [shape = 'u32[]', space=smem, size = 0x4, offset = 0x4, fixed_abs, tag = 'smem constant byte address 0x4 - core index']
  #allocation1 [shape = 'u32[144,128]{1,0:T(1,128)}', space=vmem, size = 0x12000, scoped, tag = 'internal scratch']
  #allocation2 [shape = 'f32[2,16,128]{2,1,0:T(8,128)}', space=vmem, size = 0x4000, scoped, tag = 'scratch operand']
  %s0 = inlined_call_operand.vmem [shape: bf16[2,2,16,128], index: 0, kind: input, shape index: {}]
  %s1 = inlined_call_operand.vmem [shape: bf16[1,128,128], index: 1, kind: input, shape index: {}]
  %s2 = inlined_call_operand.vmem [shape: f32[1,128], index: 2, kind: input, shape index: {}]
  %s3 = inlined_call_operand.vmem [shape: bf16[2,2,16,128], index: 3, kind: output, shape index: {}]
  %s4 = sld [smem:[#allocation0]]
  $region53: #{mds_forward.6} parent=0
    _
  %s6 = ssub.s32 1, %s4
  %s7 = scalar_select 0, %s6, %s4
  loop: start=0, step=1, limit=4
  $region2: #{mds_forward.6} parent=0 // loop_pre_header
    _
  $region3: #{mds_forward.6} parent=0 // loop_header
    %s9 = sphi 0, %s13
    %p10 = scmp.ge.s32.totalorder %s9, 4
    %s16 = sphi 0, %s35
    %s17 = sphi 0, %s31
    %s18 = sphi 0, %s27
    %s19 = sphi 0, %s16
    %s20 = sphi 0, %s17
    %s21 = sphi 0, %s18
    %s22 = sphi 0, %s19
    %s23 = sphi 0, %s20
    %s24 = sphi 0, %s21
    %s40 = sphi 0, %s42
    %s43 = sphi 0, %s40
    %s44 = sphi 0, %s43
    %s60 = sphi 0, %s44
    %s68 = sphi 0, %s70
    %s71 = sphi 0, %s68
    %s72 = sphi 0, %s71
    %s88 = sphi 0, %s72
    %s94 = sphi 0, %s96
    %s97 = sphi 0, %s94
    %s98 = sphi 0, %s97
    %s114 = sphi 0, %s98
    %s122 = sphi 0, %s124
    %s125 = sphi 0, %s122
    %s126 = sphi 0, %s125
    %s142 = sphi 0, %s126
  $region4: #{mds_forward.6} parent=0 // loop_header_branch
    %12 = sbr.rel (%p10) target = $region8
  $region5: #{mds_forward.6} parent=0 // loop_body
    %s14 = ssub.s32 %s9, 1
    %s15 = ssub.s32 %s9, 2
    %s25 = sadd.s32 1, %s18
    %p26 = scmp.ge.s32.totalorder %s25, 1
    %s27 = scalar_select %p26, 0, %s25
    %s28 = sadd.s32 1, %s17
    %s29 = scalar_select %p26, %s28, %s17
    %p30 = scmp.ge.s32.totalorder %s29, 1
    %s31 = scalar_select %p30, 0, %s29
    %s32 = sadd.s32 1, %s16
    %s33 = scalar_select %p30, %s32, %s16
    %p34 = scmp.ge.s32.totalorder %s33, 2
    %s35 = scalar_select %p34, 0, %s33
    %s36 = ssub.s32 %s16, %s35
    %s37 = ssub.s32 %s18, %s27
    %s38 = sor.u32 %s36, %s37
    %p39 = scmp.eq.s32.totalorder %s38, 0
    %s41 = sadd.s32 %s40, 1
    %s42 = scalar_select %p39, %s40, %s41
    %p45 = pneg %p39
    %p46 = scmp.eq.s32.totalorder %s9, 1
    %p47 = por %p45, %p46
    %p48 = scmp.ne.s32.totalorder %s40, %s43
    %p49 = scmp.eq.s32.totalorder %s9, 0
    %p50 = por %p48, %p49
    %p51 = scmp.ne.s32.totalorder %s40, %s43
    %p52 = scmp.eq.s32.totalorder %s14, 1
    %p53 = por %p51, %p52
    %p54 = scmp.ne.s32.totalorder %s43, %s44
    %p55 = scmp.eq.s32.totalorder %s14, 0
    %p56 = por %p54, %p55
    %p57 = scmp.ne.s32.totalorder %s43, %s44
    %p58 = scmp.eq.s32.totalorder %s15, 1
    %p59 = por %p57, %p58
    %p61 = scmp.ne.s32.totalorder %s44, %s60
    %p62 = scmp.eq.s32.totalorder %s15, 0
    %p63 = por %p61, %p62
    %s64 = ssub.s32 %s18, %s27
    %s65 = ssub.s32 %s17, %s31
    %s66 = sor.u32 %s64, %s65
    %p67 = scmp.eq.s32.totalorder %s66, 0
    %s69 = sadd.s32 %s68, 1
    %s70 = scalar_select %p67, %s68, %s69
    %p73 = pneg %p67
    %p74 = scmp.eq.s32.totalorder %s9, 1
    %p75 = por %p73, %p74
    %p76 = scmp.ne.s32.totalorder %s68, %s71
    %p77 = scmp.eq.s32.totalorder %s9, 0
    %p78 = por %p76, %p77
    %p79 = scmp.ne.s32.totalorder %s68, %s71
    %p80 = scmp.eq.s32.totalorder %s14, 1
    %p81 = por %p79, %p80
    %p82 = scmp.ne.s32.totalorder %s71, %s72
    %p83 = scmp.eq.s32.totalorder %s14, 0
    %p84 = por %p82, %p83
    %p85 = scmp.ne.s32.totalorder %s71, %s72
    %p86 = scmp.eq.s32.totalorder %s15, 1
    %p87 = por %p85, %p86
    %p89 = scmp.ne.s32.totalorder %s72, %s88
    %p90 = scmp.eq.s32.totalorder %s15, 0
    %p91 = por %p89, %p90
    %s92 = ssub.s32 %s17, %s31
    %p93 = scmp.eq.s32.totalorder %s92, 0
    %s95 = sadd.s32 %s94, 1
    %s96 = scalar_select %p93, %s94, %s95
    %p99 = pneg %p93
    %p100 = scmp.eq.s32.totalorder %s9, 1
    %p101 = por %p99, %p100
    %p102 = scmp.ne.s32.totalorder %s94, %s97
    %p103 = scmp.eq.s32.totalorder %s9, 0
    %p104 = por %p102, %p103
    %p105 = scmp.ne.s32.totalorder %s94, %s97
    %p106 = scmp.eq.s32.totalorder %s14, 1
    %p107 = por %p105, %p106
    %p108 = scmp.ne.s32.totalorder %s97, %s98
    %p109 = scmp.eq.s32.totalorder %s14, 0
    %p110 = por %p108, %p109
    %p111 = scmp.ne.s32.totalorder %s97, %s98
    %p112 = scmp.eq.s32.totalorder %s15, 1
    %p113 = por %p111, %p112
    %p115 = scmp.ne.s32.totalorder %s98, %s114
    %p116 = scmp.eq.s32.totalorder %s15, 0
    %p117 = por %p115, %p116
    %s118 = ssub.s32 %s16, %s35
    %s119 = ssub.s32 %s17, %s31
    %s120 = sor.u32 %s118, %s119
    %p121 = scmp.eq.s32.totalorder %s120, 0
    %s123 = sadd.s32 %s122, 1
    %s124 = scalar_select %p121, %s122, %s123
    %p127 = pneg %p121
    %p128 = scmp.eq.s32.totalorder %s9, 1
    %p129 = por %p127, %p128
    %p130 = scmp.ne.s32.totalorder %s122, %s125
    %p131 = scmp.eq.s32.totalorder %s9, 0
    %p132 = por %p130, %p131
    %p133 = scmp.ne.s32.totalorder %s122, %s125
    %p134 = scmp.eq.s32.totalorder %s14, 1
    %p135 = por %p133, %p134
    %p136 = scmp.ne.s32.totalorder %s125, %s126
    %p137 = scmp.eq.s32.totalorder %s14, 0
    %p138 = por %p136, %p137
    %p139 = scmp.ne.s32.totalorder %s125, %s126
    %p140 = scmp.eq.s32.totalorder %s15, 1
    %p141 = por %p139, %p140
    %p143 = scmp.ne.s32.totalorder %s126, %s142
    %p144 = scmp.eq.s32.totalorder %s15, 0
    %p145 = por %p143, %p144
    %p146 = scmp.le.s32.totalorder 1, %s9
    %p147 = scmp.lt.s32.totalorder %s9, 3
    %p148 = pnand %p146, %p147
    %p149 = pneg %p148
    // Predicated region
    $region9: #{mds_forward.6} parent=5 // pred_check
      _
    $region10: #{mds_forward.6} parent=5 // pred_check_branch
      %151 = sbr.rel (%p148) target = $region12
    $region11: #{mds_forward.6} parent=5 // pred_region
      %s152 = ssub.s32 %s9, 1
      // Predicated region
      $region13: #{mds_forward.6} parent=11 // pred_check
        %p153 = pneg %p84
      $region14: #{mds_forward.6} parent=11 // pred_check_branch
        %155 = sbr.rel (%p153) target = $region16
      $region15: #{mds_forward.6} parent=11 // pred_region
        %s156 = smul.u32 16, %s21
        %p157 = scmp.lt.s32.totalorder %s156, 15
        %s158 = scalar_select %p157, %s156, 15
        %p159 = scmp.lt.s32.totalorder %s20, 0
        %s160 = scalar_select %p159, %s20, 0
        %s161 = sadd.s32 %s160, %s158
        %s162 = smul.addr %s161, 4
        %s163 = scalar_lea.vmem %s1, %s162
        %s164 = smul.u32 16, %s21
      $region16: #{mds_forward.6} parent=11 // pred_fallthru
        _
      // Predicated region
      $region17: #{mds_forward.6} parent=11 // pred_check
        %p165 = pneg %p110
      $region18: #{mds_forward.6} parent=11 // pred_check_branch
        %167 = sbr.rel (%p165) target = $region20
      $region19: #{mds_forward.6} parent=11 // pred_region
        %p168 = scmp.lt.s32.totalorder %s20, 0
        %s169 = scalar_select %p168, %s20, 0
        %s170 = scalar_lea.vmem %s2, %s169
      $region20: #{mds_forward.6} parent=11 // pred_fallthru
        _
    $region12: #{mds_forward.6} parent=5 // pred_fallthru
      _
    %p171 = scmp.lt.s32.totalorder %s9, 2
    // Predicated region
    $region21: #{mds_forward.6} parent=5 // pred_check
      %p172 = pneg %p171
    $region22: #{mds_forward.6} parent=5 // pred_check_branch
      %174 = sbr.rel (%p172) target = $region24
    $region23: #{mds_forward.6} parent=5 // pred_region
      // Predicated region
      $region25: #{mds_forward.6} parent=23 // pred_check
        %p175 = pneg %p50
      $region26: #{mds_forward.6} parent=23 // pred_check_branch
        %177 = sbr.rel (%p175) target = $region28
      $region27: #{mds_forward.6} parent=23 // pred_region
        %p178 = scmp.lt.s32.totalorder %s16, 1
        %s179 = scalar_select %p178, %s16, 1
        %p180 = scmp.lt.s32.totalorder %s18, 0
        %s181 = scalar_select %p180, %s18, 0
        %s182 = smul.addr %s179, 4
        %s183 = sadd.s32 %s181, %s182
        %s184 = smul.addr %s183, 4
        %s185 = scalar_lea.vmem %s0, %s184
      $region28: #{mds_forward.6} parent=23 // pred_fallthru
        _
    $region24: #{mds_forward.6} parent=5 // pred_fallthru
      _
    %p186 = scmp.le.s32.totalorder 1, %s9
    %p187 = scmp.lt.s32.totalorder %s9, 3
    %p188 = pnand %p186, %p187
    %p189 = pneg %p188
    // Predicated region
    $region29: #{mds_forward.6} parent=5 // pred_check
      _
    $region30: #{mds_forward.6} parent=5 // pred_check_branch
      %191 = sbr.rel (%p188) target = $region32
    $region31: #{mds_forward.6} parent=5 // pred_region
      %s192 = ssub.s32 %s9, 1
      %p193 = scmp.lt.s32.totalorder %s19, 1
      %s194 = scalar_select %p193, %s19, 1
      %p195 = scmp.lt.s32.totalorder %s21, 0
      %s196 = scalar_select %p195, %s21, 0
      %s197 = smul.addr %s194, 4
      %s198 = sadd.s32 %s196, %s197
      %s199 = smul.addr %s198, 4
      %s200 = scalar_lea.vmem %s0, %s199
      %p201 = pneg %p56
      %p202 = pneg %p53
      %s203 = smul.u32 16, %s21
      %p204 = scmp.lt.s32.totalorder %s203, 15
      %s205 = scalar_select %p204, %s203, 15
      %p206 = scmp.lt.s32.totalorder %s20, 0
      %s207 = scalar_select %p206, %s20, 0
      %s208 = sadd.s32 %s207, %s205
      %s209 = smul.addr %s208, 4
      %s210 = scalar_lea.vmem %s1, %s209
      %p211 = pneg %p84
      %p212 = pneg %p81
      %p213 = scmp.lt.s32.totalorder %s20, 0
      %s214 = scalar_select %p213, %s20, 0
      %s215 = scalar_lea.vmem %s2, %s214
      %p216 = pneg %p110
      %p217 = pneg %p107
      %p218 = pneg %p138
      %p219 = pneg %p135
      %p220 = scmp.lt.s32.totalorder %s19, 1
      %s221 = scalar_select %p220, %s19, 1
      %p222 = scmp.lt.s32.totalorder %s20, 0
      %s223 = scalar_select %p222, %s20, 0
      %s224 = smul.addr %s221, 4
      %s225 = sadd.s32 %s223, %s224
      %s226 = smul.addr %s225, 4
      %s227 = scalar_lea.vmem %s3, %s226
      %p228 = scmp.lt.s32.totalorder %s19, 1
      %s229 = scalar_select %p228, %s19, 1
      %p230 = scmp.lt.s32.totalorder %s21, 0
      %s231 = scalar_select %p230, %s21, 0
      %s232 = smul.addr %s229, 4
      %s233 = sadd.s32 %s231, %s232
      %s234 = smul.addr %s233, 4
      %s235 = scalar_lea.vmem %s0, %s234
      %s236 = smul.u32 16, %s21
      %p237 = scmp.lt.s32.totalorder %s236, 15
      %s238 = scalar_select %p237, %s236, 15
      %p239 = scmp.lt.s32.totalorder %s20, 0
      %s240 = scalar_select %p239, %s20, 0
      %s241 = sadd.s32 %s240, %s238
      %s242 = smul.addr %s241, 4
      %s243 = scalar_lea.vmem %s1, %s242
      %s244 = smul.u32 16, %s21
      %p245 = scmp.lt.s32.totalorder %s20, 0
      %s246 = scalar_select %p245, %s20, 0
      %s247 = scalar_lea.vmem %s2, %s246
      %p248 = scmp.lt.s32.totalorder %s19, 1
      %s249 = scalar_select %p248, %s19, 1
      %p250 = scmp.lt.s32.totalorder %s20, 0
      %s251 = scalar_select %p250, %s20, 0
      %s252 = smul.addr %s249, 4
      %s253 = sadd.s32 %s251, %s252
      %s254 = smul.addr %s253, 4
      %s255 = scalar_lea.vmem %s3, %s254
      %p257 = scmp.eq.s32.totalorder %s21, 0
      // Predicated region
      $region33: #{mds_forward.6} parent=31 // pred_check
        %p258 = pneg %p257
      $region34: #{mds_forward.6} parent=31 // pred_check_branch
        %260 = sbr.rel (%p258) target = $region36
      $region35: #{mds_forward.6} parent=31 // pred_region
        %261 = vst [vmem:[#allocation2] sm:$0xff] 0.0
        %262 = vst [vmem:[#allocation2 + $0x8] sm:$0xff] 0.0
        %263 = vst [vmem:[#allocation2 + $0x10] sm:$0xff] 0.0
        %264 = vst [vmem:[#allocation2 + $0x18] sm:$0xff] 0.0
      $region36: #{mds_forward.6} parent=31 // pred_fallthru
        _
      %v265 = vld [vmem:[%s235] sm:$0xf]
      %v266 = vld [vmem:[%s235 + $0x4] sm:$0xf]
      %v267 = vld [vmem:[%s243] sm:$0xf]
      %v268 = vld [vmem:[%s243 + $0x4] sm:$0xf]
      %v269 = vld [vmem:[%s243 + $0x8] sm:$0xf]
      %v270 = vld [vmem:[%s243 + $0xc] sm:$0xf]
      %v271 = vld [vmem:[%s243 + $0x10] sm:$0xf]
      %v272 = vld [vmem:[%s243 + $0x14] sm:$0xf]
      %v273 = vld [vmem:[%s243 + $0x18] sm:$0xf]
      %v274 = vld [vmem:[%s243 + $0x1c] sm:$0xf]
      %v275 = vld [vmem:[%s243 + $0x20] sm:$0xf]
      %v276 = vld [vmem:[%s243 + $0x24] sm:$0xf]
      %v277 = vld [vmem:[%s243 + $0x28] sm:$0xf]
      %v278 = vld [vmem:[%s243 + $0x2c] sm:$0xf]
      %v279 = vld [vmem:[%s243 + $0x30] sm:$0xf]
      %v280 = vld [vmem:[%s243 + $0x34] sm:$0xf]
      %v281 = vld [vmem:[%s243 + $0x38] sm:$0xf]
      %v282 = vld [vmem:[%s243 + $0x3c] sm:$0xf]
      %v285 = vunpack.c.l.b16 %v265
      %v286 = vunpack.c.l.b16 %v266
      %v287 = vpack.c.b16 %v286, %v285
      %v305 = vunpack.c.l.b16 %v267
      %v306 = vunpack.c.l.b16 %v268
      %v307 = vunpack.c.l.b16 %v269
      %v308 = vunpack.c.l.b16 %v270
      %v309 = vunpack.c.l.b16 %v271
      %v310 = vunpack.c.l.b16 %v272
      %v311 = vunpack.c.l.b16 %v273
      %v312 = vunpack.c.l.b16 %v274
      %v313 = vunpack.c.l.b16 %v275
      %v314 = vunpack.c.l.b16 %v276
      %v315 = vunpack.c.l.b16 %v277
      %v316 = vunpack.c.l.b16 %v278
      %v317 = vunpack.c.l.b16 %v279
      %v318 = vunpack.c.l.b16 %v280
      %v319 = vunpack.c.l.b16 %v281
      %v320 = vunpack.c.l.b16 %v282
      %v321 = vpack.c.b16 %v306, %v305
      %v322 = vpack.c.b16 %v308, %v307
      %v323 = vpack.c.b16 %v310, %v309
      %v324 = vpack.c.b16 %v312, %v311
      %v325 = vpack.c.b16 %v314, %v313
      %v326 = vpack.c.b16 %v316, %v315
      %v327 = vpack.c.b16 %v318, %v317
      %v328 = vpack.c.b16 %v320, %v319
      %337 = vmatprep.subr.bf16.mxu0 0
      %338 = vmatpush1.bf16.msra.mxu0 %v328
      %339 = vmatprep.subr.bf16.mxu0 0
      %340 = vmatpush1.bf16.msra.mxu0 %v327
      %341 = vmatprep.subr.bf16.mxu0 0
      %342 = vmatpush1.bf16.msra.mxu0 %v326
      %343 = vmatprep.subr.bf16.mxu0 0
      %344 = vmatpush1.bf16.msra.mxu0 %v325
      %345 = vmatprep.subr.bf16.mxu0 0
      %346 = vmatpush1.bf16.msra.mxu0 %v324
      %347 = vmatprep.subr.bf16.mxu0 0
      %348 = vmatpush1.bf16.msra.mxu0 %v323
      %349 = vmatprep.subr.bf16.mxu0 0
      %350 = vmatpush1.bf16.msra.mxu0 %v322
      %351 = vmatprep.subr.bf16.mxu0 0
      %352 = vmatpush1.bf16.msra.mxu0 %v321
      %353 = vmatprep.subr.bf16.mxu0 0
      %354 = vmatpush2.bf16.msra.mxu0 0
      %355 = vmatprep.subr.bf16.mxu0 0
      %356 = vmatpush2.bf16.msra.mxu0 0
      %357 = vmatprep.subr.bf16.mxu0 0
      %358 = vmatpush2.bf16.msra.mxu0 0
      %359 = vmatprep.subr.bf16.mxu0 0
      %360 = vmatpush2.bf16.msra.mxu0 0
      %361 = vmatprep.subr.bf16.mxu0 0
      %362 = vmatpush2.bf16.msra.mxu0 0
      %363 = vmatprep.subr.bf16.mxu0 0
      %364 = vmatpush2.bf16.msra.mxu0 0
      %365 = vmatprep.subr.bf16.mxu0 0
      %366 = vmatpush2.bf16.msra.mxu0 0
      %367 = vmatprep.subr.bf16.mxu0 0
      %368 = vmatpush2.bf16.msra.mxu0 0
      %369 = vmatprep.mubr.bf16.mxu0 0
      %370 = vmatmul.mubr.bf16.gmra.mxu0 %v287
      %v371 = vpop.f32.mrf.mxu0
      %v372 = vadd.f32 0.0, %v371
      %v373 = vpop.f32.mrf.mxu0
      %v374 = vpop.f32.mrf.mxu0
      %v375 = vadd.f32 0.0, %v374
      %v376 = vpop.f32.mrf.mxu0
      %377 = vdwg.mxu0
      %v378 = vld [vmem:[#allocation2] sm:$0xff]
      %v379 = vld [vmem:[#allocation2 + $0x8] sm:$0xff]
      %v380 = vadd.f32 %v378, %v372
      %v381 = vadd.f32 %v379, %v375
      %382 = vst [vmem:[#allocation2] sm:$0xff] %v380
      %383 = vst [vmem:[#allocation2 + $0x8] sm:$0xff] %v381
      %s384 = scalar_lea.vmem %s235, 8
      %v385 = vld [vmem:[%s384] sm:$0xf]
      %v386 = vld [vmem:[%s384 + $0x4] sm:$0xf]
      %v387 = vld [vmem:[%s243] sm:$0xf]
      %v388 = vld [vmem:[%s243 + $0x4] sm:$0xf]
      %v389 = vld [vmem:[%s243 + $0x8] sm:$0xf]
      %v390 = vld [vmem:[%s243 + $0xc] sm:$0xf]
      %v391 = vld [vmem:[%s243 + $0x10] sm:$0xf]
      %v392 = vld [vmem:[%s243 + $0x14] sm:$0xf]
      %v393 = vld [vmem:[%s243 + $0x18] sm:$0xf]
      %v394 = vld [vmem:[%s243 + $0x1c] sm:$0xf]
      %v395 = vld [vmem:[%s243 + $0x20] sm:$0xf]
      %v396 = vld [vmem:[%s243 + $0x24] sm:$0xf]
      %v397 = vld [vmem:[%s243 + $0x28] sm:$0xf]
      %v398 = vld [vmem:[%s243 + $0x2c] sm:$0xf]
      %v399 = vld [vmem:[%s243 + $0x30] sm:$0xf]
      %v400 = vld [vmem:[%s243 + $0x34] sm:$0xf]
      %v401 = vld [vmem:[%s243 + $0x38] sm:$0xf]
      %v402 = vld [vmem:[%s243 + $0x3c] sm:$0xf]
      %v405 = vunpack.c.l.b16 %v385
      %v406 = vunpack.c.l.b16 %v386
      %v407 = vpack.c.b16 %v406, %v405
      %v425 = vunpack.c.l.b16 %v387
      %v426 = vunpack.c.l.b16 %v388
      %v427 = vunpack.c.l.b16 %v389
      %v428 = vunpack.c.l.b16 %v390
      %v429 = vunpack.c.l.b16 %v391
      %v430 = vunpack.c.l.b16 %v392
      %v431 = vunpack.c.l.b16 %v393
      %v432 = vunpack.c.l.b16 %v394
      %v433 = vunpack.c.l.b16 %v395
      %v434 = vunpack.c.l.b16 %v396
      %v435 = vunpack.c.l.b16 %v397
      %v436 = vunpack.c.l.b16 %v398
      %v437 = vunpack.c.l.b16 %v399
      %v438 = vunpack.c.l.b16 %v400
      %v439 = vunpack.c.l.b16 %v401
      %v440 = vunpack.c.l.b16 %v402
      %v441 = vpack.c.b16 %v426, %v425
      %v442 = vpack.c.b16 %v428, %v427
      %v443 = vpack.c.b16 %v430, %v429
      %v444 = vpack.c.b16 %v432, %v431
      %v445 = vpack.c.b16 %v434, %v433
      %v446 = vpack.c.b16 %v436, %v435
      %v447 = vpack.c.b16 %v438, %v437
      %v448 = vpack.c.b16 %v440, %v439
      %457 = vmatprep.subr.bf16.mxu0 0
      %458 = vmatpush1.bf16.msra.mxu0 %v448
      %459 = vmatprep.subr.bf16.mxu0 0
      %460 = vmatpush1.bf16.msra.mxu0 %v447
      %461 = vmatprep.subr.bf16.mxu0 0
      %462 = vmatpush1.bf16.msra.mxu0 %v446
      %463 = vmatprep.subr.bf16.mxu0 0
      %464 = vmatpush1.bf16.msra.mxu0 %v445
      %465 = vmatprep.subr.bf16.mxu0 0
      %466 = vmatpush1.bf16.msra.mxu0 %v444
      %467 = vmatprep.subr.bf16.mxu0 0
      %468 = vmatpush1.bf16.msra.mxu0 %v443
      %469 = vmatprep.subr.bf16.mxu0 0
      %470 = vmatpush1.bf16.msra.mxu0 %v442
      %471 = vmatprep.subr.bf16.mxu0 0
      %472 = vmatpush1.bf16.msra.mxu0 %v441
      %473 = vmatprep.subr.bf16.mxu0 0
      %474 = vmatpush2.bf16.msra.mxu0 0
      %475 = vmatprep.subr.bf16.mxu0 0
      %476 = vmatpush2.bf16.msra.mxu0 0
      %477 = vmatprep.subr.bf16.mxu0 0
      %478 = vmatpush2.bf16.msra.mxu0 0
      %479 = vmatprep.subr.bf16.mxu0 0
      %480 = vmatpush2.bf16.msra.mxu0 0
      %481 = vmatprep.subr.bf16.mxu0 0
      %482 = vmatpush2.bf16.msra.mxu0 0
      %483 = vmatprep.subr.bf16.mxu0 0
      %484 = vmatpush2.bf16.msra.mxu0 0
      %485 = vmatprep.subr.bf16.mxu0 0
      %486 = vmatpush2.bf16.msra.mxu0 0
      %487 = vmatprep.subr.bf16.mxu0 0
      %488 = vmatpush2.bf16.msra.mxu0 0
      %489 = vmatprep.mubr.bf16.mxu0 0
      %490 = vmatmul.mubr.bf16.gmra.mxu0 %v407
      %v491 = vpop.f32.mrf.mxu0
      %v492 = vadd.f32 0.0, %v491
      %v493 = vpop.f32.mrf.mxu0
      %v494 = vpop.f32.mrf.mxu0
      %v495 = vadd.f32 0.0, %v494
      %v496 = vpop.f32.mrf.mxu0
      %497 = vdwg.mxu0
      %s498 = scalar_lea.vmem [#allocation2], 16
      %v499 = vld [vmem:[%s498] sm:$0xff]
      %v500 = vld [vmem:[%s498 + $0x8] sm:$0xff]
      %v501 = vadd.f32 %v499, %v492
      %v502 = vadd.f32 %v500, %v495
      %503 = vst [vmem:[%s498] sm:$0xff] %v501
      %504 = vst [vmem:[%s498 + $0x8] sm:$0xff] %v502
      // Predicated region
      $region37: #{mds_forward.6} parent=31 // pred_check
        %p505 = pneg %p257
      $region38: #{mds_forward.6} parent=31 // pred_check_branch
        %507 = sbr.rel (%p505) target = $region40
      $region39: #{mds_forward.6} parent=31 // pred_region
        %v508 = vld [vmem:[#allocation2] sm:$0xff]
        %v509 = vld [vmem:[#allocation2 + $0x8] sm:$0xff]
        %v510 = vld [vmem:[#allocation2 + $0x10] sm:$0xff]
        %v511 = vld [vmem:[#allocation2 + $0x18] sm:$0xff]
        %v512 = vld [vmem:[%s247] sm:$0x1]
        %v514 = vlaneseq
        %v515 = vshrl.u32 %v514, 7
        %v516 = vsub.s32 0, %v515
        %v517 = vrot.slane %v512, %v516
        %v519 = vadd.f32 %v508, %v517
        %v520 = vadd.f32 %v509, %v517
        %v521 = vadd.f32 %v510, %v517
        %v522 = vadd.f32 %v511, %v517
        %v523 = vmax.f32 %v519, 0.0
        %v524 = vmax.f32 %v520, 0.0
        %v525 = vmax.f32 %v521, 0.0
        %v526 = vmax.f32 %v522, 0.0
        %v527 = vpack.c.bf16 %v524, %v523
        %v528 = vpack.c.bf16 %v526, %v525
        %v531 = vunpack.c.l.b16 %v527
        %v532 = vunpack.c.h.b16 %v527
        %v533 = vunpack.c.l.b16 %v528
        %v534 = vunpack.c.h.b16 %v528
        %v535 = vpack.c.b16 %v531, %v531
        %v536 = vpack.c.b16 %v532, %v532
        %v537 = vpack.c.b16 %v533, %v533
        %v538 = vpack.c.b16 %v534, %v534
        %543 = vst [vmem:[%s255] sm:$0xf] %v535
        %544 = vst [vmem:[%s255 + $0x4] sm:$0xf] %v536
        %545 = vst [vmem:[%s255 + $0x8] sm:$0xf] %v537
        %546 = vst [vmem:[%s255 + $0xc] sm:$0xf] %v538
      $region40: #{mds_forward.6} parent=31 // pred_fallthru
        _
      %p547 = scmp.lt.s32.totalorder %s19, 1
      %s548 = scalar_select %p547, %s19, 1
      %p549 = scmp.lt.s32.totalorder %s20, 0
      %s550 = scalar_select %p549, %s20, 0
      %s551 = smul.addr %s548, 4
      %s552 = sadd.s32 %s550, %s551
      %s553 = smul.addr %s552, 4
      %s554 = scalar_lea.vmem %s3, %s553
      // Predicated region
      $region41: #{mds_forward.6} parent=31 // pred_check
        %p555 = pneg %p135
      $region42: #{mds_forward.6} parent=31 // pred_check_branch
        %557 = sbr.rel (%p555) target = $region44
      $region43: #{mds_forward.6} parent=31 // pred_region
        _
      $region44: #{mds_forward.6} parent=31 // pred_fallthru
        _
    $region32: #{mds_forward.6} parent=5 // pred_fallthru
      _
    %p558 = scmp.le.s32.totalorder 2, %s9
    // Predicated region
    $region45: #{mds_forward.6} parent=5 // pred_check
      %p559 = pneg %p558
    $region46: #{mds_forward.6} parent=5 // pred_check_branch
      %561 = sbr.rel (%p559) target = $region48
    $region47: #{mds_forward.6} parent=5 // pred_region
      %s562 = ssub.s32 %s9, 2
      // Predicated region
      $region49: #{mds_forward.6} parent=47 // pred_check
        %p563 = pneg %p141
      $region50: #{mds_forward.6} parent=47 // pred_check_branch
        %565 = sbr.rel (%p563) target = $region52
      $region51: #{mds_forward.6} parent=47 // pred_region
        %p566 = scmp.lt.s32.totalorder %s22, 1
        %s567 = scalar_select %p566, %s22, 1
        %p568 = scmp.lt.s32.totalorder %s23, 0
        %s569 = scalar_select %p568, %s23, 0
        %s570 = smul.addr %s567, 4
        %s571 = sadd.s32 %s569, %s570
        %s572 = smul.addr %s571, 4
        %s573 = scalar_lea.vmem %s3, %s572
      $region52: #{mds_forward.6} parent=47 // pred_fallthru
        _
    $region48: #{mds_forward.6} parent=5 // pred_fallthru
      _
  $region6: #{mds_forward.6} parent=0 // loop_footer
    %s13 = sadd.s32 1, %s9
  $region7: #{mds_forward.6} parent=0 // loop_footer_branch
    %8 = sbr.rel target = $region3
  $region8: #{mds_forward.6} parent=0 // loop_exit
    _

// kernel: mds_forward.7
$region0: #{mds_forward.7}
  #allocation0 [shape = 'u32[]', space=smem, size = 0x4, offset = 0x4, fixed_abs, tag = 'smem constant byte address 0x4 - core index']
  #allocation1 [shape = 'u32[144,128]{1,0:T(1,128)}', space=vmem, size = 0x12000, scoped, tag = 'internal scratch']
  #allocation2 [shape = 'f32[2,16,128]{2,1,0:T(8,128)}', space=vmem, size = 0x4000, scoped, tag = 'scratch operand']
  %s0 = inlined_call_operand.vmem [shape: bf16[2,2,18,128], index: 0, kind: input, shape index: {}]
  %s1 = inlined_call_operand.vmem [shape: bf16[3,128,128], index: 1, kind: input, shape index: {}]
  %s2 = inlined_call_operand.vmem [shape: f32[1,128], index: 2, kind: input, shape index: {}]
  %s3 = inlined_call_operand.vmem [shape: bf16[2,2,16,128], index: 3, kind: output, shape index: {}]
  %s4 = sld [smem:[#allocation0]]
  $region53: #{mds_forward.7} parent=0
    _
  %s6 = ssub.s32 1, %s4
  %s7 = scalar_select 0, %s6, %s4
  loop: start=0, step=1, limit=4
  $region2: #{mds_forward.7} parent=0 // loop_pre_header
    _
  $region3: #{mds_forward.7} parent=0 // loop_header
    %s9 = sphi 0, %s13
    %p10 = scmp.ge.s32.totalorder %s9, 4
    %s16 = sphi 0, %s35
    %s17 = sphi 0, %s31
    %s18 = sphi 0, %s27
    %s19 = sphi 0, %s16
    %s20 = sphi 0, %s17
    %s21 = sphi 0, %s18
    %s22 = sphi 0, %s19
    %s23 = sphi 0, %s20
    %s24 = sphi 0, %s21
    %s40 = sphi 0, %s42
    %s43 = sphi 0, %s40
    %s44 = sphi 0, %s43
    %s60 = sphi 0, %s44
    %s68 = sphi 0, %s70
    %s71 = sphi 0, %s68
    %s72 = sphi 0, %s71
    %s88 = sphi 0, %s72
    %s94 = sphi 0, %s96
    %s97 = sphi 0, %s94
    %s98 = sphi 0, %s97
    %s114 = sphi 0, %s98
    %s122 = sphi 0, %s124
    %s125 = sphi 0, %s122
    %s126 = sphi 0, %s125
    %s142 = sphi 0, %s126
  $region4: #{mds_forward.7} parent=0 // loop_header_branch
    %12 = sbr.rel (%p10) target = $region8
  $region5: #{mds_forward.7} parent=0 // loop_body
    %s14 = ssub.s32 %s9, 1
    %s15 = ssub.s32 %s9, 2
    %s25 = sadd.s32 1, %s18
    %p26 = scmp.ge.s32.totalorder %s25, 1
    %s27 = scalar_select %p26, 0, %s25
    %s28 = sadd.s32 1, %s17
    %s29 = scalar_select %p26, %s28, %s17
    %p30 = scmp.ge.s32.totalorder %s29, 1
    %s31 = scalar_select %p30, 0, %s29
    %s32 = sadd.s32 1, %s16
    %s33 = scalar_select %p30, %s32, %s16
    %p34 = scmp.ge.s32.totalorder %s33, 2
    %s35 = scalar_select %p34, 0, %s33
    %s36 = ssub.s32 %s16, %s35
    %s37 = ssub.s32 %s18, %s27
    %s38 = sor.u32 %s36, %s37
    %p39 = scmp.eq.s32.totalorder %s38, 0
    %s41 = sadd.s32 %s40, 1
    %s42 = scalar_select %p39, %s40, %s41
    %p45 = pneg %p39
    %p46 = scmp.eq.s32.totalorder %s9, 1
    %p47 = por %p45, %p46
    %p48 = scmp.ne.s32.totalorder %s40, %s43
    %p49 = scmp.eq.s32.totalorder %s9, 0
    %p50 = por %p48, %p49
    %p51 = scmp.ne.s32.totalorder %s40, %s43
    %p52 = scmp.eq.s32.totalorder %s14, 1
    %p53 = por %p51, %p52
    %p54 = scmp.ne.s32.totalorder %s43, %s44
    %p55 = scmp.eq.s32.totalorder %s14, 0
    %p56 = por %p54, %p55
    %p57 = scmp.ne.s32.totalorder %s43, %s44
    %p58 = scmp.eq.s32.totalorder %s15, 1
    %p59 = por %p57, %p58
    %p61 = scmp.ne.s32.totalorder %s44, %s60
    %p62 = scmp.eq.s32.totalorder %s15, 0
    %p63 = por %p61, %p62
    %s64 = ssub.s32 %s18, %s27
    %s65 = ssub.s32 %s17, %s31
    %s66 = sor.u32 %s64, %s65
    %p67 = scmp.eq.s32.totalorder %s66, 0
    %s69 = sadd.s32 %s68, 1
    %s70 = scalar_select %p67, %s68, %s69
    %p73 = pneg %p67
    %p74 = scmp.eq.s32.totalorder %s9, 1
    %p75 = por %p73, %p74
    %p76 = scmp.ne.s32.totalorder %s68, %s71
    %p77 = scmp.eq.s32.totalorder %s9, 0
    %p78 = por %p76, %p77
    %p79 = scmp.ne.s32.totalorder %s68, %s71
    %p80 = scmp.eq.s32.totalorder %s14, 1
    %p81 = por %p79, %p80
    %p82 = scmp.ne.s32.totalorder %s71, %s72
    %p83 = scmp.eq.s32.totalorder %s14, 0
    %p84 = por %p82, %p83
    %p85 = scmp.ne.s32.totalorder %s71, %s72
    %p86 = scmp.eq.s32.totalorder %s15, 1
    %p87 = por %p85, %p86
    %p89 = scmp.ne.s32.totalorder %s72, %s88
    %p90 = scmp.eq.s32.totalorder %s15, 0
    %p91 = por %p89, %p90
    %s92 = ssub.s32 %s17, %s31
    %p93 = scmp.eq.s32.totalorder %s92, 0
    %s95 = sadd.s32 %s94, 1
    %s96 = scalar_select %p93, %s94, %s95
    %p99 = pneg %p93
    %p100 = scmp.eq.s32.totalorder %s9, 1
    %p101 = por %p99, %p100
    %p102 = scmp.ne.s32.totalorder %s94, %s97
    %p103 = scmp.eq.s32.totalorder %s9, 0
    %p104 = por %p102, %p103
    %p105 = scmp.ne.s32.totalorder %s94, %s97
    %p106 = scmp.eq.s32.totalorder %s14, 1
    %p107 = por %p105, %p106
    %p108 = scmp.ne.s32.totalorder %s97, %s98
    %p109 = scmp.eq.s32.totalorder %s14, 0
    %p110 = por %p108, %p109
    %p111 = scmp.ne.s32.totalorder %s97, %s98
    %p112 = scmp.eq.s32.totalorder %s15, 1
    %p113 = por %p111, %p112
    %p115 = scmp.ne.s32.totalorder %s98, %s114
    %p116 = scmp.eq.s32.totalorder %s15, 0
    %p117 = por %p115, %p116
    %s118 = ssub.s32 %s16, %s35
    %s119 = ssub.s32 %s17, %s31
    %s120 = sor.u32 %s118, %s119
    %p121 = scmp.eq.s32.totalorder %s120, 0
    %s123 = sadd.s32 %s122, 1
    %s124 = scalar_select %p121, %s122, %s123
    %p127 = pneg %p121
    %p128 = scmp.eq.s32.totalorder %s9, 1
    %p129 = por %p127, %p128
    %p130 = scmp.ne.s32.totalorder %s122, %s125
    %p131 = scmp.eq.s32.totalorder %s9, 0
    %p132 = por %p130, %p131
    %p133 = scmp.ne.s32.totalorder %s122, %s125
    %p134 = scmp.eq.s32.totalorder %s14, 1
    %p135 = por %p133, %p134
    %p136 = scmp.ne.s32.totalorder %s125, %s126
    %p137 = scmp.eq.s32.totalorder %s14, 0
    %p138 = por %p136, %p137
    %p139 = scmp.ne.s32.totalorder %s125, %s126
    %p140 = scmp.eq.s32.totalorder %s15, 1
    %p141 = por %p139, %p140
    %p143 = scmp.ne.s32.totalorder %s126, %s142
    %p144 = scmp.eq.s32.totalorder %s15, 0
    %p145 = por %p143, %p144
    %p146 = scmp.le.s32.totalorder 1, %s9
    %p147 = scmp.lt.s32.totalorder %s9, 3
    %p148 = pnand %p146, %p147
    %p149 = pneg %p148
    // Predicated region
    $region9: #{mds_forward.7} parent=5 // pred_check
      _
    $region10: #{mds_forward.7} parent=5 // pred_check_branch
      %151 = sbr.rel (%p148) target = $region12
    $region11: #{mds_forward.7} parent=5 // pred_region
      %s152 = ssub.s32 %s9, 1
      // Predicated region
      $region13: #{mds_forward.7} parent=11 // pred_check
        %p153 = pneg %p84
      $region14: #{mds_forward.7} parent=11 // pred_check_branch
        %155 = sbr.rel (%p153) target = $region16
      $region15: #{mds_forward.7} parent=11 // pred_region
        %s156 = smul.u32 16, %s21
        %p157 = scmp.lt.s32.totalorder %s156, 15
        %s158 = scalar_select %p157, %s156, 15
        %p159 = scmp.lt.s32.totalorder %s20, 0
        %s160 = scalar_select %p159, %s20, 0
        %s161 = sadd.s32 %s160, %s158
        %s162 = smul.addr %s161, 4
        %s163 = scalar_lea.vmem %s1, %s162
        %s164 = smul.u32 16, %s21
      $region16: #{mds_forward.7} parent=11 // pred_fallthru
        _
      // Predicated region
      $region17: #{mds_forward.7} parent=11 // pred_check
        %p165 = pneg %p110
      $region18: #{mds_forward.7} parent=11 // pred_check_branch
        %167 = sbr.rel (%p165) target = $region20
      $region19: #{mds_forward.7} parent=11 // pred_region
        %p168 = scmp.lt.s32.totalorder %s20, 0
        %s169 = scalar_select %p168, %s20, 0
        %s170 = scalar_lea.vmem %s2, %s169
      $region20: #{mds_forward.7} parent=11 // pred_fallthru
        _
    $region12: #{mds_forward.7} parent=5 // pred_fallthru
      _
    %p171 = scmp.lt.s32.totalorder %s9, 2
    // Predicated region
    $region21: #{mds_forward.7} parent=5 // pred_check
      %p172 = pneg %p171
    $region22: #{mds_forward.7} parent=5 // pred_check_branch
      %174 = sbr.rel (%p172) target = $region24
    $region23: #{mds_forward.7} parent=5 // pred_region
      // Predicated region
      $region25: #{mds_forward.7} parent=23 // pred_check
        %p175 = pneg %p50
      $region26: #{mds_forward.7} parent=23 // pred_check_branch
        %177 = sbr.rel (%p175) target = $region28
      $region27: #{mds_forward.7} parent=23 // pred_region
        %p178 = scmp.lt.s32.totalorder %s16, 1
        %s179 = scalar_select %p178, %s16, 1
        %p180 = scmp.lt.s32.totalorder %s18, 0
        %s181 = scalar_select %p180, %s18, 0
        %s182 = smul.addr %s179, 6
        %s183 = sadd.s32 %s181, %s182
        %s184 = smul.addr %s183, 4
        %s185 = scalar_lea.vmem %s0, %s184
      $region28: #{mds_forward.7} parent=23 // pred_fallthru
        _
    $region24: #{mds_forward.7} parent=5 // pred_fallthru
      _
    %p186 = scmp.le.s32.totalorder 1, %s9
    %p187 = scmp.lt.s32.totalorder %s9, 3
    %p188 = pnand %p186, %p187
    %p189 = pneg %p188
    // Predicated region
    $region29: #{mds_forward.7} parent=5 // pred_check
      _
    $region30: #{mds_forward.7} parent=5 // pred_check_branch
      %191 = sbr.rel (%p188) target = $region32
    $region31: #{mds_forward.7} parent=5 // pred_region
      %s192 = ssub.s32 %s9, 1
      %p193 = scmp.lt.s32.totalorder %s19, 1
      %s194 = scalar_select %p193, %s19, 1
      %p195 = scmp.lt.s32.totalorder %s21, 0
      %s196 = scalar_select %p195, %s21, 0
      %s197 = smul.addr %s194, 6
      %s198 = sadd.s32 %s196, %s197
      %s199 = smul.addr %s198, 4
      %s200 = scalar_lea.vmem %s0, %s199
      %p201 = pneg %p56
      %p202 = pneg %p53
      %s203 = smul.u32 16, %s21
      %p204 = scmp.lt.s32.totalorder %s203, 15
      %s205 = scalar_select %p204, %s203, 15
      %p206 = scmp.lt.s32.totalorder %s20, 0
      %s207 = scalar_select %p206, %s20, 0
      %s208 = sadd.s32 %s207, %s205
      %s209 = smul.addr %s208, 4
      %s210 = scalar_lea.vmem %s1, %s209
      %p211 = pneg %p84
      %p212 = pneg %p81
      %p213 = scmp.lt.s32.totalorder %s20, 0
      %s214 = scalar_select %p213, %s20, 0
      %s215 = scalar_lea.vmem %s2, %s214
      %p216 = pneg %p110
      %p217 = pneg %p107
      %p218 = pneg %p138
      %p219 = pneg %p135
      %p220 = scmp.lt.s32.totalorder %s19, 1
      %s221 = scalar_select %p220, %s19, 1
      %p222 = scmp.lt.s32.totalorder %s20, 0
      %s223 = scalar_select %p222, %s20, 0
      %s224 = smul.addr %s221, 4
      %s225 = sadd.s32 %s223, %s224
      %s226 = smul.addr %s225, 4
      %s227 = scalar_lea.vmem %s3, %s226
      %p228 = scmp.lt.s32.totalorder %s19, 1
      %s229 = scalar_select %p228, %s19, 1
      %p230 = scmp.lt.s32.totalorder %s21, 0
      %s231 = scalar_select %p230, %s21, 0
      %s232 = smul.addr %s229, 6
      %s233 = sadd.s32 %s231, %s232
      %s234 = smul.addr %s233, 4
      %s235 = scalar_lea.vmem %s0, %s234
      %s236 = smul.u32 16, %s21
      %p237 = scmp.lt.s32.totalorder %s236, 15
      %s238 = scalar_select %p237, %s236, 15
      %p239 = scmp.lt.s32.totalorder %s20, 0
      %s240 = scalar_select %p239, %s20, 0
      %s241 = sadd.s32 %s240, %s238
      %s242 = smul.addr %s241, 4
      %s243 = scalar_lea.vmem %s1, %s242
      %s244 = smul.u32 16, %s21
      %p245 = scmp.lt.s32.totalorder %s20, 0
      %s246 = scalar_select %p245, %s20, 0
      %s247 = scalar_lea.vmem %s2, %s246
      %p248 = scmp.lt.s32.totalorder %s19, 1
      %s249 = scalar_select %p248, %s19, 1
      %p250 = scmp.lt.s32.totalorder %s20, 0
      %s251 = scalar_select %p250, %s20, 0
      %s252 = smul.addr %s249, 4
      %s253 = sadd.s32 %s251, %s252
      %s254 = smul.addr %s253, 4
      %s255 = scalar_lea.vmem %s3, %s254
      %p257 = scmp.eq.s32.totalorder %s21, 0
      // Predicated region
      $region33: #{mds_forward.7} parent=31 // pred_check
        %p258 = pneg %p257
      $region34: #{mds_forward.7} parent=31 // pred_check_branch
        %260 = sbr.rel (%p258) target = $region36
      $region35: #{mds_forward.7} parent=31 // pred_region
        %261 = vst [vmem:[#allocation2] sm:$0xff] 0.0
        %262 = vst [vmem:[#allocation2 + $0x8] sm:$0xff] 0.0
        %263 = vst [vmem:[#allocation2 + $0x10] sm:$0xff] 0.0
        %264 = vst [vmem:[#allocation2 + $0x18] sm:$0xff] 0.0
      $region36: #{mds_forward.7} parent=31 // pred_fallthru
        _
      %v265 = vld [vmem:[%s235] sm:$0xf]
      %v266 = vld [vmem:[%s235 + $0x4] sm:$0xf]
      %v267 = vld [vmem:[%s243] sm:$0xf]
      %v268 = vld [vmem:[%s243 + $0x4] sm:$0xf]
      %v269 = vld [vmem:[%s243 + $0x8] sm:$0xf]
      %v270 = vld [vmem:[%s243 + $0xc] sm:$0xf]
      %v271 = vld [vmem:[%s243 + $0x10] sm:$0xf]
      %v272 = vld [vmem:[%s243 + $0x14] sm:$0xf]
      %v273 = vld [vmem:[%s243 + $0x18] sm:$0xf]
      %v274 = vld [vmem:[%s243 + $0x1c] sm:$0xf]
      %v275 = vld [vmem:[%s243 + $0x20] sm:$0xf]
      %v276 = vld [vmem:[%s243 + $0x24] sm:$0xf]
      %v277 = vld [vmem:[%s243 + $0x28] sm:$0xf]
      %v278 = vld [vmem:[%s243 + $0x2c] sm:$0xf]
      %v279 = vld [vmem:[%s243 + $0x30] sm:$0xf]
      %v280 = vld [vmem:[%s243 + $0x34] sm:$0xf]
      %v281 = vld [vmem:[%s243 + $0x38] sm:$0xf]
      %v282 = vld [vmem:[%s243 + $0x3c] sm:$0xf]
      %v283 = vld [vmem:[%s235 + $0x8] sm:$0x1]
      %s284 = scalar_lea.vmem %s243, 64
      %v285 = vld [vmem:[%s284] sm:$0xf]
      %v286 = vld [vmem:[%s284 + $0x4] sm:$0xf]
      %v287 = vld [vmem:[%s284 + $0x8] sm:$0xf]
      %v288 = vld [vmem:[%s284 + $0xc] sm:$0xf]
      %v289 = vld [vmem:[%s284 + $0x10] sm:$0xf]
      %v290 = vld [vmem:[%s284 + $0x14] sm:$0xf]
      %v291 = vld [vmem:[%s284 + $0x18] sm:$0xf]
      %v292 = vld [vmem:[%s284 + $0x1c] sm:$0xf]
      %v293 = vld [vmem:[%s284 + $0x20] sm:$0xf]
      %v294 = vld [vmem:[%s284 + $0x24] sm:$0xf]
      %v295 = vld [vmem:[%s284 + $0x28] sm:$0xf]
      %v296 = vld [vmem:[%s284 + $0x2c] sm:$0xf]
      %v297 = vld [vmem:[%s284 + $0x30] sm:$0xf]
      %v298 = vld [vmem:[%s284 + $0x34] sm:$0xf]
      %v299 = vld [vmem:[%s284 + $0x38] sm:$0xf]
      %v300 = vld [vmem:[%s284 + $0x3c] sm:$0xf]
      %v304 = vunpack.c.l.b16 %v265
      %v305 = vunpack.c.l.b16 %v266
      %v306 = vunpack.c.l.b16 %v283
      %v307 = vpack.c.b16 %v305, %v304
      %v308 = vpack.c.b16 %v306, %v306
      %vm309 = vsmask.f32 7424
      %v311 = vshrl.u32 %v307, 16
      %v313 = vshll.u32 %v307, 16
      %v315 = vrot.slane %v313, 1
      %v316 = vor.u32 %v311, %v315
      %v318 = vshll.u32 %v308, 16
      %v320 = vrot.slane %v318, 1
      %v321 = vsel %vm309, %v316, %v320
      %v339 = vunpack.c.l.b16 %v285
      %v340 = vunpack.c.l.b16 %v286
      %v341 = vunpack.c.l.b16 %v287
      %v342 = vunpack.c.l.b16 %v288
      %v343 = vunpack.c.l.b16 %v289
      %v344 = vunpack.c.l.b16 %v290
      %v345 = vunpack.c.l.b16 %v291
      %v346 = vunpack.c.l.b16 %v292
      %v347 = vunpack.c.l.b16 %v293
      %v348 = vunpack.c.l.b16 %v294
      %v349 = vunpack.c.l.b16 %v295
      %v350 = vunpack.c.l.b16 %v296
      %v351 = vunpack.c.l.b16 %v297
      %v352 = vunpack.c.l.b16 %v298
      %v353 = vunpack.c.l.b16 %v299
      %v354 = vunpack.c.l.b16 %v300
      %v355 = vpack.c.b16 %v340, %v339
      %v356 = vpack.c.b16 %v342, %v341
      %v357 = vpack.c.b16 %v344, %v343
      %v358 = vpack.c.b16 %v346, %v345
      %v359 = vpack.c.b16 %v348, %v347
      %v360 = vpack.c.b16 %v350, %v349
      %v361 = vpack.c.b16 %v352, %v351
      %v362 = vpack.c.b16 %v354, %v353
      %371 = vmatprep.subr.bf16.mxu0 0
      %372 = vmatpush1.bf16.msra.mxu0 %v362
      %373 = vmatprep.subr.bf16.mxu0 0
      %374 = vmatpush1.bf16.msra.mxu0 %v361
      %375 = vmatprep.subr.bf16.mxu0 0
      %376 = vmatpush1.bf16.msra.mxu0 %v360
      %377 = vmatprep.subr.bf16.mxu0 0
      %378 = vmatpush1.bf16.msra.mxu0 %v359
      %379 = vmatprep.subr.bf16.mxu0 0
      %380 = vmatpush1.bf16.msra.mxu0 %v358
      %381 = vmatprep.subr.bf16.mxu0 0
      %382 = vmatpush1.bf16.msra.mxu0 %v357
      %383 = vmatprep.subr.bf16.mxu0 0
      %384 = vmatpush1.bf16.msra.mxu0 %v356
      %385 = vmatprep.subr.bf16.mxu0 0
      %386 = vmatpush1.bf16.msra.mxu0 %v355
      %387 = vmatprep.subr.bf16.mxu0 0
      %388 = vmatpush2.bf16.msra.mxu0 0
      %389 = vmatprep.subr.bf16.mxu0 0
      %390 = vmatpush2.bf16.msra.mxu0 0
      %391 = vmatprep.subr.bf16.mxu0 0
      %392 = vmatpush2.bf16.msra.mxu0 0
      %393 = vmatprep.subr.bf16.mxu0 0
      %394 = vmatpush2.bf16.msra.mxu0 0
      %395 = vmatprep.subr.bf16.mxu0 0
      %396 = vmatpush2.bf16.msra.mxu0 0
      %397 = vmatprep.subr.bf16.mxu0 0
      %398 = vmatpush2.bf16.msra.mxu0 0
      %399 = vmatprep.subr.bf16.mxu0 0
      %400 = vmatpush2.bf16.msra.mxu0 0
      %401 = vmatprep.subr.bf16.mxu0 0
      %402 = vmatpush2.bf16.msra.mxu0 0
      %403 = vmatprep.mubr.bf16.mxu0 0
      %404 = vmatmul.mubr.bf16.gmra.mxu0 %v321
      %v405 = vpop.f32.mrf.mxu0
      %v406 = vadd.f32 0.0, %v405
      %v407 = vpop.f32.mrf.mxu0
      %v408 = vpop.f32.mrf.mxu0
      %v409 = vadd.f32 0.0, %v408
      %v410 = vpop.f32.mrf.mxu0
      %411 = vdwg.mxu0
      %v429 = vunpack.c.l.b16 %v267
      %v430 = vunpack.c.l.b16 %v268
      %v431 = vunpack.c.l.b16 %v269
      %v432 = vunpack.c.l.b16 %v270
      %v433 = vunpack.c.l.b16 %v271
      %v434 = vunpack.c.l.b16 %v272
      %v435 = vunpack.c.l.b16 %v273
      %v436 = vunpack.c.l.b16 %v274
      %v437 = vunpack.c.l.b16 %v275
      %v438 = vunpack.c.l.b16 %v276
      %v439 = vunpack.c.l.b16 %v277
      %v440 = vunpack.c.l.b16 %v278
      %v441 = vunpack.c.l.b16 %v279
      %v442 = vunpack.c.l.b16 %v280
      %v443 = vunpack.c.l.b16 %v281
      %v444 = vunpack.c.l.b16 %v282
      %v445 = vpack.c.b16 %v430, %v429
      %v446 = vpack.c.b16 %v432, %v431
      %v447 = vpack.c.b16 %v434, %v433
      %v448 = vpack.c.b16 %v436, %v435
      %v449 = vpack.c.b16 %v438, %v437
      %v450 = vpack.c.b16 %v440, %v439
      %v451 = vpack.c.b16 %v442, %v441
      %v452 = vpack.c.b16 %v444, %v443
      %461 = vmatprep.subr.bf16.mxu0 0
      %462 = vmatpush1.bf16.msra.mxu0 %v452
      %463 = vmatprep.subr.bf16.mxu0 0
      %464 = vmatpush1.bf16.msra.mxu0 %v451
      %465 = vmatprep.subr.bf16.mxu0 0
      %466 = vmatpush1.bf16.msra.mxu0 %v450
      %467 = vmatprep.subr.bf16.mxu0 0
      %468 = vmatpush1.bf16.msra.mxu0 %v449
      %469 = vmatprep.subr.bf16.mxu0 0
      %470 = vmatpush1.bf16.msra.mxu0 %v448
      %471 = vmatprep.subr.bf16.mxu0 0
      %472 = vmatpush1.bf16.msra.mxu0 %v447
      %473 = vmatprep.subr.bf16.mxu0 0
      %474 = vmatpush1.bf16.msra.mxu0 %v446
      %475 = vmatprep.subr.bf16.mxu0 0
      %476 = vmatpush1.bf16.msra.mxu0 %v445
      %477 = vmatprep.subr.bf16.mxu0 0
      %478 = vmatpush2.bf16.msra.mxu0 0
      %479 = vmatprep.subr.bf16.mxu0 0
      %480 = vmatpush2.bf16.msra.mxu0 0
      %481 = vmatprep.subr.bf16.mxu0 0
      %482 = vmatpush2.bf16.msra.mxu0 0
      %483 = vmatprep.subr.bf16.mxu0 0
      %484 = vmatpush2.bf16.msra.mxu0 0
      %485 = vmatprep.subr.bf16.mxu0 0
      %486 = vmatpush2.bf16.msra.mxu0 0
      %487 = vmatprep.subr.bf16.mxu0 0
      %488 = vmatpush2.bf16.msra.mxu0 0
      %489 = vmatprep.subr.bf16.mxu0 0
      %490 = vmatpush2.bf16.msra.mxu0 0
      %491 = vmatprep.subr.bf16.mxu0 0
      %492 = vmatpush2.bf16.msra.mxu0 0
      %493 = vmatprep.mubr.bf16.mxu0 0
      %494 = vmatmul.mubr.bf16.gmra.mxu0 %v307
      %v495 = vpop.f32.mrf.mxu0
      %v496 = vadd.f32 %v406, %v495
      %v497 = vpop.f32.mrf.mxu0
      %v498 = vpop.f32.mrf.mxu0
      %v499 = vadd.f32 %v409, %v498
      %v500 = vpop.f32.mrf.mxu0
      %501 = vdwg.mxu0
      %v502 = vld [vmem:[%s235] sm:$0xe]
      %s503 = scalar_lea.vmem %s243, 128
      %v504 = vld [vmem:[%s503] sm:$0xf]
      %v505 = vld [vmem:[%s503 + $0x4] sm:$0xf]
      %v506 = vld [vmem:[%s503 + $0x8] sm:$0xf]
      %v507 = vld [vmem:[%s503 + $0xc] sm:$0xf]
      %v508 = vld [vmem:[%s503 + $0x10] sm:$0xf]
      %v509 = vld [vmem:[%s503 + $0x14] sm:$0xf]
      %v510 = vld [vmem:[%s503 + $0x18] sm:$0xf]
      %v511 = vld [vmem:[%s503 + $0x1c] sm:$0xf]
      %v512 = vld [vmem:[%s503 + $0x20] sm:$0xf]
      %v513 = vld [vmem:[%s503 + $0x24] sm:$0xf]
      %v514 = vld [vmem:[%s503 + $0x28] sm:$0xf]
      %v515 = vld [vmem:[%s503 + $0x2c] sm:$0xf]
      %v516 = vld [vmem:[%s503 + $0x30] sm:$0xf]
      %v517 = vld [vmem:[%s503 + $0x34] sm:$0xf]
      %v518 = vld [vmem:[%s503 + $0x38] sm:$0xf]
      %v519 = vld [vmem:[%s503 + $0x3c] sm:$0xf]
      %v521 = vunpack.c.l.b16 %v502
      %v522 = vpack.c.b16 %v305, %v521
      %vm523 = vcmask 1046528
      %v524 = vrot.slane %v522, 1
      %v525 = vrot.slane %v308, 1
      %v526 = vsel %vm523, %v524, %v525
      %v544 = vunpack.c.l.b16 %v504
      %v545 = vunpack.c.l.b16 %v505
      %v546 = vunpack.c.l.b16 %v506
      %v547 = vunpack.c.l.b16 %v507
      %v548 = vunpack.c.l.b16 %v508
      %v549 = vunpack.c.l.b16 %v509
      %v550 = vunpack.c.l.b16 %v510
      %v551 = vunpack.c.l.b16 %v511
      %v552 = vunpack.c.l.b16 %v512
      %v553 = vunpack.c.l.b16 %v513
      %v554 = vunpack.c.l.b16 %v514
      %v555 = vunpack.c.l.b16 %v515
      %v556 = vunpack.c.l.b16 %v516
      %v557 = vunpack.c.l.b16 %v517
      %v558 = vunpack.c.l.b16 %v518
      %v559 = vunpack.c.l.b16 %v519
      %v560 = vpack.c.b16 %v545, %v544
      %v561 = vpack.c.b16 %v547, %v546
      %v562 = vpack.c.b16 %v549, %v548
      %v563 = vpack.c.b16 %v551, %v550
      %v564 = vpack.c.b16 %v553, %v552
      %v565 = vpack.c.b16 %v555, %v554
      %v566 = vpack.c.b16 %v557, %v556
      %v567 = vpack.c.b16 %v559, %v558
      %576 = vmatprep.subr.bf16.mxu0 0
      %577 = vmatpush1.bf16.msra.mxu0 %v567
      %578 = vmatprep.subr.bf16.mxu0 0
      %579 = vmatpush1.bf16.msra.mxu0 %v566
      %580 = vmatprep.subr.bf16.mxu0 0
      %581 = vmatpush1.bf16.msra.mxu0 %v565
      %582 = vmatprep.subr.bf16.mxu0 0
      %583 = vmatpush1.bf16.msra.mxu0 %v564
      %584 = vmatprep.subr.bf16.mxu0 0
      %585 = vmatpush1.bf16.msra.mxu0 %v563
      %586 = vmatprep.subr.bf16.mxu0 0
      %587 = vmatpush1.bf16.msra.mxu0 %v562
      %588 = vmatprep.subr.bf16.mxu0 0
      %589 = vmatpush1.bf16.msra.mxu0 %v561
      %590 = vmatprep.subr.bf16.mxu0 0
      %591 = vmatpush1.bf16.msra.mxu0 %v560
      %592 = vmatprep.subr.bf16.mxu0 0
      %593 = vmatpush2.bf16.msra.mxu0 0
      %594 = vmatprep.subr.bf16.mxu0 0
      %595 = vmatpush2.bf16.msra.mxu0 0
      %596 = vmatprep.subr.bf16.mxu0 0
      %597 = vmatpush2.bf16.msra.mxu0 0
      %598 = vmatprep.subr.bf16.mxu0 0
      %599 = vmatpush2.bf16.msra.mxu0 0
      %600 = vmatprep.subr.bf16.mxu0 0
      %601 = vmatpush2.bf16.msra.mxu0 0
      %602 = vmatprep.subr.bf16.mxu0 0
      %603 = vmatpush2.bf16.msra.mxu0 0
      %604 = vmatprep.subr.bf16.mxu0 0
      %605 = vmatpush2.bf16.msra.mxu0 0
      %606 = vmatprep.subr.bf16.mxu0 0
      %607 = vmatpush2.bf16.msra.mxu0 0
      %608 = vmatprep.mubr.bf16.mxu0 0
      %609 = vmatmul.mubr.bf16.gmra.mxu0 %v526
      %v610 = vpop.f32.mrf.mxu0
      %v611 = vadd.f32 0.0, %v610
      %v612 = vpop.f32.mrf.mxu0
      %v613 = vpop.f32.mrf.mxu0
      %v614 = vadd.f32 0.0, %v613
      %v615 = vpop.f32.mrf.mxu0
      %616 = vdwg.mxu0
      %v617 = vadd.f32 %v496, %v611
      %v618 = vadd.f32 %v499, %v614
      %v619 = vld [vmem:[#allocation2] sm:$0xff]
      %v620 = vld [vmem:[#allocation2 + $0x8] sm:$0xff]
      %v621 = vadd.f32 %v619, %v617
      %v622 = vadd.f32 %v620, %v618
      %623 = vst [vmem:[#allocation2] sm:$0xff] %v621
      %624 = vst [vmem:[#allocation2 + $0x8] sm:$0xff] %v622
      %s625 = scalar_lea.vmem %s235, 12
      %v626 = vld [vmem:[%s625] sm:$0xf]
      %v627 = vld [vmem:[%s625 + $0x4] sm:$0xf]
      %v628 = vld [vmem:[%s243] sm:$0xf]
      %v629 = vld [vmem:[%s243 + $0x4] sm:$0xf]
      %v630 = vld [vmem:[%s243 + $0x8] sm:$0xf]
      %v631 = vld [vmem:[%s243 + $0xc] sm:$0xf]
      %v632 = vld [vmem:[%s243 + $0x10] sm:$0xf]
      %v633 = vld [vmem:[%s243 + $0x14] sm:$0xf]
      %v634 = vld [vmem:[%s243 + $0x18] sm:$0xf]
      %v635 = vld [vmem:[%s243 + $0x1c] sm:$0xf]
      %v636 = vld [vmem:[%s243 + $0x20] sm:$0xf]
      %v637 = vld [vmem:[%s243 + $0x24] sm:$0xf]
      %v638 = vld [vmem:[%s243 + $0x28] sm:$0xf]
      %v639 = vld [vmem:[%s243 + $0x2c] sm:$0xf]
      %v640 = vld [vmem:[%s243 + $0x30] sm:$0xf]
      %v641 = vld [vmem:[%s243 + $0x34] sm:$0xf]
      %v642 = vld [vmem:[%s243 + $0x38] sm:$0xf]
      %v643 = vld [vmem:[%s243 + $0x3c] sm:$0xf]
      %v644 = vld [vmem:[%s625 + $0x8] sm:$0x1]
      %v645 = vld [vmem:[%s284] sm:$0xf]
      %v646 = vld [vmem:[%s284 + $0x4] sm:$0xf]
      %v647 = vld [vmem:[%s284 + $0x8] sm:$0xf]
      %v648 = vld [vmem:[%s284 + $0xc] sm:$0xf]
      %v649 = vld [vmem:[%s284 + $0x10] sm:$0xf]
      %v650 = vld [vmem:[%s284 + $0x14] sm:$0xf]
      %v651 = vld [vmem:[%s284 + $0x18] sm:$0xf]
      %v652 = vld [vmem:[%s284 + $0x1c] sm:$0xf]
      %v653 = vld [vmem:[%s284 + $0x20] sm:$0xf]
      %v654 = vld [vmem:[%s284 + $0x24] sm:$0xf]
      %v655 = vld [vmem:[%s284 + $0x28] sm:$0xf]
      %v656 = vld [vmem:[%s284 + $0x2c] sm:$0xf]
      %v657 = vld [vmem:[%s284 + $0x30] sm:$0xf]
      %v658 = vld [vmem:[%s284 + $0x34] sm:$0xf]
      %v659 = vld [vmem:[%s284 + $0x38] sm:$0xf]
      %v660 = vld [vmem:[%s284 + $0x3c] sm:$0xf]
      %v664 = vunpack.c.l.b16 %v626
      %v665 = vunpack.c.l.b16 %v627
      %v666 = vunpack.c.l.b16 %v644
      %v667 = vpack.c.b16 %v665, %v664
      %v668 = vpack.c.b16 %v666, %v666
      %v670 = vshrl.u32 %v667, 16
      %v672 = vshll.u32 %v667, 16
      %v674 = vrot.slane %v672, 1
      %v675 = vor.u32 %v670, %v674
      %v677 = vshll.u32 %v668, 16
      %v679 = vrot.slane %v677, 1
      %v680 = vsel %vm309, %v675, %v679
      %v698 = vunpack.c.l.b16 %v645
      %v699 = vunpack.c.l.b16 %v646
      %v700 = vunpack.c.l.b16 %v647
      %v701 = vunpack.c.l.b16 %v648
      %v702 = vunpack.c.l.b16 %v649
      %v703 = vunpack.c.l.b16 %v650
      %v704 = vunpack.c.l.b16 %v651
      %v705 = vunpack.c.l.b16 %v652
      %v706 = vunpack.c.l.b16 %v653
      %v707 = vunpack.c.l.b16 %v654
      %v708 = vunpack.c.l.b16 %v655
      %v709 = vunpack.c.l.b16 %v656
      %v710 = vunpack.c.l.b16 %v657
      %v711 = vunpack.c.l.b16 %v658
      %v712 = vunpack.c.l.b16 %v659
      %v713 = vunpack.c.l.b16 %v660
      %v714 = vpack.c.b16 %v699, %v698
      %v715 = vpack.c.b16 %v701, %v700
      %v716 = vpack.c.b16 %v703, %v702
      %v717 = vpack.c.b16 %v705, %v704
      %v718 = vpack.c.b16 %v707, %v706
      %v719 = vpack.c.b16 %v709, %v708
      %v720 = vpack.c.b16 %v711, %v710
      %v721 = vpack.c.b16 %v713, %v712
      %730 = vmatprep.subr.bf16.mxu0 0
      %731 = vmatpush1.bf16.msra.mxu0 %v721
      %732 = vmatprep.subr.bf16.mxu0 0
      %733 = vmatpush1.bf16.msra.mxu0 %v720
      %734 = vmatprep.subr.bf16.mxu0 0
      %735 = vmatpush1.bf16.msra.mxu0 %v719
      %736 = vmatprep.subr.bf16.mxu0 0
      %737 = vmatpush1.bf16.msra.mxu0 %v718
      %738 = vmatprep.subr.bf16.mxu0 0
      %739 = vmatpush1.bf16.msra.mxu0 %v717
      %740 = vmatprep.subr.bf16.mxu0 0
      %741 = vmatpush1.bf16.msra.mxu0 %v716
      %742 = vmatprep.subr.bf16.mxu0 0
      %743 = vmatpush1.bf16.msra.mxu0 %v715
      %744 = vmatprep.subr.bf16.mxu0 0
      %745 = vmatpush1.bf16.msra.mxu0 %v714
      %746 = vmatprep.subr.bf16.mxu0 0
      %747 = vmatpush2.bf16.msra.mxu0 0
      %748 = vmatprep.subr.bf16.mxu0 0
      %749 = vmatpush2.bf16.msra.mxu0 0
      %750 = vmatprep.subr.bf16.mxu0 0
      %751 = vmatpush2.bf16.msra.mxu0 0
      %752 = vmatprep.subr.bf16.mxu0 0
      %753 = vmatpush2.bf16.msra.mxu0 0
      %754 = vmatprep.subr.bf16.mxu0 0
      %755 = vmatpush2.bf16.msra.mxu0 0
      %756 = vmatprep.subr.bf16.mxu0 0
      %757 = vmatpush2.bf16.msra.mxu0 0
      %758 = vmatprep.subr.bf16.mxu0 0
      %759 = vmatpush2.bf16.msra.mxu0 0
      %760 = vmatprep.subr.bf16.mxu0 0
      %761 = vmatpush2.bf16.msra.mxu0 0
      %762 = vmatprep.mubr.bf16.mxu0 0
      %763 = vmatmul.mubr.bf16.gmra.mxu0 %v680
      %v764 = vpop.f32.mrf.mxu0
      %v765 = vadd.f32 0.0, %v764
      %v766 = vpop.f32.mrf.mxu0
      %v767 = vpop.f32.mrf.mxu0
      %v768 = vadd.f32 0.0, %v767
      %v769 = vpop.f32.mrf.mxu0
      %770 = vdwg.mxu0
      %v788 = vunpack.c.l.b16 %v628
      %v789 = vunpack.c.l.b16 %v629
      %v790 = vunpack.c.l.b16 %v630
      %v791 = vunpack.c.l.b16 %v631
      %v792 = vunpack.c.l.b16 %v632
      %v793 = vunpack.c.l.b16 %v633
      %v794 = vunpack.c.l.b16 %v634
      %v795 = vunpack.c.l.b16 %v635
      %v796 = vunpack.c.l.b16 %v636
      %v797 = vunpack.c.l.b16 %v637
      %v798 = vunpack.c.l.b16 %v638
      %v799 = vunpack.c.l.b16 %v639
      %v800 = vunpack.c.l.b16 %v640
      %v801 = vunpack.c.l.b16 %v641
      %v802 = vunpack.c.l.b16 %v642
      %v803 = vunpack.c.l.b16 %v643
      %v804 = vpack.c.b16 %v789, %v788
      %v805 = vpack.c.b16 %v791, %v790
      %v806 = vpack.c.b16 %v793, %v792
      %v807 = vpack.c.b16 %v795, %v794
      %v808 = vpack.c.b16 %v797, %v796
      %v809 = vpack.c.b16 %v799, %v798
      %v810 = vpack.c.b16 %v801, %v800
      %v811 = vpack.c.b16 %v803, %v802
      %820 = vmatprep.subr.bf16.mxu0 0
      %821 = vmatpush1.bf16.msra.mxu0 %v811
      %822 = vmatprep.subr.bf16.mxu0 0
      %823 = vmatpush1.bf16.msra.mxu0 %v810
      %824 = vmatprep.subr.bf16.mxu0 0
      %825 = vmatpush1.bf16.msra.mxu0 %v809
      %826 = vmatprep.subr.bf16.mxu0 0
      %827 = vmatpush1.bf16.msra.mxu0 %v808
      %828 = vmatprep.subr.bf16.mxu0 0
      %829 = vmatpush1.bf16.msra.mxu0 %v807
      %830 = vmatprep.subr.bf16.mxu0 0
      %831 = vmatpush1.bf16.msra.mxu0 %v806
      %832 = vmatprep.subr.bf16.mxu0 0
      %833 = vmatpush1.bf16.msra.mxu0 %v805
      %834 = vmatprep.subr.bf16.mxu0 0
      %835 = vmatpush1.bf16.msra.mxu0 %v804
      %836 = vmatprep.subr.bf16.mxu0 0
      %837 = vmatpush2.bf16.msra.mxu0 0
      %838 = vmatprep.subr.bf16.mxu0 0
      %839 = vmatpush2.bf16.msra.mxu0 0
      %840 = vmatprep.subr.bf16.mxu0 0
      %841 = vmatpush2.bf16.msra.mxu0 0
      %842 = vmatprep.subr.bf16.mxu0 0
      %843 = vmatpush2.bf16.msra.mxu0 0
      %844 = vmatprep.subr.bf16.mxu0 0
      %845 = vmatpush2.bf16.msra.mxu0 0
      %846 = vmatprep.subr.bf16.mxu0 0
      %847 = vmatpush2.bf16.msra.mxu0 0
      %848 = vmatprep.subr.bf16.mxu0 0
      %849 = vmatpush2.bf16.msra.mxu0 0
      %850 = vmatprep.subr.bf16.mxu0 0
      %851 = vmatpush2.bf16.msra.mxu0 0
      %852 = vmatprep.mubr.bf16.mxu0 0
      %853 = vmatmul.mubr.bf16.gmra.mxu0 %v667
      %v854 = vpop.f32.mrf.mxu0
      %v855 = vadd.f32 %v765, %v854
      %v856 = vpop.f32.mrf.mxu0
      %v857 = vpop.f32.mrf.mxu0
      %v858 = vadd.f32 %v768, %v857
      %v859 = vpop.f32.mrf.mxu0
      %860 = vdwg.mxu0
      %v861 = vld [vmem:[%s625] sm:$0xe]
      %v862 = vld [vmem:[%s503] sm:$0xf]
      %v863 = vld [vmem:[%s503 + $0x4] sm:$0xf]
      %v864 = vld [vmem:[%s503 + $0x8] sm:$0xf]
      %v865 = vld [vmem:[%s503 + $0xc] sm:$0xf]
      %v866 = vld [vmem:[%s503 + $0x10] sm:$0xf]
      %v867 = vld [vmem:[%s503 + $0x14] sm:$0xf]
      %v868 = vld [vmem:[%s503 + $0x18] sm:$0xf]
      %v869 = vld [vmem:[%s503 + $0x1c] sm:$0xf]
      %v870 = vld [vmem:[%s503 + $0x20] sm:$0xf]
      %v871 = vld [vmem:[%s503 + $0x24] sm:$0xf]
      %v872 = vld [vmem:[%s503 + $0x28] sm:$0xf]
      %v873 = vld [vmem:[%s503 + $0x2c] sm:$0xf]
      %v874 = vld [vmem:[%s503 + $0x30] sm:$0xf]
      %v875 = vld [vmem:[%s503 + $0x34] sm:$0xf]
      %v876 = vld [vmem:[%s503 + $0x38] sm:$0xf]
      %v877 = vld [vmem:[%s503 + $0x3c] sm:$0xf]
      %v879 = vunpack.c.l.b16 %v861
      %v880 = vpack.c.b16 %v665, %v879
      %v881 = vrot.slane %v880, 1
      %v882 = vrot.slane %v668, 1
      %v883 = vsel %vm523, %v881, %v882
      %v901 = vunpack.c.l.b16 %v862
      %v902 = vunpack.c.l.b16 %v863
      %v903 = vunpack.c.l.b16 %v864
      %v904 = vunpack.c.l.b16 %v865
      %v905 = vunpack.c.l.b16 %v866
      %v906 = vunpack.c.l.b16 %v867
      %v907 = vunpack.c.l.b16 %v868
      %v908 = vunpack.c.l.b16 %v869
      %v909 = vunpack.c.l.b16 %v870
      %v910 = vunpack.c.l.b16 %v871
      %v911 = vunpack.c.l.b16 %v872
      %v912 = vunpack.c.l.b16 %v873
      %v913 = vunpack.c.l.b16 %v874
      %v914 = vunpack.c.l.b16 %v875
      %v915 = vunpack.c.l.b16 %v876
      %v916 = vunpack.c.l.b16 %v877
      %v917 = vpack.c.b16 %v902, %v901
      %v918 = vpack.c.b16 %v904, %v903
      %v919 = vpack.c.b16 %v906, %v905
      %v920 = vpack.c.b16 %v908, %v907
      %v921 = vpack.c.b16 %v910, %v909
      %v922 = vpack.c.b16 %v912, %v911
      %v923 = vpack.c.b16 %v914, %v913
      %v924 = vpack.c.b16 %v916, %v915
      %933 = vmatprep.subr.bf16.mxu0 0
      %934 = vmatpush1.bf16.msra.mxu0 %v924
      %935 = vmatprep.subr.bf16.mxu0 0
      %936 = vmatpush1.bf16.msra.mxu0 %v923
      %937 = vmatprep.subr.bf16.mxu0 0
      %938 = vmatpush1.bf16.msra.mxu0 %v922
      %939 = vmatprep.subr.bf16.mxu0 0
      %940 = vmatpush1.bf16.msra.mxu0 %v921
      %941 = vmatprep.subr.bf16.mxu0 0
      %942 = vmatpush1.bf16.msra.mxu0 %v920
      %943 = vmatprep.subr.bf16.mxu0 0
      %944 = vmatpush1.bf16.msra.mxu0 %v919
      %945 = vmatprep.subr.bf16.mxu0 0
      %946 = vmatpush1.bf16.msra.mxu0 %v918
      %947 = vmatprep.subr.bf16.mxu0 0
      %948 = vmatpush1.bf16.msra.mxu0 %v917
      %949 = vmatprep.subr.bf16.mxu0 0
      %950 = vmatpush2.bf16.msra.mxu0 0
      %951 = vmatprep.subr.bf16.mxu0 0
      %952 = vmatpush2.bf16.msra.mxu0 0
      %953 = vmatprep.subr.bf16.mxu0 0
      %954 = vmatpush2.bf16.msra.mxu0 0
      %955 = vmatprep.subr.bf16.mxu0 0
      %956 = vmatpush2.bf16.msra.mxu0 0
      %957 = vmatprep.subr.bf16.mxu0 0
      %958 = vmatpush2.bf16.msra.mxu0 0
      %959 = vmatprep.subr.bf16.mxu0 0
      %960 = vmatpush2.bf16.msra.mxu0 0
      %961 = vmatprep.subr.bf16.mxu0 0
      %962 = vmatpush2.bf16.msra.mxu0 0
      %963 = vmatprep.subr.bf16.mxu0 0
      %964 = vmatpush2.bf16.msra.mxu0 0
      %965 = vmatprep.mubr.bf16.mxu0 0
      %966 = vmatmul.mubr.bf16.gmra.mxu0 %v883
      %v967 = vpop.f32.mrf.mxu0
      %v968 = vadd.f32 0.0, %v967
      %v969 = vpop.f32.mrf.mxu0
      %v970 = vpop.f32.mrf.mxu0
      %v971 = vadd.f32 0.0, %v970
      %v972 = vpop.f32.mrf.mxu0
      %973 = vdwg.mxu0
      %v974 = vadd.f32 %v855, %v968
      %v975 = vadd.f32 %v858, %v971
      %s976 = scalar_lea.vmem [#allocation2], 16
      %v977 = vld [vmem:[%s976] sm:$0xff]
      %v978 = vld [vmem:[%s976 + $0x8] sm:$0xff]
      %v979 = vadd.f32 %v977, %v974
      %v980 = vadd.f32 %v978, %v975
      %981 = vst [vmem:[%s976] sm:$0xff] %v979
      %982 = vst [vmem:[%s976 + $0x8] sm:$0xff] %v980
      // Predicated region
      $region37: #{mds_forward.7} parent=31 // pred_check
        %p983 = pneg %p257
      $region38: #{mds_forward.7} parent=31 // pred_check_branch
        %985 = sbr.rel (%p983) target = $region40
      $region39: #{mds_forward.7} parent=31 // pred_region
        %v986 = vld [vmem:[#allocation2] sm:$0xff]
        %v987 = vld [vmem:[#allocation2 + $0x8] sm:$0xff]
        %v988 = vld [vmem:[#allocation2 + $0x10] sm:$0xff]
        %v989 = vld [vmem:[#allocation2 + $0x18] sm:$0xff]
        %v990 = vld [vmem:[%s247] sm:$0x1]
        %v992 = vlaneseq
        %v993 = vshrl.u32 %v992, 7
        %v994 = vsub.s32 0, %v993
        %v995 = vrot.slane %v990, %v994
        %v997 = vadd.f32 %v986, %v995
        %v998 = vadd.f32 %v987, %v995
        %v999 = vadd.f32 %v988, %v995
        %v1000 = vadd.f32 %v989, %v995
        %v1001 = vmax.f32 %v997, 0.0
        %v1002 = vmax.f32 %v998, 0.0
        %v1003 = vmax.f32 %v999, 0.0
        %v1004 = vmax.f32 %v1000, 0.0
        %v1005 = vpack.c.bf16 %v1002, %v1001
        %v1006 = vpack.c.bf16 %v1004, %v1003
        %v1009 = vunpack.c.l.b16 %v1005
        %v1010 = vunpack.c.h.b16 %v1005
        %v1011 = vunpack.c.l.b16 %v1006
        %v1012 = vunpack.c.h.b16 %v1006
        %v1013 = vpack.c.b16 %v1009, %v1009
        %v1014 = vpack.c.b16 %v1010, %v1010
        %v1015 = vpack.c.b16 %v1011, %v1011
        %v1016 = vpack.c.b16 %v1012, %v1012
        %1021 = vst [vmem:[%s255] sm:$0xf] %v1013
        %1022 = vst [vmem:[%s255 + $0x4] sm:$0xf] %v1014
        %1023 = vst [vmem:[%s255 + $0x8] sm:$0xf] %v1015
        %1024 = vst [vmem:[%s255 + $0xc] sm:$0xf] %v1016
      $region40: #{mds_forward.7} parent=31 // pred_fallthru
        _
      %p1025 = scmp.lt.s32.totalorder %s19, 1
      %s1026 = scalar_select %p1025, %s19, 1
      %p1027 = scmp.lt.s32.totalorder %s20, 0
      %s1028 = scalar_select %p1027, %s20, 0
      %s1029 = smul.addr %s1026, 4
      %s1030 = sadd.s32 %s1028, %s1029
      %s1031 = smul.addr %s1030, 4
      %s1032 = scalar_lea.vmem %s3, %s1031
      // Predicated region
      $region41: #{mds_forward.7} parent=31 // pred_check
        %p1033 = pneg %p135
      $region42: #{mds_forward.7} parent=31 // pred_check_branch
        %1035 = sbr.rel (%p1033) target = $region44
      $region43: #{mds_forward.7} parent=31 // pred_region
        _
      $region44: #{mds_forward.7} parent=31 // pred_fallthru
        _
    $region32: #{mds_forward.7} parent=5 // pred_fallthru
      _
    %p1036 = scmp.le.s32.totalorder 2, %s9
    // Predicated region
    $region45: #{mds_forward.7} parent=5 // pred_check
      %p1037 = pneg %p1036
    $region46: #{mds_forward.7} parent=5 // pred_check_branch
      %1039 = sbr.rel (%p1037) target = $region48
    $region47: #{mds_forward.7} parent=5 // pred_region
      %s1040 = ssub.s32 %s9, 2
      // Predicated region
      $region49: #{mds_forward.7} parent=47 // pred_check
        %p1041 = pneg %p141
      $region50: #{mds_forward.7} parent=47 // pred_check_branch
        %1043 = sbr.rel (%p1041) target = $region52
      $region51: #{mds_forward.7} parent=47 // pred_region
        %p1044 = scmp.lt.s32.totalorder %s22, 1
        %s1045 = scalar_select %p1044, %s22, 1
        %p1046 = scmp.lt.s32.totalorder %s23, 0
        %s1047 = scalar_select %p1046, %s23, 0
        %s1048 = smul.addr %s1045, 4
        %s1049 = sadd.s32 %s1047, %s1048
        %s1050 = smul.addr %s1049, 4
        %s1051 = scalar_lea.vmem %s3, %s1050
      $region52: #{mds_forward.7} parent=47 // pred_fallthru
        _
    $region48: #{mds_forward.7} parent=5 // pred_fallthru
      _
  $region6: #{mds_forward.7} parent=0 // loop_footer
    %s13 = sadd.s32 1, %s9
  $region7: #{mds_forward.7} parent=0 // loop_footer_branch
    %8 = sbr.rel target = $region3
  $region8: #{mds_forward.7} parent=0 // loop_exit
    _

// kernel: mds_forward.8
$region0: #{mds_forward.8}
  #allocation0 [shape = 'u32[]', space=smem, size = 0x4, offset = 0x4, fixed_abs, tag = 'smem constant byte address 0x4 - core index']
  #allocation1 [shape = 'u32[144,128]{1,0:T(1,128)}', space=vmem, size = 0x12000, scoped, tag = 'internal scratch']
  #allocation2 [shape = 'f32[2,16,128]{2,1,0:T(8,128)}', space=vmem, size = 0x4000, scoped, tag = 'scratch operand']
  %s0 = inlined_call_operand.vmem [shape: bf16[2,4,16,128], index: 0, kind: input, shape index: {}]
  %s1 = inlined_call_operand.vmem [shape: bf16[3,128,128], index: 1, kind: input, shape index: {}]
  %s2 = inlined_call_operand.vmem [shape: f32[1,128], index: 2, kind: input, shape index: {}]
  %s3 = inlined_call_operand.vmem [shape: bf16[2,2,16,128], index: 3, kind: output, shape index: {}]
  %s4 = sld [smem:[#allocation0]]
  $region53: #{mds_forward.8} parent=0
    _
  %s6 = ssub.s32 1, %s4
  %s7 = scalar_select 0, %s6, %s4
  loop: start=0, step=1, limit=4
  $region2: #{mds_forward.8} parent=0 // loop_pre_header
    _
  $region3: #{mds_forward.8} parent=0 // loop_header
    %s9 = sphi 0, %s13
    %p10 = scmp.ge.s32.totalorder %s9, 4
    %s16 = sphi 0, %s35
    %s17 = sphi 0, %s31
    %s18 = sphi 0, %s27
    %s19 = sphi 0, %s16
    %s20 = sphi 0, %s17
    %s21 = sphi 0, %s18
    %s22 = sphi 0, %s19
    %s23 = sphi 0, %s20
    %s24 = sphi 0, %s21
    %s40 = sphi 0, %s42
    %s43 = sphi 0, %s40
    %s44 = sphi 0, %s43
    %s60 = sphi 0, %s44
    %s68 = sphi 0, %s70
    %s71 = sphi 0, %s68
    %s72 = sphi 0, %s71
    %s88 = sphi 0, %s72
    %s94 = sphi 0, %s96
    %s97 = sphi 0, %s94
    %s98 = sphi 0, %s97
    %s114 = sphi 0, %s98
    %s122 = sphi 0, %s124
    %s125 = sphi 0, %s122
    %s126 = sphi 0, %s125
    %s142 = sphi 0, %s126
  $region4: #{mds_forward.8} parent=0 // loop_header_branch
    %12 = sbr.rel (%p10) target = $region8
  $region5: #{mds_forward.8} parent=0 // loop_body
    %s14 = ssub.s32 %s9, 1
    %s15 = ssub.s32 %s9, 2
    %s25 = sadd.s32 1, %s18
    %p26 = scmp.ge.s32.totalorder %s25, 1
    %s27 = scalar_select %p26, 0, %s25
    %s28 = sadd.s32 1, %s17
    %s29 = scalar_select %p26, %s28, %s17
    %p30 = scmp.ge.s32.totalorder %s29, 1
    %s31 = scalar_select %p30, 0, %s29
    %s32 = sadd.s32 1, %s16
    %s33 = scalar_select %p30, %s32, %s16
    %p34 = scmp.ge.s32.totalorder %s33, 2
    %s35 = scalar_select %p34, 0, %s33
    %s36 = ssub.s32 %s16, %s35
    %s37 = ssub.s32 %s18, %s27
    %s38 = sor.u32 %s36, %s37
    %p39 = scmp.eq.s32.totalorder %s38, 0
    %s41 = sadd.s32 %s40, 1
    %s42 = scalar_select %p39, %s40, %s41
    %p45 = pneg %p39
    %p46 = scmp.eq.s32.totalorder %s9, 1
    %p47 = por %p45, %p46
    %p48 = scmp.ne.s32.totalorder %s40, %s43
    %p49 = scmp.eq.s32.totalorder %s9, 0
    %p50 = por %p48, %p49
    %p51 = scmp.ne.s32.totalorder %s40, %s43
    %p52 = scmp.eq.s32.totalorder %s14, 1
    %p53 = por %p51, %p52
    %p54 = scmp.ne.s32.totalorder %s43, %s44
    %p55 = scmp.eq.s32.totalorder %s14, 0
    %p56 = por %p54, %p55
    %p57 = scmp.ne.s32.totalorder %s43, %s44
    %p58 = scmp.eq.s32.totalorder %s15, 1
    %p59 = por %p57, %p58
    %p61 = scmp.ne.s32.totalorder %s44, %s60
    %p62 = scmp.eq.s32.totalorder %s15, 0
    %p63 = por %p61, %p62
    %s64 = ssub.s32 %s18, %s27
    %s65 = ssub.s32 %s17, %s31
    %s66 = sor.u32 %s64, %s65
    %p67 = scmp.eq.s32.totalorder %s66, 0
    %s69 = sadd.s32 %s68, 1
    %s70 = scalar_select %p67, %s68, %s69
    %p73 = pneg %p67
    %p74 = scmp.eq.s32.totalorder %s9, 1
    %p75 = por %p73, %p74
    %p76 = scmp.ne.s32.totalorder %s68, %s71
    %p77 = scmp.eq.s32.totalorder %s9, 0
    %p78 = por %p76, %p77
    %p79 = scmp.ne.s32.totalorder %s68, %s71
    %p80 = scmp.eq.s32.totalorder %s14, 1
    %p81 = por %p79, %p80
    %p82 = scmp.ne.s32.totalorder %s71, %s72
    %p83 = scmp.eq.s32.totalorder %s14, 0
    %p84 = por %p82, %p83
    %p85 = scmp.ne.s32.totalorder %s71, %s72
    %p86 = scmp.eq.s32.totalorder %s15, 1
    %p87 = por %p85, %p86
    %p89 = scmp.ne.s32.totalorder %s72, %s88
    %p90 = scmp.eq.s32.totalorder %s15, 0
    %p91 = por %p89, %p90
    %s92 = ssub.s32 %s17, %s31
    %p93 = scmp.eq.s32.totalorder %s92, 0
    %s95 = sadd.s32 %s94, 1
    %s96 = scalar_select %p93, %s94, %s95
    %p99 = pneg %p93
    %p100 = scmp.eq.s32.totalorder %s9, 1
    %p101 = por %p99, %p100
    %p102 = scmp.ne.s32.totalorder %s94, %s97
    %p103 = scmp.eq.s32.totalorder %s9, 0
    %p104 = por %p102, %p103
    %p105 = scmp.ne.s32.totalorder %s94, %s97
    %p106 = scmp.eq.s32.totalorder %s14, 1
    %p107 = por %p105, %p106
    %p108 = scmp.ne.s32.totalorder %s97, %s98
    %p109 = scmp.eq.s32.totalorder %s14, 0
    %p110 = por %p108, %p109
    %p111 = scmp.ne.s32.totalorder %s97, %s98
    %p112 = scmp.eq.s32.totalorder %s15, 1
    %p113 = por %p111, %p112
    %p115 = scmp.ne.s32.totalorder %s98, %s114
    %p116 = scmp.eq.s32.totalorder %s15, 0
    %p117 = por %p115, %p116
    %s118 = ssub.s32 %s16, %s35
    %s119 = ssub.s32 %s17, %s31
    %s120 = sor.u32 %s118, %s119
    %p121 = scmp.eq.s32.totalorder %s120, 0
    %s123 = sadd.s32 %s122, 1
    %s124 = scalar_select %p121, %s122, %s123
    %p127 = pneg %p121
    %p128 = scmp.eq.s32.totalorder %s9, 1
    %p129 = por %p127, %p128
    %p130 = scmp.ne.s32.totalorder %s122, %s125
    %p131 = scmp.eq.s32.totalorder %s9, 0
    %p132 = por %p130, %p131
    %p133 = scmp.ne.s32.totalorder %s122, %s125
    %p134 = scmp.eq.s32.totalorder %s14, 1
    %p135 = por %p133, %p134
    %p136 = scmp.ne.s32.totalorder %s125, %s126
    %p137 = scmp.eq.s32.totalorder %s14, 0
    %p138 = por %p136, %p137
    %p139 = scmp.ne.s32.totalorder %s125, %s126
    %p140 = scmp.eq.s32.totalorder %s15, 1
    %p141 = por %p139, %p140
    %p143 = scmp.ne.s32.totalorder %s126, %s142
    %p144 = scmp.eq.s32.totalorder %s15, 0
    %p145 = por %p143, %p144
    %p146 = scmp.le.s32.totalorder 1, %s9
    %p147 = scmp.lt.s32.totalorder %s9, 3
    %p148 = pnand %p146, %p147
    %p149 = pneg %p148
    // Predicated region
    $region9: #{mds_forward.8} parent=5 // pred_check
      _
    $region10: #{mds_forward.8} parent=5 // pred_check_branch
      %151 = sbr.rel (%p148) target = $region12
    $region11: #{mds_forward.8} parent=5 // pred_region
      %s152 = ssub.s32 %s9, 1
      // Predicated region
      $region13: #{mds_forward.8} parent=11 // pred_check
        %p153 = pneg %p84
      $region14: #{mds_forward.8} parent=11 // pred_check_branch
        %155 = sbr.rel (%p153) target = $region16
      $region15: #{mds_forward.8} parent=11 // pred_region
        %s156 = smul.u32 16, %s21
        %p157 = scmp.lt.s32.totalorder %s156, 15
        %s158 = scalar_select %p157, %s156, 15
        %p159 = scmp.lt.s32.totalorder %s20, 0
        %s160 = scalar_select %p159, %s20, 0
        %s161 = sadd.s32 %s160, %s158
        %s162 = smul.addr %s161, 4
        %s163 = scalar_lea.vmem %s1, %s162
        %s164 = smul.u32 16, %s21
      $region16: #{mds_forward.8} parent=11 // pred_fallthru
        _
      // Predicated region
      $region17: #{mds_forward.8} parent=11 // pred_check
        %p165 = pneg %p110
      $region18: #{mds_forward.8} parent=11 // pred_check_branch
        %167 = sbr.rel (%p165) target = $region20
      $region19: #{mds_forward.8} parent=11 // pred_region
        %p168 = scmp.lt.s32.totalorder %s20, 0
        %s169 = scalar_select %p168, %s20, 0
        %s170 = scalar_lea.vmem %s2, %s169
      $region20: #{mds_forward.8} parent=11 // pred_fallthru
        _
    $region12: #{mds_forward.8} parent=5 // pred_fallthru
      _
    %p171 = scmp.lt.s32.totalorder %s9, 2
    // Predicated region
    $region21: #{mds_forward.8} parent=5 // pred_check
      %p172 = pneg %p171
    $region22: #{mds_forward.8} parent=5 // pred_check_branch
      %174 = sbr.rel (%p172) target = $region24
    $region23: #{mds_forward.8} parent=5 // pred_region
      // Predicated region
      $region25: #{mds_forward.8} parent=23 // pred_check
        %p175 = pneg %p50
      $region26: #{mds_forward.8} parent=23 // pred_check_branch
        %177 = sbr.rel (%p175) target = $region28
      $region27: #{mds_forward.8} parent=23 // pred_region
        %p178 = scmp.lt.s32.totalorder %s16, 1
        %s179 = scalar_select %p178, %s16, 1
        %p180 = scmp.lt.s32.totalorder %s18, 0
        %s181 = scalar_select %p180, %s18, 0
        %s182 = smul.addr %s179, 8
        %s183 = sadd.s32 %s181, %s182
        %s184 = smul.addr %s183, 4
        %s185 = scalar_lea.vmem %s0, %s184
      $region28: #{mds_forward.8} parent=23 // pred_fallthru
        _
    $region24: #{mds_forward.8} parent=5 // pred_fallthru
      _
    %p186 = scmp.le.s32.totalorder 1, %s9
    %p187 = scmp.lt.s32.totalorder %s9, 3
    %p188 = pnand %p186, %p187
    %p189 = pneg %p188
    // Predicated region
    $region29: #{mds_forward.8} parent=5 // pred_check
      _
    $region30: #{mds_forward.8} parent=5 // pred_check_branch
      %191 = sbr.rel (%p188) target = $region32
    $region31: #{mds_forward.8} parent=5 // pred_region
      %s192 = ssub.s32 %s9, 1
      %p193 = scmp.lt.s32.totalorder %s19, 1
      %s194 = scalar_select %p193, %s19, 1
      %p195 = scmp.lt.s32.totalorder %s21, 0
      %s196 = scalar_select %p195, %s21, 0
      %s197 = smul.addr %s194, 8
      %s198 = sadd.s32 %s196, %s197
      %s199 = smul.addr %s198, 4
      %s200 = scalar_lea.vmem %s0, %s199
      %p201 = pneg %p56
      %p202 = pneg %p53
      %s203 = smul.u32 16, %s21
      %p204 = scmp.lt.s32.totalorder %s203, 15
      %s205 = scalar_select %p204, %s203, 15
      %p206 = scmp.lt.s32.totalorder %s20, 0
      %s207 = scalar_select %p206, %s20, 0
      %s208 = sadd.s32 %s207, %s205
      %s209 = smul.addr %s208, 4
      %s210 = scalar_lea.vmem %s1, %s209
      %p211 = pneg %p84
      %p212 = pneg %p81
      %p213 = scmp.lt.s32.totalorder %s20, 0
      %s214 = scalar_select %p213, %s20, 0
      %s215 = scalar_lea.vmem %s2, %s214
      %p216 = pneg %p110
      %p217 = pneg %p107
      %p218 = pneg %p138
      %p219 = pneg %p135
      %p220 = scmp.lt.s32.totalorder %s19, 1
      %s221 = scalar_select %p220, %s19, 1
      %p222 = scmp.lt.s32.totalorder %s20, 0
      %s223 = scalar_select %p222, %s20, 0
      %s224 = smul.addr %s221, 4
      %s225 = sadd.s32 %s223, %s224
      %s226 = smul.addr %s225, 4
      %s227 = scalar_lea.vmem %s3, %s226
      %p228 = scmp.lt.s32.totalorder %s19, 1
      %s229 = scalar_select %p228, %s19, 1
      %p230 = scmp.lt.s32.totalorder %s21, 0
      %s231 = scalar_select %p230, %s21, 0
      %s232 = smul.addr %s229, 8
      %s233 = sadd.s32 %s231, %s232
      %s234 = smul.addr %s233, 4
      %s235 = scalar_lea.vmem %s0, %s234
      %s236 = smul.u32 16, %s21
      %p237 = scmp.lt.s32.totalorder %s236, 15
      %s238 = scalar_select %p237, %s236, 15
      %p239 = scmp.lt.s32.totalorder %s20, 0
      %s240 = scalar_select %p239, %s20, 0
      %s241 = sadd.s32 %s240, %s238
      %s242 = smul.addr %s241, 4
      %s243 = scalar_lea.vmem %s1, %s242
      %s244 = smul.u32 16, %s21
      %p245 = scmp.lt.s32.totalorder %s20, 0
      %s246 = scalar_select %p245, %s20, 0
      %s247 = scalar_lea.vmem %s2, %s246
      %p248 = scmp.lt.s32.totalorder %s19, 1
      %s249 = scalar_select %p248, %s19, 1
      %p250 = scmp.lt.s32.totalorder %s20, 0
      %s251 = scalar_select %p250, %s20, 0
      %s252 = smul.addr %s249, 4
      %s253 = sadd.s32 %s251, %s252
      %s254 = smul.addr %s253, 4
      %s255 = scalar_lea.vmem %s3, %s254
      %p257 = scmp.eq.s32.totalorder %s21, 0
      // Predicated region
      $region33: #{mds_forward.8} parent=31 // pred_check
        %p258 = pneg %p257
      $region34: #{mds_forward.8} parent=31 // pred_check_branch
        %260 = sbr.rel (%p258) target = $region36
      $region35: #{mds_forward.8} parent=31 // pred_region
        %261 = vst [vmem:[#allocation2] sm:$0xff] 0.0
        %262 = vst [vmem:[#allocation2 + $0x8] sm:$0xff] 0.0
        %263 = vst [vmem:[#allocation2 + $0x10] sm:$0xff] 0.0
        %264 = vst [vmem:[#allocation2 + $0x18] sm:$0xff] 0.0
      $region36: #{mds_forward.8} parent=31 // pred_fallthru
        _
      %s265 = scalar_lea.vmem %s235, 8
      %v266 = vld [vmem:[%s265] sm:$0xf]
      %v267 = vld [vmem:[%s265 + $0x4] sm:$0xf]
      %s268 = scalar_lea.vmem %s243, 64
      %v269 = vld [vmem:[%s268] sm:$0xf]
      %v270 = vld [vmem:[%s268 + $0x4] sm:$0xf]
      %v271 = vld [vmem:[%s268 + $0x8] sm:$0xf]
      %v272 = vld [vmem:[%s268 + $0xc] sm:$0xf]
      %v273 = vld [vmem:[%s268 + $0x10] sm:$0xf]
      %v274 = vld [vmem:[%s268 + $0x14] sm:$0xf]
      %v275 = vld [vmem:[%s268 + $0x18] sm:$0xf]
      %v276 = vld [vmem:[%s268 + $0x1c] sm:$0xf]
      %v277 = vld [vmem:[%s268 + $0x20] sm:$0xf]
      %v278 = vld [vmem:[%s268 + $0x24] sm:$0xf]
      %v279 = vld [vmem:[%s268 + $0x28] sm:$0xf]
      %v280 = vld [vmem:[%s268 + $0x2c] sm:$0xf]
      %v281 = vld [vmem:[%s268 + $0x30] sm:$0xf]
      %v282 = vld [vmem:[%s268 + $0x34] sm:$0xf]
      %v283 = vld [vmem:[%s268 + $0x38] sm:$0xf]
      %v284 = vld [vmem:[%s268 + $0x3c] sm:$0xf]
      %s285 = scalar_lea.vmem %s235, 16
      %v286 = vld [vmem:[%s285] sm:$0xf]
      %v287 = vld [vmem:[%s285 + $0x4] sm:$0xf]
      %s288 = scalar_lea.vmem %s243, 128
      %v289 = vld [vmem:[%s288] sm:$0xf]
      %v290 = vld [vmem:[%s288 + $0x4] sm:$0xf]
      %v291 = vld [vmem:[%s288 + $0x8] sm:$0xf]
      %v292 = vld [vmem:[%s288 + $0xc] sm:$0xf]
      %v293 = vld [vmem:[%s288 + $0x10] sm:$0xf]
      %v294 = vld [vmem:[%s288 + $0x14] sm:$0xf]
      %v295 = vld [vmem:[%s288 + $0x18] sm:$0xf]
      %v296 = vld [vmem:[%s288 + $0x1c] sm:$0xf]
      %v297 = vld [vmem:[%s288 + $0x20] sm:$0xf]
      %v298 = vld [vmem:[%s288 + $0x24] sm:$0xf]
      %v299 = vld [vmem:[%s288 + $0x28] sm:$0xf]
      %v300 = vld [vmem:[%s288 + $0x2c] sm:$0xf]
      %v301 = vld [vmem:[%s288 + $0x30] sm:$0xf]
      %v302 = vld [vmem:[%s288 + $0x34] sm:$0xf]
      %v303 = vld [vmem:[%s288 + $0x38] sm:$0xf]
      %v304 = vld [vmem:[%s288 + $0x3c] sm:$0xf]
      %v307 = vunpack.c.l.b16 %v286
      %v308 = vunpack.c.l.b16 %v287
      %v309 = vpack.c.b16 %v308, %v307
      %v327 = vunpack.c.l.b16 %v289
      %v328 = vunpack.c.l.b16 %v290
      %v329 = vunpack.c.l.b16 %v291
      %v330 = vunpack.c.l.b16 %v292
      %v331 = vunpack.c.l.b16 %v293
      %v332 = vunpack.c.l.b16 %v294
      %v333 = vunpack.c.l.b16 %v295
      %v334 = vunpack.c.l.b16 %v296
      %v335 = vunpack.c.l.b16 %v297
      %v336 = vunpack.c.l.b16 %v298
      %v337 = vunpack.c.l.b16 %v299
      %v338 = vunpack.c.l.b16 %v300
      %v339 = vunpack.c.l.b16 %v301
      %v340 = vunpack.c.l.b16 %v302
      %v341 = vunpack.c.l.b16 %v303
      %v342 = vunpack.c.l.b16 %v304
      %v343 = vpack.c.b16 %v328, %v327
      %v344 = vpack.c.b16 %v330, %v329
      %v345 = vpack.c.b16 %v332, %v331
      %v346 = vpack.c.b16 %v334, %v333
      %v347 = vpack.c.b16 %v336, %v335
      %v348 = vpack.c.b16 %v338, %v337
      %v349 = vpack.c.b16 %v340, %v339
      %v350 = vpack.c.b16 %v342, %v341
      %359 = vmatprep.subr.bf16.mxu0 0
      %360 = vmatpush1.bf16.msra.mxu0 %v350
      %361 = vmatprep.subr.bf16.mxu0 0
      %362 = vmatpush1.bf16.msra.mxu0 %v349
      %363 = vmatprep.subr.bf16.mxu0 0
      %364 = vmatpush1.bf16.msra.mxu0 %v348
      %365 = vmatprep.subr.bf16.mxu0 0
      %366 = vmatpush1.bf16.msra.mxu0 %v347
      %367 = vmatprep.subr.bf16.mxu0 0
      %368 = vmatpush1.bf16.msra.mxu0 %v346
      %369 = vmatprep.subr.bf16.mxu0 0
      %370 = vmatpush1.bf16.msra.mxu0 %v345
      %371 = vmatprep.subr.bf16.mxu0 0
      %372 = vmatpush1.bf16.msra.mxu0 %v344
      %373 = vmatprep.subr.bf16.mxu0 0
      %374 = vmatpush1.bf16.msra.mxu0 %v343
      %375 = vmatprep.subr.bf16.mxu0 0
      %376 = vmatpush2.bf16.msra.mxu0 0
      %377 = vmatprep.subr.bf16.mxu0 0
      %378 = vmatpush2.bf16.msra.mxu0 0
      %379 = vmatprep.subr.bf16.mxu0 0
      %380 = vmatpush2.bf16.msra.mxu0 0
      %381 = vmatprep.subr.bf16.mxu0 0
      %382 = vmatpush2.bf16.msra.mxu0 0
      %383 = vmatprep.subr.bf16.mxu0 0
      %384 = vmatpush2.bf16.msra.mxu0 0
      %385 = vmatprep.subr.bf16.mxu0 0
      %386 = vmatpush2.bf16.msra.mxu0 0
      %387 = vmatprep.subr.bf16.mxu0 0
      %388 = vmatpush2.bf16.msra.mxu0 0
      %389 = vmatprep.subr.bf16.mxu0 0
      %390 = vmatpush2.bf16.msra.mxu0 0
      %391 = vmatprep.mubr.bf16.mxu0 0
      %392 = vmatmul.mubr.bf16.gmra.mxu0 %v309
      %v393 = vpop.f32.mrf.mxu0
      %v394 = vadd.f32 0.0, %v393
      %v395 = vpop.f32.mrf.mxu0
      %v396 = vpop.f32.mrf.mxu0
      %v397 = vadd.f32 0.0, %v396
      %v398 = vpop.f32.mrf.mxu0
      %399 = vdwg.mxu0
      %v402 = vunpack.c.l.b16 %v266
      %v403 = vunpack.c.l.b16 %v267
      %v404 = vpack.c.b16 %v403, %v402
      %v422 = vunpack.c.l.b16 %v269
      %v423 = vunpack.c.l.b16 %v270
      %v424 = vunpack.c.l.b16 %v271
      %v425 = vunpack.c.l.b16 %v272
      %v426 = vunpack.c.l.b16 %v273
      %v427 = vunpack.c.l.b16 %v274
      %v428 = vunpack.c.l.b16 %v275
      %v429 = vunpack.c.l.b16 %v276
      %v430 = vunpack.c.l.b16 %v277
      %v431 = vunpack.c.l.b16 %v278
      %v432 = vunpack.c.l.b16 %v279
      %v433 = vunpack.c.l.b16 %v280
      %v434 = vunpack.c.l.b16 %v281
      %v435 = vunpack.c.l.b16 %v282
      %v436 = vunpack.c.l.b16 %v283
      %v437 = vunpack.c.l.b16 %v284
      %v438 = vpack.c.b16 %v423, %v422
      %v439 = vpack.c.b16 %v425, %v424
      %v440 = vpack.c.b16 %v427, %v426
      %v441 = vpack.c.b16 %v429, %v428
      %v442 = vpack.c.b16 %v431, %v430
      %v443 = vpack.c.b16 %v433, %v432
      %v444 = vpack.c.b16 %v435, %v434
      %v445 = vpack.c.b16 %v437, %v436
      %454 = vmatprep.subr.bf16.mxu0 0
      %455 = vmatpush1.bf16.msra.mxu0 %v445
      %456 = vmatprep.subr.bf16.mxu0 0
      %457 = vmatpush1.bf16.msra.mxu0 %v444
      %458 = vmatprep.subr.bf16.mxu0 0
      %459 = vmatpush1.bf16.msra.mxu0 %v443
      %460 = vmatprep.subr.bf16.mxu0 0
      %461 = vmatpush1.bf16.msra.mxu0 %v442
      %462 = vmatprep.subr.bf16.mxu0 0
      %463 = vmatpush1.bf16.msra.mxu0 %v441
      %464 = vmatprep.subr.bf16.mxu0 0
      %465 = vmatpush1.bf16.msra.mxu0 %v440
      %466 = vmatprep.subr.bf16.mxu0 0
      %467 = vmatpush1.bf16.msra.mxu0 %v439
      %468 = vmatprep.subr.bf16.mxu0 0
      %469 = vmatpush1.bf16.msra.mxu0 %v438
      %470 = vmatprep.subr.bf16.mxu0 0
      %471 = vmatpush2.bf16.msra.mxu0 0
      %472 = vmatprep.subr.bf16.mxu0 0
      %473 = vmatpush2.bf16.msra.mxu0 0
      %474 = vmatprep.subr.bf16.mxu0 0
      %475 = vmatpush2.bf16.msra.mxu0 0
      %476 = vmatprep.subr.bf16.mxu0 0
      %477 = vmatpush2.bf16.msra.mxu0 0
      %478 = vmatprep.subr.bf16.mxu0 0
      %479 = vmatpush2.bf16.msra.mxu0 0
      %480 = vmatprep.subr.bf16.mxu0 0
      %481 = vmatpush2.bf16.msra.mxu0 0
      %482 = vmatprep.subr.bf16.mxu0 0
      %483 = vmatpush2.bf16.msra.mxu0 0
      %484 = vmatprep.subr.bf16.mxu0 0
      %485 = vmatpush2.bf16.msra.mxu0 0
      %486 = vmatprep.mubr.bf16.mxu0 0
      %487 = vmatmul.mubr.bf16.gmra.mxu0 %v404
      %v488 = vpop.f32.mrf.mxu0
      %v489 = vadd.f32 %v394, %v488
      %v490 = vpop.f32.mrf.mxu0
      %v491 = vpop.f32.mrf.mxu0
      %v492 = vadd.f32 %v397, %v491
      %v493 = vpop.f32.mrf.mxu0
      %494 = vdwg.mxu0
      %v495 = vld [vmem:[#allocation2] sm:$0xff]
      %v496 = vld [vmem:[#allocation2 + $0x8] sm:$0xff]
      %v497 = vadd.f32 %v495, %v489
      %v498 = vadd.f32 %v496, %v492
      %499 = vst [vmem:[#allocation2] sm:$0xff] %v497
      %500 = vst [vmem:[#allocation2 + $0x8] sm:$0xff] %v498
      %v501 = vld [vmem:[%s265] sm:$0xf]
      %v502 = vld [vmem:[%s265 + $0x4] sm:$0xf]
      %v503 = vld [vmem:[%s243] sm:$0xf]
      %v504 = vld [vmem:[%s243 + $0x4] sm:$0xf]
      %v505 = vld [vmem:[%s243 + $0x8] sm:$0xf]
      %v506 = vld [vmem:[%s243 + $0xc] sm:$0xf]
      %v507 = vld [vmem:[%s243 + $0x10] sm:$0xf]
      %v508 = vld [vmem:[%s243 + $0x14] sm:$0xf]
      %v509 = vld [vmem:[%s243 + $0x18] sm:$0xf]
      %v510 = vld [vmem:[%s243 + $0x1c] sm:$0xf]
      %v511 = vld [vmem:[%s243 + $0x20] sm:$0xf]
      %v512 = vld [vmem:[%s243 + $0x24] sm:$0xf]
      %v513 = vld [vmem:[%s243 + $0x28] sm:$0xf]
      %v514 = vld [vmem:[%s243 + $0x2c] sm:$0xf]
      %v515 = vld [vmem:[%s243 + $0x30] sm:$0xf]
      %v516 = vld [vmem:[%s243 + $0x34] sm:$0xf]
      %v517 = vld [vmem:[%s243 + $0x38] sm:$0xf]
      %v518 = vld [vmem:[%s243 + $0x3c] sm:$0xf]
      %v519 = vld [vmem:[%s285] sm:$0xf]
      %v520 = vld [vmem:[%s285 + $0x4] sm:$0xf]
      %v521 = vld [vmem:[%s268] sm:$0xf]
      %v522 = vld [vmem:[%s268 + $0x4] sm:$0xf]
      %v523 = vld [vmem:[%s268 + $0x8] sm:$0xf]
      %v524 = vld [vmem:[%s268 + $0xc] sm:$0xf]
      %v525 = vld [vmem:[%s268 + $0x10] sm:$0xf]
      %v526 = vld [vmem:[%s268 + $0x14] sm:$0xf]
      %v527 = vld [vmem:[%s268 + $0x18] sm:$0xf]
      %v528 = vld [vmem:[%s268 + $0x1c] sm:$0xf]
      %v529 = vld [vmem:[%s268 + $0x20] sm:$0xf]
      %v530 = vld [vmem:[%s268 + $0x24] sm:$0xf]
      %v531 = vld [vmem:[%s268 + $0x28] sm:$0xf]
      %v532 = vld [vmem:[%s268 + $0x2c] sm:$0xf]
      %v533 = vld [vmem:[%s268 + $0x30] sm:$0xf]
      %v534 = vld [vmem:[%s268 + $0x34] sm:$0xf]
      %v535 = vld [vmem:[%s268 + $0x38] sm:$0xf]
      %v536 = vld [vmem:[%s268 + $0x3c] sm:$0xf]
      %v539 = vunpack.c.l.b16 %v519
      %v540 = vunpack.c.l.b16 %v520
      %v541 = vpack.c.b16 %v540, %v539
      %v559 = vunpack.c.l.b16 %v521
      %v560 = vunpack.c.l.b16 %v522
      %v561 = vunpack.c.l.b16 %v523
      %v562 = vunpack.c.l.b16 %v524
      %v563 = vunpack.c.l.b16 %v525
      %v564 = vunpack.c.l.b16 %v526
      %v565 = vunpack.c.l.b16 %v527
      %v566 = vunpack.c.l.b16 %v528
      %v567 = vunpack.c.l.b16 %v529
      %v568 = vunpack.c.l.b16 %v530
      %v569 = vunpack.c.l.b16 %v531
      %v570 = vunpack.c.l.b16 %v532
      %v571 = vunpack.c.l.b16 %v533
      %v572 = vunpack.c.l.b16 %v534
      %v573 = vunpack.c.l.b16 %v535
      %v574 = vunpack.c.l.b16 %v536
      %v575 = vpack.c.b16 %v560, %v559
      %v576 = vpack.c.b16 %v562, %v561
      %v577 = vpack.c.b16 %v564, %v563
      %v578 = vpack.c.b16 %v566, %v565
      %v579 = vpack.c.b16 %v568, %v567
      %v580 = vpack.c.b16 %v570, %v569
      %v581 = vpack.c.b16 %v572, %v571
      %v582 = vpack.c.b16 %v574, %v573
      %591 = vmatprep.subr.bf16.mxu0 0
      %592 = vmatpush1.bf16.msra.mxu0 %v582
      %593 = vmatprep.subr.bf16.mxu0 0
      %594 = vmatpush1.bf16.msra.mxu0 %v581
      %595 = vmatprep.subr.bf16.mxu0 0
      %596 = vmatpush1.bf16.msra.mxu0 %v580
      %597 = vmatprep.subr.bf16.mxu0 0
      %598 = vmatpush1.bf16.msra.mxu0 %v579
      %599 = vmatprep.subr.bf16.mxu0 0
      %600 = vmatpush1.bf16.msra.mxu0 %v578
      %601 = vmatprep.subr.bf16.mxu0 0
      %602 = vmatpush1.bf16.msra.mxu0 %v577
      %603 = vmatprep.subr.bf16.mxu0 0
      %604 = vmatpush1.bf16.msra.mxu0 %v576
      %605 = vmatprep.subr.bf16.mxu0 0
      %606 = vmatpush1.bf16.msra.mxu0 %v575
      %607 = vmatprep.subr.bf16.mxu0 0
      %608 = vmatpush2.bf16.msra.mxu0 0
      %609 = vmatprep.subr.bf16.mxu0 0
      %610 = vmatpush2.bf16.msra.mxu0 0
      %611 = vmatprep.subr.bf16.mxu0 0
      %612 = vmatpush2.bf16.msra.mxu0 0
      %613 = vmatprep.subr.bf16.mxu0 0
      %614 = vmatpush2.bf16.msra.mxu0 0
      %615 = vmatprep.subr.bf16.mxu0 0
      %616 = vmatpush2.bf16.msra.mxu0 0
      %617 = vmatprep.subr.bf16.mxu0 0
      %618 = vmatpush2.bf16.msra.mxu0 0
      %619 = vmatprep.subr.bf16.mxu0 0
      %620 = vmatpush2.bf16.msra.mxu0 0
      %621 = vmatprep.subr.bf16.mxu0 0
      %622 = vmatpush2.bf16.msra.mxu0 0
      %623 = vmatprep.mubr.bf16.mxu0 0
      %624 = vmatmul.mubr.bf16.gmra.mxu0 %v541
      %v625 = vpop.f32.mrf.mxu0
      %v626 = vadd.f32 0.0, %v625
      %v627 = vpop.f32.mrf.mxu0
      %v628 = vpop.f32.mrf.mxu0
      %v629 = vadd.f32 0.0, %v628
      %v630 = vpop.f32.mrf.mxu0
      %631 = vdwg.mxu0
      %v634 = vunpack.c.l.b16 %v501
      %v635 = vunpack.c.l.b16 %v502
      %v636 = vpack.c.b16 %v635, %v634
      %v654 = vunpack.c.l.b16 %v503
      %v655 = vunpack.c.l.b16 %v504
      %v656 = vunpack.c.l.b16 %v505
      %v657 = vunpack.c.l.b16 %v506
      %v658 = vunpack.c.l.b16 %v507
      %v659 = vunpack.c.l.b16 %v508
      %v660 = vunpack.c.l.b16 %v509
      %v661 = vunpack.c.l.b16 %v510
      %v662 = vunpack.c.l.b16 %v511
      %v663 = vunpack.c.l.b16 %v512
      %v664 = vunpack.c.l.b16 %v513
      %v665 = vunpack.c.l.b16 %v514
      %v666 = vunpack.c.l.b16 %v515
      %v667 = vunpack.c.l.b16 %v516
      %v668 = vunpack.c.l.b16 %v517
      %v669 = vunpack.c.l.b16 %v518
      %v670 = vpack.c.b16 %v655, %v654
      %v671 = vpack.c.b16 %v657, %v656
      %v672 = vpack.c.b16 %v659, %v658
      %v673 = vpack.c.b16 %v661, %v660
      %v674 = vpack.c.b16 %v663, %v662
      %v675 = vpack.c.b16 %v665, %v664
      %v676 = vpack.c.b16 %v667, %v666
      %v677 = vpack.c.b16 %v669, %v668
      %686 = vmatprep.subr.bf16.mxu0 0
      %687 = vmatpush1.bf16.msra.mxu0 %v677
      %688 = vmatprep.subr.bf16.mxu0 0
      %689 = vmatpush1.bf16.msra.mxu0 %v676
      %690 = vmatprep.subr.bf16.mxu0 0
      %691 = vmatpush1.bf16.msra.mxu0 %v675
      %692 = vmatprep.subr.bf16.mxu0 0
      %693 = vmatpush1.bf16.msra.mxu0 %v674
      %694 = vmatprep.subr.bf16.mxu0 0
      %695 = vmatpush1.bf16.msra.mxu0 %v673
      %696 = vmatprep.subr.bf16.mxu0 0
      %697 = vmatpush1.bf16.msra.mxu0 %v672
      %698 = vmatprep.subr.bf16.mxu0 0
      %699 = vmatpush1.bf16.msra.mxu0 %v671
      %700 = vmatprep.subr.bf16.mxu0 0
      %701 = vmatpush1.bf16.msra.mxu0 %v670
      %702 = vmatprep.subr.bf16.mxu0 0
      %703 = vmatpush2.bf16.msra.mxu0 0
      %704 = vmatprep.subr.bf16.mxu0 0
      %705 = vmatpush2.bf16.msra.mxu0 0
      %706 = vmatprep.subr.bf16.mxu0 0
      %707 = vmatpush2.bf16.msra.mxu0 0
      %708 = vmatprep.subr.bf16.mxu0 0
      %709 = vmatpush2.bf16.msra.mxu0 0
      %710 = vmatprep.subr.bf16.mxu0 0
      %711 = vmatpush2.bf16.msra.mxu0 0
      %712 = vmatprep.subr.bf16.mxu0 0
      %713 = vmatpush2.bf16.msra.mxu0 0
      %714 = vmatprep.subr.bf16.mxu0 0
      %715 = vmatpush2.bf16.msra.mxu0 0
      %716 = vmatprep.subr.bf16.mxu0 0
      %717 = vmatpush2.bf16.msra.mxu0 0
      %718 = vmatprep.mubr.bf16.mxu0 0
      %719 = vmatmul.mubr.bf16.gmra.mxu0 %v636
      %v720 = vpop.f32.mrf.mxu0
      %v721 = vadd.f32 %v626, %v720
      %v722 = vpop.f32.mrf.mxu0
      %v723 = vpop.f32.mrf.mxu0
      %v724 = vadd.f32 %v629, %v723
      %v725 = vpop.f32.mrf.mxu0
      %726 = vdwg.mxu0
      %s727 = scalar_lea.vmem [#allocation2], 16
      %v728 = vld [vmem:[%s727] sm:$0xff]
      %v729 = vld [vmem:[%s727 + $0x8] sm:$0xff]
      %v730 = vadd.f32 %v728, %v721
      %v731 = vadd.f32 %v729, %v724
      %732 = vst [vmem:[%s727] sm:$0xff] %v730
      %733 = vst [vmem:[%s727 + $0x8] sm:$0xff] %v731
      // Predicated region
      $region37: #{mds_forward.8} parent=31 // pred_check
        %p734 = pneg %p257
      $region38: #{mds_forward.8} parent=31 // pred_check_branch
        %736 = sbr.rel (%p734) target = $region40
      $region39: #{mds_forward.8} parent=31 // pred_region
        %v737 = vld [vmem:[#allocation2] sm:$0xff]
        %v738 = vld [vmem:[#allocation2 + $0x8] sm:$0xff]
        %v739 = vld [vmem:[#allocation2 + $0x10] sm:$0xff]
        %v740 = vld [vmem:[#allocation2 + $0x18] sm:$0xff]
        %v741 = vld [vmem:[%s247] sm:$0x1]
        %v743 = vlaneseq
        %v744 = vshrl.u32 %v743, 7
        %v745 = vsub.s32 0, %v744
        %v746 = vrot.slane %v741, %v745
        %v748 = vadd.f32 %v737, %v746
        %v749 = vadd.f32 %v738, %v746
        %v750 = vadd.f32 %v739, %v746
        %v751 = vadd.f32 %v740, %v746
        %v752 = vmax.f32 %v748, 0.0
        %v753 = vmax.f32 %v749, 0.0
        %v754 = vmax.f32 %v750, 0.0
        %v755 = vmax.f32 %v751, 0.0
        %v756 = vpack.c.bf16 %v753, %v752
        %v757 = vpack.c.bf16 %v755, %v754
        %v760 = vunpack.c.l.b16 %v756
        %v761 = vunpack.c.h.b16 %v756
        %v762 = vunpack.c.l.b16 %v757
        %v763 = vunpack.c.h.b16 %v757
        %v764 = vpack.c.b16 %v760, %v760
        %v765 = vpack.c.b16 %v761, %v761
        %v766 = vpack.c.b16 %v762, %v762
        %v767 = vpack.c.b16 %v763, %v763
        %772 = vst [vmem:[%s255] sm:$0xf] %v764
        %773 = vst [vmem:[%s255 + $0x4] sm:$0xf] %v765
        %774 = vst [vmem:[%s255 + $0x8] sm:$0xf] %v766
        %775 = vst [vmem:[%s255 + $0xc] sm:$0xf] %v767
      $region40: #{mds_forward.8} parent=31 // pred_fallthru
        _
      %p776 = scmp.lt.s32.totalorder %s19, 1
      %s777 = scalar_select %p776, %s19, 1
      %p778 = scmp.lt.s32.totalorder %s20, 0
      %s779 = scalar_select %p778, %s20, 0
      %s780 = smul.addr %s777, 4
      %s781 = sadd.s32 %s779, %s780
      %s782 = smul.addr %s781, 4
      %s783 = scalar_lea.vmem %s3, %s782
      // Predicated region
      $region41: #{mds_forward.8} parent=31 // pred_check
        %p784 = pneg %p135
      $region42: #{mds_forward.8} parent=31 // pred_check_branch
        %786 = sbr.rel (%p784) target = $region44
      $region43: #{mds_forward.8} parent=31 // pred_region
        _
      $region44: #{mds_forward.8} parent=31 // pred_fallthru
        _
    $region32: #{mds_forward.8} parent=5 // pred_fallthru
      _
    %p787 = scmp.le.s32.totalorder 2, %s9
    // Predicated region
    $region45: #{mds_forward.8} parent=5 // pred_check
      %p788 = pneg %p787
    $region46: #{mds_forward.8} parent=5 // pred_check_branch
      %790 = sbr.rel (%p788) target = $region48
    $region47: #{mds_forward.8} parent=5 // pred_region
      %s791 = ssub.s32 %s9, 2
      // Predicated region
      $region49: #{mds_forward.8} parent=47 // pred_check
        %p792 = pneg %p141
      $region50: #{mds_forward.8} parent=47 // pred_check_branch
        %794 = sbr.rel (%p792) target = $region52
      $region51: #{mds_forward.8} parent=47 // pred_region
        %p795 = scmp.lt.s32.totalorder %s22, 1
        %s796 = scalar_select %p795, %s22, 1
        %p797 = scmp.lt.s32.totalorder %s23, 0
        %s798 = scalar_select %p797, %s23, 0
        %s799 = smul.addr %s796, 4
        %s800 = sadd.s32 %s798, %s799
        %s801 = smul.addr %s800, 4
        %s802 = scalar_lea.vmem %s3, %s801
      $region52: #{mds_forward.8} parent=47 // pred_fallthru
        _
    $region48: #{mds_forward.8} parent=5 // pred_fallthru
      _
  $region6: #{mds_forward.8} parent=0 // loop_footer
    %s13 = sadd.s32 1, %s9
  $region7: #{mds_forward.8} parent=0 // loop_footer_branch
    %8 = sbr.rel target = $region3
  $region8: #{mds_forward.8} parent=0 // loop_exit
    _

// kernel: mds_forward.9
$region0: #{mds_forward.9}
  #allocation0 [shape = 'u32[]', space=smem, size = 0x4, offset = 0x4, fixed_abs, tag = 'smem constant byte address 0x4 - core index']
  #allocation1 [shape = 'u32[144,128]{1,0:T(1,128)}', space=vmem, size = 0x12000, scoped, tag = 'internal scratch']
  #allocation2 [shape = 'f32[2,16,128]{2,1,0:T(8,128)}', space=vmem, size = 0x4000, scoped, tag = 'scratch operand']
  %s0 = inlined_call_operand.vmem [shape: bf16[2,8,22,128], index: 0, kind: input, shape index: {}]
  %s1 = inlined_call_operand.vmem [shape: bf16[9,128,128], index: 1, kind: input, shape index: {}]
  %s2 = inlined_call_operand.vmem [shape: f32[1,128], index: 2, kind: input, shape index: {}]
  %s3 = inlined_call_operand.vmem [shape: bf16[2,2,16,128], index: 3, kind: output, shape index: {}]
  %s4 = sld [smem:[#allocation0]]
  $region53: #{mds_forward.9} parent=0
    _
  %s6 = ssub.s32 1, %s4
  %s7 = scalar_select 0, %s6, %s4
  loop: start=0, step=1, limit=4
  $region2: #{mds_forward.9} parent=0 // loop_pre_header
    _
  $region3: #{mds_forward.9} parent=0 // loop_header
    %s9 = sphi 0, %s13
    %p10 = scmp.ge.s32.totalorder %s9, 4
    %s16 = sphi 0, %s35
    %s17 = sphi 0, %s31
    %s18 = sphi 0, %s27
    %s19 = sphi 0, %s16
    %s20 = sphi 0, %s17
    %s21 = sphi 0, %s18
    %s22 = sphi 0, %s19
    %s23 = sphi 0, %s20
    %s24 = sphi 0, %s21
    %s40 = sphi 0, %s42
    %s43 = sphi 0, %s40
    %s44 = sphi 0, %s43
    %s60 = sphi 0, %s44
    %s68 = sphi 0, %s70
    %s71 = sphi 0, %s68
    %s72 = sphi 0, %s71
    %s88 = sphi 0, %s72
    %s94 = sphi 0, %s96
    %s97 = sphi 0, %s94
    %s98 = sphi 0, %s97
    %s114 = sphi 0, %s98
    %s122 = sphi 0, %s124
    %s125 = sphi 0, %s122
    %s126 = sphi 0, %s125
    %s142 = sphi 0, %s126
  $region4: #{mds_forward.9} parent=0 // loop_header_branch
    %12 = sbr.rel (%p10) target = $region8
  $region5: #{mds_forward.9} parent=0 // loop_body
    %s14 = ssub.s32 %s9, 1
    %s15 = ssub.s32 %s9, 2
    %s25 = sadd.s32 1, %s18
    %p26 = scmp.ge.s32.totalorder %s25, 1
    %s27 = scalar_select %p26, 0, %s25
    %s28 = sadd.s32 1, %s17
    %s29 = scalar_select %p26, %s28, %s17
    %p30 = scmp.ge.s32.totalorder %s29, 1
    %s31 = scalar_select %p30, 0, %s29
    %s32 = sadd.s32 1, %s16
    %s33 = scalar_select %p30, %s32, %s16
    %p34 = scmp.ge.s32.totalorder %s33, 2
    %s35 = scalar_select %p34, 0, %s33
    %s36 = ssub.s32 %s16, %s35
    %s37 = ssub.s32 %s18, %s27
    %s38 = sor.u32 %s36, %s37
    %p39 = scmp.eq.s32.totalorder %s38, 0
    %s41 = sadd.s32 %s40, 1
    %s42 = scalar_select %p39, %s40, %s41
    %p45 = pneg %p39
    %p46 = scmp.eq.s32.totalorder %s9, 1
    %p47 = por %p45, %p46
    %p48 = scmp.ne.s32.totalorder %s40, %s43
    %p49 = scmp.eq.s32.totalorder %s9, 0
    %p50 = por %p48, %p49
    %p51 = scmp.ne.s32.totalorder %s40, %s43
    %p52 = scmp.eq.s32.totalorder %s14, 1
    %p53 = por %p51, %p52
    %p54 = scmp.ne.s32.totalorder %s43, %s44
    %p55 = scmp.eq.s32.totalorder %s14, 0
    %p56 = por %p54, %p55
    %p57 = scmp.ne.s32.totalorder %s43, %s44
    %p58 = scmp.eq.s32.totalorder %s15, 1
    %p59 = por %p57, %p58
    %p61 = scmp.ne.s32.totalorder %s44, %s60
    %p62 = scmp.eq.s32.totalorder %s15, 0
    %p63 = por %p61, %p62
    %s64 = ssub.s32 %s18, %s27
    %s65 = ssub.s32 %s17, %s31
    %s66 = sor.u32 %s64, %s65
    %p67 = scmp.eq.s32.totalorder %s66, 0
    %s69 = sadd.s32 %s68, 1
    %s70 = scalar_select %p67, %s68, %s69
    %p73 = pneg %p67
    %p74 = scmp.eq.s32.totalorder %s9, 1
    %p75 = por %p73, %p74
    %p76 = scmp.ne.s32.totalorder %s68, %s71
    %p77 = scmp.eq.s32.totalorder %s9, 0
    %p78 = por %p76, %p77
    %p79 = scmp.ne.s32.totalorder %s68, %s71
    %p80 = scmp.eq.s32.totalorder %s14, 1
    %p81 = por %p79, %p80
    %p82 = scmp.ne.s32.totalorder %s71, %s72
    %p83 = scmp.eq.s32.totalorder %s14, 0
    %p84 = por %p82, %p83
    %p85 = scmp.ne.s32.totalorder %s71, %s72
    %p86 = scmp.eq.s32.totalorder %s15, 1
    %p87 = por %p85, %p86
    %p89 = scmp.ne.s32.totalorder %s72, %s88
    %p90 = scmp.eq.s32.totalorder %s15, 0
    %p91 = por %p89, %p90
    %s92 = ssub.s32 %s17, %s31
    %p93 = scmp.eq.s32.totalorder %s92, 0
    %s95 = sadd.s32 %s94, 1
    %s96 = scalar_select %p93, %s94, %s95
    %p99 = pneg %p93
    %p100 = scmp.eq.s32.totalorder %s9, 1
    %p101 = por %p99, %p100
    %p102 = scmp.ne.s32.totalorder %s94, %s97
    %p103 = scmp.eq.s32.totalorder %s9, 0
    %p104 = por %p102, %p103
    %p105 = scmp.ne.s32.totalorder %s94, %s97
    %p106 = scmp.eq.s32.totalorder %s14, 1
    %p107 = por %p105, %p106
    %p108 = scmp.ne.s32.totalorder %s97, %s98
    %p109 = scmp.eq.s32.totalorder %s14, 0
    %p110 = por %p108, %p109
    %p111 = scmp.ne.s32.totalorder %s97, %s98
    %p112 = scmp.eq.s32.totalorder %s15, 1
    %p113 = por %p111, %p112
    %p115 = scmp.ne.s32.totalorder %s98, %s114
    %p116 = scmp.eq.s32.totalorder %s15, 0
    %p117 = por %p115, %p116
    %s118 = ssub.s32 %s16, %s35
    %s119 = ssub.s32 %s17, %s31
    %s120 = sor.u32 %s118, %s119
    %p121 = scmp.eq.s32.totalorder %s120, 0
    %s123 = sadd.s32 %s122, 1
    %s124 = scalar_select %p121, %s122, %s123
    %p127 = pneg %p121
    %p128 = scmp.eq.s32.totalorder %s9, 1
    %p129 = por %p127, %p128
    %p130 = scmp.ne.s32.totalorder %s122, %s125
    %p131 = scmp.eq.s32.totalorder %s9, 0
    %p132 = por %p130, %p131
    %p133 = scmp.ne.s32.totalorder %s122, %s125
    %p134 = scmp.eq.s32.totalorder %s14, 1
    %p135 = por %p133, %p134
    %p136 = scmp.ne.s32.totalorder %s125, %s126
    %p137 = scmp.eq.s32.totalorder %s14, 0
    %p138 = por %p136, %p137
    %p139 = scmp.ne.s32.totalorder %s125, %s126
    %p140 = scmp.eq.s32.totalorder %s15, 1
    %p141 = por %p139, %p140
    %p143 = scmp.ne.s32.totalorder %s126, %s142
    %p144 = scmp.eq.s32.totalorder %s15, 0
    %p145 = por %p143, %p144
    %p146 = scmp.le.s32.totalorder 1, %s9
    %p147 = scmp.lt.s32.totalorder %s9, 3
    %p148 = pnand %p146, %p147
    %p149 = pneg %p148
    // Predicated region
    $region9: #{mds_forward.9} parent=5 // pred_check
      _
    $region10: #{mds_forward.9} parent=5 // pred_check_branch
      %151 = sbr.rel (%p148) target = $region12
    $region11: #{mds_forward.9} parent=5 // pred_region
      %s152 = ssub.s32 %s9, 1
      // Predicated region
      $region13: #{mds_forward.9} parent=11 // pred_check
        %p153 = pneg %p84
      $region14: #{mds_forward.9} parent=11 // pred_check_branch
        %155 = sbr.rel (%p153) target = $region16
      $region15: #{mds_forward.9} parent=11 // pred_region
        %s156 = smul.u32 16, %s21
        %p157 = scmp.lt.s32.totalorder %s156, 15
        %s158 = scalar_select %p157, %s156, 15
        %p159 = scmp.lt.s32.totalorder %s20, 0
        %s160 = scalar_select %p159, %s20, 0
        %s161 = sadd.s32 %s160, %s158
        %s162 = smul.addr %s161, 4
        %s163 = scalar_lea.vmem %s1, %s162
        %s164 = smul.u32 16, %s21
      $region16: #{mds_forward.9} parent=11 // pred_fallthru
        _
      // Predicated region
      $region17: #{mds_forward.9} parent=11 // pred_check
        %p165 = pneg %p110
      $region18: #{mds_forward.9} parent=11 // pred_check_branch
        %167 = sbr.rel (%p165) target = $region20
      $region19: #{mds_forward.9} parent=11 // pred_region
        %p168 = scmp.lt.s32.totalorder %s20, 0
        %s169 = scalar_select %p168, %s20, 0
        %s170 = scalar_lea.vmem %s2, %s169
      $region20: #{mds_forward.9} parent=11 // pred_fallthru
        _
    $region12: #{mds_forward.9} parent=5 // pred_fallthru
      _
    %p171 = scmp.lt.s32.totalorder %s9, 2
    // Predicated region
    $region21: #{mds_forward.9} parent=5 // pred_check
      %p172 = pneg %p171
    $region22: #{mds_forward.9} parent=5 // pred_check_branch
      %174 = sbr.rel (%p172) target = $region24
    $region23: #{mds_forward.9} parent=5 // pred_region
      // Predicated region
      $region25: #{mds_forward.9} parent=23 // pred_check
        %p175 = pneg %p50
      $region26: #{mds_forward.9} parent=23 // pred_check_branch
        %177 = sbr.rel (%p175) target = $region28
      $region27: #{mds_forward.9} parent=23 // pred_region
        %p178 = scmp.lt.s32.totalorder %s16, 1
        %s179 = scalar_select %p178, %s16, 1
        %p180 = scmp.lt.s32.totalorder %s18, 0
        %s181 = scalar_select %p180, %s18, 0
        %s182 = smul.addr %s179, 24
        %s183 = sadd.s32 %s181, %s182
        %s184 = smul.addr %s183, 4
        %s185 = scalar_lea.vmem %s0, %s184
      $region28: #{mds_forward.9} parent=23 // pred_fallthru
        _
    $region24: #{mds_forward.9} parent=5 // pred_fallthru
      _
    %p186 = scmp.le.s32.totalorder 1, %s9
    %p187 = scmp.lt.s32.totalorder %s9, 3
    %p188 = pnand %p186, %p187
    %p189 = pneg %p188
    // Predicated region
    $region29: #{mds_forward.9} parent=5 // pred_check
      _
    $region30: #{mds_forward.9} parent=5 // pred_check_branch
      %191 = sbr.rel (%p188) target = $region32
    $region31: #{mds_forward.9} parent=5 // pred_region
      %s192 = ssub.s32 %s9, 1
      %p193 = scmp.lt.s32.totalorder %s19, 1
      %s194 = scalar_select %p193, %s19, 1
      %p195 = scmp.lt.s32.totalorder %s21, 0
      %s196 = scalar_select %p195, %s21, 0
      %s197 = smul.addr %s194, 24
      %s198 = sadd.s32 %s196, %s197
      %s199 = smul.addr %s198, 4
      %s200 = scalar_lea.vmem %s0, %s199
      %p201 = pneg %p56
      %p202 = pneg %p53
      %s203 = smul.u32 16, %s21
      %p204 = scmp.lt.s32.totalorder %s203, 15
      %s205 = scalar_select %p204, %s203, 15
      %p206 = scmp.lt.s32.totalorder %s20, 0
      %s207 = scalar_select %p206, %s20, 0
      %s208 = sadd.s32 %s207, %s205
      %s209 = smul.addr %s208, 4
      %s210 = scalar_lea.vmem %s1, %s209
      %p211 = pneg %p84
      %p212 = pneg %p81
      %p213 = scmp.lt.s32.totalorder %s20, 0
      %s214 = scalar_select %p213, %s20, 0
      %s215 = scalar_lea.vmem %s2, %s214
      %p216 = pneg %p110
      %p217 = pneg %p107
      %p218 = pneg %p138
      %p219 = pneg %p135
      %p220 = scmp.lt.s32.totalorder %s19, 1
      %s221 = scalar_select %p220, %s19, 1
      %p222 = scmp.lt.s32.totalorder %s20, 0
      %s223 = scalar_select %p222, %s20, 0
      %s224 = smul.addr %s221, 4
      %s225 = sadd.s32 %s223, %s224
      %s226 = smul.addr %s225, 4
      %s227 = scalar_lea.vmem %s3, %s226
      %p228 = scmp.lt.s32.totalorder %s19, 1
      %s229 = scalar_select %p228, %s19, 1
      %p230 = scmp.lt.s32.totalorder %s21, 0
      %s231 = scalar_select %p230, %s21, 0
      %s232 = smul.addr %s229, 24
      %s233 = sadd.s32 %s231, %s232
      %s234 = smul.addr %s233, 4
      %s235 = scalar_lea.vmem %s0, %s234
      %s236 = smul.u32 16, %s21
      %p237 = scmp.lt.s32.totalorder %s236, 15
      %s238 = scalar_select %p237, %s236, 15
      %p239 = scmp.lt.s32.totalorder %s20, 0
      %s240 = scalar_select %p239, %s20, 0
      %s241 = sadd.s32 %s240, %s238
      %s242 = smul.addr %s241, 4
      %s243 = scalar_lea.vmem %s1, %s242
      %s244 = smul.u32 16, %s21
      %p245 = scmp.lt.s32.totalorder %s20, 0
      %s246 = scalar_select %p245, %s20, 0
      %s247 = scalar_lea.vmem %s2, %s246
      %p248 = scmp.lt.s32.totalorder %s19, 1
      %s249 = scalar_select %p248, %s19, 1
      %p250 = scmp.lt.s32.totalorder %s20, 0
      %s251 = scalar_select %p250, %s20, 0
      %s252 = smul.addr %s249, 4
      %s253 = sadd.s32 %s251, %s252
      %s254 = smul.addr %s253, 4
      %s255 = scalar_lea.vmem %s3, %s254
      %p257 = scmp.eq.s32.totalorder %s21, 0
      // Predicated region
      $region33: #{mds_forward.9} parent=31 // pred_check
        %p258 = pneg %p257
      $region34: #{mds_forward.9} parent=31 // pred_check_branch
        %260 = sbr.rel (%p258) target = $region36
      $region35: #{mds_forward.9} parent=31 // pred_region
        %261 = vst [vmem:[#allocation2] sm:$0xff] 0.0
        %262 = vst [vmem:[#allocation2 + $0x8] sm:$0xff] 0.0
        %263 = vst [vmem:[#allocation2 + $0x10] sm:$0xff] 0.0
        %264 = vst [vmem:[#allocation2 + $0x18] sm:$0xff] 0.0
      $region36: #{mds_forward.9} parent=31 // pred_fallthru
        _
      %s265 = scalar_lea.vmem %s235, 36
      %v266 = vld [vmem:[%s265] sm:$0xf]
      %v267 = vld [vmem:[%s265 + $0x4] sm:$0xf]
      %s268 = scalar_lea.vmem %s243, 192
      %v269 = vld [vmem:[%s268] sm:$0xf]
      %v270 = vld [vmem:[%s268 + $0x4] sm:$0xf]
      %v271 = vld [vmem:[%s268 + $0x8] sm:$0xf]
      %v272 = vld [vmem:[%s268 + $0xc] sm:$0xf]
      %v273 = vld [vmem:[%s268 + $0x10] sm:$0xf]
      %v274 = vld [vmem:[%s268 + $0x14] sm:$0xf]
      %v275 = vld [vmem:[%s268 + $0x18] sm:$0xf]
      %v276 = vld [vmem:[%s268 + $0x1c] sm:$0xf]
      %v277 = vld [vmem:[%s268 + $0x20] sm:$0xf]
      %v278 = vld [vmem:[%s268 + $0x24] sm:$0xf]
      %v279 = vld [vmem:[%s268 + $0x28] sm:$0xf]
      %v280 = vld [vmem:[%s268 + $0x2c] sm:$0xf]
      %v281 = vld [vmem:[%s268 + $0x30] sm:$0xf]
      %v282 = vld [vmem:[%s268 + $0x34] sm:$0xf]
      %v283 = vld [vmem:[%s268 + $0x38] sm:$0xf]
      %v284 = vld [vmem:[%s268 + $0x3c] sm:$0xf]
      %v285 = vld [vmem:[%s265] sm:$0xe]
      %v286 = vld [vmem:[%s265 + $0x8] sm:$0x3]
      %s287 = scalar_lea.vmem %s243, 256
      %v288 = vld [vmem:[%s287] sm:$0xf]
      %v289 = vld [vmem:[%s287 + $0x4] sm:$0xf]
      %v290 = vld [vmem:[%s287 + $0x8] sm:$0xf]
      %v291 = vld [vmem:[%s287 + $0xc] sm:$0xf]
      %v292 = vld [vmem:[%s287 + $0x10] sm:$0xf]
      %v293 = vld [vmem:[%s287 + $0x14] sm:$0xf]
      %v294 = vld [vmem:[%s287 + $0x18] sm:$0xf]
      %v295 = vld [vmem:[%s287 + $0x1c] sm:$0xf]
      %v296 = vld [vmem:[%s287 + $0x20] sm:$0xf]
      %v297 = vld [vmem:[%s287 + $0x24] sm:$0xf]
      %v298 = vld [vmem:[%s287 + $0x28] sm:$0xf]
      %v299 = vld [vmem:[%s287 + $0x2c] sm:$0xf]
      %v300 = vld [vmem:[%s287 + $0x30] sm:$0xf]
      %v301 = vld [vmem:[%s287 + $0x34] sm:$0xf]
      %v302 = vld [vmem:[%s287 + $0x38] sm:$0xf]
      %v303 = vld [vmem:[%s287 + $0x3c] sm:$0xf]
      %v307 = vunpack.c.l.b16 %v285
      %v308 = vunpack.c.l.b16 %v267
      %v309 = vunpack.c.l.b16 %v286
      %v310 = vpack.c.b16 %v308, %v307
      %v311 = vpack.c.b16 %v309, %v309
      %vm312 = vsmask.f32 6400
      %v314 = vshrl.u32 %v310, 16
      %v316 = vrot.slane %v314, 1
      %v317 = vshll.u32 %v310, 16
      %v319 = vrot.slane %v317, 2
      %v320 = vor.u32 %v316, %v319
      %v322 = vshrl.u32 %v311, 16
      %v324 = vrot.slane %v322, 1
      %v325 = vshll.u32 %v311, 16
      %v327 = vrot.slane %v325, 2
      %v328 = vor.u32 %v324, %v327
      %v329 = vsel %vm312, %v320, %v328
      %v347 = vunpack.c.l.b16 %v288
      %v348 = vunpack.c.l.b16 %v289
      %v349 = vunpack.c.l.b16 %v290
      %v350 = vunpack.c.l.b16 %v291
      %v351 = vunpack.c.l.b16 %v292
      %v352 = vunpack.c.l.b16 %v293
      %v353 = vunpack.c.l.b16 %v294
      %v354 = vunpack.c.l.b16 %v295
      %v355 = vunpack.c.l.b16 %v296
      %v356 = vunpack.c.l.b16 %v297
      %v357 = vunpack.c.l.b16 %v298
      %v358 = vunpack.c.l.b16 %v299
      %v359 = vunpack.c.l.b16 %v300
      %v360 = vunpack.c.l.b16 %v301
      %v361 = vunpack.c.l.b16 %v302
      %v362 = vunpack.c.l.b16 %v303
      %v363 = vpack.c.b16 %v348, %v347
      %v364 = vpack.c.b16 %v350, %v349
      %v365 = vpack.c.b16 %v352, %v351
      %v366 = vpack.c.b16 %v354, %v353
      %v367 = vpack.c.b16 %v356, %v355
      %v368 = vpack.c.b16 %v358, %v357
      %v369 = vpack.c.b16 %v360, %v359
      %v370 = vpack.c.b16 %v362, %v361
      %379 = vmatprep.subr.bf16.mxu0 0
      %380 = vmatpush1.bf16.msra.mxu0 %v370
      %381 = vmatprep.subr.bf16.mxu0 0
      %382 = vmatpush1.bf16.msra.mxu0 %v369
      %383 = vmatprep.subr.bf16.mxu0 0
      %384 = vmatpush1.bf16.msra.mxu0 %v368
      %385 = vmatprep.subr.bf16.mxu0 0
      %386 = vmatpush1.bf16.msra.mxu0 %v367
      %387 = vmatprep.subr.bf16.mxu0 0
      %388 = vmatpush1.bf16.msra.mxu0 %v366
      %389 = vmatprep.subr.bf16.mxu0 0
      %390 = vmatpush1.bf16.msra.mxu0 %v365
      %391 = vmatprep.subr.bf16.mxu0 0
      %392 = vmatpush1.bf16.msra.mxu0 %v364
      %393 = vmatprep.subr.bf16.mxu0 0
      %394 = vmatpush1.bf16.msra.mxu0 %v363
      %395 = vmatprep.subr.bf16.mxu0 0
      %396 = vmatpush2.bf16.msra.mxu0 0
      %397 = vmatprep.subr.bf16.mxu0 0
      %398 = vmatpush2.bf16.msra.mxu0 0
      %399 = vmatprep.subr.bf16.mxu0 0
      %400 = vmatpush2.bf16.msra.mxu0 0
      %401 = vmatprep.subr.bf16.mxu0 0
      %402 = vmatpush2.bf16.msra.mxu0 0
      %403 = vmatprep.subr.bf16.mxu0 0
      %404 = vmatpush2.bf16.msra.mxu0 0
      %405 = vmatprep.subr.bf16.mxu0 0
      %406 = vmatpush2.bf16.msra.mxu0 0
      %407 = vmatprep.subr.bf16.mxu0 0
      %408 = vmatpush2.bf16.msra.mxu0 0
      %409 = vmatprep.subr.bf16.mxu0 0
      %410 = vmatpush2.bf16.msra.mxu0 0
      %411 = vmatprep.mubr.bf16.mxu0 0
      %412 = vmatmul.mubr.bf16.gmra.mxu0 %v329
      %v413 = vpop.f32.mrf.mxu0
      %v414 = vadd.f32 0.0, %v413
      %v415 = vpop.f32.mrf.mxu0
      %v416 = vpop.f32.mrf.mxu0
      %v417 = vadd.f32 0.0, %v416
      %v418 = vpop.f32.mrf.mxu0
      %419 = vdwg.mxu0
      %v421 = vunpack.c.l.b16 %v266
      %v422 = vpack.c.b16 %v308, %v421
      %v440 = vunpack.c.l.b16 %v269
      %v441 = vunpack.c.l.b16 %v270
      %v442 = vunpack.c.l.b16 %v271
      %v443 = vunpack.c.l.b16 %v272
      %v444 = vunpack.c.l.b16 %v273
      %v445 = vunpack.c.l.b16 %v274
      %v446 = vunpack.c.l.b16 %v275
      %v447 = vunpack.c.l.b16 %v276
      %v448 = vunpack.c.l.b16 %v277
      %v449 = vunpack.c.l.b16 %v278
      %v450 = vunpack.c.l.b16 %v279
      %v451 = vunpack.c.l.b16 %v280
      %v452 = vunpack.c.l.b16 %v281
      %v453 = vunpack.c.l.b16 %v282
      %v454 = vunpack.c.l.b16 %v283
      %v455 = vunpack.c.l.b16 %v284
      %v456 = vpack.c.b16 %v441, %v440
      %v457 = vpack.c.b16 %v443, %v442
      %v458 = vpack.c.b16 %v445, %v444
      %v459 = vpack.c.b16 %v447, %v446
      %v460 = vpack.c.b16 %v449, %v448
      %v461 = vpack.c.b16 %v451, %v450
      %v462 = vpack.c.b16 %v453, %v452
      %v463 = vpack.c.b16 %v455, %v454
      %472 = vmatprep.subr.bf16.mxu0 0
      %473 = vmatpush1.bf16.msra.mxu0 %v463
      %474 = vmatprep.subr.bf16.mxu0 0
      %475 = vmatpush1.bf16.msra.mxu0 %v462
      %476 = vmatprep.subr.bf16.mxu0 0
      %477 = vmatpush1.bf16.msra.mxu0 %v461
      %478 = vmatprep.subr.bf16.mxu0 0
      %479 = vmatpush1.bf16.msra.mxu0 %v460
      %480 = vmatprep.subr.bf16.mxu0 0
      %481 = vmatpush1.bf16.msra.mxu0 %v459
      %482 = vmatprep.subr.bf16.mxu0 0
      %483 = vmatpush1.bf16.msra.mxu0 %v458
      %484 = vmatprep.subr.bf16.mxu0 0
      %485 = vmatpush1.bf16.msra.mxu0 %v457
      %486 = vmatprep.subr.bf16.mxu0 0
      %487 = vmatpush1.bf16.msra.mxu0 %v456
      %488 = vmatprep.subr.bf16.mxu0 0
      %489 = vmatpush2.bf16.msra.mxu0 0
      %490 = vmatprep.subr.bf16.mxu0 0
      %491 = vmatpush2.bf16.msra.mxu0 0
      %492 = vmatprep.subr.bf16.mxu0 0
      %493 = vmatpush2.bf16.msra.mxu0 0
      %494 = vmatprep.subr.bf16.mxu0 0
      %495 = vmatpush2.bf16.msra.mxu0 0
      %496 = vmatprep.subr.bf16.mxu0 0
      %497 = vmatpush2.bf16.msra.mxu0 0
      %498 = vmatprep.subr.bf16.mxu0 0
      %499 = vmatpush2.bf16.msra.mxu0 0
      %500 = vmatprep.subr.bf16.mxu0 0
      %501 = vmatpush2.bf16.msra.mxu0 0
      %502 = vmatprep.subr.bf16.mxu0 0
      %503 = vmatpush2.bf16.msra.mxu0 0
      %504 = vmatprep.mubr.bf16.mxu0 0
      %505 = vmatmul.mubr.bf16.gmra.mxu0 %v422
      %v506 = vpop.f32.mrf.mxu0
      %v507 = vadd.f32 %v414, %v506
      %v508 = vpop.f32.mrf.mxu0
      %v509 = vpop.f32.mrf.mxu0
      %v510 = vadd.f32 %v417, %v509
      %v511 = vpop.f32.mrf.mxu0
      %512 = vdwg.mxu0
      %v513 = vld [vmem:[%s265] sm:$0x8]
      %v514 = vld [vmem:[%s265 + $0x8] sm:$0x7]
      %s515 = scalar_lea.vmem %s243, 320
      %v516 = vld [vmem:[%s515] sm:$0xf]
      %v517 = vld [vmem:[%s515 + $0x4] sm:$0xf]
      %v518 = vld [vmem:[%s515 + $0x8] sm:$0xf]
      %v519 = vld [vmem:[%s515 + $0xc] sm:$0xf]
      %v520 = vld [vmem:[%s515 + $0x10] sm:$0xf]
      %v521 = vld [vmem:[%s515 + $0x14] sm:$0xf]
      %v522 = vld [vmem:[%s515 + $0x18] sm:$0xf]
      %v523 = vld [vmem:[%s515 + $0x1c] sm:$0xf]
      %v524 = vld [vmem:[%s515 + $0x20] sm:$0xf]
      %v525 = vld [vmem:[%s515 + $0x24] sm:$0xf]
      %v526 = vld [vmem:[%s515 + $0x28] sm:$0xf]
      %v527 = vld [vmem:[%s515 + $0x2c] sm:$0xf]
      %v528 = vld [vmem:[%s515 + $0x30] sm:$0xf]
      %v529 = vld [vmem:[%s515 + $0x34] sm:$0xf]
      %v530 = vld [vmem:[%s515 + $0x38] sm:$0xf]
      %v531 = vld [vmem:[%s515 + $0x3c] sm:$0xf]
      %v534 = vunpack.c.l.b16 %v513
      %v535 = vunpack.c.l.b16 %v514
      %v536 = vpack.c.b16 %v308, %v534
      %v537 = vpack.c.b16 %v535, %v535
      %vm538 = vcmask 1044480
      %v539 = vrot.slane %v536, 3
      %v540 = vrot.slane %v537, 3
      %v541 = vsel %vm538, %v539, %v540
      %v559 = vunpack.c.l.b16 %v516
      %v560 = vunpack.c.l.b16 %v517
      %v561 = vunpack.c.l.b16 %v518
      %v562 = vunpack.c.l.b16 %v519
      %v563 = vunpack.c.l.b16 %v520
      %v564 = vunpack.c.l.b16 %v521
      %v565 = vunpack.c.l.b16 %v522
      %v566 = vunpack.c.l.b16 %v523
      %v567 = vunpack.c.l.b16 %v524
      %v568 = vunpack.c.l.b16 %v525
      %v569 = vunpack.c.l.b16 %v526
      %v570 = vunpack.c.l.b16 %v527
      %v571 = vunpack.c.l.b16 %v528
      %v572 = vunpack.c.l.b16 %v529
      %v573 = vunpack.c.l.b16 %v530
      %v574 = vunpack.c.l.b16 %v531
      %v575 = vpack.c.b16 %v560, %v559
      %v576 = vpack.c.b16 %v562, %v561
      %v577 = vpack.c.b16 %v564, %v563
      %v578 = vpack.c.b16 %v566, %v565
      %v579 = vpack.c.b16 %v568, %v567
      %v580 = vpack.c.b16 %v570, %v569
      %v581 = vpack.c.b16 %v572, %v571
      %v582 = vpack.c.b16 %v574, %v573
      %591 = vmatprep.subr.bf16.mxu0 0
      %592 = vmatpush1.bf16.msra.mxu0 %v582
      %593 = vmatprep.subr.bf16.mxu0 0
      %594 = vmatpush1.bf16.msra.mxu0 %v581
      %595 = vmatprep.subr.bf16.mxu0 0
      %596 = vmatpush1.bf16.msra.mxu0 %v580
      %597 = vmatprep.subr.bf16.mxu0 0
      %598 = vmatpush1.bf16.msra.mxu0 %v579
      %599 = vmatprep.subr.bf16.mxu0 0
      %600 = vmatpush1.bf16.msra.mxu0 %v578
      %601 = vmatprep.subr.bf16.mxu0 0
      %602 = vmatpush1.bf16.msra.mxu0 %v577
      %603 = vmatprep.subr.bf16.mxu0 0
      %604 = vmatpush1.bf16.msra.mxu0 %v576
      %605 = vmatprep.subr.bf16.mxu0 0
      %606 = vmatpush1.bf16.msra.mxu0 %v575
      %607 = vmatprep.subr.bf16.mxu0 0
      %608 = vmatpush2.bf16.msra.mxu0 0
      %609 = vmatprep.subr.bf16.mxu0 0
      %610 = vmatpush2.bf16.msra.mxu0 0
      %611 = vmatprep.subr.bf16.mxu0 0
      %612 = vmatpush2.bf16.msra.mxu0 0
      %613 = vmatprep.subr.bf16.mxu0 0
      %614 = vmatpush2.bf16.msra.mxu0 0
      %615 = vmatprep.subr.bf16.mxu0 0
      %616 = vmatpush2.bf16.msra.mxu0 0
      %617 = vmatprep.subr.bf16.mxu0 0
      %618 = vmatpush2.bf16.msra.mxu0 0
      %619 = vmatprep.subr.bf16.mxu0 0
      %620 = vmatpush2.bf16.msra.mxu0 0
      %621 = vmatprep.subr.bf16.mxu0 0
      %622 = vmatpush2.bf16.msra.mxu0 0
      %623 = vmatprep.mubr.bf16.mxu0 0
      %624 = vmatmul.mubr.bf16.gmra.mxu0 %v541
      %v625 = vpop.f32.mrf.mxu0
      %v626 = vadd.f32 0.0, %v625
      %v627 = vpop.f32.mrf.mxu0
      %v628 = vpop.f32.mrf.mxu0
      %v629 = vadd.f32 0.0, %v628
      %v630 = vpop.f32.mrf.mxu0
      %631 = vdwg.mxu0
      %v632 = vadd.f32 %v507, %v626
      %v633 = vadd.f32 %v510, %v629
      %v634 = vld [vmem:[#allocation2] sm:$0xff]
      %v635 = vld [vmem:[#allocation2 + $0x8] sm:$0xff]
      %v636 = vadd.f32 %v634, %v632
      %v637 = vadd.f32 %v635, %v633
      %638 = vst [vmem:[#allocation2] sm:$0xff] %v636
      %639 = vst [vmem:[#allocation2 + $0x8] sm:$0xff] %v637
      %s640 = scalar_lea.vmem %s235, 48
      %v641 = vld [vmem:[%s640] sm:$0xf]
      %v642 = vld [vmem:[%s640 + $0x4] sm:$0xf]
      %v643 = vld [vmem:[%s268] sm:$0xf]
      %v644 = vld [vmem:[%s268 + $0x4] sm:$0xf]
      %v645 = vld [vmem:[%s268 + $0x8] sm:$0xf]
      %v646 = vld [vmem:[%s268 + $0xc] sm:$0xf]
      %v647 = vld [vmem:[%s268 + $0x10] sm:$0xf]
      %v648 = vld [vmem:[%s268 + $0x14] sm:$0xf]
      %v649 = vld [vmem:[%s268 + $0x18] sm:$0xf]
      %v650 = vld [vmem:[%s268 + $0x1c] sm:$0xf]
      %v651 = vld [vmem:[%s268 + $0x20] sm:$0xf]
      %v652 = vld [vmem:[%s268 + $0x24] sm:$0xf]
      %v653 = vld [vmem:[%s268 + $0x28] sm:$0xf]
      %v654 = vld [vmem:[%s268 + $0x2c] sm:$0xf]
      %v655 = vld [vmem:[%s268 + $0x30] sm:$0xf]
      %v656 = vld [vmem:[%s268 + $0x34] sm:$0xf]
      %v657 = vld [vmem:[%s268 + $0x38] sm:$0xf]
      %v658 = vld [vmem:[%s268 + $0x3c] sm:$0xf]
      %v659 = vld [vmem:[%s640] sm:$0xe]
      %v660 = vld [vmem:[%s640 + $0x8] sm:$0x3]
      %v661 = vld [vmem:[%s287] sm:$0xf]
      %v662 = vld [vmem:[%s287 + $0x4] sm:$0xf]
      %v663 = vld [vmem:[%s287 + $0x8] sm:$0xf]
      %v664 = vld [vmem:[%s287 + $0xc] sm:$0xf]
      %v665 = vld [vmem:[%s287 + $0x10] sm:$0xf]
      %v666 = vld [vmem:[%s287 + $0x14] sm:$0xf]
      %v667 = vld [vmem:[%s287 + $0x18] sm:$0xf]
      %v668 = vld [vmem:[%s287 + $0x1c] sm:$0xf]
      %v669 = vld [vmem:[%s287 + $0x20] sm:$0xf]
      %v670 = vld [vmem:[%s287 + $0x24] sm:$0xf]
      %v671 = vld [vmem:[%s287 + $0x28] sm:$0xf]
      %v672 = vld [vmem:[%s287 + $0x2c] sm:$0xf]
      %v673 = vld [vmem:[%s287 + $0x30] sm:$0xf]
      %v674 = vld [vmem:[%s287 + $0x34] sm:$0xf]
      %v675 = vld [vmem:[%s287 + $0x38] sm:$0xf]
      %v676 = vld [vmem:[%s287 + $0x3c] sm:$0xf]
      %v680 = vunpack.c.l.b16 %v659
      %v681 = vunpack.c.l.b16 %v642
      %v682 = vunpack.c.l.b16 %v660
      %v683 = vpack.c.b16 %v681, %v680
      %v684 = vpack.c.b16 %v682, %v682
      %v686 = vshrl.u32 %v683, 16
      %v688 = vrot.slane %v686, 1
      %v689 = vshll.u32 %v683, 16
      %v691 = vrot.slane %v689, 2
      %v692 = vor.u32 %v688, %v691
      %v694 = vshrl.u32 %v684, 16
      %v696 = vrot.slane %v694, 1
      %v697 = vshll.u32 %v684, 16
      %v699 = vrot.slane %v697, 2
      %v700 = vor.u32 %v696, %v699
      %v701 = vsel %vm312, %v692, %v700
      %v719 = vunpack.c.l.b16 %v661
      %v720 = vunpack.c.l.b16 %v662
      %v721 = vunpack.c.l.b16 %v663
      %v722 = vunpack.c.l.b16 %v664
      %v723 = vunpack.c.l.b16 %v665
      %v724 = vunpack.c.l.b16 %v666
      %v725 = vunpack.c.l.b16 %v667
      %v726 = vunpack.c.l.b16 %v668
      %v727 = vunpack.c.l.b16 %v669
      %v728 = vunpack.c.l.b16 %v670
      %v729 = vunpack.c.l.b16 %v671
      %v730 = vunpack.c.l.b16 %v672
      %v731 = vunpack.c.l.b16 %v673
      %v732 = vunpack.c.l.b16 %v674
      %v733 = vunpack.c.l.b16 %v675
      %v734 = vunpack.c.l.b16 %v676
      %v735 = vpack.c.b16 %v720, %v719
      %v736 = vpack.c.b16 %v722, %v721
      %v737 = vpack.c.b16 %v724, %v723
      %v738 = vpack.c.b16 %v726, %v725
      %v739 = vpack.c.b16 %v728, %v727
      %v740 = vpack.c.b16 %v730, %v729
      %v741 = vpack.c.b16 %v732, %v731
      %v742 = vpack.c.b16 %v734, %v733
      %751 = vmatprep.subr.bf16.mxu0 0
      %752 = vmatpush1.bf16.msra.mxu0 %v742
      %753 = vmatprep.subr.bf16.mxu0 0
      %754 = vmatpush1.bf16.msra.mxu0 %v741
      %755 = vmatprep.subr.bf16.mxu0 0
      %756 = vmatpush1.bf16.msra.mxu0 %v740
      %757 = vmatprep.subr.bf16.mxu0 0
      %758 = vmatpush1.bf16.msra.mxu0 %v739
      %759 = vmatprep.subr.bf16.mxu0 0
      %760 = vmatpush1.bf16.msra.mxu0 %v738
      %761 = vmatprep.subr.bf16.mxu0 0
      %762 = vmatpush1.bf16.msra.mxu0 %v737
      %763 = vmatprep.subr.bf16.mxu0 0
      %764 = vmatpush1.bf16.msra.mxu0 %v736
      %765 = vmatprep.subr.bf16.mxu0 0
      %766 = vmatpush1.bf16.msra.mxu0 %v735
      %767 = vmatprep.subr.bf16.mxu0 0
      %768 = vmatpush2.bf16.msra.mxu0 0
      %769 = vmatprep.subr.bf16.mxu0 0
      %770 = vmatpush2.bf16.msra.mxu0 0
      %771 = vmatprep.subr.bf16.mxu0 0
      %772 = vmatpush2.bf16.msra.mxu0 0
      %773 = vmatprep.subr.bf16.mxu0 0
      %774 = vmatpush2.bf16.msra.mxu0 0
      %775 = vmatprep.subr.bf16.mxu0 0
      %776 = vmatpush2.bf16.msra.mxu0 0
      %777 = vmatprep.subr.bf16.mxu0 0
      %778 = vmatpush2.bf16.msra.mxu0 0
      %779 = vmatprep.subr.bf16.mxu0 0
      %780 = vmatpush2.bf16.msra.mxu0 0
      %781 = vmatprep.subr.bf16.mxu0 0
      %782 = vmatpush2.bf16.msra.mxu0 0
      %783 = vmatprep.mubr.bf16.mxu0 0
      %784 = vmatmul.mubr.bf16.gmra.mxu0 %v701
      %v785 = vpop.f32.mrf.mxu0
      %v786 = vadd.f32 0.0, %v785
      %v787 = vpop.f32.mrf.mxu0
      %v788 = vpop.f32.mrf.mxu0
      %v789 = vadd.f32 0.0, %v788
      %v790 = vpop.f32.mrf.mxu0
      %791 = vdwg.mxu0
      %v793 = vunpack.c.l.b16 %v641
      %v794 = vpack.c.b16 %v681, %v793
      %v812 = vunpack.c.l.b16 %v643
      %v813 = vunpack.c.l.b16 %v644
      %v814 = vunpack.c.l.b16 %v645
      %v815 = vunpack.c.l.b16 %v646
      %v816 = vunpack.c.l.b16 %v647
      %v817 = vunpack.c.l.b16 %v648
      %v818 = vunpack.c.l.b16 %v649
      %v819 = vunpack.c.l.b16 %v650
      %v820 = vunpack.c.l.b16 %v651
      %v821 = vunpack.c.l.b16 %v652
      %v822 = vunpack.c.l.b16 %v653
      %v823 = vunpack.c.l.b16 %v654
      %v824 = vunpack.c.l.b16 %v655
      %v825 = vunpack.c.l.b16 %v656
      %v826 = vunpack.c.l.b16 %v657
      %v827 = vunpack.c.l.b16 %v658
      %v828 = vpack.c.b16 %v813, %v812
      %v829 = vpack.c.b16 %v815, %v814
      %v830 = vpack.c.b16 %v817, %v816
      %v831 = vpack.c.b16 %v819, %v818
      %v832 = vpack.c.b16 %v821, %v820
      %v833 = vpack.c.b16 %v823, %v822
      %v834 = vpack.c.b16 %v825, %v824
      %v835 = vpack.c.b16 %v827, %v826
      %844 = vmatprep.subr.bf16.mxu0 0
      %845 = vmatpush1.bf16.msra.mxu0 %v835
      %846 = vmatprep.subr.bf16.mxu0 0
      %847 = vmatpush1.bf16.msra.mxu0 %v834
      %848 = vmatprep.subr.bf16.mxu0 0
      %849 = vmatpush1.bf16.msra.mxu0 %v833
      %850 = vmatprep.subr.bf16.mxu0 0
      %851 = vmatpush1.bf16.msra.mxu0 %v832
      %852 = vmatprep.subr.bf16.mxu0 0
      %853 = vmatpush1.bf16.msra.mxu0 %v831
      %854 = vmatprep.subr.bf16.mxu0 0
      %855 = vmatpush1.bf16.msra.mxu0 %v830
      %856 = vmatprep.subr.bf16.mxu0 0
      %857 = vmatpush1.bf16.msra.mxu0 %v829
      %858 = vmatprep.subr.bf16.mxu0 0
      %859 = vmatpush1.bf16.msra.mxu0 %v828
      %860 = vmatprep.subr.bf16.mxu0 0
      %861 = vmatpush2.bf16.msra.mxu0 0
      %862 = vmatprep.subr.bf16.mxu0 0
      %863 = vmatpush2.bf16.msra.mxu0 0
      %864 = vmatprep.subr.bf16.mxu0 0
      %865 = vmatpush2.bf16.msra.mxu0 0
      %866 = vmatprep.subr.bf16.mxu0 0
      %867 = vmatpush2.bf16.msra.mxu0 0
      %868 = vmatprep.subr.bf16.mxu0 0
      %869 = vmatpush2.bf16.msra.mxu0 0
      %870 = vmatprep.subr.bf16.mxu0 0
      %871 = vmatpush2.bf16.msra.mxu0 0
      %872 = vmatprep.subr.bf16.mxu0 0
      %873 = vmatpush2.bf16.msra.mxu0 0
      %874 = vmatprep.subr.bf16.mxu0 0
      %875 = vmatpush2.bf16.msra.mxu0 0
      %876 = vmatprep.mubr.bf16.mxu0 0
      %877 = vmatmul.mubr.bf16.gmra.mxu0 %v794
      %v878 = vpop.f32.mrf.mxu0
      %v879 = vadd.f32 %v786, %v878
      %v880 = vpop.f32.mrf.mxu0
      %v881 = vpop.f32.mrf.mxu0
      %v882 = vadd.f32 %v789, %v881
      %v883 = vpop.f32.mrf.mxu0
      %884 = vdwg.mxu0
      %v885 = vld [vmem:[%s640] sm:$0x8]
      %v886 = vld [vmem:[%s640 + $0x8] sm:$0x7]
      %v887 = vld [vmem:[%s515] sm:$0xf]
      %v888 = vld [vmem:[%s515 + $0x4] sm:$0xf]
      %v889 = vld [vmem:[%s515 + $0x8] sm:$0xf]
      %v890 = vld [vmem:[%s515 + $0xc] sm:$0xf]
      %v891 = vld [vmem:[%s515 + $0x10] sm:$0xf]
      %v892 = vld [vmem:[%s515 + $0x14] sm:$0xf]
      %v893 = vld [vmem:[%s515 + $0x18] sm:$0xf]
      %v894 = vld [vmem:[%s515 + $0x1c] sm:$0xf]
      %v895 = vld [vmem:[%s515 + $0x20] sm:$0xf]
      %v896 = vld [vmem:[%s515 + $0x24] sm:$0xf]
      %v897 = vld [vmem:[%s515 + $0x28] sm:$0xf]
      %v898 = vld [vmem:[%s515 + $0x2c] sm:$0xf]
      %v899 = vld [vmem:[%s515 + $0x30] sm:$0xf]
      %v900 = vld [vmem:[%s515 + $0x34] sm:$0xf]
      %v901 = vld [vmem:[%s515 + $0x38] sm:$0xf]
      %v902 = vld [vmem:[%s515 + $0x3c] sm:$0xf]
      %v905 = vunpack.c.l.b16 %v885
      %v906 = vunpack.c.l.b16 %v886
      %v907 = vpack.c.b16 %v681, %v905
      %v908 = vpack.c.b16 %v906, %v906
      %v909 = vrot.slane %v907, 3
      %v910 = vrot.slane %v908, 3
      %v911 = vsel %vm538, %v909, %v910
      %v929 = vunpack.c.l.b16 %v887
      %v930 = vunpack.c.l.b16 %v888
      %v931 = vunpack.c.l.b16 %v889
      %v932 = vunpack.c.l.b16 %v890
      %v933 = vunpack.c.l.b16 %v891
      %v934 = vunpack.c.l.b16 %v892
      %v935 = vunpack.c.l.b16 %v893
      %v936 = vunpack.c.l.b16 %v894
      %v937 = vunpack.c.l.b16 %v895
      %v938 = vunpack.c.l.b16 %v896
      %v939 = vunpack.c.l.b16 %v897
      %v940 = vunpack.c.l.b16 %v898
      %v941 = vunpack.c.l.b16 %v899
      %v942 = vunpack.c.l.b16 %v900
      %v943 = vunpack.c.l.b16 %v901
      %v944 = vunpack.c.l.b16 %v902
      %v945 = vpack.c.b16 %v930, %v929
      %v946 = vpack.c.b16 %v932, %v931
      %v947 = vpack.c.b16 %v934, %v933
      %v948 = vpack.c.b16 %v936, %v935
      %v949 = vpack.c.b16 %v938, %v937
      %v950 = vpack.c.b16 %v940, %v939
      %v951 = vpack.c.b16 %v942, %v941
      %v952 = vpack.c.b16 %v944, %v943
      %961 = vmatprep.subr.bf16.mxu0 0
      %962 = vmatpush1.bf16.msra.mxu0 %v952
      %963 = vmatprep.subr.bf16.mxu0 0
      %964 = vmatpush1.bf16.msra.mxu0 %v951
      %965 = vmatprep.subr.bf16.mxu0 0
      %966 = vmatpush1.bf16.msra.mxu0 %v950
      %967 = vmatprep.subr.bf16.mxu0 0
      %968 = vmatpush1.bf16.msra.mxu0 %v949
      %969 = vmatprep.subr.bf16.mxu0 0
      %970 = vmatpush1.bf16.msra.mxu0 %v948
      %971 = vmatprep.subr.bf16.mxu0 0
      %972 = vmatpush1.bf16.msra.mxu0 %v947
      %973 = vmatprep.subr.bf16.mxu0 0
      %974 = vmatpush1.bf16.msra.mxu0 %v946
      %975 = vmatprep.subr.bf16.mxu0 0
      %976 = vmatpush1.bf16.msra.mxu0 %v945
      %977 = vmatprep.subr.bf16.mxu0 0
      %978 = vmatpush2.bf16.msra.mxu0 0
      %979 = vmatprep.subr.bf16.mxu0 0
      %980 = vmatpush2.bf16.msra.mxu0 0
      %981 = vmatprep.subr.bf16.mxu0 0
      %982 = vmatpush2.bf16.msra.mxu0 0
      %983 = vmatprep.subr.bf16.mxu0 0
      %984 = vmatpush2.bf16.msra.mxu0 0
      %985 = vmatprep.subr.bf16.mxu0 0
      %986 = vmatpush2.bf16.msra.mxu0 0
      %987 = vmatprep.subr.bf16.mxu0 0
      %988 = vmatpush2.bf16.msra.mxu0 0
      %989 = vmatprep.subr.bf16.mxu0 0
      %990 = vmatpush2.bf16.msra.mxu0 0
      %991 = vmatprep.subr.bf16.mxu0 0
      %992 = vmatpush2.bf16.msra.mxu0 0
      %993 = vmatprep.mubr.bf16.mxu0 0
      %994 = vmatmul.mubr.bf16.gmra.mxu0 %v911
      %v995 = vpop.f32.mrf.mxu0
      %v996 = vadd.f32 0.0, %v995
      %v997 = vpop.f32.mrf.mxu0
      %v998 = vpop.f32.mrf.mxu0
      %v999 = vadd.f32 0.0, %v998
      %v1000 = vpop.f32.mrf.mxu0
      %1001 = vdwg.mxu0
      %v1002 = vadd.f32 %v879, %v996
      %v1003 = vadd.f32 %v882, %v999
      %s1004 = scalar_lea.vmem [#allocation2], 16
      %v1005 = vld [vmem:[%s1004] sm:$0xff]
      %v1006 = vld [vmem:[%s1004 + $0x8] sm:$0xff]
      %v1007 = vadd.f32 %v1005, %v1002
      %v1008 = vadd.f32 %v1006, %v1003
      %1009 = vst [vmem:[%s1004] sm:$0xff] %v1007
      %1010 = vst [vmem:[%s1004 + $0x8] sm:$0xff] %v1008
      // Predicated region
      $region37: #{mds_forward.9} parent=31 // pred_check
        %p1011 = pneg %p257
      $region38: #{mds_forward.9} parent=31 // pred_check_branch
        %1013 = sbr.rel (%p1011) target = $region40
      $region39: #{mds_forward.9} parent=31 // pred_region
        %v1014 = vld [vmem:[#allocation2] sm:$0xff]
        %v1015 = vld [vmem:[#allocation2 + $0x8] sm:$0xff]
        %v1016 = vld [vmem:[#allocation2 + $0x10] sm:$0xff]
        %v1017 = vld [vmem:[#allocation2 + $0x18] sm:$0xff]
        %v1018 = vld [vmem:[%s247] sm:$0x1]
        %v1020 = vlaneseq
        %v1021 = vshrl.u32 %v1020, 7
        %v1022 = vsub.s32 0, %v1021
        %v1023 = vrot.slane %v1018, %v1022
        %v1025 = vadd.f32 %v1014, %v1023
        %v1026 = vadd.f32 %v1015, %v1023
        %v1027 = vadd.f32 %v1016, %v1023
        %v1028 = vadd.f32 %v1017, %v1023
        %v1029 = vmax.f32 %v1025, 0.0
        %v1030 = vmax.f32 %v1026, 0.0
        %v1031 = vmax.f32 %v1027, 0.0
        %v1032 = vmax.f32 %v1028, 0.0
        %v1033 = vpack.c.bf16 %v1030, %v1029
        %v1034 = vpack.c.bf16 %v1032, %v1031
        %v1037 = vunpack.c.l.b16 %v1033
        %v1038 = vunpack.c.h.b16 %v1033
        %v1039 = vunpack.c.l.b16 %v1034
        %v1040 = vunpack.c.h.b16 %v1034
        %v1041 = vpack.c.b16 %v1037, %v1037
        %v1042 = vpack.c.b16 %v1038, %v1038
        %v1043 = vpack.c.b16 %v1039, %v1039
        %v1044 = vpack.c.b16 %v1040, %v1040
        %1049 = vst [vmem:[%s255] sm:$0xf] %v1041
        %1050 = vst [vmem:[%s255 + $0x4] sm:$0xf] %v1042
        %1051 = vst [vmem:[%s255 + $0x8] sm:$0xf] %v1043
        %1052 = vst [vmem:[%s255 + $0xc] sm:$0xf] %v1044
      $region40: #{mds_forward.9} parent=31 // pred_fallthru
        _
      %p1053 = scmp.lt.s32.totalorder %s19, 1
      %s1054 = scalar_select %p1053, %s19, 1
      %p1055 = scmp.lt.s32.totalorder %s20, 0
      %s1056 = scalar_select %p1055, %s20, 0
      %s1057 = smul.addr %s1054, 4
      %s1058 = sadd.s32 %s1056, %s1057
      %s1059 = smul.addr %s1058, 4
      %s1060 = scalar_lea.vmem %s3, %s1059
      // Predicated region
      $region41: #{mds_forward.9} parent=31 // pred_check
        %p1061 = pneg %p135
      $region42: #{mds_forward.9} parent=31 // pred_check_branch
        %1063 = sbr.rel (%p1061) target = $region44
      $region43: #{mds_forward.9} parent=31 // pred_region
        _
      $region44: #{mds_forward.9} parent=31 // pred_fallthru
        _
    $region32: #{mds_forward.9} parent=5 // pred_fallthru
      _
    %p1064 = scmp.le.s32.totalorder 2, %s9
    // Predicated region
    $region45: #{mds_forward.9} parent=5 // pred_check
      %p1065 = pneg %p1064
    $region46: #{mds_forward.9} parent=5 // pred_check_branch
      %1067 = sbr.rel (%p1065) target = $region48
    $region47: #{mds_forward.9} parent=5 // pred_region
      %s1068 = ssub.s32 %s9, 2
      // Predicated region
      $region49: #{mds_forward.9} parent=47 // pred_check
        %p1069 = pneg %p141
      $region50: #{mds_forward.9} parent=47 // pred_check_branch
        %1071 = sbr.rel (%p1069) target = $region52
      $region51: #{mds_forward.9} parent=47 // pred_region
        %p1072 = scmp.lt.s32.totalorder %s22, 1
        %s1073 = scalar_select %p1072, %s22, 1
        %p1074 = scmp.lt.s32.totalorder %s23, 0
        %s1075 = scalar_select %p1074, %s23, 0
        %s1076 = smul.addr %s1073, 4
        %s1077 = sadd.s32 %s1075, %s1076
        %s1078 = smul.addr %s1077, 4
        %s1079 = scalar_lea.vmem %s3, %s1078
      $region52: #{mds_forward.9} parent=47 // pred_fallthru
        _
    $region48: #{mds_forward.9} parent=5 // pred_fallthru
      _
  $region6: #{mds_forward.9} parent=0 // loop_footer
    %s13 = sadd.s32 1, %s9
  $region7: #{mds_forward.9} parent=0 // loop_footer_branch
    %8 = sbr.rel target = $region3
  $region8: #{mds_forward.9} parent=0 // loop_exit
    _

// kernel: mds_forward.11
$region0: #{mds_forward.11}
  #allocation0 [shape = 'u32[]', space=smem, size = 0x4, offset = 0x4, fixed_abs, tag = 'smem constant byte address 0x4 - core index']
  #allocation1 [shape = 'u32[144,128]{1,0:T(1,128)}', space=vmem, size = 0x12000, scoped, tag = 'internal scratch']
  #allocation2 [shape = 'f32[1]{0:T(128)S(6)}', space=smem, size = 0x200, scoped, tag = 'scoped memory for mds_forward.11']
  %s0 = inlined_call_operand.vmem [shape: f32[2,4,18], index: 0, kind: input, shape index: {}]
  %s1 = inlined_call_operand.vmem [shape: f32[2,4,18], index: 1, kind: input, shape index: {}]
  %s2 = inlined_call_operand.vmem [shape: f32[18], index: 2, kind: input, shape index: {}]
  %s3 = inlined_call_operand.<no memory space> [shape: f32[1], index: 3, kind: input, shape index: {}]
  %s4 = inlined_call_operand.hbm [shape: f32[2,2,16], index: 4, kind: output, shape index: {}]
  %s5 = sld [smem:[#allocation0]]
  $region53: #{mds_forward.11} parent=0
    _
  %s7 = ssub.s32 1, %s5
  %s8 = scalar_select 0, %s7, %s5
  %9 = sst [smem:[#allocation2]] %s3
  $region1: #{mds_forward.11} parent=0
    #allocation3 [shape = 'u8[512]{0}', space=smem, size = 0x200, scoped, tag = 'input window, operand 2, single buffered']
    #allocation4 [shape = 's32[2]{0}', space=sflag, size = 0x8, scoped, tag = 'scoped memory for mds_forward.11']
    #allocation5 [shape = 's32[2]{0}', space=sflag, size = 0x8, scoped, tag = 'scoped memory for mds_forward.11']
    #allocation6 [shape = 'u8[2048]{0}', space=vmem, size = 0x800, scoped, tag = 'output window, operand 0']
    %10 = vsyncpa [#allocation5], 0
    %11 = vsyncpa [#allocation4], 0
    %s12 = scalar_lea.sflag [#allocation4], 1
    %13 = vsyncpa %s12, 0
    loop: start=0, step=1, limit=4
    $region2: #{mds_forward.11} parent=1 // loop_pre_header
      _
    $region3: #{mds_forward.11} parent=1 // loop_header
      %s15 = sphi 0, %s19
      %p16 = scmp.ge.s32.totalorder %s15, 4
      %s25 = sphi 0, %s27
      %s28 = sphi 0, %s25
      %s29 = sphi 0, %s28
      %s45 = sphi 0, %s29
      %s51 = sphi 0, %s53
      %s54 = sphi 0, %s51
      %s55 = sphi 0, %s54
      %s71 = sphi 0, %s55
      %s75 = sphi 0, %s75
      %s77 = sphi 0, %s75
      %s78 = sphi 0, %s77
      %s92 = sphi 0, %s78
      %s96 = sphi 0, %s96
      %s98 = sphi 0, %s96
      %s99 = sphi 0, %s98
      %s113 = sphi 0, %s99
      %s119 = sphi 0, %s121
      %s122 = sphi 0, %s119
      %s123 = sphi 0, %s122
      %s139 = sphi 0, %s123
    $region4: #{mds_forward.11} parent=1 // loop_header_branch
      %18 = sbr.rel (%p16) target = $region8
    $region5: #{mds_forward.11} parent=1 // loop_body
      %s20 = ssub.s32 %s15, 1
      %s21 = ssub.s32 %s15, 2
      %s22 = sadd.s32 %s15, 1
      %s23 = ssub.s32 %s15, %s22
      %p24 = scmp.eq.s32.totalorder %s23, 0
      %s26 = sadd.s32 %s25, 1
      %s27 = scalar_select %p24, %s25, %s26
      %p30 = pneg %p24
      %p31 = scmp.eq.s32.totalorder %s15, 1
      %p32 = por %p30, %p31
      %p33 = scmp.ne.s32.totalorder %s25, %s28
      %p34 = scmp.eq.s32.totalorder %s15, 0
      %p35 = por %p33, %p34
      %p36 = scmp.ne.s32.totalorder %s25, %s28
      %p37 = scmp.eq.s32.totalorder %s20, 1
      %p38 = por %p36, %p37
      %p39 = scmp.ne.s32.totalorder %s28, %s29
      %p40 = scmp.eq.s32.totalorder %s20, 0
      %p41 = por %p39, %p40
      %p42 = scmp.ne.s32.totalorder %s28, %s29
      %p43 = scmp.eq.s32.totalorder %s21, 1
      %p44 = por %p42, %p43
      %p46 = scmp.ne.s32.totalorder %s29, %s45
      %p47 = scmp.eq.s32.totalorder %s21, 0
      %p48 = por %p46, %p47
      %s49 = ssub.s32 %s15, %s22
      %p50 = scmp.eq.s32.totalorder %s49, 0
      %s52 = sadd.s32 %s51, 1
      %s53 = scalar_select %p50, %s51, %s52
      %p56 = pneg %p50
      %p57 = scmp.eq.s32.totalorder %s15, 1
      %p58 = por %p56, %p57
      %p59 = scmp.ne.s32.totalorder %s51, %s54
      %p60 = scmp.eq.s32.totalorder %s15, 0
      %p61 = por %p59, %p60
      %p62 = scmp.ne.s32.totalorder %s51, %s54
      %p63 = scmp.eq.s32.totalorder %s20, 1
      %p64 = por %p62, %p63
      %p65 = scmp.ne.s32.totalorder %s54, %s55
      %p66 = scmp.eq.s32.totalorder %s20, 0
      %p67 = por %p65, %p66
      %p68 = scmp.ne.s32.totalorder %s54, %s55
      %p69 = scmp.eq.s32.totalorder %s21, 1
      %p70 = por %p68, %p69
      %p72 = scmp.ne.s32.totalorder %s55, %s71
      %p73 = scmp.eq.s32.totalorder %s21, 0
      %p74 = por %p72, %p73
      %s76 = sadd.s32 %s75, 1
      %p79 = scmp.eq.s32.totalorder %s15, 1
      %p80 = scmp.ne.s32.totalorder %s75, %s77
      %p81 = scmp.eq.s32.totalorder %s15, 0
      %p82 = por %p80, %p81
      %p83 = scmp.ne.s32.totalorder %s75, %s77
      %p84 = scmp.eq.s32.totalorder %s20, 1
      %p85 = por %p83, %p84
      %p86 = scmp.ne.s32.totalorder %s77, %s78
      %p87 = scmp.eq.s32.totalorder %s20, 0
      %p88 = por %p86, %p87
      %p89 = scmp.ne.s32.totalorder %s77, %s78
      %p90 = scmp.eq.s32.totalorder %s21, 1
      %p91 = por %p89, %p90
      %p93 = scmp.ne.s32.totalorder %s78, %s92
      %p94 = scmp.eq.s32.totalorder %s21, 0
      %p95 = por %p93, %p94
      %s97 = sadd.s32 %s96, 1
      %p100 = scmp.eq.s32.totalorder %s15, 1
      %p101 = scmp.ne.s32.totalorder %s96, %s98
      %p102 = scmp.eq.s32.totalorder %s15, 0
      %p103 = por %p101, %p102
      %p104 = scmp.ne.s32.totalorder %s96, %s98
      %p105 = scmp.eq.s32.totalorder %s20, 1
      %p106 = por %p104, %p105
      %p107 = scmp.ne.s32.totalorder %s98, %s99
      %p108 = scmp.eq.s32.totalorder %s20, 0
      %p109 = por %p107, %p108
      %p110 = scmp.ne.s32.totalorder %s98, %s99
      %p111 = scmp.eq.s32.totalorder %s21, 1
      %p112 = por %p110, %p111
      %p114 = scmp.ne.s32.totalorder %s99, %s113
      %p115 = scmp.eq.s32.totalorder %s21, 0
      %p116 = por %p114, %p115
      %s117 = ssub.s32 %s15, %s22
      %p118 = scmp.eq.s32.totalorder %s117, 0
      %s120 = sadd.s32 %s119, 1
      %s121 = scalar_select %p118, %s119, %s120
      %p124 = pneg %p118
      %p125 = scmp.eq.s32.totalorder %s15, 1
      %p126 = por %p124, %p125
      %p127 = scmp.ne.s32.totalorder %s119, %s122
      %p128 = scmp.eq.s32.totalorder %s15, 0
      %p129 = por %p127, %p128
      %p130 = scmp.ne.s32.totalorder %s119, %s122
      %p131 = scmp.eq.s32.totalorder %s20, 1
      %p132 = por %p130, %p131
      %p133 = scmp.ne.s32.totalorder %s122, %s123
      %p134 = scmp.eq.s32.totalorder %s20, 0
      %p135 = por %p133, %p134
      %p136 = scmp.ne.s32.totalorder %s122, %s123
      %p137 = scmp.eq.s32.totalorder %s21, 1
      %p138 = por %p136, %p137
      %p140 = scmp.ne.s32.totalorder %s123, %s139
      %p141 = scmp.eq.s32.totalorder %s21, 0
      %p142 = por %p140, %p141
      %p143 = scmp.le.s32.totalorder 1, %s15
      %p144 = scmp.lt.s32.totalorder %s15, 3
      %p145 = pnand %p143, %p144
      %p146 = pneg %p145
      // Predicated region
      $region9: #{mds_forward.11} parent=5 // pred_check
        _
      $region10: #{mds_forward.11} parent=5 // pred_check_branch
        %148 = sbr.rel (%p145) target = $region12
      $region11: #{mds_forward.11} parent=5 // pred_region
        %s149 = ssub.s32 %s15, 1
        // Predicated region
        $region13: #{mds_forward.11} parent=11 // pred_check
          %p150 = pneg %p88
        $region14: #{mds_forward.11} parent=11 // pred_check_branch
          %152 = sbr.rel (%p150) target = $region16
        $region15: #{mds_forward.11} parent=11 // pred_region
          %s154 = ssub.s32 16, 16
          %155 = vsyncadd [#allocation5], %s154
          %s157 = sshll.u32 %s2, 4
          %s158 = int_to_ptr.vmem [resolvable:$true] %s157
          %160 = dma.vmem_to_smem %s158, 16, [#allocation3], [#allocation5]
        $region16: #{mds_forward.11} parent=11 // pred_fallthru
          _
        // Predicated region
        $region17: #{mds_forward.11} parent=11 // pred_check
          %p161 = pneg %p109
        $region18: #{mds_forward.11} parent=11 // pred_check_branch
          %163 = sbr.rel (%p161) target = $region20
        $region19: #{mds_forward.11} parent=11 // pred_region
          _
        $region20: #{mds_forward.11} parent=11 // pred_fallthru
          _
      $region12: #{mds_forward.11} parent=5 // pred_fallthru
        _
      %p164 = scmp.lt.s32.totalorder %s15, 2
      // Predicated region
      $region21: #{mds_forward.11} parent=5 // pred_check
        %p165 = pneg %p164
      $region22: #{mds_forward.11} parent=5 // pred_check_branch
        %167 = sbr.rel (%p165) target = $region24
      $region23: #{mds_forward.11} parent=5 // pred_region
        // Predicated region
        $region25: #{mds_forward.11} parent=23 // pred_check
          %p168 = pneg %p35
        $region26: #{mds_forward.11} parent=23 // pred_check_branch
          %170 = sbr.rel (%p168) target = $region28
        $region27: #{mds_forward.11} parent=23 // pred_region
          %p171 = scmp.lt.s32.totalorder %s15, 1
          %s172 = scalar_select %p171, %s15, 1
          %s173 = smul.addr %s172, 4
          %s174 = scalar_lea.vmem %s0, %s173
        $region28: #{mds_forward.11} parent=23 // pred_fallthru
          _
        // Predicated region
        $region29: #{mds_forward.11} parent=23 // pred_check
          %p175 = pneg %p61
        $region30: #{mds_forward.11} parent=23 // pred_check_branch
          %177 = sbr.rel (%p175) target = $region32
        $region31: #{mds_forward.11} parent=23 // pred_region
          %p178 = scmp.lt.s32.totalorder %s15, 1
          %s179 = scalar_select %p178, %s15, 1
          %s180 = smul.addr %s179, 4
          %s181 = scalar_lea.vmem %s1, %s180
        $region32: #{mds_forward.11} parent=23 // pred_fallthru
          _
      $region24: #{mds_forward.11} parent=5 // pred_fallthru
        _
      %p182 = scmp.le.s32.totalorder 1, %s15
      %p183 = scmp.lt.s32.totalorder %s15, 3
      %p184 = pnand %p182, %p183
      %p185 = pneg %p184
      // Predicated region
      $region33: #{mds_forward.11} parent=5 // pred_check
        _
      $region34: #{mds_forward.11} parent=5 // pred_check_branch
        %187 = sbr.rel (%p184) target = $region36
      $region35: #{mds_forward.11} parent=5 // pred_region
        %s188 = ssub.s32 %s15, 1
        // Predicated region
        $region37: #{mds_forward.11} parent=35 // pred_check
          %p189 = pneg %p88
        $region38: #{mds_forward.11} parent=35 // pred_check_branch
          %191 = sbr.rel (%p189) target = $region40
        $region39: #{mds_forward.11} parent=35 // pred_region
          %192 = dma.done [#allocation5], 16
        $region40: #{mds_forward.11} parent=35 // pred_fallthru
          _
        %193 = sfence
        %p194 = scmp.lt.s32.totalorder %s20, 1
        %s195 = scalar_select %p194, %s20, 1
        %s196 = smul.addr %s195, 4
        %s197 = scalar_lea.vmem %s0, %s196
        %p198 = pneg %p41
        %p199 = pneg %p38
        %p200 = scmp.lt.s32.totalorder %s20, 1
        %s201 = scalar_select %p200, %s20, 1
        %s202 = smul.addr %s201, 4
        %s203 = scalar_lea.vmem %s1, %s202
        %p204 = pneg %p67
        %p205 = pneg %p64
        %p206 = pneg %p88
        %p207 = pneg %p85
        %p208 = pneg %p109
        %p209 = pneg %p106
        %p210 = pneg %p135
        %p211 = pneg %p132
        %s212 = sand.u32 %s122, 1
        %s213 = scalar_lea.sflag [#allocation4], %s212
        %s214 = sand.u32 %s122, 1
        %s215 = smul.addr %s214, 2
        %s216 = scalar_lea.vmem [#allocation6], %s215
        %p217 = scmp.lt.s32.totalorder %s20, 1
        %s218 = scalar_select %p217, %s20, 1
        %s219 = smul.addr %s218, 4
        %s220 = scalar_lea.vmem %s0, %s219
        %p221 = scmp.lt.s32.totalorder %s20, 1
        %s222 = scalar_select %p221, %s20, 1
        %s223 = smul.addr %s222, 4
        %s224 = scalar_lea.vmem %s1, %s223
        %v225 = vld [vmem:[%s220] sm:$0x3]
        %v226 = vld [vmem:[%s224] sm:$0x3]
        %v227 = vmul.f32 %v225, %v226
        %v228 = vmax.f32 %v227, 0.0
        %s229 = sld [smem:[#allocation3]]
        %v230 = vstv %s229
        %v231 = vmul.f32 %v228, %v230
        %v232 = vadd.f32 %v231, 0.0
        %s233 = sld [smem:[#allocation3 + $0x9]]
        %v234 = vstv %s233
        %v235 = vmul.f32 %v225, %v234
        %v236 = vadd.f32 %v232, %v235
        %s237 = sld [smem:[#allocation3 + $0x1]]
        %v238 = vstv %s237
        %v239 = vmul.f32 %v228, %v238
        %241 = vrot.lane.b32.xlu0 %v239, 127
        %v242 = vpop.permute.xlu0 %241
        %v244 = vadd.f32 %v236, %v242
        %s245 = sld [smem:[#allocation3 + $0xa]]
        %v246 = vstv %s245
        %v247 = vmul.f32 %v225, %v246
        %249 = vrot.lane.b32.xlu0 %v247, 127
        %v250 = vpop.permute.xlu0 %249
        %v252 = vadd.f32 %v244, %v250
        %s253 = sld [smem:[#allocation3 + $0x2]]
        %v254 = vstv %s253
        %v255 = vmul.f32 %v228, %v254
        %257 = vrot.lane.b32.xlu0 %v255, 126
        %v258 = vpop.permute.xlu0 %257
        %v260 = vadd.f32 %v252, %v258
        %s261 = sld [smem:[#allocation3 + $0xb]]
        %v262 = vstv %s261
        %v263 = vmul.f32 %v225, %v262
        %265 = vrot.lane.b32.xlu0 %v263, 126
        %v266 = vpop.permute.xlu0 %265
        %v268 = vadd.f32 %v260, %v266
        %v269 = vld [vmem:[%s220 + $0x1] sm:$0x3]
        %v270 = vld [vmem:[%s224 + $0x1] sm:$0x3]
        %v271 = vmul.f32 %v269, %v270
        %v272 = vmax.f32 %v271, 0.0
        %s273 = sld [smem:[#allocation3 + $0x3]]
        %v274 = vstv %s273
        %v275 = vmul.f32 %v272, %v274
        %v276 = vadd.f32 %v268, %v275
        %s277 = sld [smem:[#allocation3 + $0xc]]
        %v278 = vstv %s277
        %v279 = vmul.f32 %v269, %v278
        %v280 = vadd.f32 %v276, %v279
        %s281 = sld [smem:[#allocation3 + $0x4]]
        %v282 = vstv %s281
        %v283 = vmul.f32 %v272, %v282
        %285 = vrot.lane.b32.xlu0 %v283, 127
        %v286 = vpop.permute.xlu0 %285
        %v288 = vadd.f32 %v280, %v286
        %s289 = sld [smem:[#allocation3 + $0xd]]
        %v290 = vstv %s289
        %v291 = vmul.f32 %v269, %v290
        %293 = vrot.lane.b32.xlu0 %v291, 127
        %v294 = vpop.permute.xlu0 %293
        %v296 = vadd.f32 %v288, %v294
        %s297 = sld [smem:[#allocation3 + $0x5]]
        %v298 = vstv %s297
        %v299 = vmul.f32 %v272, %v298
        %301 = vrot.lane.b32.xlu0 %v299, 126
        %v302 = vpop.permute.xlu0 %301
        %v304 = vadd.f32 %v296, %v302
        %s305 = sld [smem:[#allocation3 + $0xe]]
        %v306 = vstv %s305
        %v307 = vmul.f32 %v269, %v306
        %309 = vrot.lane.b32.xlu0 %v307, 126
        %v310 = vpop.permute.xlu0 %309
        %v312 = vadd.f32 %v304, %v310
        %v313 = vld [vmem:[%s220 + $0x2] sm:$0x3]
        %v314 = vld [vmem:[%s224 + $0x2] sm:$0x3]
        %v315 = vmul.f32 %v313, %v314
        %v316 = vmax.f32 %v315, 0.0
        %s317 = sld [smem:[#allocation3 + $0x6]]
        %v318 = vstv %s317
        %v319 = vmul.f32 %v316, %v318
        %v320 = vadd.f32 %v312, %v319
        %s321 = sld [smem:[#allocation3 + $0xf]]
        %v322 = vstv %s321
        %v323 = vmul.f32 %v313, %v322
        %v324 = vadd.f32 %v320, %v323
        %s325 = sld [smem:[#allocation3 + $0x7]]
        %v326 = vstv %s325
        %v327 = vmul.f32 %v316, %v326
        %329 = vrot.lane.b32.xlu0 %v327, 127
        %v330 = vpop.permute.xlu0 %329
        %v332 = vadd.f32 %v324, %v330
        %s333 = sld [smem:[#allocation3 + $0x10]]
        %v334 = vstv %s333
        %v335 = vmul.f32 %v313, %v334
        %337 = vrot.lane.b32.xlu0 %v335, 127
        %v338 = vpop.permute.xlu0 %337
        %v340 = vadd.f32 %v332, %v338
        %s341 = sld [smem:[#allocation3 + $0x8]]
        %v342 = vstv %s341
        %v343 = vmul.f32 %v316, %v342
        %345 = vrot.lane.b32.xlu0 %v343, 126
        %v346 = vpop.permute.xlu0 %345
        %v348 = vadd.f32 %v340, %v346
        %s349 = sld [smem:[#allocation3 + $0x11]]
        %v350 = vstv %s349
        %v351 = vmul.f32 %v313, %v350
        %353 = vrot.lane.b32.xlu0 %v351, 126
        %v354 = vpop.permute.xlu0 %353
        %v356 = vadd.f32 %v348, %v354
        %s357 = sld [smem:[#allocation2]]
        %v358 = vstv %s357
        %v359 = vadd.f32 %v356, %v358
        %v360 = vmax.f32 %v359, 0.0
        %vm361 = vcmask 123904
        %362 = vst.msk [vmem:[%s216] sm:$0x3] %vm361, %v360
        %s363 = sand.u32 %s122, 1
        %s364 = scalar_lea.sflag [#allocation4], %s363
        %s365 = sand.u32 %s122, 1
        %s366 = smul.addr %s365, 2
        %s367 = scalar_lea.vmem [#allocation6], %s366
        // Predicated region
        $region41: #{mds_forward.11} parent=35 // pred_check
          %p368 = pneg %p132
        $region42: #{mds_forward.11} parent=35 // pred_check_branch
          %370 = sbr.rel (%p368) target = $region44
        $region43: #{mds_forward.11} parent=35 // pred_region
          %s372 = ssub.s32 32, 32
          %373 = vsyncadd %s364, %s372
          %s374 = smul.addr %s20, 32
          %s375 = scalar_lea.hbm %s4, %s374
          %s377 = sshll.u32 %s367, 4
          %s378 = int_to_ptr.vmem [resolvable:$true] %s377
          %380 = dma.vmem_to_hbm [thread:$0]  %s378, 32, %s375, %s364
        $region44: #{mds_forward.11} parent=35 // pred_fallthru
          _
      $region36: #{mds_forward.11} parent=5 // pred_fallthru
        _
      %p381 = scmp.le.s32.totalorder 2, %s15
      // Predicated region
      $region45: #{mds_forward.11} parent=5 // pred_check
        %p382 = pneg %p381
      $region46: #{mds_forward.11} parent=5 // pred_check_branch
        %384 = sbr.rel (%p382) target = $region48
      $region47: #{mds_forward.11} parent=5 // pred_region
        %s385 = ssub.s32 %s15, 2
        // Predicated region
        $region49: #{mds_forward.11} parent=47 // pred_check
          %p386 = pneg %p138
        $region50: #{mds_forward.11} parent=47 // pred_check_branch
          %388 = sbr.rel (%p386) target = $region52
        $region51: #{mds_forward.11} parent=47 // pred_region
          %s389 = sand.u32 %s123, 1
          %s390 = scalar_lea.sflag [#allocation4], %s389
          %s391 = sand.u32 %s123, 1
          %s392 = smul.addr %s391, 2
          %s393 = scalar_lea.vmem [#allocation6], %s392
          %394 = dma.done %s390, 32
        $region52: #{mds_forward.11} parent=47 // pred_fallthru
          _
      $region48: #{mds_forward.11} parent=5 // pred_fallthru
        _
    $region6: #{mds_forward.11} parent=1 // loop_footer
      %s19 = sadd.s32 1, %s15
    $region7: #{mds_forward.11} parent=1 // loop_footer_branch
      %14 = sbr.rel target = $region3
    $region8: #{mds_forward.11} parent=1 // loop_exit
      _
    %395 = vsyncpa [#allocation4], 1
    %s396 = scalar_lea.sflag [#allocation4], 1
    %397 = vsyncpa %s396, 1
    %398 = vsyncpa [#allocation5], 1
    %s399 = scalar_lea.sflag [#allocation5], 1
    %400 = vsyncpa %s399, 1

// kernel: mds_forward.10
$region0: #{mds_forward.10}
  #allocation0 [shape = 'u32[]', space=smem, size = 0x4, offset = 0x4, fixed_abs, tag = 'smem constant byte address 0x4 - core index']
  #allocation1 [shape = 'u32[144,128]{1,0:T(1,128)}', space=vmem, size = 0x12000, scoped, tag = 'internal scratch']
  #allocation2 [shape = 'f32[2,16,128]{2,1,0:T(8,128)}', space=vmem, size = 0x4000, scoped, tag = 'scratch operand']
  %s0 = inlined_call_operand.vmem [shape: bf16[2,4,18,128], index: 0, kind: input, shape index: {}]
  %s1 = inlined_call_operand.vmem [shape: bf16[2,4,18,128], index: 1, kind: input, shape index: {}]
  %s2 = inlined_call_operand.vmem [shape: bf16[9,128,128], index: 2, kind: input, shape index: {}]
  %s3 = inlined_call_operand.vmem [shape: bf16[9,128,128], index: 3, kind: input, shape index: {}]
  %s4 = inlined_call_operand.vmem [shape: f32[1,128], index: 4, kind: input, shape index: {}]
  %s5 = inlined_call_operand.vmem [shape: f32[2,2,16,128], index: 5, kind: output, shape index: {}]
  %s6 = sld [smem:[#allocation0]]
  $region61: #{mds_forward.10} parent=0
    _
  %s8 = ssub.s32 1, %s6
  %s9 = scalar_select 0, %s8, %s6
  loop: start=0, step=1, limit=4
  $region2: #{mds_forward.10} parent=0 // loop_pre_header
    _
  $region3: #{mds_forward.10} parent=0 // loop_header
    %s11 = sphi 0, %s15
    %p12 = scmp.ge.s32.totalorder %s11, 4
    %s18 = sphi 0, %s37
    %s19 = sphi 0, %s33
    %s20 = sphi 0, %s29
    %s21 = sphi 0, %s18
    %s22 = sphi 0, %s19
    %s23 = sphi 0, %s20
    %s24 = sphi 0, %s21
    %s25 = sphi 0, %s22
    %s26 = sphi 0, %s23
    %s42 = sphi 0, %s44
    %s45 = sphi 0, %s42
    %s46 = sphi 0, %s45
    %s62 = sphi 0, %s46
    %s70 = sphi 0, %s72
    %s73 = sphi 0, %s70
    %s74 = sphi 0, %s73
    %s90 = sphi 0, %s74
    %s98 = sphi 0, %s100
    %s101 = sphi 0, %s98
    %s102 = sphi 0, %s101
    %s118 = sphi 0, %s102
    %s126 = sphi 0, %s128
    %s129 = sphi 0, %s126
    %s130 = sphi 0, %s129
    %s146 = sphi 0, %s130
    %s152 = sphi 0, %s154
    %s155 = sphi 0, %s152
    %s156 = sphi 0, %s155
    %s172 = sphi 0, %s156
    %s180 = sphi 0, %s182
    %s183 = sphi 0, %s180
    %s184 = sphi 0, %s183
    %s200 = sphi 0, %s184
  $region4: #{mds_forward.10} parent=0 // loop_header_branch
    %14 = sbr.rel (%p12) target = $region8
  $region5: #{mds_forward.10} parent=0 // loop_body
    %s16 = ssub.s32 %s11, 1
    %s17 = ssub.s32 %s11, 2
    %s27 = sadd.s32 1, %s20
    %p28 = scmp.ge.s32.totalorder %s27, 1
    %s29 = scalar_select %p28, 0, %s27
    %s30 = sadd.s32 1, %s19
    %s31 = scalar_select %p28, %s30, %s19
    %p32 = scmp.ge.s32.totalorder %s31, 1
    %s33 = scalar_select %p32, 0, %s31
    %s34 = sadd.s32 1, %s18
    %s35 = scalar_select %p32, %s34, %s18
    %p36 = scmp.ge.s32.totalorder %s35, 2
    %s37 = scalar_select %p36, 0, %s35
    %s38 = ssub.s32 %s18, %s37
    %s39 = ssub.s32 %s20, %s29
    %s40 = sor.u32 %s38, %s39
    %p41 = scmp.eq.s32.totalorder %s40, 0
    %s43 = sadd.s32 %s42, 1
    %s44 = scalar_select %p41, %s42, %s43
    %p47 = pneg %p41
    %p48 = scmp.eq.s32.totalorder %s11, 1
    %p49 = por %p47, %p48
    %p50 = scmp.ne.s32.totalorder %s42, %s45
    %p51 = scmp.eq.s32.totalorder %s11, 0
    %p52 = por %p50, %p51
    %p53 = scmp.ne.s32.totalorder %s42, %s45
    %p54 = scmp.eq.s32.totalorder %s16, 1
    %p55 = por %p53, %p54
    %p56 = scmp.ne.s32.totalorder %s45, %s46
    %p57 = scmp.eq.s32.totalorder %s16, 0
    %p58 = por %p56, %p57
    %p59 = scmp.ne.s32.totalorder %s45, %s46
    %p60 = scmp.eq.s32.totalorder %s17, 1
    %p61 = por %p59, %p60
    %p63 = scmp.ne.s32.totalorder %s46, %s62
    %p64 = scmp.eq.s32.totalorder %s17, 0
    %p65 = por %p63, %p64
    %s66 = ssub.s32 %s18, %s37
    %s67 = ssub.s32 %s20, %s29
    %s68 = sor.u32 %s66, %s67
    %p69 = scmp.eq.s32.totalorder %s68, 0
    %s71 = sadd.s32 %s70, 1
    %s72 = scalar_select %p69, %s70, %s71
    %p75 = pneg %p69
    %p76 = scmp.eq.s32.totalorder %s11, 1
    %p77 = por %p75, %p76
    %p78 = scmp.ne.s32.totalorder %s70, %s73
    %p79 = scmp.eq.s32.totalorder %s11, 0
    %p80 = por %p78, %p79
    %p81 = scmp.ne.s32.totalorder %s70, %s73
    %p82 = scmp.eq.s32.totalorder %s16, 1
    %p83 = por %p81, %p82
    %p84 = scmp.ne.s32.totalorder %s73, %s74
    %p85 = scmp.eq.s32.totalorder %s16, 0
    %p86 = por %p84, %p85
    %p87 = scmp.ne.s32.totalorder %s73, %s74
    %p88 = scmp.eq.s32.totalorder %s17, 1
    %p89 = por %p87, %p88
    %p91 = scmp.ne.s32.totalorder %s74, %s90
    %p92 = scmp.eq.s32.totalorder %s17, 0
    %p93 = por %p91, %p92
    %s94 = ssub.s32 %s20, %s29
    %s95 = ssub.s32 %s19, %s33
    %s96 = sor.u32 %s94, %s95
    %p97 = scmp.eq.s32.totalorder %s96, 0
    %s99 = sadd.s32 %s98, 1
    %s100 = scalar_select %p97, %s98, %s99
    %p103 = pneg %p97
    %p104 = scmp.eq.s32.totalorder %s11, 1
    %p105 = por %p103, %p104
    %p106 = scmp.ne.s32.totalorder %s98, %s101
    %p107 = scmp.eq.s32.totalorder %s11, 0
    %p108 = por %p106, %p107
    %p109 = scmp.ne.s32.totalorder %s98, %s101
    %p110 = scmp.eq.s32.totalorder %s16, 1
    %p111 = por %p109, %p110
    %p112 = scmp.ne.s32.totalorder %s101, %s102
    %p113 = scmp.eq.s32.totalorder %s16, 0
    %p114 = por %p112, %p113
    %p115 = scmp.ne.s32.totalorder %s101, %s102
    %p116 = scmp.eq.s32.totalorder %s17, 1
    %p117 = por %p115, %p116
    %p119 = scmp.ne.s32.totalorder %s102, %s118
    %p120 = scmp.eq.s32.totalorder %s17, 0
    %p121 = por %p119, %p120
    %s122 = ssub.s32 %s20, %s29
    %s123 = ssub.s32 %s19, %s33
    %s124 = sor.u32 %s122, %s123
    %p125 = scmp.eq.s32.totalorder %s124, 0
    %s127 = sadd.s32 %s126, 1
    %s128 = scalar_select %p125, %s126, %s127
    %p131 = pneg %p125
    %p132 = scmp.eq.s32.totalorder %s11, 1
    %p133 = por %p131, %p132
    %p134 = scmp.ne.s32.totalorder %s126, %s129
    %p135 = scmp.eq.s32.totalorder %s11, 0
    %p136 = por %p134, %p135
    %p137 = scmp.ne.s32.totalorder %s126, %s129
    %p138 = scmp.eq.s32.totalorder %s16, 1
    %p139 = por %p137, %p138
    %p140 = scmp.ne.s32.totalorder %s129, %s130
    %p141 = scmp.eq.s32.totalorder %s16, 0
    %p142 = por %p140, %p141
    %p143 = scmp.ne.s32.totalorder %s129, %s130
    %p144 = scmp.eq.s32.totalorder %s17, 1
    %p145 = por %p143, %p144
    %p147 = scmp.ne.s32.totalorder %s130, %s146
    %p148 = scmp.eq.s32.totalorder %s17, 0
    %p149 = por %p147, %p148
    %s150 = ssub.s32 %s19, %s33
    %p151 = scmp.eq.s32.totalorder %s150, 0
    %s153 = sadd.s32 %s152, 1
    %s154 = scalar_select %p151, %s152, %s153
    %p157 = pneg %p151
    %p158 = scmp.eq.s32.totalorder %s11, 1
    %p159 = por %p157, %p158
    %p160 = scmp.ne.s32.totalorder %s152, %s155
    %p161 = scmp.eq.s32.totalorder %s11, 0
    %p162 = por %p160, %p161
    %p163 = scmp.ne.s32.totalorder %s152, %s155
    %p164 = scmp.eq.s32.totalorder %s16, 1
    %p165 = por %p163, %p164
    %p166 = scmp.ne.s32.totalorder %s155, %s156
    %p167 = scmp.eq.s32.totalorder %s16, 0
    %p168 = por %p166, %p167
    %p169 = scmp.ne.s32.totalorder %s155, %s156
    %p170 = scmp.eq.s32.totalorder %s17, 1
    %p171 = por %p169, %p170
    %p173 = scmp.ne.s32.totalorder %s156, %s172
    %p174 = scmp.eq.s32.totalorder %s17, 0
    %p175 = por %p173, %p174
    %s176 = ssub.s32 %s18, %s37
    %s177 = ssub.s32 %s19, %s33
    %s178 = sor.u32 %s176, %s177
    %p179 = scmp.eq.s32.totalorder %s178, 0
    %s181 = sadd.s32 %s180, 1
    %s182 = scalar_select %p179, %s180, %s181
    %p185 = pneg %p179
    %p186 = scmp.eq.s32.totalorder %s11, 1
    %p187 = por %p185, %p186
    %p188 = scmp.ne.s32.totalorder %s180, %s183
    %p189 = scmp.eq.s32.totalorder %s11, 0
    %p190 = por %p188, %p189
    %p191 = scmp.ne.s32.totalorder %s180, %s183
    %p192 = scmp.eq.s32.totalorder %s16, 1
    %p193 = por %p191, %p192
    %p194 = scmp.ne.s32.totalorder %s183, %s184
    %p195 = scmp.eq.s32.totalorder %s16, 0
    %p196 = por %p194, %p195
    %p197 = scmp.ne.s32.totalorder %s183, %s184
    %p198 = scmp.eq.s32.totalorder %s17, 1
    %p199 = por %p197, %p198
    %p201 = scmp.ne.s32.totalorder %s184, %s200
    %p202 = scmp.eq.s32.totalorder %s17, 0
    %p203 = por %p201, %p202
    %p204 = scmp.le.s32.totalorder 1, %s11
    %p205 = scmp.lt.s32.totalorder %s11, 3
    %p206 = pnand %p204, %p205
    %p207 = pneg %p206
    // Predicated region
    $region9: #{mds_forward.10} parent=5 // pred_check
      _
    $region10: #{mds_forward.10} parent=5 // pred_check_branch
      %209 = sbr.rel (%p206) target = $region12
    $region11: #{mds_forward.10} parent=5 // pred_region
      %s210 = ssub.s32 %s11, 1
      // Predicated region
      $region13: #{mds_forward.10} parent=11 // pred_check
        %p211 = pneg %p114
      $region14: #{mds_forward.10} parent=11 // pred_check_branch
        %213 = sbr.rel (%p211) target = $region16
      $region15: #{mds_forward.10} parent=11 // pred_region
        %s214 = smul.u32 16, %s23
        %p215 = scmp.lt.s32.totalorder %s214, 15
        %s216 = scalar_select %p215, %s214, 15
        %p217 = scmp.lt.s32.totalorder %s22, 0
        %s218 = scalar_select %p217, %s22, 0
        %s219 = sadd.s32 %s218, %s216
        %s220 = smul.addr %s219, 4
        %s221 = scalar_lea.vmem %s2, %s220
        %s222 = smul.u32 16, %s23
      $region16: #{mds_forward.10} parent=11 // pred_fallthru
        _
      // Predicated region
      $region17: #{mds_forward.10} parent=11 // pred_check
        %p223 = pneg %p142
      $region18: #{mds_forward.10} parent=11 // pred_check_branch
        %225 = sbr.rel (%p223) target = $region20
      $region19: #{mds_forward.10} parent=11 // pred_region
        %s226 = smul.u32 16, %s23
        %p227 = scmp.lt.s32.totalorder %s226, 15
        %s228 = scalar_select %p227, %s226, 15
        %p229 = scmp.lt.s32.totalorder %s22, 0
        %s230 = scalar_select %p229, %s22, 0
        %s231 = sadd.s32 %s230, %s228
        %s232 = smul.addr %s231, 4
        %s233 = scalar_lea.vmem %s3, %s232
        %s234 = smul.u32 16, %s23
      $region20: #{mds_forward.10} parent=11 // pred_fallthru
        _
      // Predicated region
      $region21: #{mds_forward.10} parent=11 // pred_check
        %p235 = pneg %p168
      $region22: #{mds_forward.10} parent=11 // pred_check_branch
        %237 = sbr.rel (%p235) target = $region24
      $region23: #{mds_forward.10} parent=11 // pred_region
        %p238 = scmp.lt.s32.totalorder %s22, 0
        %s239 = scalar_select %p238, %s22, 0
        %s240 = scalar_lea.vmem %s4, %s239
      $region24: #{mds_forward.10} parent=11 // pred_fallthru
        _
    $region12: #{mds_forward.10} parent=5 // pred_fallthru
      _
    %p241 = scmp.lt.s32.totalorder %s11, 2
    // Predicated region
    $region25: #{mds_forward.10} parent=5 // pred_check
      %p242 = pneg %p241
    $region26: #{mds_forward.10} parent=5 // pred_check_branch
      %244 = sbr.rel (%p242) target = $region28
    $region27: #{mds_forward.10} parent=5 // pred_region
      // Predicated region
      $region29: #{mds_forward.10} parent=27 // pred_check
        %p245 = pneg %p52
      $region30: #{mds_forward.10} parent=27 // pred_check_branch
        %247 = sbr.rel (%p245) target = $region32
      $region31: #{mds_forward.10} parent=27 // pred_region
        %p248 = scmp.lt.s32.totalorder %s18, 1
        %s249 = scalar_select %p248, %s18, 1
        %p250 = scmp.lt.s32.totalorder %s20, 0
        %s251 = scalar_select %p250, %s20, 0
        %s252 = smul.addr %s249, 12
        %s253 = sadd.s32 %s251, %s252
        %s254 = smul.addr %s253, 4
        %s255 = scalar_lea.vmem %s0, %s254
      $region32: #{mds_forward.10} parent=27 // pred_fallthru
        _
      // Predicated region
      $region33: #{mds_forward.10} parent=27 // pred_check
        %p256 = pneg %p80
      $region34: #{mds_forward.10} parent=27 // pred_check_branch
        %258 = sbr.rel (%p256) target = $region36
      $region35: #{mds_forward.10} parent=27 // pred_region
        %p259 = scmp.lt.s32.totalorder %s18, 1
        %s260 = scalar_select %p259, %s18, 1
        %p261 = scmp.lt.s32.totalorder %s20, 0
        %s262 = scalar_select %p261, %s20, 0
        %s263 = smul.addr %s260, 12
        %s264 = sadd.s32 %s262, %s263
        %s265 = smul.addr %s264, 4
        %s266 = scalar_lea.vmem %s1, %s265
      $region36: #{mds_forward.10} parent=27 // pred_fallthru
        _
    $region28: #{mds_forward.10} parent=5 // pred_fallthru
      _
    %p267 = scmp.le.s32.totalorder 1, %s11
    %p268 = scmp.lt.s32.totalorder %s11, 3
    %p269 = pnand %p267, %p268
    %p270 = pneg %p269
    // Predicated region
    $region37: #{mds_forward.10} parent=5 // pred_check
      _
    $region38: #{mds_forward.10} parent=5 // pred_check_branch
      %272 = sbr.rel (%p269) target = $region40
    $region39: #{mds_forward.10} parent=5 // pred_region
      %s273 = ssub.s32 %s11, 1
      %p274 = scmp.lt.s32.totalorder %s21, 1
      %s275 = scalar_select %p274, %s21, 1
      %p276 = scmp.lt.s32.totalorder %s23, 0
      %s277 = scalar_select %p276, %s23, 0
      %s278 = smul.addr %s275, 12
      %s279 = sadd.s32 %s277, %s278
      %s280 = smul.addr %s279, 4
      %s281 = scalar_lea.vmem %s0, %s280
      %p282 = pneg %p58
      %p283 = pneg %p55
      %p284 = scmp.lt.s32.totalorder %s21, 1
      %s285 = scalar_select %p284, %s21, 1
      %p286 = scmp.lt.s32.totalorder %s23, 0
      %s287 = scalar_select %p286, %s23, 0
      %s288 = smul.addr %s285, 12
      %s289 = sadd.s32 %s287, %s288
      %s290 = smul.addr %s289, 4
      %s291 = scalar_lea.vmem %s1, %s290
      %p292 = pneg %p86
      %p293 = pneg %p83
      %s294 = smul.u32 16, %s23
      %p295 = scmp.lt.s32.totalorder %s294, 15
      %s296 = scalar_select %p295, %s294, 15
      %p297 = scmp.lt.s32.totalorder %s22, 0
      %s298 = scalar_select %p297, %s22, 0
      %s299 = sadd.s32 %s298, %s296
      %s300 = smul.addr %s299, 4
      %s301 = scalar_lea.vmem %s2, %s300
      %p302 = pneg %p114
      %p303 = pneg %p111
      %s304 = smul.u32 16, %s23
      %p305 = scmp.lt.s32.totalorder %s304, 15
      %s306 = scalar_select %p305, %s304, 15
      %p307 = scmp.lt.s32.totalorder %s22, 0
      %s308 = scalar_select %p307, %s22, 0
      %s309 = sadd.s32 %s308, %s306
      %s310 = smul.addr %s309, 4
      %s311 = scalar_lea.vmem %s3, %s310
      %p312 = pneg %p142
      %p313 = pneg %p139
      %p314 = scmp.lt.s32.totalorder %s22, 0
      %s315 = scalar_select %p314, %s22, 0
      %s316 = scalar_lea.vmem %s4, %s315
      %p317 = pneg %p168
      %p318 = pneg %p165
      %p319 = pneg %p196
      %p320 = pneg %p193
      %p321 = scmp.lt.s32.totalorder %s21, 1
      %s322 = scalar_select %p321, %s21, 1
      %p323 = scmp.lt.s32.totalorder %s22, 0
      %s324 = scalar_select %p323, %s22, 0
      %s325 = smul.addr %s322, 4
      %s326 = sadd.s32 %s324, %s325
      %s327 = smul.addr %s326, 8
      %s328 = scalar_lea.vmem %s5, %s327
      %p329 = scmp.lt.s32.totalorder %s21, 1
      %s330 = scalar_select %p329, %s21, 1
      %p331 = scmp.lt.s32.totalorder %s23, 0
      %s332 = scalar_select %p331, %s23, 0
      %s333 = smul.addr %s330, 12
      %s334 = sadd.s32 %s332, %s333
      %s335 = smul.addr %s334, 4
      %s336 = scalar_lea.vmem %s0, %s335
      %p337 = scmp.lt.s32.totalorder %s21, 1
      %s338 = scalar_select %p337, %s21, 1
      %p339 = scmp.lt.s32.totalorder %s23, 0
      %s340 = scalar_select %p339, %s23, 0
      %s341 = smul.addr %s338, 12
      %s342 = sadd.s32 %s340, %s341
      %s343 = smul.addr %s342, 4
      %s344 = scalar_lea.vmem %s1, %s343
      %s345 = smul.u32 16, %s23
      %p346 = scmp.lt.s32.totalorder %s345, 15
      %s347 = scalar_select %p346, %s345, 15
      %p348 = scmp.lt.s32.totalorder %s22, 0
      %s349 = scalar_select %p348, %s22, 0
      %s350 = sadd.s32 %s349, %s347
      %s351 = smul.addr %s350, 4
      %s352 = scalar_lea.vmem %s2, %s351
      %s353 = smul.u32 16, %s23
      %s354 = smul.u32 16, %s23
      %p355 = scmp.lt.s32.totalorder %s354, 15
      %s356 = scalar_select %p355, %s354, 15
      %p357 = scmp.lt.s32.totalorder %s22, 0
      %s358 = scalar_select %p357, %s22, 0
      %s359 = sadd.s32 %s358, %s356
      %s360 = smul.addr %s359, 4
      %s361 = scalar_lea.vmem %s3, %s360
      %s362 = smul.u32 16, %s23
      %p363 = scmp.lt.s32.totalorder %s22, 0
      %s364 = scalar_select %p363, %s22, 0
      %s365 = scalar_lea.vmem %s4, %s364
      %p366 = scmp.lt.s32.totalorder %s21, 1
      %s367 = scalar_select %p366, %s21, 1
      %p368 = scmp.lt.s32.totalorder %s22, 0
      %s369 = scalar_select %p368, %s22, 0
      %s370 = smul.addr %s367, 4
      %s371 = sadd.s32 %s369, %s370
      %s372 = smul.addr %s371, 8
      %s373 = scalar_lea.vmem %s5, %s372
      %p375 = scmp.eq.s32.totalorder %s23, 0
      // Predicated region
      $region41: #{mds_forward.10} parent=39 // pred_check
        %p376 = pneg %p375
      $region42: #{mds_forward.10} parent=39 // pred_check_branch
        %378 = sbr.rel (%p376) target = $region44
      $region43: #{mds_forward.10} parent=39 // pred_region
        %379 = vst [vmem:[#allocation2] sm:$0xff] 0.0
        %380 = vst [vmem:[#allocation2 + $0x8] sm:$0xff] 0.0
        %381 = vst [vmem:[#allocation2 + $0x10] sm:$0xff] 0.0
        %382 = vst [vmem:[#allocation2 + $0x18] sm:$0xff] 0.0
      $region44: #{mds_forward.10} parent=39 // pred_fallthru
        _
      %s383 = scalar_lea.vmem %s336, 12
      %v384 = vld [vmem:[%s383] sm:$0xf]
      %v385 = vld [vmem:[%s383 + $0x4] sm:$0xf]
      %s386 = scalar_lea.vmem %s344, 12
      %v387 = vld [vmem:[%s386] sm:$0xf]
      %v388 = vld [vmem:[%s386 + $0x4] sm:$0xf]
      %v389 = vunpack.c.l.bf16 %v384
      %v390 = vunpack.c.l.bf16 %v385
      %v391 = vunpack.c.l.bf16 %v387
      %v392 = vunpack.c.l.bf16 %v388
      %v393 = vmul.f32 %v389, %v391
      %v394 = vmul.f32 %v390, %v392
      %v395 = vmax.f32 %v393, 0.0
      %v396 = vmax.f32 %v394, 0.0
      %v397 = vpack.c.bf16 %v396, %v395
      %s398 = scalar_lea.vmem %s352, 192
      %v399 = vld [vmem:[%s398] sm:$0xf]
      %v400 = vld [vmem:[%s398 + $0x4] sm:$0xf]
      %v401 = vld [vmem:[%s398 + $0x8] sm:$0xf]
      %v402 = vld [vmem:[%s398 + $0xc] sm:$0xf]
      %v403 = vld [vmem:[%s398 + $0x10] sm:$0xf]
      %v404 = vld [vmem:[%s398 + $0x14] sm:$0xf]
      %v405 = vld [vmem:[%s398 + $0x18] sm:$0xf]
      %v406 = vld [vmem:[%s398 + $0x1c] sm:$0xf]
      %v407 = vld [vmem:[%s398 + $0x20] sm:$0xf]
      %v408 = vld [vmem:[%s398 + $0x24] sm:$0xf]
      %v409 = vld [vmem:[%s398 + $0x28] sm:$0xf]
      %v410 = vld [vmem:[%s398 + $0x2c] sm:$0xf]
      %v411 = vld [vmem:[%s398 + $0x30] sm:$0xf]
      %v412 = vld [vmem:[%s398 + $0x34] sm:$0xf]
      %v413 = vld [vmem:[%s398 + $0x38] sm:$0xf]
      %v414 = vld [vmem:[%s398 + $0x3c] sm:$0xf]
      %s415 = scalar_lea.vmem %s361, 192
      %v416 = vld [vmem:[%s415] sm:$0xf]
      %v417 = vld [vmem:[%s415 + $0x4] sm:$0xf]
      %v418 = vld [vmem:[%s415 + $0x8] sm:$0xf]
      %v419 = vld [vmem:[%s415 + $0xc] sm:$0xf]
      %v420 = vld [vmem:[%s415 + $0x10] sm:$0xf]
      %v421 = vld [vmem:[%s415 + $0x14] sm:$0xf]
      %v422 = vld [vmem:[%s415 + $0x18] sm:$0xf]
      %v423 = vld [vmem:[%s415 + $0x1c] sm:$0xf]
      %v424 = vld [vmem:[%s415 + $0x20] sm:$0xf]
      %v425 = vld [vmem:[%s415 + $0x24] sm:$0xf]
      %v426 = vld [vmem:[%s415 + $0x28] sm:$0xf]
      %v427 = vld [vmem:[%s415 + $0x2c] sm:$0xf]
      %v428 = vld [vmem:[%s415 + $0x30] sm:$0xf]
      %v429 = vld [vmem:[%s415 + $0x34] sm:$0xf]
      %v430 = vld [vmem:[%s415 + $0x38] sm:$0xf]
      %v431 = vld [vmem:[%s415 + $0x3c] sm:$0xf]
      %v434 = vunpack.c.l.b16 %v384
      %v435 = vunpack.c.l.b16 %v385
      %v436 = vpack.c.b16 %v435, %v434
      %v454 = vunpack.c.l.b16 %v416
      %v455 = vunpack.c.l.b16 %v417
      %v456 = vunpack.c.l.b16 %v418
      %v457 = vunpack.c.l.b16 %v419
      %v458 = vunpack.c.l.b16 %v420
      %v459 = vunpack.c.l.b16 %v421
      %v460 = vunpack.c.l.b16 %v422
      %v461 = vunpack.c.l.b16 %v423
      %v462 = vunpack.c.l.b16 %v424
      %v463 = vunpack.c.l.b16 %v425
      %v464 = vunpack.c.l.b16 %v426
      %v465 = vunpack.c.l.b16 %v427
      %v466 = vunpack.c.l.b16 %v428
      %v467 = vunpack.c.l.b16 %v429
      %v468 = vunpack.c.l.b16 %v430
      %v469 = vunpack.c.l.b16 %v431
      %v470 = vpack.c.b16 %v455, %v454
      %v471 = vpack.c.b16 %v457, %v456
      %v472 = vpack.c.b16 %v459, %v458
      %v473 = vpack.c.b16 %v461, %v460
      %v474 = vpack.c.b16 %v463, %v462
      %v475 = vpack.c.b16 %v465, %v464
      %v476 = vpack.c.b16 %v467, %v466
      %v477 = vpack.c.b16 %v469, %v468
      %486 = vmatprep.subr.bf16.mxu0 0
      %487 = vmatpush1.bf16.msra.mxu0 %v477
      %488 = vmatprep.subr.bf16.mxu0 0
      %489 = vmatpush1.bf16.msra.mxu0 %v476
      %490 = vmatprep.subr.bf16.mxu0 0
      %491 = vmatpush1.bf16.msra.mxu0 %v475
      %492 = vmatprep.subr.bf16.mxu0 0
      %493 = vmatpush1.bf16.msra.mxu0 %v474
      %494 = vmatprep.subr.bf16.mxu0 0
      %495 = vmatpush1.bf16.msra.mxu0 %v473
      %496 = vmatprep.subr.bf16.mxu0 0
      %497 = vmatpush1.bf16.msra.mxu0 %v472
      %498 = vmatprep.subr.bf16.mxu0 0
      %499 = vmatpush1.bf16.msra.mxu0 %v471
      %500 = vmatprep.subr.bf16.mxu0 0
      %501 = vmatpush1.bf16.msra.mxu0 %v470
      %502 = vmatprep.subr.bf16.mxu0 0
      %503 = vmatpush2.bf16.msra.mxu0 0
      %504 = vmatprep.subr.bf16.mxu0 0
      %505 = vmatpush2.bf16.msra.mxu0 0
      %506 = vmatprep.subr.bf16.mxu0 0
      %507 = vmatpush2.bf16.msra.mxu0 0
      %508 = vmatprep.subr.bf16.mxu0 0
      %509 = vmatpush2.bf16.msra.mxu0 0
      %510 = vmatprep.subr.bf16.mxu0 0
      %511 = vmatpush2.bf16.msra.mxu0 0
      %512 = vmatprep.subr.bf16.mxu0 0
      %513 = vmatpush2.bf16.msra.mxu0 0
      %514 = vmatprep.subr.bf16.mxu0 0
      %515 = vmatpush2.bf16.msra.mxu0 0
      %516 = vmatprep.subr.bf16.mxu0 0
      %517 = vmatpush2.bf16.msra.mxu0 0
      %518 = vmatprep.mubr.bf16.mxu0 0
      %519 = vmatmul.mubr.bf16.gmra.mxu0 %v436
      %v520 = vpop.f32.mrf.mxu0
      %v521 = vadd.f32 0.0, %v520
      %v522 = vpop.f32.mrf.mxu0
      %v523 = vpop.f32.mrf.mxu0
      %v524 = vadd.f32 0.0, %v523
      %v525 = vpop.f32.mrf.mxu0
      %526 = vdwg.mxu0
      %v543 = vunpack.c.l.b16 %v399
      %v544 = vunpack.c.l.b16 %v400
      %v545 = vunpack.c.l.b16 %v401
      %v546 = vunpack.c.l.b16 %v402
      %v547 = vunpack.c.l.b16 %v403
      %v548 = vunpack.c.l.b16 %v404
      %v549 = vunpack.c.l.b16 %v405
      %v550 = vunpack.c.l.b16 %v406
      %v551 = vunpack.c.l.b16 %v407
      %v552 = vunpack.c.l.b16 %v408
      %v553 = vunpack.c.l.b16 %v409
      %v554 = vunpack.c.l.b16 %v410
      %v555 = vunpack.c.l.b16 %v411
      %v556 = vunpack.c.l.b16 %v412
      %v557 = vunpack.c.l.b16 %v413
      %v558 = vunpack.c.l.b16 %v414
      %v559 = vpack.c.b16 %v544, %v543
      %v560 = vpack.c.b16 %v546, %v545
      %v561 = vpack.c.b16 %v548, %v547
      %v562 = vpack.c.b16 %v550, %v549
      %v563 = vpack.c.b16 %v552, %v551
      %v564 = vpack.c.b16 %v554, %v553
      %v565 = vpack.c.b16 %v556, %v555
      %v566 = vpack.c.b16 %v558, %v557
      %575 = vmatprep.subr.bf16.mxu0 0
      %576 = vmatpush1.bf16.msra.mxu0 %v566
      %577 = vmatprep.subr.bf16.mxu0 0
      %578 = vmatpush1.bf16.msra.mxu0 %v565
      %579 = vmatprep.subr.bf16.mxu0 0
      %580 = vmatpush1.bf16.msra.mxu0 %v564
      %581 = vmatprep.subr.bf16.mxu0 0
      %582 = vmatpush1.bf16.msra.mxu0 %v563
      %583 = vmatprep.subr.bf16.mxu0 0
      %584 = vmatpush1.bf16.msra.mxu0 %v562
      %585 = vmatprep.subr.bf16.mxu0 0
      %586 = vmatpush1.bf16.msra.mxu0 %v561
      %587 = vmatprep.subr.bf16.mxu0 0
      %588 = vmatpush1.bf16.msra.mxu0 %v560
      %589 = vmatprep.subr.bf16.mxu0 0
      %590 = vmatpush1.bf16.msra.mxu0 %v559
      %591 = vmatprep.subr.bf16.mxu0 0
      %592 = vmatpush2.bf16.msra.mxu0 0
      %593 = vmatprep.subr.bf16.mxu0 0
      %594 = vmatpush2.bf16.msra.mxu0 0
      %595 = vmatprep.subr.bf16.mxu0 0
      %596 = vmatpush2.bf16.msra.mxu0 0
      %597 = vmatprep.subr.bf16.mxu0 0
      %598 = vmatpush2.bf16.msra.mxu0 0
      %599 = vmatprep.subr.bf16.mxu0 0
      %600 = vmatpush2.bf16.msra.mxu0 0
      %601 = vmatprep.subr.bf16.mxu0 0
      %602 = vmatpush2.bf16.msra.mxu0 0
      %603 = vmatprep.subr.bf16.mxu0 0
      %604 = vmatpush2.bf16.msra.mxu0 0
      %605 = vmatprep.subr.bf16.mxu0 0
      %606 = vmatpush2.bf16.msra.mxu0 0
      %607 = vmatprep.mubr.bf16.mxu0 0
      %608 = vmatmul.mubr.bf16.gmra.mxu0 %v397
      %v609 = vpop.f32.mrf.mxu0
      %v610 = vadd.f32 %v521, %v609
      %v611 = vpop.f32.mrf.mxu0
      %v612 = vpop.f32.mrf.mxu0
      %v613 = vadd.f32 %v524, %v612
      %v614 = vpop.f32.mrf.mxu0
      %615 = vdwg.mxu0
      %v616 = vld [vmem:[%s383] sm:$0xf]
      %v617 = vld [vmem:[%s383 + $0x4] sm:$0xf]
      %v618 = vld [vmem:[%s383 + $0x8] sm:$0x1]
      %v619 = vld [vmem:[%s386] sm:$0xf]
      %v620 = vld [vmem:[%s386 + $0x4] sm:$0xf]
      %v621 = vld [vmem:[%s386 + $0x8] sm:$0x1]
      %v622 = vunpack.c.l.bf16 %v616
      %v623 = vunpack.c.l.bf16 %v617
      %v624 = vunpack.c.l.bf16 %v618
      %v625 = vunpack.c.l.bf16 %v619
      %v626 = vunpack.c.l.bf16 %v620
      %v627 = vunpack.c.l.bf16 %v621
      %v628 = vmul.f32 %v622, %v625
      %v629 = vmul.f32 %v623, %v626
      %v630 = vmul.f32 %v624, %v627
      %v631 = vmax.f32 %v628, 0.0
      %v632 = vmax.f32 %v629, 0.0
      %v633 = vmax.f32 %v630, 0.0
      %v634 = vpack.c.bf16 %v632, %v631
      %v635 = vpack.c.bf16 %v633, %v633
      %s636 = scalar_lea.vmem %s352, 256
      %v637 = vld [vmem:[%s636] sm:$0xf]
      %v638 = vld [vmem:[%s636 + $0x4] sm:$0xf]
      %v639 = vld [vmem:[%s636 + $0x8] sm:$0xf]
      %v640 = vld [vmem:[%s636 + $0xc] sm:$0xf]
      %v641 = vld [vmem:[%s636 + $0x10] sm:$0xf]
      %v642 = vld [vmem:[%s636 + $0x14] sm:$0xf]
      %v643 = vld [vmem:[%s636 + $0x18] sm:$0xf]
      %v644 = vld [vmem:[%s636 + $0x1c] sm:$0xf]
      %v645 = vld [vmem:[%s636 + $0x20] sm:$0xf]
      %v646 = vld [vmem:[%s636 + $0x24] sm:$0xf]
      %v647 = vld [vmem:[%s636 + $0x28] sm:$0xf]
      %v648 = vld [vmem:[%s636 + $0x2c] sm:$0xf]
      %v649 = vld [vmem:[%s636 + $0x30] sm:$0xf]
      %v650 = vld [vmem:[%s636 + $0x34] sm:$0xf]
      %v651 = vld [vmem:[%s636 + $0x38] sm:$0xf]
      %v652 = vld [vmem:[%s636 + $0x3c] sm:$0xf]
      %vm653 = vsmask.f32 7424
      %v655 = vshrl.u32 %v634, 16
      %v657 = vshll.u32 %v634, 16
      %v659 = vrot.slane %v657, 1
      %v660 = vor.u32 %v655, %v659
      %v662 = vshll.u32 %v635, 16
      %v664 = vrot.slane %v662, 1
      %v665 = vsel %vm653, %v660, %v664
      %v683 = vunpack.c.l.b16 %v637
      %v684 = vunpack.c.l.b16 %v638
      %v685 = vunpack.c.l.b16 %v639
      %v686 = vunpack.c.l.b16 %v640
      %v687 = vunpack.c.l.b16 %v641
      %v688 = vunpack.c.l.b16 %v642
      %v689 = vunpack.c.l.b16 %v643
      %v690 = vunpack.c.l.b16 %v644
      %v691 = vunpack.c.l.b16 %v645
      %v692 = vunpack.c.l.b16 %v646
      %v693 = vunpack.c.l.b16 %v647
      %v694 = vunpack.c.l.b16 %v648
      %v695 = vunpack.c.l.b16 %v649
      %v696 = vunpack.c.l.b16 %v650
      %v697 = vunpack.c.l.b16 %v651
      %v698 = vunpack.c.l.b16 %v652
      %v699 = vpack.c.b16 %v684, %v683
      %v700 = vpack.c.b16 %v686, %v685
      %v701 = vpack.c.b16 %v688, %v687
      %v702 = vpack.c.b16 %v690, %v689
      %v703 = vpack.c.b16 %v692, %v691
      %v704 = vpack.c.b16 %v694, %v693
      %v705 = vpack.c.b16 %v696, %v695
      %v706 = vpack.c.b16 %v698, %v697
      %715 = vmatprep.subr.bf16.mxu0 0
      %716 = vmatpush1.bf16.msra.mxu0 %v706
      %717 = vmatprep.subr.bf16.mxu0 0
      %718 = vmatpush1.bf16.msra.mxu0 %v705
      %719 = vmatprep.subr.bf16.mxu0 0
      %720 = vmatpush1.bf16.msra.mxu0 %v704
      %721 = vmatprep.subr.bf16.mxu0 0
      %722 = vmatpush1.bf16.msra.mxu0 %v703
      %723 = vmatprep.subr.bf16.mxu0 0
      %724 = vmatpush1.bf16.msra.mxu0 %v702
      %725 = vmatprep.subr.bf16.mxu0 0
      %726 = vmatpush1.bf16.msra.mxu0 %v701
      %727 = vmatprep.subr.bf16.mxu0 0
      %728 = vmatpush1.bf16.msra.mxu0 %v700
      %729 = vmatprep.subr.bf16.mxu0 0
      %730 = vmatpush1.bf16.msra.mxu0 %v699
      %731 = vmatprep.subr.bf16.mxu0 0
      %732 = vmatpush2.bf16.msra.mxu0 0
      %733 = vmatprep.subr.bf16.mxu0 0
      %734 = vmatpush2.bf16.msra.mxu0 0
      %735 = vmatprep.subr.bf16.mxu0 0
      %736 = vmatpush2.bf16.msra.mxu0 0
      %737 = vmatprep.subr.bf16.mxu0 0
      %738 = vmatpush2.bf16.msra.mxu0 0
      %739 = vmatprep.subr.bf16.mxu0 0
      %740 = vmatpush2.bf16.msra.mxu0 0
      %741 = vmatprep.subr.bf16.mxu0 0
      %742 = vmatpush2.bf16.msra.mxu0 0
      %743 = vmatprep.subr.bf16.mxu0 0
      %744 = vmatpush2.bf16.msra.mxu0 0
      %745 = vmatprep.subr.bf16.mxu0 0
      %746 = vmatpush2.bf16.msra.mxu0 0
      %747 = vmatprep.mubr.bf16.mxu0 0
      %748 = vmatmul.mubr.bf16.gmra.mxu0 %v665
      %v749 = vpop.f32.mrf.mxu0
      %v750 = vadd.f32 0.0, %v749
      %v751 = vpop.f32.mrf.mxu0
      %v752 = vpop.f32.mrf.mxu0
      %v753 = vadd.f32 0.0, %v752
      %v754 = vpop.f32.mrf.mxu0
      %755 = vdwg.mxu0
      %v756 = vadd.f32 %v610, %v750
      %v757 = vadd.f32 %v613, %v753
      %s758 = scalar_lea.vmem %s361, 256
      %v759 = vld [vmem:[%s758] sm:$0xf]
      %v760 = vld [vmem:[%s758 + $0x4] sm:$0xf]
      %v761 = vld [vmem:[%s758 + $0x8] sm:$0xf]
      %v762 = vld [vmem:[%s758 + $0xc] sm:$0xf]
      %v763 = vld [vmem:[%s758 + $0x10] sm:$0xf]
      %v764 = vld [vmem:[%s758 + $0x14] sm:$0xf]
      %v765 = vld [vmem:[%s758 + $0x18] sm:$0xf]
      %v766 = vld [vmem:[%s758 + $0x1c] sm:$0xf]
      %v767 = vld [vmem:[%s758 + $0x20] sm:$0xf]
      %v768 = vld [vmem:[%s758 + $0x24] sm:$0xf]
      %v769 = vld [vmem:[%s758 + $0x28] sm:$0xf]
      %v770 = vld [vmem:[%s758 + $0x2c] sm:$0xf]
      %v771 = vld [vmem:[%s758 + $0x30] sm:$0xf]
      %v772 = vld [vmem:[%s758 + $0x34] sm:$0xf]
      %v773 = vld [vmem:[%s758 + $0x38] sm:$0xf]
      %v774 = vld [vmem:[%s758 + $0x3c] sm:$0xf]
      %v778 = vunpack.c.l.b16 %v616
      %v779 = vunpack.c.l.b16 %v617
      %v780 = vunpack.c.l.b16 %v618
      %v781 = vpack.c.b16 %v779, %v778
      %v782 = vpack.c.b16 %v780, %v780
      %v784 = vshrl.u32 %v781, 16
      %v786 = vshll.u32 %v781, 16
      %v788 = vrot.slane %v786, 1
      %v789 = vor.u32 %v784, %v788
      %v791 = vshll.u32 %v782, 16
      %v793 = vrot.slane %v791, 1
      %v794 = vsel %vm653, %v789, %v793
      %v812 = vunpack.c.l.b16 %v759
      %v813 = vunpack.c.l.b16 %v760
      %v814 = vunpack.c.l.b16 %v761
      %v815 = vunpack.c.l.b16 %v762
      %v816 = vunpack.c.l.b16 %v763
      %v817 = vunpack.c.l.b16 %v764
      %v818 = vunpack.c.l.b16 %v765
      %v819 = vunpack.c.l.b16 %v766
      %v820 = vunpack.c.l.b16 %v767
      %v821 = vunpack.c.l.b16 %v768
      %v822 = vunpack.c.l.b16 %v769
      %v823 = vunpack.c.l.b16 %v770
      %v824 = vunpack.c.l.b16 %v771
      %v825 = vunpack.c.l.b16 %v772
      %v826 = vunpack.c.l.b16 %v773
      %v827 = vunpack.c.l.b16 %v774
      %v828 = vpack.c.b16 %v813, %v812
      %v829 = vpack.c.b16 %v815, %v814
      %v830 = vpack.c.b16 %v817, %v816
      %v831 = vpack.c.b16 %v819, %v818
      %v832 = vpack.c.b16 %v821, %v820
      %v833 = vpack.c.b16 %v823, %v822
      %v834 = vpack.c.b16 %v825, %v824
      %v835 = vpack.c.b16 %v827, %v826
      %844 = vmatprep.subr.bf16.mxu0 0
      %845 = vmatpush1.bf16.msra.mxu0 %v835
      %846 = vmatprep.subr.bf16.mxu0 0
      %847 = vmatpush1.bf16.msra.mxu0 %v834
      %848 = vmatprep.subr.bf16.mxu0 0
      %849 = vmatpush1.bf16.msra.mxu0 %v833
      %850 = vmatprep.subr.bf16.mxu0 0
      %851 = vmatpush1.bf16.msra.mxu0 %v832
      %852 = vmatprep.subr.bf16.mxu0 0
      %853 = vmatpush1.bf16.msra.mxu0 %v831
      %854 = vmatprep.subr.bf16.mxu0 0
      %855 = vmatpush1.bf16.msra.mxu0 %v830
      %856 = vmatprep.subr.bf16.mxu0 0
      %857 = vmatpush1.bf16.msra.mxu0 %v829
      %858 = vmatprep.subr.bf16.mxu0 0
      %859 = vmatpush1.bf16.msra.mxu0 %v828
      %860 = vmatprep.subr.bf16.mxu0 0
      %861 = vmatpush2.bf16.msra.mxu0 0
      %862 = vmatprep.subr.bf16.mxu0 0
      %863 = vmatpush2.bf16.msra.mxu0 0
      %864 = vmatprep.subr.bf16.mxu0 0
      %865 = vmatpush2.bf16.msra.mxu0 0
      %866 = vmatprep.subr.bf16.mxu0 0
      %867 = vmatpush2.bf16.msra.mxu0 0
      %868 = vmatprep.subr.bf16.mxu0 0
      %869 = vmatpush2.bf16.msra.mxu0 0
      %870 = vmatprep.subr.bf16.mxu0 0
      %871 = vmatpush2.bf16.msra.mxu0 0
      %872 = vmatprep.subr.bf16.mxu0 0
      %873 = vmatpush2.bf16.msra.mxu0 0
      %874 = vmatprep.subr.bf16.mxu0 0
      %875 = vmatpush2.bf16.msra.mxu0 0
      %876 = vmatprep.mubr.bf16.mxu0 0
      %877 = vmatmul.mubr.bf16.gmra.mxu0 %v794
      %v878 = vpop.f32.mrf.mxu0
      %v879 = vadd.f32 0.0, %v878
      %v880 = vpop.f32.mrf.mxu0
      %v881 = vpop.f32.mrf.mxu0
      %v882 = vadd.f32 0.0, %v881
      %v883 = vpop.f32.mrf.mxu0
      %884 = vdwg.mxu0
      %v885 = vadd.f32 %v756, %v879
      %v886 = vadd.f32 %v757, %v882
      %v887 = vld [vmem:[%s383] sm:$0xe]
      %v888 = vld [vmem:[%s386] sm:$0xe]
      %v889 = vunpack.c.l.bf16 %v887
      %v890 = vunpack.c.l.bf16 %v888
      %v891 = vmul.f32 %v889, %v890
      %v892 = vmax.f32 %v891, 0.0
      %v893 = vpack.c.bf16 %v632, %v892
      %s894 = scalar_lea.vmem %s352, 320
      %v895 = vld [vmem:[%s894] sm:$0xf]
      %v896 = vld [vmem:[%s894 + $0x4] sm:$0xf]
      %v897 = vld [vmem:[%s894 + $0x8] sm:$0xf]
      %v898 = vld [vmem:[%s894 + $0xc] sm:$0xf]
      %v899 = vld [vmem:[%s894 + $0x10] sm:$0xf]
      %v900 = vld [vmem:[%s894 + $0x14] sm:$0xf]
      %v901 = vld [vmem:[%s894 + $0x18] sm:$0xf]
      %v902 = vld [vmem:[%s894 + $0x1c] sm:$0xf]
      %v903 = vld [vmem:[%s894 + $0x20] sm:$0xf]
      %v904 = vld [vmem:[%s894 + $0x24] sm:$0xf]
      %v905 = vld [vmem:[%s894 + $0x28] sm:$0xf]
      %v906 = vld [vmem:[%s894 + $0x2c] sm:$0xf]
      %v907 = vld [vmem:[%s894 + $0x30] sm:$0xf]
      %v908 = vld [vmem:[%s894 + $0x34] sm:$0xf]
      %v909 = vld [vmem:[%s894 + $0x38] sm:$0xf]
      %v910 = vld [vmem:[%s894 + $0x3c] sm:$0xf]
      %vm913 = vcmask 1046528
      %v914 = vrot.slane %v893, 1
      %v915 = vrot.slane %v635, 1
      %v916 = vsel %vm913, %v914, %v915
      %v934 = vunpack.c.l.b16 %v895
      %v935 = vunpack.c.l.b16 %v896
      %v936 = vunpack.c.l.b16 %v897
      %v937 = vunpack.c.l.b16 %v898
      %v938 = vunpack.c.l.b16 %v899
      %v939 = vunpack.c.l.b16 %v900
      %v940 = vunpack.c.l.b16 %v901
      %v941 = vunpack.c.l.b16 %v902
      %v942 = vunpack.c.l.b16 %v903
      %v943 = vunpack.c.l.b16 %v904
      %v944 = vunpack.c.l.b16 %v905
      %v945 = vunpack.c.l.b16 %v906
      %v946 = vunpack.c.l.b16 %v907
      %v947 = vunpack.c.l.b16 %v908
      %v948 = vunpack.c.l.b16 %v909
      %v949 = vunpack.c.l.b16 %v910
      %v950 = vpack.c.b16 %v935, %v934
      %v951 = vpack.c.b16 %v937, %v936
      %v952 = vpack.c.b16 %v939, %v938
      %v953 = vpack.c.b16 %v941, %v940
      %v954 = vpack.c.b16 %v943, %v942
      %v955 = vpack.c.b16 %v945, %v944
      %v956 = vpack.c.b16 %v947, %v946
      %v957 = vpack.c.b16 %v949, %v948
      %966 = vmatprep.subr.bf16.mxu0 0
      %967 = vmatpush1.bf16.msra.mxu0 %v957
      %968 = vmatprep.subr.bf16.mxu0 0
      %969 = vmatpush1.bf16.msra.mxu0 %v956
      %970 = vmatprep.subr.bf16.mxu0 0
      %971 = vmatpush1.bf16.msra.mxu0 %v955
      %972 = vmatprep.subr.bf16.mxu0 0
      %973 = vmatpush1.bf16.msra.mxu0 %v954
      %974 = vmatprep.subr.bf16.mxu0 0
      %975 = vmatpush1.bf16.msra.mxu0 %v953
      %976 = vmatprep.subr.bf16.mxu0 0
      %977 = vmatpush1.bf16.msra.mxu0 %v952
      %978 = vmatprep.subr.bf16.mxu0 0
      %979 = vmatpush1.bf16.msra.mxu0 %v951
      %980 = vmatprep.subr.bf16.mxu0 0
      %981 = vmatpush1.bf16.msra.mxu0 %v950
      %982 = vmatprep.subr.bf16.mxu0 0
      %983 = vmatpush2.bf16.msra.mxu0 0
      %984 = vmatprep.subr.bf16.mxu0 0
      %985 = vmatpush2.bf16.msra.mxu0 0
      %986 = vmatprep.subr.bf16.mxu0 0
      %987 = vmatpush2.bf16.msra.mxu0 0
      %988 = vmatprep.subr.bf16.mxu0 0
      %989 = vmatpush2.bf16.msra.mxu0 0
      %990 = vmatprep.subr.bf16.mxu0 0
      %991 = vmatpush2.bf16.msra.mxu0 0
      %992 = vmatprep.subr.bf16.mxu0 0
      %993 = vmatpush2.bf16.msra.mxu0 0
      %994 = vmatprep.subr.bf16.mxu0 0
      %995 = vmatpush2.bf16.msra.mxu0 0
      %996 = vmatprep.subr.bf16.mxu0 0
      %997 = vmatpush2.bf16.msra.mxu0 0
      %998 = vmatprep.mubr.bf16.mxu0 0
      %999 = vmatmul.mubr.bf16.gmra.mxu0 %v916
      %v1000 = vpop.f32.mrf.mxu0
      %v1001 = vadd.f32 0.0, %v1000
      %v1002 = vpop.f32.mrf.mxu0
      %v1003 = vpop.f32.mrf.mxu0
      %v1004 = vadd.f32 0.0, %v1003
      %v1005 = vpop.f32.mrf.mxu0
      %1006 = vdwg.mxu0
      %v1007 = vadd.f32 %v885, %v1001
      %v1008 = vadd.f32 %v886, %v1004
      %s1009 = scalar_lea.vmem %s361, 320
      %v1010 = vld [vmem:[%s1009] sm:$0xf]
      %v1011 = vld [vmem:[%s1009 + $0x4] sm:$0xf]
      %v1012 = vld [vmem:[%s1009 + $0x8] sm:$0xf]
      %v1013 = vld [vmem:[%s1009 + $0xc] sm:$0xf]
      %v1014 = vld [vmem:[%s1009 + $0x10] sm:$0xf]
      %v1015 = vld [vmem:[%s1009 + $0x14] sm:$0xf]
      %v1016 = vld [vmem:[%s1009 + $0x18] sm:$0xf]
      %v1017 = vld [vmem:[%s1009 + $0x1c] sm:$0xf]
      %v1018 = vld [vmem:[%s1009 + $0x20] sm:$0xf]
      %v1019 = vld [vmem:[%s1009 + $0x24] sm:$0xf]
      %v1020 = vld [vmem:[%s1009 + $0x28] sm:$0xf]
      %v1021 = vld [vmem:[%s1009 + $0x2c] sm:$0xf]
      %v1022 = vld [vmem:[%s1009 + $0x30] sm:$0xf]
      %v1023 = vld [vmem:[%s1009 + $0x34] sm:$0xf]
      %v1024 = vld [vmem:[%s1009 + $0x38] sm:$0xf]
      %v1025 = vld [vmem:[%s1009 + $0x3c] sm:$0xf]
      %v1027 = vunpack.c.l.b16 %v887
      %v1028 = vpack.c.b16 %v779, %v1027
      %v1029 = vrot.slane %v1028, 1
      %v1030 = vrot.slane %v782, 1
      %v1031 = vsel %vm913, %v1029, %v1030
      %v1049 = vunpack.c.l.b16 %v1010
      %v1050 = vunpack.c.l.b16 %v1011
      %v1051 = vunpack.c.l.b16 %v1012
      %v1052 = vunpack.c.l.b16 %v1013
      %v1053 = vunpack.c.l.b16 %v1014
      %v1054 = vunpack.c.l.b16 %v1015
      %v1055 = vunpack.c.l.b16 %v1016
      %v1056 = vunpack.c.l.b16 %v1017
      %v1057 = vunpack.c.l.b16 %v1018
      %v1058 = vunpack.c.l.b16 %v1019
      %v1059 = vunpack.c.l.b16 %v1020
      %v1060 = vunpack.c.l.b16 %v1021
      %v1061 = vunpack.c.l.b16 %v1022
      %v1062 = vunpack.c.l.b16 %v1023
      %v1063 = vunpack.c.l.b16 %v1024
      %v1064 = vunpack.c.l.b16 %v1025
      %v1065 = vpack.c.b16 %v1050, %v1049
      %v1066 = vpack.c.b16 %v1052, %v1051
      %v1067 = vpack.c.b16 %v1054, %v1053
      %v1068 = vpack.c.b16 %v1056, %v1055
      %v1069 = vpack.c.b16 %v1058, %v1057
      %v1070 = vpack.c.b16 %v1060, %v1059
      %v1071 = vpack.c.b16 %v1062, %v1061
      %v1072 = vpack.c.b16 %v1064, %v1063
      %1081 = vmatprep.subr.bf16.mxu0 0
      %1082 = vmatpush1.bf16.msra.mxu0 %v1072
      %1083 = vmatprep.subr.bf16.mxu0 0
      %1084 = vmatpush1.bf16.msra.mxu0 %v1071
      %1085 = vmatprep.subr.bf16.mxu0 0
      %1086 = vmatpush1.bf16.msra.mxu0 %v1070
      %1087 = vmatprep.subr.bf16.mxu0 0
      %1088 = vmatpush1.bf16.msra.mxu0 %v1069
      %1089 = vmatprep.subr.bf16.mxu0 0
      %1090 = vmatpush1.bf16.msra.mxu0 %v1068
      %1091 = vmatprep.subr.bf16.mxu0 0
      %1092 = vmatpush1.bf16.msra.mxu0 %v1067
      %1093 = vmatprep.subr.bf16.mxu0 0
      %1094 = vmatpush1.bf16.msra.mxu0 %v1066
      %1095 = vmatprep.subr.bf16.mxu0 0
      %1096 = vmatpush1.bf16.msra.mxu0 %v1065
      %1097 = vmatprep.subr.bf16.mxu0 0
      %1098 = vmatpush2.bf16.msra.mxu0 0
      %1099 = vmatprep.subr.bf16.mxu0 0
      %1100 = vmatpush2.bf16.msra.mxu0 0
      %1101 = vmatprep.subr.bf16.mxu0 0
      %1102 = vmatpush2.bf16.msra.mxu0 0
      %1103 = vmatprep.subr.bf16.mxu0 0
      %1104 = vmatpush2.bf16.msra.mxu0 0
      %1105 = vmatprep.subr.bf16.mxu0 0
      %1106 = vmatpush2.bf16.msra.mxu0 0
      %1107 = vmatprep.subr.bf16.mxu0 0
      %1108 = vmatpush2.bf16.msra.mxu0 0
      %1109 = vmatprep.subr.bf16.mxu0 0
      %1110 = vmatpush2.bf16.msra.mxu0 0
      %1111 = vmatprep.subr.bf16.mxu0 0
      %1112 = vmatpush2.bf16.msra.mxu0 0
      %1113 = vmatprep.mubr.bf16.mxu0 0
      %1114 = vmatmul.mubr.bf16.gmra.mxu0 %v1031
      %v1115 = vpop.f32.mrf.mxu0
      %v1116 = vadd.f32 0.0, %v1115
      %v1117 = vpop.f32.mrf.mxu0
      %v1118 = vpop.f32.mrf.mxu0
      %v1119 = vadd.f32 0.0, %v1118
      %v1120 = vpop.f32.mrf.mxu0
      %1121 = vdwg.mxu0
      %v1122 = vadd.f32 %v1007, %v1116
      %v1123 = vadd.f32 %v1008, %v1119
      %s1124 = scalar_lea.vmem %s336, 24
      %v1125 = vld [vmem:[%s1124] sm:$0xf]
      %v1126 = vld [vmem:[%s1124 + $0x4] sm:$0xf]
      %s1127 = scalar_lea.vmem %s344, 24
      %v1128 = vld [vmem:[%s1127] sm:$0xf]
      %v1129 = vld [vmem:[%s1127 + $0x4] sm:$0xf]
      %v1130 = vunpack.c.l.bf16 %v1125
      %v1131 = vunpack.c.l.bf16 %v1126
      %v1132 = vunpack.c.l.bf16 %v1128
      %v1133 = vunpack.c.l.bf16 %v1129
      %v1134 = vmul.f32 %v1130, %v1132
      %v1135 = vmul.f32 %v1131, %v1133
      %v1136 = vmax.f32 %v1134, 0.0
      %v1137 = vmax.f32 %v1135, 0.0
      %v1138 = vpack.c.bf16 %v1137, %v1136
      %s1139 = scalar_lea.vmem %s352, 384
      %v1140 = vld [vmem:[%s1139] sm:$0xf]
      %v1141 = vld [vmem:[%s1139 + $0x4] sm:$0xf]
      %v1142 = vld [vmem:[%s1139 + $0x8] sm:$0xf]
      %v1143 = vld [vmem:[%s1139 + $0xc] sm:$0xf]
      %v1144 = vld [vmem:[%s1139 + $0x10] sm:$0xf]
      %v1145 = vld [vmem:[%s1139 + $0x14] sm:$0xf]
      %v1146 = vld [vmem:[%s1139 + $0x18] sm:$0xf]
      %v1147 = vld [vmem:[%s1139 + $0x1c] sm:$0xf]
      %v1148 = vld [vmem:[%s1139 + $0x20] sm:$0xf]
      %v1149 = vld [vmem:[%s1139 + $0x24] sm:$0xf]
      %v1150 = vld [vmem:[%s1139 + $0x28] sm:$0xf]
      %v1151 = vld [vmem:[%s1139 + $0x2c] sm:$0xf]
      %v1152 = vld [vmem:[%s1139 + $0x30] sm:$0xf]
      %v1153 = vld [vmem:[%s1139 + $0x34] sm:$0xf]
      %v1154 = vld [vmem:[%s1139 + $0x38] sm:$0xf]
      %v1155 = vld [vmem:[%s1139 + $0x3c] sm:$0xf]
      %v1172 = vunpack.c.l.b16 %v1140
      %v1173 = vunpack.c.l.b16 %v1141
      %v1174 = vunpack.c.l.b16 %v1142
      %v1175 = vunpack.c.l.b16 %v1143
      %v1176 = vunpack.c.l.b16 %v1144
      %v1177 = vunpack.c.l.b16 %v1145
      %v1178 = vunpack.c.l.b16 %v1146
      %v1179 = vunpack.c.l.b16 %v1147
      %v1180 = vunpack.c.l.b16 %v1148
      %v1181 = vunpack.c.l.b16 %v1149
      %v1182 = vunpack.c.l.b16 %v1150
      %v1183 = vunpack.c.l.b16 %v1151
      %v1184 = vunpack.c.l.b16 %v1152
      %v1185 = vunpack.c.l.b16 %v1153
      %v1186 = vunpack.c.l.b16 %v1154
      %v1187 = vunpack.c.l.b16 %v1155
      %v1188 = vpack.c.b16 %v1173, %v1172
      %v1189 = vpack.c.b16 %v1175, %v1174
      %v1190 = vpack.c.b16 %v1177, %v1176
      %v1191 = vpack.c.b16 %v1179, %v1178
      %v1192 = vpack.c.b16 %v1181, %v1180
      %v1193 = vpack.c.b16 %v1183, %v1182
      %v1194 = vpack.c.b16 %v1185, %v1184
      %v1195 = vpack.c.b16 %v1187, %v1186
      %1204 = vmatprep.subr.bf16.mxu0 0
      %1205 = vmatpush1.bf16.msra.mxu0 %v1195
      %1206 = vmatprep.subr.bf16.mxu0 0
      %1207 = vmatpush1.bf16.msra.mxu0 %v1194
      %1208 = vmatprep.subr.bf16.mxu0 0
      %1209 = vmatpush1.bf16.msra.mxu0 %v1193
      %1210 = vmatprep.subr.bf16.mxu0 0
      %1211 = vmatpush1.bf16.msra.mxu0 %v1192
      %1212 = vmatprep.subr.bf16.mxu0 0
      %1213 = vmatpush1.bf16.msra.mxu0 %v1191
      %1214 = vmatprep.subr.bf16.mxu0 0
      %1215 = vmatpush1.bf16.msra.mxu0 %v1190
      %1216 = vmatprep.subr.bf16.mxu0 0
      %1217 = vmatpush1.bf16.msra.mxu0 %v1189
      %1218 = vmatprep.subr.bf16.mxu0 0
      %1219 = vmatpush1.bf16.msra.mxu0 %v1188
      %1220 = vmatprep.subr.bf16.mxu0 0
      %1221 = vmatpush2.bf16.msra.mxu0 0
      %1222 = vmatprep.subr.bf16.mxu0 0
      %1223 = vmatpush2.bf16.msra.mxu0 0
      %1224 = vmatprep.subr.bf16.mxu0 0
      %1225 = vmatpush2.bf16.msra.mxu0 0
      %1226 = vmatprep.subr.bf16.mxu0 0
      %1227 = vmatpush2.bf16.msra.mxu0 0
      %1228 = vmatprep.subr.bf16.mxu0 0
      %1229 = vmatpush2.bf16.msra.mxu0 0
      %1230 = vmatprep.subr.bf16.mxu0 0
      %1231 = vmatpush2.bf16.msra.mxu0 0
      %1232 = vmatprep.subr.bf16.mxu0 0
      %1233 = vmatpush2.bf16.msra.mxu0 0
      %1234 = vmatprep.subr.bf16.mxu0 0
      %1235 = vmatpush2.bf16.msra.mxu0 0
      %1236 = vmatprep.mubr.bf16.mxu0 0
      %1237 = vmatmul.mubr.bf16.gmra.mxu0 %v1138
      %v1238 = vpop.f32.mrf.mxu0
      %v1239 = vadd.f32 0.0, %v1238
      %v1240 = vpop.f32.mrf.mxu0
      %v1241 = vpop.f32.mrf.mxu0
      %v1242 = vadd.f32 0.0, %v1241
      %v1243 = vpop.f32.mrf.mxu0
      %1244 = vdwg.mxu0
      %v1245 = vadd.f32 %v1122, %v1239
      %v1246 = vadd.f32 %v1123, %v1242
      %s1247 = scalar_lea.vmem %s361, 384
      %v1248 = vld [vmem:[%s1247] sm:$0xf]
      %v1249 = vld [vmem:[%s1247 + $0x4] sm:$0xf]
      %v1250 = vld [vmem:[%s1247 + $0x8] sm:$0xf]
      %v1251 = vld [vmem:[%s1247 + $0xc] sm:$0xf]
      %v1252 = vld [vmem:[%s1247 + $0x10] sm:$0xf]
      %v1253 = vld [vmem:[%s1247 + $0x14] sm:$0xf]
      %v1254 = vld [vmem:[%s1247 + $0x18] sm:$0xf]
      %v1255 = vld [vmem:[%s1247 + $0x1c] sm:$0xf]
      %v1256 = vld [vmem:[%s1247 + $0x20] sm:$0xf]
      %v1257 = vld [vmem:[%s1247 + $0x24] sm:$0xf]
      %v1258 = vld [vmem:[%s1247 + $0x28] sm:$0xf]
      %v1259 = vld [vmem:[%s1247 + $0x2c] sm:$0xf]
      %v1260 = vld [vmem:[%s1247 + $0x30] sm:$0xf]
      %v1261 = vld [vmem:[%s1247 + $0x34] sm:$0xf]
      %v1262 = vld [vmem:[%s1247 + $0x38] sm:$0xf]
      %v1263 = vld [vmem:[%s1247 + $0x3c] sm:$0xf]
      %v1266 = vunpack.c.l.b16 %v1125
      %v1267 = vunpack.c.l.b16 %v1126
      %v1268 = vpack.c.b16 %v1267, %v1266
      %v1286 = vunpack.c.l.b16 %v1248
      %v1287 = vunpack.c.l.b16 %v1249
      %v1288 = vunpack.c.l.b16 %v1250
      %v1289 = vunpack.c.l.b16 %v1251
      %v1290 = vunpack.c.l.b16 %v1252
      %v1291 = vunpack.c.l.b16 %v1253
      %v1292 = vunpack.c.l.b16 %v1254
      %v1293 = vunpack.c.l.b16 %v1255
      %v1294 = vunpack.c.l.b16 %v1256
      %v1295 = vunpack.c.l.b16 %v1257
      %v1296 = vunpack.c.l.b16 %v1258
      %v1297 = vunpack.c.l.b16 %v1259
      %v1298 = vunpack.c.l.b16 %v1260
      %v1299 = vunpack.c.l.b16 %v1261
      %v1300 = vunpack.c.l.b16 %v1262
      %v1301 = vunpack.c.l.b16 %v1263
      %v1302 = vpack.c.b16 %v1287, %v1286
      %v1303 = vpack.c.b16 %v1289, %v1288
      %v1304 = vpack.c.b16 %v1291, %v1290
      %v1305 = vpack.c.b16 %v1293, %v1292
      %v1306 = vpack.c.b16 %v1295, %v1294
      %v1307 = vpack.c.b16 %v1297, %v1296
      %v1308 = vpack.c.b16 %v1299, %v1298
      %v1309 = vpack.c.b16 %v1301, %v1300
      %1318 = vmatprep.subr.bf16.mxu0 0
      %1319 = vmatpush1.bf16.msra.mxu0 %v1309
      %1320 = vmatprep.subr.bf16.mxu0 0
      %1321 = vmatpush1.bf16.msra.mxu0 %v1308
      %1322 = vmatprep.subr.bf16.mxu0 0
      %1323 = vmatpush1.bf16.msra.mxu0 %v1307
      %1324 = vmatprep.subr.bf16.mxu0 0
      %1325 = vmatpush1.bf16.msra.mxu0 %v1306
      %1326 = vmatprep.subr.bf16.mxu0 0
      %1327 = vmatpush1.bf16.msra.mxu0 %v1305
      %1328 = vmatprep.subr.bf16.mxu0 0
      %1329 = vmatpush1.bf16.msra.mxu0 %v1304
      %1330 = vmatprep.subr.bf16.mxu0 0
      %1331 = vmatpush1.bf16.msra.mxu0 %v1303
      %1332 = vmatprep.subr.bf16.mxu0 0
      %1333 = vmatpush1.bf16.msra.mxu0 %v1302
      %1334 = vmatprep.subr.bf16.mxu0 0
      %1335 = vmatpush2.bf16.msra.mxu0 0
      %1336 = vmatprep.subr.bf16.mxu0 0
      %1337 = vmatpush2.bf16.msra.mxu0 0
      %1338 = vmatprep.subr.bf16.mxu0 0
      %1339 = vmatpush2.bf16.msra.mxu0 0
      %1340 = vmatprep.subr.bf16.mxu0 0
      %1341 = vmatpush2.bf16.msra.mxu0 0
      %1342 = vmatprep.subr.bf16.mxu0 0
      %1343 = vmatpush2.bf16.msra.mxu0 0
      %1344 = vmatprep.subr.bf16.mxu0 0
      %1345 = vmatpush2.bf16.msra.mxu0 0
      %1346 = vmatprep.subr.bf16.mxu0 0
      %1347 = vmatpush2.bf16.msra.mxu0 0
      %1348 = vmatprep.subr.bf16.mxu0 0
      %1349 = vmatpush2.bf16.msra.mxu0 0
      %1350 = vmatprep.mubr.bf16.mxu0 0
      %1351 = vmatmul.mubr.bf16.gmra.mxu0 %v1268
      %v1352 = vpop.f32.mrf.mxu0
      %v1353 = vadd.f32 0.0, %v1352
      %v1354 = vpop.f32.mrf.mxu0
      %v1355 = vpop.f32.mrf.mxu0
      %v1356 = vadd.f32 0.0, %v1355
      %v1357 = vpop.f32.mrf.mxu0
      %1358 = vdwg.mxu0
      %v1359 = vadd.f32 %v1245, %v1353
      %v1360 = vadd.f32 %v1246, %v1356
      %v1361 = vld [vmem:[%s1124] sm:$0xf]
      %v1362 = vld [vmem:[%s1124 + $0x4] sm:$0xf]
      %v1363 = vld [vmem:[%s1124 + $0x8] sm:$0x1]
      %v1364 = vld [vmem:[%s1127] sm:$0xf]
      %v1365 = vld [vmem:[%s1127 + $0x4] sm:$0xf]
      %v1366 = vld [vmem:[%s1127 + $0x8] sm:$0x1]
      %v1367 = vunpack.c.l.bf16 %v1361
      %v1368 = vunpack.c.l.bf16 %v1362
      %v1369 = vunpack.c.l.bf16 %v1363
      %v1370 = vunpack.c.l.bf16 %v1364
      %v1371 = vunpack.c.l.bf16 %v1365
      %v1372 = vunpack.c.l.bf16 %v1366
      %v1373 = vmul.f32 %v1367, %v1370
      %v1374 = vmul.f32 %v1368, %v1371
      %v1375 = vmul.f32 %v1369, %v1372
      %v1376 = vmax.f32 %v1373, 0.0
      %v1377 = vmax.f32 %v1374, 0.0
      %v1378 = vmax.f32 %v1375, 0.0
      %v1379 = vpack.c.bf16 %v1377, %v1376
      %v1380 = vpack.c.bf16 %v1378, %v1378
      %s1381 = scalar_lea.vmem %s352, 448
      %v1382 = vld [vmem:[%s1381] sm:$0xf]
      %v1383 = vld [vmem:[%s1381 + $0x4] sm:$0xf]
      %v1384 = vld [vmem:[%s1381 + $0x8] sm:$0xf]
      %v1385 = vld [vmem:[%s1381 + $0xc] sm:$0xf]
      %v1386 = vld [vmem:[%s1381 + $0x10] sm:$0xf]
      %v1387 = vld [vmem:[%s1381 + $0x14] sm:$0xf]
      %v1388 = vld [vmem:[%s1381 + $0x18] sm:$0xf]
      %v1389 = vld [vmem:[%s1381 + $0x1c] sm:$0xf]
      %v1390 = vld [vmem:[%s1381 + $0x20] sm:$0xf]
      %v1391 = vld [vmem:[%s1381 + $0x24] sm:$0xf]
      %v1392 = vld [vmem:[%s1381 + $0x28] sm:$0xf]
      %v1393 = vld [vmem:[%s1381 + $0x2c] sm:$0xf]
      %v1394 = vld [vmem:[%s1381 + $0x30] sm:$0xf]
      %v1395 = vld [vmem:[%s1381 + $0x34] sm:$0xf]
      %v1396 = vld [vmem:[%s1381 + $0x38] sm:$0xf]
      %v1397 = vld [vmem:[%s1381 + $0x3c] sm:$0xf]
      %v1399 = vshrl.u32 %v1379, 16
      %v1401 = vshll.u32 %v1379, 16
      %v1403 = vrot.slane %v1401, 1
      %v1404 = vor.u32 %v1399, %v1403
      %v1406 = vshll.u32 %v1380, 16
      %v1408 = vrot.slane %v1406, 1
      %v1409 = vsel %vm653, %v1404, %v1408
      %v1427 = vunpack.c.l.b16 %v1382
      %v1428 = vunpack.c.l.b16 %v1383
      %v1429 = vunpack.c.l.b16 %v1384
      %v1430 = vunpack.c.l.b16 %v1385
      %v1431 = vunpack.c.l.b16 %v1386
      %v1432 = vunpack.c.l.b16 %v1387
      %v1433 = vunpack.c.l.b16 %v1388
      %v1434 = vunpack.c.l.b16 %v1389
      %v1435 = vunpack.c.l.b16 %v1390
      %v1436 = vunpack.c.l.b16 %v1391
      %v1437 = vunpack.c.l.b16 %v1392
      %v1438 = vunpack.c.l.b16 %v1393
      %v1439 = vunpack.c.l.b16 %v1394
      %v1440 = vunpack.c.l.b16 %v1395
      %v1441 = vunpack.c.l.b16 %v1396
      %v1442 = vunpack.c.l.b16 %v1397
      %v1443 = vpack.c.b16 %v1428, %v1427
      %v1444 = vpack.c.b16 %v1430, %v1429
      %v1445 = vpack.c.b16 %v1432, %v1431
      %v1446 = vpack.c.b16 %v1434, %v1433
      %v1447 = vpack.c.b16 %v1436, %v1435
      %v1448 = vpack.c.b16 %v1438, %v1437
      %v1449 = vpack.c.b16 %v1440, %v1439
      %v1450 = vpack.c.b16 %v1442, %v1441
      %1459 = vmatprep.subr.bf16.mxu0 0
      %1460 = vmatpush1.bf16.msra.mxu0 %v1450
      %1461 = vmatprep.subr.bf16.mxu0 0
      %1462 = vmatpush1.bf16.msra.mxu0 %v1449
      %1463 = vmatprep.subr.bf16.mxu0 0
      %1464 = vmatpush1.bf16.msra.mxu0 %v1448
      %1465 = vmatprep.subr.bf16.mxu0 0
      %1466 = vmatpush1.bf16.msra.mxu0 %v1447
      %1467 = vmatprep.subr.bf16.mxu0 0
      %1468 = vmatpush1.bf16.msra.mxu0 %v1446
      %1469 = vmatprep.subr.bf16.mxu0 0
      %1470 = vmatpush1.bf16.msra.mxu0 %v1445
      %1471 = vmatprep.subr.bf16.mxu0 0
      %1472 = vmatpush1.bf16.msra.mxu0 %v1444
      %1473 = vmatprep.subr.bf16.mxu0 0
      %1474 = vmatpush1.bf16.msra.mxu0 %v1443
      %1475 = vmatprep.subr.bf16.mxu0 0
      %1476 = vmatpush2.bf16.msra.mxu0 0
      %1477 = vmatprep.subr.bf16.mxu0 0
      %1478 = vmatpush2.bf16.msra.mxu0 0
      %1479 = vmatprep.subr.bf16.mxu0 0
      %1480 = vmatpush2.bf16.msra.mxu0 0
      %1481 = vmatprep.subr.bf16.mxu0 0
      %1482 = vmatpush2.bf16.msra.mxu0 0
      %1483 = vmatprep.subr.bf16.mxu0 0
      %1484 = vmatpush2.bf16.msra.mxu0 0
      %1485 = vmatprep.subr.bf16.mxu0 0
      %1486 = vmatpush2.bf16.msra.mxu0 0
      %1487 = vmatprep.subr.bf16.mxu0 0
      %1488 = vmatpush2.bf16.msra.mxu0 0
      %1489 = vmatprep.subr.bf16.mxu0 0
      %1490 = vmatpush2.bf16.msra.mxu0 0
      %1491 = vmatprep.mubr.bf16.mxu0 0
      %1492 = vmatmul.mubr.bf16.gmra.mxu0 %v1409
      %v1493 = vpop.f32.mrf.mxu0
      %v1494 = vadd.f32 0.0, %v1493
      %v1495 = vpop.f32.mrf.mxu0
      %v1496 = vpop.f32.mrf.mxu0
      %v1497 = vadd.f32 0.0, %v1496
      %v1498 = vpop.f32.mrf.mxu0
      %1499 = vdwg.mxu0
      %v1500 = vadd.f32 %v1359, %v1494
      %v1501 = vadd.f32 %v1360, %v1497
      %s1502 = scalar_lea.vmem %s361, 448
      %v1503 = vld [vmem:[%s1502] sm:$0xf]
      %v1504 = vld [vmem:[%s1502 + $0x4] sm:$0xf]
      %v1505 = vld [vmem:[%s1502 + $0x8] sm:$0xf]
      %v1506 = vld [vmem:[%s1502 + $0xc] sm:$0xf]
      %v1507 = vld [vmem:[%s1502 + $0x10] sm:$0xf]
      %v1508 = vld [vmem:[%s1502 + $0x14] sm:$0xf]
      %v1509 = vld [vmem:[%s1502 + $0x18] sm:$0xf]
      %v1510 = vld [vmem:[%s1502 + $0x1c] sm:$0xf]
      %v1511 = vld [vmem:[%s1502 + $0x20] sm:$0xf]
      %v1512 = vld [vmem:[%s1502 + $0x24] sm:$0xf]
      %v1513 = vld [vmem:[%s1502 + $0x28] sm:$0xf]
      %v1514 = vld [vmem:[%s1502 + $0x2c] sm:$0xf]
      %v1515 = vld [vmem:[%s1502 + $0x30] sm:$0xf]
      %v1516 = vld [vmem:[%s1502 + $0x34] sm:$0xf]
      %v1517 = vld [vmem:[%s1502 + $0x38] sm:$0xf]
      %v1518 = vld [vmem:[%s1502 + $0x3c] sm:$0xf]
      %v1522 = vunpack.c.l.b16 %v1361
      %v1523 = vunpack.c.l.b16 %v1362
      %v1524 = vunpack.c.l.b16 %v1363
      %v1525 = vpack.c.b16 %v1523, %v1522
      %v1526 = vpack.c.b16 %v1524, %v1524
      %v1528 = vshrl.u32 %v1525, 16
      %v1530 = vshll.u32 %v1525, 16
      %v1532 = vrot.slane %v1530, 1
      %v1533 = vor.u32 %v1528, %v1532
      %v1535 = vshll.u32 %v1526, 16
      %v1537 = vrot.slane %v1535, 1
      %v1538 = vsel %vm653, %v1533, %v1537
      %v1556 = vunpack.c.l.b16 %v1503
      %v1557 = vunpack.c.l.b16 %v1504
      %v1558 = vunpack.c.l.b16 %v1505
      %v1559 = vunpack.c.l.b16 %v1506
      %v1560 = vunpack.c.l.b16 %v1507
      %v1561 = vunpack.c.l.b16 %v1508
      %v1562 = vunpack.c.l.b16 %v1509
      %v1563 = vunpack.c.l.b16 %v1510
      %v1564 = vunpack.c.l.b16 %v1511
      %v1565 = vunpack.c.l.b16 %v1512
      %v1566 = vunpack.c.l.b16 %v1513
      %v1567 = vunpack.c.l.b16 %v1514
      %v1568 = vunpack.c.l.b16 %v1515
      %v1569 = vunpack.c.l.b16 %v1516
      %v1570 = vunpack.c.l.b16 %v1517
      %v1571 = vunpack.c.l.b16 %v1518
      %v1572 = vpack.c.b16 %v1557, %v1556
      %v1573 = vpack.c.b16 %v1559, %v1558
      %v1574 = vpack.c.b16 %v1561, %v1560
      %v1575 = vpack.c.b16 %v1563, %v1562
      %v1576 = vpack.c.b16 %v1565, %v1564
      %v1577 = vpack.c.b16 %v1567, %v1566
      %v1578 = vpack.c.b16 %v1569, %v1568
      %v1579 = vpack.c.b16 %v1571, %v1570
      %1588 = vmatprep.subr.bf16.mxu0 0
      %1589 = vmatpush1.bf16.msra.mxu0 %v1579
      %1590 = vmatprep.subr.bf16.mxu0 0
      %1591 = vmatpush1.bf16.msra.mxu0 %v1578
      %1592 = vmatprep.subr.bf16.mxu0 0
      %1593 = vmatpush1.bf16.msra.mxu0 %v1577
      %1594 = vmatprep.subr.bf16.mxu0 0
      %1595 = vmatpush1.bf16.msra.mxu0 %v1576
      %1596 = vmatprep.subr.bf16.mxu0 0
      %1597 = vmatpush1.bf16.msra.mxu0 %v1575
      %1598 = vmatprep.subr.bf16.mxu0 0
      %1599 = vmatpush1.bf16.msra.mxu0 %v1574
      %1600 = vmatprep.subr.bf16.mxu0 0
      %1601 = vmatpush1.bf16.msra.mxu0 %v1573
      %1602 = vmatprep.subr.bf16.mxu0 0
      %1603 = vmatpush1.bf16.msra.mxu0 %v1572
      %1604 = vmatprep.subr.bf16.mxu0 0
      %1605 = vmatpush2.bf16.msra.mxu0 0
      %1606 = vmatprep.subr.bf16.mxu0 0
      %1607 = vmatpush2.bf16.msra.mxu0 0
      %1608 = vmatprep.subr.bf16.mxu0 0
      %1609 = vmatpush2.bf16.msra.mxu0 0
      %1610 = vmatprep.subr.bf16.mxu0 0
      %1611 = vmatpush2.bf16.msra.mxu0 0
      %1612 = vmatprep.subr.bf16.mxu0 0
      %1613 = vmatpush2.bf16.msra.mxu0 0
      %1614 = vmatprep.subr.bf16.mxu0 0
      %1615 = vmatpush2.bf16.msra.mxu0 0
      %1616 = vmatprep.subr.bf16.mxu0 0
      %1617 = vmatpush2.bf16.msra.mxu0 0
      %1618 = vmatprep.subr.bf16.mxu0 0
      %1619 = vmatpush2.bf16.msra.mxu0 0
      %1620 = vmatprep.mubr.bf16.mxu0 0
      %1621 = vmatmul.mubr.bf16.gmra.mxu0 %v1538
      %v1622 = vpop.f32.mrf.mxu0
      %v1623 = vadd.f32 0.0, %v1622
      %v1624 = vpop.f32.mrf.mxu0
      %v1625 = vpop.f32.mrf.mxu0
      %v1626 = vadd.f32 0.0, %v1625
      %v1627 = vpop.f32.mrf.mxu0
      %1628 = vdwg.mxu0
      %v1629 = vadd.f32 %v1500, %v1623
      %v1630 = vadd.f32 %v1501, %v1626
      %v1631 = vld [vmem:[%s1124] sm:$0xe]
      %v1632 = vld [vmem:[%s1127] sm:$0xe]
      %v1633 = vunpack.c.l.bf16 %v1631
      %v1634 = vunpack.c.l.bf16 %v1632
      %v1635 = vmul.f32 %v1633, %v1634
      %v1636 = vmax.f32 %v1635, 0.0
      %v1637 = vpack.c.bf16 %v1377, %v1636
      %s1638 = scalar_lea.vmem %s352, 512
      %v1639 = vld [vmem:[%s1638] sm:$0xf]
      %v1640 = vld [vmem:[%s1638 + $0x4] sm:$0xf]
      %v1641 = vld [vmem:[%s1638 + $0x8] sm:$0xf]
      %v1642 = vld [vmem:[%s1638 + $0xc] sm:$0xf]
      %v1643 = vld [vmem:[%s1638 + $0x10] sm:$0xf]
      %v1644 = vld [vmem:[%s1638 + $0x14] sm:$0xf]
      %v1645 = vld [vmem:[%s1638 + $0x18] sm:$0xf]
      %v1646 = vld [vmem:[%s1638 + $0x1c] sm:$0xf]
      %v1647 = vld [vmem:[%s1638 + $0x20] sm:$0xf]
      %v1648 = vld [vmem:[%s1638 + $0x24] sm:$0xf]
      %v1649 = vld [vmem:[%s1638 + $0x28] sm:$0xf]
      %v1650 = vld [vmem:[%s1638 + $0x2c] sm:$0xf]
      %v1651 = vld [vmem:[%s1638 + $0x30] sm:$0xf]
      %v1652 = vld [vmem:[%s1638 + $0x34] sm:$0xf]
      %v1653 = vld [vmem:[%s1638 + $0x38] sm:$0xf]
      %v1654 = vld [vmem:[%s1638 + $0x3c] sm:$0xf]
      %v1657 = vrot.slane %v1637, 1
      %v1658 = vrot.slane %v1380, 1
      %v1659 = vsel %vm913, %v1657, %v1658
      %v1677 = vunpack.c.l.b16 %v1639
      %v1678 = vunpack.c.l.b16 %v1640
      %v1679 = vunpack.c.l.b16 %v1641
      %v1680 = vunpack.c.l.b16 %v1642
      %v1681 = vunpack.c.l.b16 %v1643
      %v1682 = vunpack.c.l.b16 %v1644
      %v1683 = vunpack.c.l.b16 %v1645
      %v1684 = vunpack.c.l.b16 %v1646
      %v1685 = vunpack.c.l.b16 %v1647
      %v1686 = vunpack.c.l.b16 %v1648
      %v1687 = vunpack.c.l.b16 %v1649
      %v1688 = vunpack.c.l.b16 %v1650
      %v1689 = vunpack.c.l.b16 %v1651
      %v1690 = vunpack.c.l.b16 %v1652
      %v1691 = vunpack.c.l.b16 %v1653
      %v1692 = vunpack.c.l.b16 %v1654
      %v1693 = vpack.c.b16 %v1678, %v1677
      %v1694 = vpack.c.b16 %v1680, %v1679
      %v1695 = vpack.c.b16 %v1682, %v1681
      %v1696 = vpack.c.b16 %v1684, %v1683
      %v1697 = vpack.c.b16 %v1686, %v1685
      %v1698 = vpack.c.b16 %v1688, %v1687
      %v1699 = vpack.c.b16 %v1690, %v1689
      %v1700 = vpack.c.b16 %v1692, %v1691
      %1709 = vmatprep.subr.bf16.mxu0 0
      %1710 = vmatpush1.bf16.msra.mxu0 %v1700
      %1711 = vmatprep.subr.bf16.mxu0 0
      %1712 = vmatpush1.bf16.msra.mxu0 %v1699
      %1713 = vmatprep.subr.bf16.mxu0 0
      %1714 = vmatpush1.bf16.msra.mxu0 %v1698
      %1715 = vmatprep.subr.bf16.mxu0 0
      %1716 = vmatpush1.bf16.msra.mxu0 %v1697
      %1717 = vmatprep.subr.bf16.mxu0 0
      %1718 = vmatpush1.bf16.msra.mxu0 %v1696
      %1719 = vmatprep.subr.bf16.mxu0 0
      %1720 = vmatpush1.bf16.msra.mxu0 %v1695
      %1721 = vmatprep.subr.bf16.mxu0 0
      %1722 = vmatpush1.bf16.msra.mxu0 %v1694
      %1723 = vmatprep.subr.bf16.mxu0 0
      %1724 = vmatpush1.bf16.msra.mxu0 %v1693
      %1725 = vmatprep.subr.bf16.mxu0 0
      %1726 = vmatpush2.bf16.msra.mxu0 0
      %1727 = vmatprep.subr.bf16.mxu0 0
      %1728 = vmatpush2.bf16.msra.mxu0 0
      %1729 = vmatprep.subr.bf16.mxu0 0
      %1730 = vmatpush2.bf16.msra.mxu0 0
      %1731 = vmatprep.subr.bf16.mxu0 0
      %1732 = vmatpush2.bf16.msra.mxu0 0
      %1733 = vmatprep.subr.bf16.mxu0 0
      %1734 = vmatpush2.bf16.msra.mxu0 0
      %1735 = vmatprep.subr.bf16.mxu0 0
      %1736 = vmatpush2.bf16.msra.mxu0 0
      %1737 = vmatprep.subr.bf16.mxu0 0
      %1738 = vmatpush2.bf16.msra.mxu0 0
      %1739 = vmatprep.subr.bf16.mxu0 0
      %1740 = vmatpush2.bf16.msra.mxu0 0
      %1741 = vmatprep.mubr.bf16.mxu0 0
      %1742 = vmatmul.mubr.bf16.gmra.mxu0 %v1659
      %v1743 = vpop.f32.mrf.mxu0
      %v1744 = vadd.f32 0.0, %v1743
      %v1745 = vpop.f32.mrf.mxu0
      %v1746 = vpop.f32.mrf.mxu0
      %v1747 = vadd.f32 0.0, %v1746
      %v1748 = vpop.f32.mrf.mxu0
      %1749 = vdwg.mxu0
      %v1750 = vadd.f32 %v1629, %v1744
      %v1751 = vadd.f32 %v1630, %v1747
      %s1752 = scalar_lea.vmem %s361, 512
      %v1753 = vld [vmem:[%s1752] sm:$0xf]
      %v1754 = vld [vmem:[%s1752 + $0x4] sm:$0xf]
      %v1755 = vld [vmem:[%s1752 + $0x8] sm:$0xf]
      %v1756 = vld [vmem:[%s1752 + $0xc] sm:$0xf]
      %v1757 = vld [vmem:[%s1752 + $0x10] sm:$0xf]
      %v1758 = vld [vmem:[%s1752 + $0x14] sm:$0xf]
      %v1759 = vld [vmem:[%s1752 + $0x18] sm:$0xf]
      %v1760 = vld [vmem:[%s1752 + $0x1c] sm:$0xf]
      %v1761 = vld [vmem:[%s1752 + $0x20] sm:$0xf]
      %v1762 = vld [vmem:[%s1752 + $0x24] sm:$0xf]
      %v1763 = vld [vmem:[%s1752 + $0x28] sm:$0xf]
      %v1764 = vld [vmem:[%s1752 + $0x2c] sm:$0xf]
      %v1765 = vld [vmem:[%s1752 + $0x30] sm:$0xf]
      %v1766 = vld [vmem:[%s1752 + $0x34] sm:$0xf]
      %v1767 = vld [vmem:[%s1752 + $0x38] sm:$0xf]
      %v1768 = vld [vmem:[%s1752 + $0x3c] sm:$0xf]
      %v1770 = vunpack.c.l.b16 %v1631
      %v1771 = vpack.c.b16 %v1523, %v1770
      %v1772 = vrot.slane %v1771, 1
      %v1773 = vrot.slane %v1526, 1
      %v1774 = vsel %vm913, %v1772, %v1773
      %v1792 = vunpack.c.l.b16 %v1753
      %v1793 = vunpack.c.l.b16 %v1754
      %v1794 = vunpack.c.l.b16 %v1755
      %v1795 = vunpack.c.l.b16 %v1756
      %v1796 = vunpack.c.l.b16 %v1757
      %v1797 = vunpack.c.l.b16 %v1758
      %v1798 = vunpack.c.l.b16 %v1759
      %v1799 = vunpack.c.l.b16 %v1760
      %v1800 = vunpack.c.l.b16 %v1761
      %v1801 = vunpack.c.l.b16 %v1762
      %v1802 = vunpack.c.l.b16 %v1763
      %v1803 = vunpack.c.l.b16 %v1764
      %v1804 = vunpack.c.l.b16 %v1765
      %v1805 = vunpack.c.l.b16 %v1766
      %v1806 = vunpack.c.l.b16 %v1767
      %v1807 = vunpack.c.l.b16 %v1768
      %v1808 = vpack.c.b16 %v1793, %v1792
      %v1809 = vpack.c.b16 %v1795, %v1794
      %v1810 = vpack.c.b16 %v1797, %v1796
      %v1811 = vpack.c.b16 %v1799, %v1798
      %v1812 = vpack.c.b16 %v1801, %v1800
      %v1813 = vpack.c.b16 %v1803, %v1802
      %v1814 = vpack.c.b16 %v1805, %v1804
      %v1815 = vpack.c.b16 %v1807, %v1806
      %1824 = vmatprep.subr.bf16.mxu0 0
      %1825 = vmatpush1.bf16.msra.mxu0 %v1815
      %1826 = vmatprep.subr.bf16.mxu0 0
      %1827 = vmatpush1.bf16.msra.mxu0 %v1814
      %1828 = vmatprep.subr.bf16.mxu0 0
      %1829 = vmatpush1.bf16.msra.mxu0 %v1813
      %1830 = vmatprep.subr.bf16.mxu0 0
      %1831 = vmatpush1.bf16.msra.mxu0 %v1812
      %1832 = vmatprep.subr.bf16.mxu0 0
      %1833 = vmatpush1.bf16.msra.mxu0 %v1811
      %1834 = vmatprep.subr.bf16.mxu0 0
      %1835 = vmatpush1.bf16.msra.mxu0 %v1810
      %1836 = vmatprep.subr.bf16.mxu0 0
      %1837 = vmatpush1.bf16.msra.mxu0 %v1809
      %1838 = vmatprep.subr.bf16.mxu0 0
      %1839 = vmatpush1.bf16.msra.mxu0 %v1808
      %1840 = vmatprep.subr.bf16.mxu0 0
      %1841 = vmatpush2.bf16.msra.mxu0 0
      %1842 = vmatprep.subr.bf16.mxu0 0
      %1843 = vmatpush2.bf16.msra.mxu0 0
      %1844 = vmatprep.subr.bf16.mxu0 0
      %1845 = vmatpush2.bf16.msra.mxu0 0
      %1846 = vmatprep.subr.bf16.mxu0 0
      %1847 = vmatpush2.bf16.msra.mxu0 0
      %1848 = vmatprep.subr.bf16.mxu0 0
      %1849 = vmatpush2.bf16.msra.mxu0 0
      %1850 = vmatprep.subr.bf16.mxu0 0
      %1851 = vmatpush2.bf16.msra.mxu0 0
      %1852 = vmatprep.subr.bf16.mxu0 0
      %1853 = vmatpush2.bf16.msra.mxu0 0
      %1854 = vmatprep.subr.bf16.mxu0 0
      %1855 = vmatpush2.bf16.msra.mxu0 0
      %1856 = vmatprep.mubr.bf16.mxu0 0
      %1857 = vmatmul.mubr.bf16.gmra.mxu0 %v1774
      %v1858 = vpop.f32.mrf.mxu0
      %v1859 = vadd.f32 0.0, %v1858
      %v1860 = vpop.f32.mrf.mxu0
      %v1861 = vpop.f32.mrf.mxu0
      %v1862 = vadd.f32 0.0, %v1861
      %v1863 = vpop.f32.mrf.mxu0
      %1864 = vdwg.mxu0
      %v1865 = vadd.f32 %v1750, %v1859
      %v1866 = vadd.f32 %v1751, %v1862
      %v1867 = vld [vmem:[#allocation2] sm:$0xff]
      %v1868 = vld [vmem:[#allocation2 + $0x8] sm:$0xff]
      %v1869 = vadd.f32 %v1867, %v1865
      %v1870 = vadd.f32 %v1868, %v1866
      %1871 = vst [vmem:[#allocation2] sm:$0xff] %v1869
      %1872 = vst [vmem:[#allocation2 + $0x8] sm:$0xff] %v1870
      %v1873 = vld [vmem:[%s383] sm:$0xf]
      %v1874 = vld [vmem:[%s383 + $0x4] sm:$0xf]
      %v1875 = vld [vmem:[%s386] sm:$0xf]
      %v1876 = vld [vmem:[%s386 + $0x4] sm:$0xf]
      %v1877 = vunpack.c.l.bf16 %v1873
      %v1878 = vunpack.c.l.bf16 %v1874
      %v1879 = vunpack.c.l.bf16 %v1875
      %v1880 = vunpack.c.l.bf16 %v1876
      %v1881 = vmul.f32 %v1877, %v1879
      %v1882 = vmul.f32 %v1878, %v1880
      %v1883 = vmax.f32 %v1881, 0.0
      %v1884 = vmax.f32 %v1882, 0.0
      %v1885 = vpack.c.bf16 %v1884, %v1883
      %v1886 = vld [vmem:[%s352] sm:$0xf]
      %v1887 = vld [vmem:[%s352 + $0x4] sm:$0xf]
      %v1888 = vld [vmem:[%s352 + $0x8] sm:$0xf]
      %v1889 = vld [vmem:[%s352 + $0xc] sm:$0xf]
      %v1890 = vld [vmem:[%s352 + $0x10] sm:$0xf]
      %v1891 = vld [vmem:[%s352 + $0x14] sm:$0xf]
      %v1892 = vld [vmem:[%s352 + $0x18] sm:$0xf]
      %v1893 = vld [vmem:[%s352 + $0x1c] sm:$0xf]
      %v1894 = vld [vmem:[%s352 + $0x20] sm:$0xf]
      %v1895 = vld [vmem:[%s352 + $0x24] sm:$0xf]
      %v1896 = vld [vmem:[%s352 + $0x28] sm:$0xf]
      %v1897 = vld [vmem:[%s352 + $0x2c] sm:$0xf]
      %v1898 = vld [vmem:[%s352 + $0x30] sm:$0xf]
      %v1899 = vld [vmem:[%s352 + $0x34] sm:$0xf]
      %v1900 = vld [vmem:[%s352 + $0x38] sm:$0xf]
      %v1901 = vld [vmem:[%s352 + $0x3c] sm:$0xf]
      %v1902 = vld [vmem:[%s361] sm:$0xf]
      %v1903 = vld [vmem:[%s361 + $0x4] sm:$0xf]
      %v1904 = vld [vmem:[%s361 + $0x8] sm:$0xf]
      %v1905 = vld [vmem:[%s361 + $0xc] sm:$0xf]
      %v1906 = vld [vmem:[%s361 + $0x10] sm:$0xf]
      %v1907 = vld [vmem:[%s361 + $0x14] sm:$0xf]
      %v1908 = vld [vmem:[%s361 + $0x18] sm:$0xf]
      %v1909 = vld [vmem:[%s361 + $0x1c] sm:$0xf]
      %v1910 = vld [vmem:[%s361 + $0x20] sm:$0xf]
      %v1911 = vld [vmem:[%s361 + $0x24] sm:$0xf]
      %v1912 = vld [vmem:[%s361 + $0x28] sm:$0xf]
      %v1913 = vld [vmem:[%s361 + $0x2c] sm:$0xf]
      %v1914 = vld [vmem:[%s361 + $0x30] sm:$0xf]
      %v1915 = vld [vmem:[%s361 + $0x34] sm:$0xf]
      %v1916 = vld [vmem:[%s361 + $0x38] sm:$0xf]
      %v1917 = vld [vmem:[%s361 + $0x3c] sm:$0xf]
      %v1920 = vunpack.c.l.b16 %v1873
      %v1921 = vunpack.c.l.b16 %v1874
      %v1922 = vpack.c.b16 %v1921, %v1920
      %v1940 = vunpack.c.l.b16 %v1902
      %v1941 = vunpack.c.l.b16 %v1903
      %v1942 = vunpack.c.l.b16 %v1904
      %v1943 = vunpack.c.l.b16 %v1905
      %v1944 = vunpack.c.l.b16 %v1906
      %v1945 = vunpack.c.l.b16 %v1907
      %v1946 = vunpack.c.l.b16 %v1908
      %v1947 = vunpack.c.l.b16 %v1909
      %v1948 = vunpack.c.l.b16 %v1910
      %v1949 = vunpack.c.l.b16 %v1911
      %v1950 = vunpack.c.l.b16 %v1912
      %v1951 = vunpack.c.l.b16 %v1913
      %v1952 = vunpack.c.l.b16 %v1914
      %v1953 = vunpack.c.l.b16 %v1915
      %v1954 = vunpack.c.l.b16 %v1916
      %v1955 = vunpack.c.l.b16 %v1917
      %v1956 = vpack.c.b16 %v1941, %v1940
      %v1957 = vpack.c.b16 %v1943, %v1942
      %v1958 = vpack.c.b16 %v1945, %v1944
      %v1959 = vpack.c.b16 %v1947, %v1946
      %v1960 = vpack.c.b16 %v1949, %v1948
      %v1961 = vpack.c.b16 %v1951, %v1950
      %v1962 = vpack.c.b16 %v1953, %v1952
      %v1963 = vpack.c.b16 %v1955, %v1954
      %1972 = vmatprep.subr.bf16.mxu0 0
      %1973 = vmatpush1.bf16.msra.mxu0 %v1963
      %1974 = vmatprep.subr.bf16.mxu0 0
      %1975 = vmatpush1.bf16.msra.mxu0 %v1962
      %1976 = vmatprep.subr.bf16.mxu0 0
      %1977 = vmatpush1.bf16.msra.mxu0 %v1961
      %1978 = vmatprep.subr.bf16.mxu0 0
      %1979 = vmatpush1.bf16.msra.mxu0 %v1960
      %1980 = vmatprep.subr.bf16.mxu0 0
      %1981 = vmatpush1.bf16.msra.mxu0 %v1959
      %1982 = vmatprep.subr.bf16.mxu0 0
      %1983 = vmatpush1.bf16.msra.mxu0 %v1958
      %1984 = vmatprep.subr.bf16.mxu0 0
      %1985 = vmatpush1.bf16.msra.mxu0 %v1957
      %1986 = vmatprep.subr.bf16.mxu0 0
      %1987 = vmatpush1.bf16.msra.mxu0 %v1956
      %1988 = vmatprep.subr.bf16.mxu0 0
      %1989 = vmatpush2.bf16.msra.mxu0 0
      %1990 = vmatprep.subr.bf16.mxu0 0
      %1991 = vmatpush2.bf16.msra.mxu0 0
      %1992 = vmatprep.subr.bf16.mxu0 0
      %1993 = vmatpush2.bf16.msra.mxu0 0
      %1994 = vmatprep.subr.bf16.mxu0 0
      %1995 = vmatpush2.bf16.msra.mxu0 0
      %1996 = vmatprep.subr.bf16.mxu0 0
      %1997 = vmatpush2.bf16.msra.mxu0 0
      %1998 = vmatprep.subr.bf16.mxu0 0
      %1999 = vmatpush2.bf16.msra.mxu0 0
      %2000 = vmatprep.subr.bf16.mxu0 0
      %2001 = vmatpush2.bf16.msra.mxu0 0
      %2002 = vmatprep.subr.bf16.mxu0 0
      %2003 = vmatpush2.bf16.msra.mxu0 0
      %2004 = vmatprep.mubr.bf16.mxu0 0
      %2005 = vmatmul.mubr.bf16.gmra.mxu0 %v1922
      %v2006 = vpop.f32.mrf.mxu0
      %v2007 = vadd.f32 0.0, %v2006
      %v2008 = vpop.f32.mrf.mxu0
      %v2009 = vpop.f32.mrf.mxu0
      %v2010 = vadd.f32 0.0, %v2009
      %v2011 = vpop.f32.mrf.mxu0
      %2012 = vdwg.mxu0
      %v2029 = vunpack.c.l.b16 %v1886
      %v2030 = vunpack.c.l.b16 %v1887
      %v2031 = vunpack.c.l.b16 %v1888
      %v2032 = vunpack.c.l.b16 %v1889
      %v2033 = vunpack.c.l.b16 %v1890
      %v2034 = vunpack.c.l.b16 %v1891
      %v2035 = vunpack.c.l.b16 %v1892
      %v2036 = vunpack.c.l.b16 %v1893
      %v2037 = vunpack.c.l.b16 %v1894
      %v2038 = vunpack.c.l.b16 %v1895
      %v2039 = vunpack.c.l.b16 %v1896
      %v2040 = vunpack.c.l.b16 %v1897
      %v2041 = vunpack.c.l.b16 %v1898
      %v2042 = vunpack.c.l.b16 %v1899
      %v2043 = vunpack.c.l.b16 %v1900
      %v2044 = vunpack.c.l.b16 %v1901
      %v2045 = vpack.c.b16 %v2030, %v2029
      %v2046 = vpack.c.b16 %v2032, %v2031
      %v2047 = vpack.c.b16 %v2034, %v2033
      %v2048 = vpack.c.b16 %v2036, %v2035
      %v2049 = vpack.c.b16 %v2038, %v2037
      %v2050 = vpack.c.b16 %v2040, %v2039
      %v2051 = vpack.c.b16 %v2042, %v2041
      %v2052 = vpack.c.b16 %v2044, %v2043
      %2061 = vmatprep.subr.bf16.mxu0 0
      %2062 = vmatpush1.bf16.msra.mxu0 %v2052
      %2063 = vmatprep.subr.bf16.mxu0 0
      %2064 = vmatpush1.bf16.msra.mxu0 %v2051
      %2065 = vmatprep.subr.bf16.mxu0 0
      %2066 = vmatpush1.bf16.msra.mxu0 %v2050
      %2067 = vmatprep.subr.bf16.mxu0 0
      %2068 = vmatpush1.bf16.msra.mxu0 %v2049
      %2069 = vmatprep.subr.bf16.mxu0 0
      %2070 = vmatpush1.bf16.msra.mxu0 %v2048
      %2071 = vmatprep.subr.bf16.mxu0 0
      %2072 = vmatpush1.bf16.msra.mxu0 %v2047
      %2073 = vmatprep.subr.bf16.mxu0 0
      %2074 = vmatpush1.bf16.msra.mxu0 %v2046
      %2075 = vmatprep.subr.bf16.mxu0 0
      %2076 = vmatpush1.bf16.msra.mxu0 %v2045
      %2077 = vmatprep.subr.bf16.mxu0 0
      %2078 = vmatpush2.bf16.msra.mxu0 0
      %2079 = vmatprep.subr.bf16.mxu0 0
      %2080 = vmatpush2.bf16.msra.mxu0 0
      %2081 = vmatprep.subr.bf16.mxu0 0
      %2082 = vmatpush2.bf16.msra.mxu0 0
      %2083 = vmatprep.subr.bf16.mxu0 0
      %2084 = vmatpush2.bf16.msra.mxu0 0
      %2085 = vmatprep.subr.bf16.mxu0 0
      %2086 = vmatpush2.bf16.msra.mxu0 0
      %2087 = vmatprep.subr.bf16.mxu0 0
      %2088 = vmatpush2.bf16.msra.mxu0 0
      %2089 = vmatprep.subr.bf16.mxu0 0
      %2090 = vmatpush2.bf16.msra.mxu0 0
      %2091 = vmatprep.subr.bf16.mxu0 0
      %2092 = vmatpush2.bf16.msra.mxu0 0
      %2093 = vmatprep.mubr.bf16.mxu0 0
      %2094 = vmatmul.mubr.bf16.gmra.mxu0 %v1885
      %v2095 = vpop.f32.mrf.mxu0
      %v2096 = vadd.f32 %v2007, %v2095
      %v2097 = vpop.f32.mrf.mxu0
      %v2098 = vpop.f32.mrf.mxu0
      %v2099 = vadd.f32 %v2010, %v2098
      %v2100 = vpop.f32.mrf.mxu0
      %2101 = vdwg.mxu0
      %v2102 = vld [vmem:[%s383] sm:$0xf]
      %v2103 = vld [vmem:[%s383 + $0x4] sm:$0xf]
      %v2104 = vld [vmem:[%s383 + $0x8] sm:$0x1]
      %v2105 = vld [vmem:[%s386] sm:$0xf]
      %v2106 = vld [vmem:[%s386 + $0x4] sm:$0xf]
      %v2107 = vld [vmem:[%s386 + $0x8] sm:$0x1]
      %v2108 = vunpack.c.l.bf16 %v2102
      %v2109 = vunpack.c.l.bf16 %v2103
      %v2110 = vunpack.c.l.bf16 %v2104
      %v2111 = vunpack.c.l.bf16 %v2105
      %v2112 = vunpack.c.l.bf16 %v2106
      %v2113 = vunpack.c.l.bf16 %v2107
      %v2114 = vmul.f32 %v2108, %v2111
      %v2115 = vmul.f32 %v2109, %v2112
      %v2116 = vmul.f32 %v2110, %v2113
      %v2117 = vmax.f32 %v2114, 0.0
      %v2118 = vmax.f32 %v2115, 0.0
      %v2119 = vmax.f32 %v2116, 0.0
      %v2120 = vpack.c.bf16 %v2118, %v2117
      %v2121 = vpack.c.bf16 %v2119, %v2119
      %s2122 = scalar_lea.vmem %s352, 64
      %v2123 = vld [vmem:[%s2122] sm:$0xf]
      %v2124 = vld [vmem:[%s2122 + $0x4] sm:$0xf]
      %v2125 = vld [vmem:[%s2122 + $0x8] sm:$0xf]
      %v2126 = vld [vmem:[%s2122 + $0xc] sm:$0xf]
      %v2127 = vld [vmem:[%s2122 + $0x10] sm:$0xf]
      %v2128 = vld [vmem:[%s2122 + $0x14] sm:$0xf]
      %v2129 = vld [vmem:[%s2122 + $0x18] sm:$0xf]
      %v2130 = vld [vmem:[%s2122 + $0x1c] sm:$0xf]
      %v2131 = vld [vmem:[%s2122 + $0x20] sm:$0xf]
      %v2132 = vld [vmem:[%s2122 + $0x24] sm:$0xf]
      %v2133 = vld [vmem:[%s2122 + $0x28] sm:$0xf]
      %v2134 = vld [vmem:[%s2122 + $0x2c] sm:$0xf]
      %v2135 = vld [vmem:[%s2122 + $0x30] sm:$0xf]
      %v2136 = vld [vmem:[%s2122 + $0x34] sm:$0xf]
      %v2137 = vld [vmem:[%s2122 + $0x38] sm:$0xf]
      %v2138 = vld [vmem:[%s2122 + $0x3c] sm:$0xf]
      %v2140 = vshrl.u32 %v2120, 16
      %v2142 = vshll.u32 %v2120, 16
      %v2144 = vrot.slane %v2142, 1
      %v2145 = vor.u32 %v2140, %v2144
      %v2147 = vshll.u32 %v2121, 16
      %v2149 = vrot.slane %v2147, 1
      %v2150 = vsel %vm653, %v2145, %v2149
      %v2168 = vunpack.c.l.b16 %v2123
      %v2169 = vunpack.c.l.b16 %v2124
      %v2170 = vunpack.c.l.b16 %v2125
      %v2171 = vunpack.c.l.b16 %v2126
      %v2172 = vunpack.c.l.b16 %v2127
      %v2173 = vunpack.c.l.b16 %v2128
      %v2174 = vunpack.c.l.b16 %v2129
      %v2175 = vunpack.c.l.b16 %v2130
      %v2176 = vunpack.c.l.b16 %v2131
      %v2177 = vunpack.c.l.b16 %v2132
      %v2178 = vunpack.c.l.b16 %v2133
      %v2179 = vunpack.c.l.b16 %v2134
      %v2180 = vunpack.c.l.b16 %v2135
      %v2181 = vunpack.c.l.b16 %v2136
      %v2182 = vunpack.c.l.b16 %v2137
      %v2183 = vunpack.c.l.b16 %v2138
      %v2184 = vpack.c.b16 %v2169, %v2168
      %v2185 = vpack.c.b16 %v2171, %v2170
      %v2186 = vpack.c.b16 %v2173, %v2172
      %v2187 = vpack.c.b16 %v2175, %v2174
      %v2188 = vpack.c.b16 %v2177, %v2176
      %v2189 = vpack.c.b16 %v2179, %v2178
      %v2190 = vpack.c.b16 %v2181, %v2180
      %v2191 = vpack.c.b16 %v2183, %v2182
      %2200 = vmatprep.subr.bf16.mxu0 0
      %2201 = vmatpush1.bf16.msra.mxu0 %v2191
      %2202 = vmatprep.subr.bf16.mxu0 0
      %2203 = vmatpush1.bf16.msra.mxu0 %v2190
      %2204 = vmatprep.subr.bf16.mxu0 0
      %2205 = vmatpush1.bf16.msra.mxu0 %v2189
      %2206 = vmatprep.subr.bf16.mxu0 0
      %2207 = vmatpush1.bf16.msra.mxu0 %v2188
      %2208 = vmatprep.subr.bf16.mxu0 0
      %2209 = vmatpush1.bf16.msra.mxu0 %v2187
      %2210 = vmatprep.subr.bf16.mxu0 0
      %2211 = vmatpush1.bf16.msra.mxu0 %v2186
      %2212 = vmatprep.subr.bf16.mxu0 0
      %2213 = vmatpush1.bf16.msra.mxu0 %v2185
      %2214 = vmatprep.subr.bf16.mxu0 0
      %2215 = vmatpush1.bf16.msra.mxu0 %v2184
      %2216 = vmatprep.subr.bf16.mxu0 0
      %2217 = vmatpush2.bf16.msra.mxu0 0
      %2218 = vmatprep.subr.bf16.mxu0 0
      %2219 = vmatpush2.bf16.msra.mxu0 0
      %2220 = vmatprep.subr.bf16.mxu0 0
      %2221 = vmatpush2.bf16.msra.mxu0 0
      %2222 = vmatprep.subr.bf16.mxu0 0
      %2223 = vmatpush2.bf16.msra.mxu0 0
      %2224 = vmatprep.subr.bf16.mxu0 0
      %2225 = vmatpush2.bf16.msra.mxu0 0
      %2226 = vmatprep.subr.bf16.mxu0 0
      %2227 = vmatpush2.bf16.msra.mxu0 0
      %2228 = vmatprep.subr.bf16.mxu0 0
      %2229 = vmatpush2.bf16.msra.mxu0 0
      %2230 = vmatprep.subr.bf16.mxu0 0
      %2231 = vmatpush2.bf16.msra.mxu0 0
      %2232 = vmatprep.mubr.bf16.mxu0 0
      %2233 = vmatmul.mubr.bf16.gmra.mxu0 %v2150
      %v2234 = vpop.f32.mrf.mxu0
      %v2235 = vadd.f32 0.0, %v2234
      %v2236 = vpop.f32.mrf.mxu0
      %v2237 = vpop.f32.mrf.mxu0
      %v2238 = vadd.f32 0.0, %v2237
      %v2239 = vpop.f32.mrf.mxu0
      %2240 = vdwg.mxu0
      %v2241 = vadd.f32 %v2096, %v2235
      %v2242 = vadd.f32 %v2099, %v2238
      %s2243 = scalar_lea.vmem %s361, 64
      %v2244 = vld [vmem:[%s2243] sm:$0xf]
      %v2245 = vld [vmem:[%s2243 + $0x4] sm:$0xf]
      %v2246 = vld [vmem:[%s2243 + $0x8] sm:$0xf]
      %v2247 = vld [vmem:[%s2243 + $0xc] sm:$0xf]
      %v2248 = vld [vmem:[%s2243 + $0x10] sm:$0xf]
      %v2249 = vld [vmem:[%s2243 + $0x14] sm:$0xf]
      %v2250 = vld [vmem:[%s2243 + $0x18] sm:$0xf]
      %v2251 = vld [vmem:[%s2243 + $0x1c] sm:$0xf]
      %v2252 = vld [vmem:[%s2243 + $0x20] sm:$0xf]
      %v2253 = vld [vmem:[%s2243 + $0x24] sm:$0xf]
      %v2254 = vld [vmem:[%s2243 + $0x28] sm:$0xf]
      %v2255 = vld [vmem:[%s2243 + $0x2c] sm:$0xf]
      %v2256 = vld [vmem:[%s2243 + $0x30] sm:$0xf]
      %v2257 = vld [vmem:[%s2243 + $0x34] sm:$0xf]
      %v2258 = vld [vmem:[%s2243 + $0x38] sm:$0xf]
      %v2259 = vld [vmem:[%s2243 + $0x3c] sm:$0xf]
      %v2263 = vunpack.c.l.b16 %v2102
      %v2264 = vunpack.c.l.b16 %v2103
      %v2265 = vunpack.c.l.b16 %v2104
      %v2266 = vpack.c.b16 %v2264, %v2263
      %v2267 = vpack.c.b16 %v2265, %v2265
      %v2269 = vshrl.u32 %v2266, 16
      %v2271 = vshll.u32 %v2266, 16
      %v2273 = vrot.slane %v2271, 1
      %v2274 = vor.u32 %v2269, %v2273
      %v2276 = vshll.u32 %v2267, 16
      %v2278 = vrot.slane %v2276, 1
      %v2279 = vsel %vm653, %v2274, %v2278
      %v2297 = vunpack.c.l.b16 %v2244
      %v2298 = vunpack.c.l.b16 %v2245
      %v2299 = vunpack.c.l.b16 %v2246
      %v2300 = vunpack.c.l.b16 %v2247
      %v2301 = vunpack.c.l.b16 %v2248
      %v2302 = vunpack.c.l.b16 %v2249
      %v2303 = vunpack.c.l.b16 %v2250
      %v2304 = vunpack.c.l.b16 %v2251
      %v2305 = vunpack.c.l.b16 %v2252
      %v2306 = vunpack.c.l.b16 %v2253
      %v2307 = vunpack.c.l.b16 %v2254
      %v2308 = vunpack.c.l.b16 %v2255
      %v2309 = vunpack.c.l.b16 %v2256
      %v2310 = vunpack.c.l.b16 %v2257
      %v2311 = vunpack.c.l.b16 %v2258
      %v2312 = vunpack.c.l.b16 %v2259
      %v2313 = vpack.c.b16 %v2298, %v2297
      %v2314 = vpack.c.b16 %v2300, %v2299
      %v2315 = vpack.c.b16 %v2302, %v2301
      %v2316 = vpack.c.b16 %v2304, %v2303
      %v2317 = vpack.c.b16 %v2306, %v2305
      %v2318 = vpack.c.b16 %v2308, %v2307
      %v2319 = vpack.c.b16 %v2310, %v2309
      %v2320 = vpack.c.b16 %v2312, %v2311
      %2329 = vmatprep.subr.bf16.mxu0 0
      %2330 = vmatpush1.bf16.msra.mxu0 %v2320
      %2331 = vmatprep.subr.bf16.mxu0 0
      %2332 = vmatpush1.bf16.msra.mxu0 %v2319
      %2333 = vmatprep.subr.bf16.mxu0 0
      %2334 = vmatpush1.bf16.msra.mxu0 %v2318
      %2335 = vmatprep.subr.bf16.mxu0 0
      %2336 = vmatpush1.bf16.msra.mxu0 %v2317
      %2337 = vmatprep.subr.bf16.mxu0 0
      %2338 = vmatpush1.bf16.msra.mxu0 %v2316
      %2339 = vmatprep.subr.bf16.mxu0 0
      %2340 = vmatpush1.bf16.msra.mxu0 %v2315
      %2341 = vmatprep.subr.bf16.mxu0 0
      %2342 = vmatpush1.bf16.msra.mxu0 %v2314
      %2343 = vmatprep.subr.bf16.mxu0 0
      %2344 = vmatpush1.bf16.msra.mxu0 %v2313
      %2345 = vmatprep.subr.bf16.mxu0 0
      %2346 = vmatpush2.bf16.msra.mxu0 0
      %2347 = vmatprep.subr.bf16.mxu0 0
      %2348 = vmatpush2.bf16.msra.mxu0 0
      %2349 = vmatprep.subr.bf16.mxu0 0
      %2350 = vmatpush2.bf16.msra.mxu0 0
      %2351 = vmatprep.subr.bf16.mxu0 0
      %2352 = vmatpush2.bf16.msra.mxu0 0
      %2353 = vmatprep.subr.bf16.mxu0 0
      %2354 = vmatpush2.bf16.msra.mxu0 0
      %2355 = vmatprep.subr.bf16.mxu0 0
      %2356 = vmatpush2.bf16.msra.mxu0 0
      %2357 = vmatprep.subr.bf16.mxu0 0
      %2358 = vmatpush2.bf16.msra.mxu0 0
      %2359 = vmatprep.subr.bf16.mxu0 0
      %2360 = vmatpush2.bf16.msra.mxu0 0
      %2361 = vmatprep.mubr.bf16.mxu0 0
      %2362 = vmatmul.mubr.bf16.gmra.mxu0 %v2279
      %v2363 = vpop.f32.mrf.mxu0
      %v2364 = vadd.f32 0.0, %v2363
      %v2365 = vpop.f32.mrf.mxu0
      %v2366 = vpop.f32.mrf.mxu0
      %v2367 = vadd.f32 0.0, %v2366
      %v2368 = vpop.f32.mrf.mxu0
      %2369 = vdwg.mxu0
      %v2370 = vadd.f32 %v2241, %v2364
      %v2371 = vadd.f32 %v2242, %v2367
      %v2372 = vld [vmem:[%s383] sm:$0xe]
      %v2373 = vld [vmem:[%s386] sm:$0xe]
      %v2374 = vunpack.c.l.bf16 %v2372
      %v2375 = vunpack.c.l.bf16 %v2373
      %v2376 = vmul.f32 %v2374, %v2375
      %v2377 = vmax.f32 %v2376, 0.0
      %v2378 = vpack.c.bf16 %v2118, %v2377
      %s2379 = scalar_lea.vmem %s352, 128
      %v2380 = vld [vmem:[%s2379] sm:$0xf]
      %v2381 = vld [vmem:[%s2379 + $0x4] sm:$0xf]
      %v2382 = vld [vmem:[%s2379 + $0x8] sm:$0xf]
      %v2383 = vld [vmem:[%s2379 + $0xc] sm:$0xf]
      %v2384 = vld [vmem:[%s2379 + $0x10] sm:$0xf]
      %v2385 = vld [vmem:[%s2379 + $0x14] sm:$0xf]
      %v2386 = vld [vmem:[%s2379 + $0x18] sm:$0xf]
      %v2387 = vld [vmem:[%s2379 + $0x1c] sm:$0xf]
      %v2388 = vld [vmem:[%s2379 + $0x20] sm:$0xf]
      %v2389 = vld [vmem:[%s2379 + $0x24] sm:$0xf]
      %v2390 = vld [vmem:[%s2379 + $0x28] sm:$0xf]
      %v2391 = vld [vmem:[%s2379 + $0x2c] sm:$0xf]
      %v2392 = vld [vmem:[%s2379 + $0x30] sm:$0xf]
      %v2393 = vld [vmem:[%s2379 + $0x34] sm:$0xf]
      %v2394 = vld [vmem:[%s2379 + $0x38] sm:$0xf]
      %v2395 = vld [vmem:[%s2379 + $0x3c] sm:$0xf]
      %v2398 = vrot.slane %v2378, 1
      %v2399 = vrot.slane %v2121, 1
      %v2400 = vsel %vm913, %v2398, %v2399
      %v2418 = vunpack.c.l.b16 %v2380
      %v2419 = vunpack.c.l.b16 %v2381
      %v2420 = vunpack.c.l.b16 %v2382
      %v2421 = vunpack.c.l.b16 %v2383
      %v2422 = vunpack.c.l.b16 %v2384
      %v2423 = vunpack.c.l.b16 %v2385
      %v2424 = vunpack.c.l.b16 %v2386
      %v2425 = vunpack.c.l.b16 %v2387
      %v2426 = vunpack.c.l.b16 %v2388
      %v2427 = vunpack.c.l.b16 %v2389
      %v2428 = vunpack.c.l.b16 %v2390
      %v2429 = vunpack.c.l.b16 %v2391
      %v2430 = vunpack.c.l.b16 %v2392
      %v2431 = vunpack.c.l.b16 %v2393
      %v2432 = vunpack.c.l.b16 %v2394
      %v2433 = vunpack.c.l.b16 %v2395
      %v2434 = vpack.c.b16 %v2419, %v2418
      %v2435 = vpack.c.b16 %v2421, %v2420
      %v2436 = vpack.c.b16 %v2423, %v2422
      %v2437 = vpack.c.b16 %v2425, %v2424
      %v2438 = vpack.c.b16 %v2427, %v2426
      %v2439 = vpack.c.b16 %v2429, %v2428
      %v2440 = vpack.c.b16 %v2431, %v2430
      %v2441 = vpack.c.b16 %v2433, %v2432
      %2450 = vmatprep.subr.bf16.mxu0 0
      %2451 = vmatpush1.bf16.msra.mxu0 %v2441
      %2452 = vmatprep.subr.bf16.mxu0 0
      %2453 = vmatpush1.bf16.msra.mxu0 %v2440
      %2454 = vmatprep.subr.bf16.mxu0 0
      %2455 = vmatpush1.bf16.msra.mxu0 %v2439
      %2456 = vmatprep.subr.bf16.mxu0 0
      %2457 = vmatpush1.bf16.msra.mxu0 %v2438
      %2458 = vmatprep.subr.bf16.mxu0 0
      %2459 = vmatpush1.bf16.msra.mxu0 %v2437
      %2460 = vmatprep.subr.bf16.mxu0 0
      %2461 = vmatpush1.bf16.msra.mxu0 %v2436
      %2462 = vmatprep.subr.bf16.mxu0 0
      %2463 = vmatpush1.bf16.msra.mxu0 %v2435
      %2464 = vmatprep.subr.bf16.mxu0 0
      %2465 = vmatpush1.bf16.msra.mxu0 %v2434
      %2466 = vmatprep.subr.bf16.mxu0 0
      %2467 = vmatpush2.bf16.msra.mxu0 0
      %2468 = vmatprep.subr.bf16.mxu0 0
      %2469 = vmatpush2.bf16.msra.mxu0 0
      %2470 = vmatprep.subr.bf16.mxu0 0
      %2471 = vmatpush2.bf16.msra.mxu0 0
      %2472 = vmatprep.subr.bf16.mxu0 0
      %2473 = vmatpush2.bf16.msra.mxu0 0
      %2474 = vmatprep.subr.bf16.mxu0 0
      %2475 = vmatpush2.bf16.msra.mxu0 0
      %2476 = vmatprep.subr.bf16.mxu0 0
      %2477 = vmatpush2.bf16.msra.mxu0 0
      %2478 = vmatprep.subr.bf16.mxu0 0
      %2479 = vmatpush2.bf16.msra.mxu0 0
      %2480 = vmatprep.subr.bf16.mxu0 0
      %2481 = vmatpush2.bf16.msra.mxu0 0
      %2482 = vmatprep.mubr.bf16.mxu0 0
      %2483 = vmatmul.mubr.bf16.gmra.mxu0 %v2400
      %v2484 = vpop.f32.mrf.mxu0
      %v2485 = vadd.f32 0.0, %v2484
      %v2486 = vpop.f32.mrf.mxu0
      %v2487 = vpop.f32.mrf.mxu0
      %v2488 = vadd.f32 0.0, %v2487
      %v2489 = vpop.f32.mrf.mxu0
      %2490 = vdwg.mxu0
      %v2491 = vadd.f32 %v2370, %v2485
      %v2492 = vadd.f32 %v2371, %v2488
      %s2493 = scalar_lea.vmem %s361, 128
      %v2494 = vld [vmem:[%s2493] sm:$0xf]
      %v2495 = vld [vmem:[%s2493 + $0x4] sm:$0xf]
      %v2496 = vld [vmem:[%s2493 + $0x8] sm:$0xf]
      %v2497 = vld [vmem:[%s2493 + $0xc] sm:$0xf]
      %v2498 = vld [vmem:[%s2493 + $0x10] sm:$0xf]
      %v2499 = vld [vmem:[%s2493 + $0x14] sm:$0xf]
      %v2500 = vld [vmem:[%s2493 + $0x18] sm:$0xf]
      %v2501 = vld [vmem:[%s2493 + $0x1c] sm:$0xf]
      %v2502 = vld [vmem:[%s2493 + $0x20] sm:$0xf]
      %v2503 = vld [vmem:[%s2493 + $0x24] sm:$0xf]
      %v2504 = vld [vmem:[%s2493 + $0x28] sm:$0xf]
      %v2505 = vld [vmem:[%s2493 + $0x2c] sm:$0xf]
      %v2506 = vld [vmem:[%s2493 + $0x30] sm:$0xf]
      %v2507 = vld [vmem:[%s2493 + $0x34] sm:$0xf]
      %v2508 = vld [vmem:[%s2493 + $0x38] sm:$0xf]
      %v2509 = vld [vmem:[%s2493 + $0x3c] sm:$0xf]
      %v2511 = vunpack.c.l.b16 %v2372
      %v2512 = vpack.c.b16 %v2264, %v2511
      %v2513 = vrot.slane %v2512, 1
      %v2514 = vrot.slane %v2267, 1
      %v2515 = vsel %vm913, %v2513, %v2514
      %v2533 = vunpack.c.l.b16 %v2494
      %v2534 = vunpack.c.l.b16 %v2495
      %v2535 = vunpack.c.l.b16 %v2496
      %v2536 = vunpack.c.l.b16 %v2497
      %v2537 = vunpack.c.l.b16 %v2498
      %v2538 = vunpack.c.l.b16 %v2499
      %v2539 = vunpack.c.l.b16 %v2500
      %v2540 = vunpack.c.l.b16 %v2501
      %v2541 = vunpack.c.l.b16 %v2502
      %v2542 = vunpack.c.l.b16 %v2503
      %v2543 = vunpack.c.l.b16 %v2504
      %v2544 = vunpack.c.l.b16 %v2505
      %v2545 = vunpack.c.l.b16 %v2506
      %v2546 = vunpack.c.l.b16 %v2507
      %v2547 = vunpack.c.l.b16 %v2508
      %v2548 = vunpack.c.l.b16 %v2509
      %v2549 = vpack.c.b16 %v2534, %v2533
      %v2550 = vpack.c.b16 %v2536, %v2535
      %v2551 = vpack.c.b16 %v2538, %v2537
      %v2552 = vpack.c.b16 %v2540, %v2539
      %v2553 = vpack.c.b16 %v2542, %v2541
      %v2554 = vpack.c.b16 %v2544, %v2543
      %v2555 = vpack.c.b16 %v2546, %v2545
      %v2556 = vpack.c.b16 %v2548, %v2547
      %2565 = vmatprep.subr.bf16.mxu0 0
      %2566 = vmatpush1.bf16.msra.mxu0 %v2556
      %2567 = vmatprep.subr.bf16.mxu0 0
      %2568 = vmatpush1.bf16.msra.mxu0 %v2555
      %2569 = vmatprep.subr.bf16.mxu0 0
      %2570 = vmatpush1.bf16.msra.mxu0 %v2554
      %2571 = vmatprep.subr.bf16.mxu0 0
      %2572 = vmatpush1.bf16.msra.mxu0 %v2553
      %2573 = vmatprep.subr.bf16.mxu0 0
      %2574 = vmatpush1.bf16.msra.mxu0 %v2552
      %2575 = vmatprep.subr.bf16.mxu0 0
      %2576 = vmatpush1.bf16.msra.mxu0 %v2551
      %2577 = vmatprep.subr.bf16.mxu0 0
      %2578 = vmatpush1.bf16.msra.mxu0 %v2550
      %2579 = vmatprep.subr.bf16.mxu0 0
      %2580 = vmatpush1.bf16.msra.mxu0 %v2549
      %2581 = vmatprep.subr.bf16.mxu0 0
      %2582 = vmatpush2.bf16.msra.mxu0 0
      %2583 = vmatprep.subr.bf16.mxu0 0
      %2584 = vmatpush2.bf16.msra.mxu0 0
      %2585 = vmatprep.subr.bf16.mxu0 0
      %2586 = vmatpush2.bf16.msra.mxu0 0
      %2587 = vmatprep.subr.bf16.mxu0 0
      %2588 = vmatpush2.bf16.msra.mxu0 0
      %2589 = vmatprep.subr.bf16.mxu0 0
      %2590 = vmatpush2.bf16.msra.mxu0 0
      %2591 = vmatprep.subr.bf16.mxu0 0
      %2592 = vmatpush2.bf16.msra.mxu0 0
      %2593 = vmatprep.subr.bf16.mxu0 0
      %2594 = vmatpush2.bf16.msra.mxu0 0
      %2595 = vmatprep.subr.bf16.mxu0 0
      %2596 = vmatpush2.bf16.msra.mxu0 0
      %2597 = vmatprep.mubr.bf16.mxu0 0
      %2598 = vmatmul.mubr.bf16.gmra.mxu0 %v2515
      %v2599 = vpop.f32.mrf.mxu0
      %v2600 = vadd.f32 0.0, %v2599
      %v2601 = vpop.f32.mrf.mxu0
      %v2602 = vpop.f32.mrf.mxu0
      %v2603 = vadd.f32 0.0, %v2602
      %v2604 = vpop.f32.mrf.mxu0
      %2605 = vdwg.mxu0
      %v2606 = vadd.f32 %v2491, %v2600
      %v2607 = vadd.f32 %v2492, %v2603
      %v2608 = vld [vmem:[%s1124] sm:$0xf]
      %v2609 = vld [vmem:[%s1124 + $0x4] sm:$0xf]
      %v2610 = vld [vmem:[%s1127] sm:$0xf]
      %v2611 = vld [vmem:[%s1127 + $0x4] sm:$0xf]
      %v2612 = vunpack.c.l.bf16 %v2608
      %v2613 = vunpack.c.l.bf16 %v2609
      %v2614 = vunpack.c.l.bf16 %v2610
      %v2615 = vunpack.c.l.bf16 %v2611
      %v2616 = vmul.f32 %v2612, %v2614
      %v2617 = vmul.f32 %v2613, %v2615
      %v2618 = vmax.f32 %v2616, 0.0
      %v2619 = vmax.f32 %v2617, 0.0
      %v2620 = vpack.c.bf16 %v2619, %v2618
      %v2621 = vld [vmem:[%s398] sm:$0xf]
      %v2622 = vld [vmem:[%s398 + $0x4] sm:$0xf]
      %v2623 = vld [vmem:[%s398 + $0x8] sm:$0xf]
      %v2624 = vld [vmem:[%s398 + $0xc] sm:$0xf]
      %v2625 = vld [vmem:[%s398 + $0x10] sm:$0xf]
      %v2626 = vld [vmem:[%s398 + $0x14] sm:$0xf]
      %v2627 = vld [vmem:[%s398 + $0x18] sm:$0xf]
      %v2628 = vld [vmem:[%s398 + $0x1c] sm:$0xf]
      %v2629 = vld [vmem:[%s398 + $0x20] sm:$0xf]
      %v2630 = vld [vmem:[%s398 + $0x24] sm:$0xf]
      %v2631 = vld [vmem:[%s398 + $0x28] sm:$0xf]
      %v2632 = vld [vmem:[%s398 + $0x2c] sm:$0xf]
      %v2633 = vld [vmem:[%s398 + $0x30] sm:$0xf]
      %v2634 = vld [vmem:[%s398 + $0x34] sm:$0xf]
      %v2635 = vld [vmem:[%s398 + $0x38] sm:$0xf]
      %v2636 = vld [vmem:[%s398 + $0x3c] sm:$0xf]
      %v2653 = vunpack.c.l.b16 %v2621
      %v2654 = vunpack.c.l.b16 %v2622
      %v2655 = vunpack.c.l.b16 %v2623
      %v2656 = vunpack.c.l.b16 %v2624
      %v2657 = vunpack.c.l.b16 %v2625
      %v2658 = vunpack.c.l.b16 %v2626
      %v2659 = vunpack.c.l.b16 %v2627
      %v2660 = vunpack.c.l.b16 %v2628
      %v2661 = vunpack.c.l.b16 %v2629
      %v2662 = vunpack.c.l.b16 %v2630
      %v2663 = vunpack.c.l.b16 %v2631
      %v2664 = vunpack.c.l.b16 %v2632
      %v2665 = vunpack.c.l.b16 %v2633
      %v2666 = vunpack.c.l.b16 %v2634
      %v2667 = vunpack.c.l.b16 %v2635
      %v2668 = vunpack.c.l.b16 %v2636
      %v2669 = vpack.c.b16 %v2654, %v2653
      %v2670 = vpack.c.b16 %v2656, %v2655
      %v2671 = vpack.c.b16 %v2658, %v2657
      %v2672 = vpack.c.b16 %v2660, %v2659
      %v2673 = vpack.c.b16 %v2662, %v2661
      %v2674 = vpack.c.b16 %v2664, %v2663
      %v2675 = vpack.c.b16 %v2666, %v2665
      %v2676 = vpack.c.b16 %v2668, %v2667
      %2685 = vmatprep.subr.bf16.mxu0 0
      %2686 = vmatpush1.bf16.msra.mxu0 %v2676
      %2687 = vmatprep.subr.bf16.mxu0 0
      %2688 = vmatpush1.bf16.msra.mxu0 %v2675
      %2689 = vmatprep.subr.bf16.mxu0 0
      %2690 = vmatpush1.bf16.msra.mxu0 %v2674
      %2691 = vmatprep.subr.bf16.mxu0 0
      %2692 = vmatpush1.bf16.msra.mxu0 %v2673
      %2693 = vmatprep.subr.bf16.mxu0 0
      %2694 = vmatpush1.bf16.msra.mxu0 %v2672
      %2695 = vmatprep.subr.bf16.mxu0 0
      %2696 = vmatpush1.bf16.msra.mxu0 %v2671
      %2697 = vmatprep.subr.bf16.mxu0 0
      %2698 = vmatpush1.bf16.msra.mxu0 %v2670
      %2699 = vmatprep.subr.bf16.mxu0 0
      %2700 = vmatpush1.bf16.msra.mxu0 %v2669
      %2701 = vmatprep.subr.bf16.mxu0 0
      %2702 = vmatpush2.bf16.msra.mxu0 0
      %2703 = vmatprep.subr.bf16.mxu0 0
      %2704 = vmatpush2.bf16.msra.mxu0 0
      %2705 = vmatprep.subr.bf16.mxu0 0
      %2706 = vmatpush2.bf16.msra.mxu0 0
      %2707 = vmatprep.subr.bf16.mxu0 0
      %2708 = vmatpush2.bf16.msra.mxu0 0
      %2709 = vmatprep.subr.bf16.mxu0 0
      %2710 = vmatpush2.bf16.msra.mxu0 0
      %2711 = vmatprep.subr.bf16.mxu0 0
      %2712 = vmatpush2.bf16.msra.mxu0 0
      %2713 = vmatprep.subr.bf16.mxu0 0
      %2714 = vmatpush2.bf16.msra.mxu0 0
      %2715 = vmatprep.subr.bf16.mxu0 0
      %2716 = vmatpush2.bf16.msra.mxu0 0
      %2717 = vmatprep.mubr.bf16.mxu0 0
      %2718 = vmatmul.mubr.bf16.gmra.mxu0 %v2620
      %v2719 = vpop.f32.mrf.mxu0
      %v2720 = vadd.f32 0.0, %v2719
      %v2721 = vpop.f32.mrf.mxu0
      %v2722 = vpop.f32.mrf.mxu0
      %v2723 = vadd.f32 0.0, %v2722
      %v2724 = vpop.f32.mrf.mxu0
      %2725 = vdwg.mxu0
      %v2726 = vadd.f32 %v2606, %v2720
      %v2727 = vadd.f32 %v2607, %v2723
      %v2728 = vld [vmem:[%s415] sm:$0xf]
      %v2729 = vld [vmem:[%s415 + $0x4] sm:$0xf]
      %v2730 = vld [vmem:[%s415 + $0x8] sm:$0xf]
      %v2731 = vld [vmem:[%s415 + $0xc] sm:$0xf]
      %v2732 = vld [vmem:[%s415 + $0x10] sm:$0xf]
      %v2733 = vld [vmem:[%s415 + $0x14] sm:$0xf]
      %v2734 = vld [vmem:[%s415 + $0x18] sm:$0xf]
      %v2735 = vld [vmem:[%s415 + $0x1c] sm:$0xf]
      %v2736 = vld [vmem:[%s415 + $0x20] sm:$0xf]
      %v2737 = vld [vmem:[%s415 + $0x24] sm:$0xf]
      %v2738 = vld [vmem:[%s415 + $0x28] sm:$0xf]
      %v2739 = vld [vmem:[%s415 + $0x2c] sm:$0xf]
      %v2740 = vld [vmem:[%s415 + $0x30] sm:$0xf]
      %v2741 = vld [vmem:[%s415 + $0x34] sm:$0xf]
      %v2742 = vld [vmem:[%s415 + $0x38] sm:$0xf]
      %v2743 = vld [vmem:[%s415 + $0x3c] sm:$0xf]
      %v2746 = vunpack.c.l.b16 %v2608
      %v2747 = vunpack.c.l.b16 %v2609
      %v2748 = vpack.c.b16 %v2747, %v2746
      %v2766 = vunpack.c.l.b16 %v2728
      %v2767 = vunpack.c.l.b16 %v2729
      %v2768 = vunpack.c.l.b16 %v2730
      %v2769 = vunpack.c.l.b16 %v2731
      %v2770 = vunpack.c.l.b16 %v2732
      %v2771 = vunpack.c.l.b16 %v2733
      %v2772 = vunpack.c.l.b16 %v2734
      %v2773 = vunpack.c.l.b16 %v2735
      %v2774 = vunpack.c.l.b16 %v2736
      %v2775 = vunpack.c.l.b16 %v2737
      %v2776 = vunpack.c.l.b16 %v2738
      %v2777 = vunpack.c.l.b16 %v2739
      %v2778 = vunpack.c.l.b16 %v2740
      %v2779 = vunpack.c.l.b16 %v2741
      %v2780 = vunpack.c.l.b16 %v2742
      %v2781 = vunpack.c.l.b16 %v2743
      %v2782 = vpack.c.b16 %v2767, %v2766
      %v2783 = vpack.c.b16 %v2769, %v2768
      %v2784 = vpack.c.b16 %v2771, %v2770
      %v2785 = vpack.c.b16 %v2773, %v2772
      %v2786 = vpack.c.b16 %v2775, %v2774
      %v2787 = vpack.c.b16 %v2777, %v2776
      %v2788 = vpack.c.b16 %v2779, %v2778
      %v2789 = vpack.c.b16 %v2781, %v2780
      %2798 = vmatprep.subr.bf16.mxu0 0
      %2799 = vmatpush1.bf16.msra.mxu0 %v2789
      %2800 = vmatprep.subr.bf16.mxu0 0
      %2801 = vmatpush1.bf16.msra.mxu0 %v2788
      %2802 = vmatprep.subr.bf16.mxu0 0
      %2803 = vmatpush1.bf16.msra.mxu0 %v2787
      %2804 = vmatprep.subr.bf16.mxu0 0
      %2805 = vmatpush1.bf16.msra.mxu0 %v2786
      %2806 = vmatprep.subr.bf16.mxu0 0
      %2807 = vmatpush1.bf16.msra.mxu0 %v2785
      %2808 = vmatprep.subr.bf16.mxu0 0
      %2809 = vmatpush1.bf16.msra.mxu0 %v2784
      %2810 = vmatprep.subr.bf16.mxu0 0
      %2811 = vmatpush1.bf16.msra.mxu0 %v2783
      %2812 = vmatprep.subr.bf16.mxu0 0
      %2813 = vmatpush1.bf16.msra.mxu0 %v2782
      %2814 = vmatprep.subr.bf16.mxu0 0
      %2815 = vmatpush2.bf16.msra.mxu0 0
      %2816 = vmatprep.subr.bf16.mxu0 0
      %2817 = vmatpush2.bf16.msra.mxu0 0
      %2818 = vmatprep.subr.bf16.mxu0 0
      %2819 = vmatpush2.bf16.msra.mxu0 0
      %2820 = vmatprep.subr.bf16.mxu0 0
      %2821 = vmatpush2.bf16.msra.mxu0 0
      %2822 = vmatprep.subr.bf16.mxu0 0
      %2823 = vmatpush2.bf16.msra.mxu0 0
      %2824 = vmatprep.subr.bf16.mxu0 0
      %2825 = vmatpush2.bf16.msra.mxu0 0
      %2826 = vmatprep.subr.bf16.mxu0 0
      %2827 = vmatpush2.bf16.msra.mxu0 0
      %2828 = vmatprep.subr.bf16.mxu0 0
      %2829 = vmatpush2.bf16.msra.mxu0 0
      %2830 = vmatprep.mubr.bf16.mxu0 0
      %2831 = vmatmul.mubr.bf16.gmra.mxu0 %v2748
      %v2832 = vpop.f32.mrf.mxu0
      %v2833 = vadd.f32 0.0, %v2832
      %v2834 = vpop.f32.mrf.mxu0
      %v2835 = vpop.f32.mrf.mxu0
      %v2836 = vadd.f32 0.0, %v2835
      %v2837 = vpop.f32.mrf.mxu0
      %2838 = vdwg.mxu0
      %v2839 = vadd.f32 %v2726, %v2833
      %v2840 = vadd.f32 %v2727, %v2836
      %v2841 = vld [vmem:[%s1124] sm:$0xf]
      %v2842 = vld [vmem:[%s1124 + $0x4] sm:$0xf]
      %v2843 = vld [vmem:[%s1124 + $0x8] sm:$0x1]
      %v2844 = vld [vmem:[%s1127] sm:$0xf]
      %v2845 = vld [vmem:[%s1127 + $0x4] sm:$0xf]
      %v2846 = vld [vmem:[%s1127 + $0x8] sm:$0x1]
      %v2847 = vunpack.c.l.bf16 %v2841
      %v2848 = vunpack.c.l.bf16 %v2842
      %v2849 = vunpack.c.l.bf16 %v2843
      %v2850 = vunpack.c.l.bf16 %v2844
      %v2851 = vunpack.c.l.bf16 %v2845
      %v2852 = vunpack.c.l.bf16 %v2846
      %v2853 = vmul.f32 %v2847, %v2850
      %v2854 = vmul.f32 %v2848, %v2851
      %v2855 = vmul.f32 %v2849, %v2852
      %v2856 = vmax.f32 %v2853, 0.0
      %v2857 = vmax.f32 %v2854, 0.0
      %v2858 = vmax.f32 %v2855, 0.0
      %v2859 = vpack.c.bf16 %v2857, %v2856
      %v2860 = vpack.c.bf16 %v2858, %v2858
      %v2861 = vld [vmem:[%s636] sm:$0xf]
      %v2862 = vld [vmem:[%s636 + $0x4] sm:$0xf]
      %v2863 = vld [vmem:[%s636 + $0x8] sm:$0xf]
      %v2864 = vld [vmem:[%s636 + $0xc] sm:$0xf]
      %v2865 = vld [vmem:[%s636 + $0x10] sm:$0xf]
      %v2866 = vld [vmem:[%s636 + $0x14] sm:$0xf]
      %v2867 = vld [vmem:[%s636 + $0x18] sm:$0xf]
      %v2868 = vld [vmem:[%s636 + $0x1c] sm:$0xf]
      %v2869 = vld [vmem:[%s636 + $0x20] sm:$0xf]
      %v2870 = vld [vmem:[%s636 + $0x24] sm:$0xf]
      %v2871 = vld [vmem:[%s636 + $0x28] sm:$0xf]
      %v2872 = vld [vmem:[%s636 + $0x2c] sm:$0xf]
      %v2873 = vld [vmem:[%s636 + $0x30] sm:$0xf]
      %v2874 = vld [vmem:[%s636 + $0x34] sm:$0xf]
      %v2875 = vld [vmem:[%s636 + $0x38] sm:$0xf]
      %v2876 = vld [vmem:[%s636 + $0x3c] sm:$0xf]
      %v2878 = vshrl.u32 %v2859, 16
      %v2880 = vshll.u32 %v2859, 16
      %v2882 = vrot.slane %v2880, 1
      %v2883 = vor.u32 %v2878, %v2882
      %v2885 = vshll.u32 %v2860, 16
      %v2887 = vrot.slane %v2885, 1
      %v2888 = vsel %vm653, %v2883, %v2887
      %v2906 = vunpack.c.l.b16 %v2861
      %v2907 = vunpack.c.l.b16 %v2862
      %v2908 = vunpack.c.l.b16 %v2863
      %v2909 = vunpack.c.l.b16 %v2864
      %v2910 = vunpack.c.l.b16 %v2865
      %v2911 = vunpack.c.l.b16 %v2866
      %v2912 = vunpack.c.l.b16 %v2867
      %v2913 = vunpack.c.l.b16 %v2868
      %v2914 = vunpack.c.l.b16 %v2869
      %v2915 = vunpack.c.l.b16 %v2870
      %v2916 = vunpack.c.l.b16 %v2871
      %v2917 = vunpack.c.l.b16 %v2872
      %v2918 = vunpack.c.l.b16 %v2873
      %v2919 = vunpack.c.l.b16 %v2874
      %v2920 = vunpack.c.l.b16 %v2875
      %v2921 = vunpack.c.l.b16 %v2876
      %v2922 = vpack.c.b16 %v2907, %v2906
      %v2923 = vpack.c.b16 %v2909, %v2908
      %v2924 = vpack.c.b16 %v2911, %v2910
      %v2925 = vpack.c.b16 %v2913, %v2912
      %v2926 = vpack.c.b16 %v2915, %v2914
      %v2927 = vpack.c.b16 %v2917, %v2916
      %v2928 = vpack.c.b16 %v2919, %v2918
      %v2929 = vpack.c.b16 %v2921, %v2920
      %2938 = vmatprep.subr.bf16.mxu0 0
      %2939 = vmatpush1.bf16.msra.mxu0 %v2929
      %2940 = vmatprep.subr.bf16.mxu0 0
      %2941 = vmatpush1.bf16.msra.mxu0 %v2928
      %2942 = vmatprep.subr.bf16.mxu0 0
      %2943 = vmatpush1.bf16.msra.mxu0 %v2927
      %2944 = vmatprep.subr.bf16.mxu0 0
      %2945 = vmatpush1.bf16.msra.mxu0 %v2926
      %2946 = vmatprep.subr.bf16.mxu0 0
      %2947 = vmatpush1.bf16.msra.mxu0 %v2925
      %2948 = vmatprep.subr.bf16.mxu0 0
      %2949 = vmatpush1.bf16.msra.mxu0 %v2924
      %2950 = vmatprep.subr.bf16.mxu0 0
      %2951 = vmatpush1.bf16.msra.mxu0 %v2923
      %2952 = vmatprep.subr.bf16.mxu0 0
      %2953 = vmatpush1.bf16.msra.mxu0 %v2922
      %2954 = vmatprep.subr.bf16.mxu0 0
      %2955 = vmatpush2.bf16.msra.mxu0 0
      %2956 = vmatprep.subr.bf16.mxu0 0
      %2957 = vmatpush2.bf16.msra.mxu0 0
      %2958 = vmatprep.subr.bf16.mxu0 0
      %2959 = vmatpush2.bf16.msra.mxu0 0
      %2960 = vmatprep.subr.bf16.mxu0 0
      %2961 = vmatpush2.bf16.msra.mxu0 0
      %2962 = vmatprep.subr.bf16.mxu0 0
      %2963 = vmatpush2.bf16.msra.mxu0 0
      %2964 = vmatprep.subr.bf16.mxu0 0
      %2965 = vmatpush2.bf16.msra.mxu0 0
      %2966 = vmatprep.subr.bf16.mxu0 0
      %2967 = vmatpush2.bf16.msra.mxu0 0
      %2968 = vmatprep.subr.bf16.mxu0 0
      %2969 = vmatpush2.bf16.msra.mxu0 0
      %2970 = vmatprep.mubr.bf16.mxu0 0
      %2971 = vmatmul.mubr.bf16.gmra.mxu0 %v2888
      %v2972 = vpop.f32.mrf.mxu0
      %v2973 = vadd.f32 0.0, %v2972
      %v2974 = vpop.f32.mrf.mxu0
      %v2975 = vpop.f32.mrf.mxu0
      %v2976 = vadd.f32 0.0, %v2975
      %v2977 = vpop.f32.mrf.mxu0
      %2978 = vdwg.mxu0
      %v2979 = vadd.f32 %v2839, %v2973
      %v2980 = vadd.f32 %v2840, %v2976
      %v2981 = vld [vmem:[%s758] sm:$0xf]
      %v2982 = vld [vmem:[%s758 + $0x4] sm:$0xf]
      %v2983 = vld [vmem:[%s758 + $0x8] sm:$0xf]
      %v2984 = vld [vmem:[%s758 + $0xc] sm:$0xf]
      %v2985 = vld [vmem:[%s758 + $0x10] sm:$0xf]
      %v2986 = vld [vmem:[%s758 + $0x14] sm:$0xf]
      %v2987 = vld [vmem:[%s758 + $0x18] sm:$0xf]
      %v2988 = vld [vmem:[%s758 + $0x1c] sm:$0xf]
      %v2989 = vld [vmem:[%s758 + $0x20] sm:$0xf]
      %v2990 = vld [vmem:[%s758 + $0x24] sm:$0xf]
      %v2991 = vld [vmem:[%s758 + $0x28] sm:$0xf]
      %v2992 = vld [vmem:[%s758 + $0x2c] sm:$0xf]
      %v2993 = vld [vmem:[%s758 + $0x30] sm:$0xf]
      %v2994 = vld [vmem:[%s758 + $0x34] sm:$0xf]
      %v2995 = vld [vmem:[%s758 + $0x38] sm:$0xf]
      %v2996 = vld [vmem:[%s758 + $0x3c] sm:$0xf]
      %v3000 = vunpack.c.l.b16 %v2841
      %v3001 = vunpack.c.l.b16 %v2842
      %v3002 = vunpack.c.l.b16 %v2843
      %v3003 = vpack.c.b16 %v3001, %v3000
      %v3004 = vpack.c.b16 %v3002, %v3002
      %v3006 = vshrl.u32 %v3003, 16
      %v3008 = vshll.u32 %v3003, 16
      %v3010 = vrot.slane %v3008, 1
      %v3011 = vor.u32 %v3006, %v3010
      %v3013 = vshll.u32 %v3004, 16
      %v3015 = vrot.slane %v3013, 1
      %v3016 = vsel %vm653, %v3011, %v3015
      %v3034 = vunpack.c.l.b16 %v2981
      %v3035 = vunpack.c.l.b16 %v2982
      %v3036 = vunpack.c.l.b16 %v2983
      %v3037 = vunpack.c.l.b16 %v2984
      %v3038 = vunpack.c.l.b16 %v2985
      %v3039 = vunpack.c.l.b16 %v2986
      %v3040 = vunpack.c.l.b16 %v2987
      %v3041 = vunpack.c.l.b16 %v2988
      %v3042 = vunpack.c.l.b16 %v2989
      %v3043 = vunpack.c.l.b16 %v2990
      %v3044 = vunpack.c.l.b16 %v2991
      %v3045 = vunpack.c.l.b16 %v2992
      %v3046 = vunpack.c.l.b16 %v2993
      %v3047 = vunpack.c.l.b16 %v2994
      %v3048 = vunpack.c.l.b16 %v2995
      %v3049 = vunpack.c.l.b16 %v2996
      %v3050 = vpack.c.b16 %v3035, %v3034
      %v3051 = vpack.c.b16 %v3037, %v3036
      %v3052 = vpack.c.b16 %v3039, %v3038
      %v3053 = vpack.c.b16 %v3041, %v3040
      %v3054 = vpack.c.b16 %v3043, %v3042
      %v3055 = vpack.c.b16 %v3045, %v3044
      %v3056 = vpack.c.b16 %v3047, %v3046
      %v3057 = vpack.c.b16 %v3049, %v3048
      %3066 = vmatprep.subr.bf16.mxu0 0
      %3067 = vmatpush1.bf16.msra.mxu0 %v3057
      %3068 = vmatprep.subr.bf16.mxu0 0
      %3069 = vmatpush1.bf16.msra.mxu0 %v3056
      %3070 = vmatprep.subr.bf16.mxu0 0
      %3071 = vmatpush1.bf16.msra.mxu0 %v3055
      %3072 = vmatprep.subr.bf16.mxu0 0
      %3073 = vmatpush1.bf16.msra.mxu0 %v3054
      %3074 = vmatprep.subr.bf16.mxu0 0
      %3075 = vmatpush1.bf16.msra.mxu0 %v3053
      %3076 = vmatprep.subr.bf16.mxu0 0
      %3077 = vmatpush1.bf16.msra.mxu0 %v3052
      %3078 = vmatprep.subr.bf16.mxu0 0
      %3079 = vmatpush1.bf16.msra.mxu0 %v3051
      %3080 = vmatprep.subr.bf16.mxu0 0
      %3081 = vmatpush1.bf16.msra.mxu0 %v3050
      %3082 = vmatprep.subr.bf16.mxu0 0
      %3083 = vmatpush2.bf16.msra.mxu0 0
      %3084 = vmatprep.subr.bf16.mxu0 0
      %3085 = vmatpush2.bf16.msra.mxu0 0
      %3086 = vmatprep.subr.bf16.mxu0 0
      %3087 = vmatpush2.bf16.msra.mxu0 0
      %3088 = vmatprep.subr.bf16.mxu0 0
      %3089 = vmatpush2.bf16.msra.mxu0 0
      %3090 = vmatprep.subr.bf16.mxu0 0
      %3091 = vmatpush2.bf16.msra.mxu0 0
      %3092 = vmatprep.subr.bf16.mxu0 0
      %3093 = vmatpush2.bf16.msra.mxu0 0
      %3094 = vmatprep.subr.bf16.mxu0 0
      %3095 = vmatpush2.bf16.msra.mxu0 0
      %3096 = vmatprep.subr.bf16.mxu0 0
      %3097 = vmatpush2.bf16.msra.mxu0 0
      %3098 = vmatprep.mubr.bf16.mxu0 0
      %3099 = vmatmul.mubr.bf16.gmra.mxu0 %v3016
      %v3100 = vpop.f32.mrf.mxu0
      %v3101 = vadd.f32 0.0, %v3100
      %v3102 = vpop.f32.mrf.mxu0
      %v3103 = vpop.f32.mrf.mxu0
      %v3104 = vadd.f32 0.0, %v3103
      %v3105 = vpop.f32.mrf.mxu0
      %3106 = vdwg.mxu0
      %v3107 = vadd.f32 %v2979, %v3101
      %v3108 = vadd.f32 %v2980, %v3104
      %v3109 = vld [vmem:[%s1124] sm:$0xe]
      %v3110 = vld [vmem:[%s1127] sm:$0xe]
      %v3111 = vunpack.c.l.bf16 %v3109
      %v3112 = vunpack.c.l.bf16 %v3110
      %v3113 = vmul.f32 %v3111, %v3112
      %v3114 = vmax.f32 %v3113, 0.0
      %v3115 = vpack.c.bf16 %v2857, %v3114
      %v3116 = vld [vmem:[%s894] sm:$0xf]
      %v3117 = vld [vmem:[%s894 + $0x4] sm:$0xf]
      %v3118 = vld [vmem:[%s894 + $0x8] sm:$0xf]
      %v3119 = vld [vmem:[%s894 + $0xc] sm:$0xf]
      %v3120 = vld [vmem:[%s894 + $0x10] sm:$0xf]
      %v3121 = vld [vmem:[%s894 + $0x14] sm:$0xf]
      %v3122 = vld [vmem:[%s894 + $0x18] sm:$0xf]
      %v3123 = vld [vmem:[%s894 + $0x1c] sm:$0xf]
      %v3124 = vld [vmem:[%s894 + $0x20] sm:$0xf]
      %v3125 = vld [vmem:[%s894 + $0x24] sm:$0xf]
      %v3126 = vld [vmem:[%s894 + $0x28] sm:$0xf]
      %v3127 = vld [vmem:[%s894 + $0x2c] sm:$0xf]
      %v3128 = vld [vmem:[%s894 + $0x30] sm:$0xf]
      %v3129 = vld [vmem:[%s894 + $0x34] sm:$0xf]
      %v3130 = vld [vmem:[%s894 + $0x38] sm:$0xf]
      %v3131 = vld [vmem:[%s894 + $0x3c] sm:$0xf]
      %v3134 = vrot.slane %v3115, 1
      %v3135 = vrot.slane %v2860, 1
      %v3136 = vsel %vm913, %v3134, %v3135
      %v3154 = vunpack.c.l.b16 %v3116
      %v3155 = vunpack.c.l.b16 %v3117
      %v3156 = vunpack.c.l.b16 %v3118
      %v3157 = vunpack.c.l.b16 %v3119
      %v3158 = vunpack.c.l.b16 %v3120
      %v3159 = vunpack.c.l.b16 %v3121
      %v3160 = vunpack.c.l.b16 %v3122
      %v3161 = vunpack.c.l.b16 %v3123
      %v3162 = vunpack.c.l.b16 %v3124
      %v3163 = vunpack.c.l.b16 %v3125
      %v3164 = vunpack.c.l.b16 %v3126
      %v3165 = vunpack.c.l.b16 %v3127
      %v3166 = vunpack.c.l.b16 %v3128
      %v3167 = vunpack.c.l.b16 %v3129
      %v3168 = vunpack.c.l.b16 %v3130
      %v3169 = vunpack.c.l.b16 %v3131
      %v3170 = vpack.c.b16 %v3155, %v3154
      %v3171 = vpack.c.b16 %v3157, %v3156
      %v3172 = vpack.c.b16 %v3159, %v3158
      %v3173 = vpack.c.b16 %v3161, %v3160
      %v3174 = vpack.c.b16 %v3163, %v3162
      %v3175 = vpack.c.b16 %v3165, %v3164
      %v3176 = vpack.c.b16 %v3167, %v3166
      %v3177 = vpack.c.b16 %v3169, %v3168
      %3186 = vmatprep.subr.bf16.mxu0 0
      %3187 = vmatpush1.bf16.msra.mxu0 %v3177
      %3188 = vmatprep.subr.bf16.mxu0 0
      %3189 = vmatpush1.bf16.msra.mxu0 %v3176
      %3190 = vmatprep.subr.bf16.mxu0 0
      %3191 = vmatpush1.bf16.msra.mxu0 %v3175
      %3192 = vmatprep.subr.bf16.mxu0 0
      %3193 = vmatpush1.bf16.msra.mxu0 %v3174
      %3194 = vmatprep.subr.bf16.mxu0 0
      %3195 = vmatpush1.bf16.msra.mxu0 %v3173
      %3196 = vmatprep.subr.bf16.mxu0 0
      %3197 = vmatpush1.bf16.msra.mxu0 %v3172
      %3198 = vmatprep.subr.bf16.mxu0 0
      %3199 = vmatpush1.bf16.msra.mxu0 %v3171
      %3200 = vmatprep.subr.bf16.mxu0 0
      %3201 = vmatpush1.bf16.msra.mxu0 %v3170
      %3202 = vmatprep.subr.bf16.mxu0 0
      %3203 = vmatpush2.bf16.msra.mxu0 0
      %3204 = vmatprep.subr.bf16.mxu0 0
      %3205 = vmatpush2.bf16.msra.mxu0 0
      %3206 = vmatprep.subr.bf16.mxu0 0
      %3207 = vmatpush2.bf16.msra.mxu0 0
      %3208 = vmatprep.subr.bf16.mxu0 0
      %3209 = vmatpush2.bf16.msra.mxu0 0
      %3210 = vmatprep.subr.bf16.mxu0 0
      %3211 = vmatpush2.bf16.msra.mxu0 0
      %3212 = vmatprep.subr.bf16.mxu0 0
      %3213 = vmatpush2.bf16.msra.mxu0 0
      %3214 = vmatprep.subr.bf16.mxu0 0
      %3215 = vmatpush2.bf16.msra.mxu0 0
      %3216 = vmatprep.subr.bf16.mxu0 0
      %3217 = vmatpush2.bf16.msra.mxu0 0
      %3218 = vmatprep.mubr.bf16.mxu0 0
      %3219 = vmatmul.mubr.bf16.gmra.mxu0 %v3136
      %v3220 = vpop.f32.mrf.mxu0
      %v3221 = vadd.f32 0.0, %v3220
      %v3222 = vpop.f32.mrf.mxu0
      %v3223 = vpop.f32.mrf.mxu0
      %v3224 = vadd.f32 0.0, %v3223
      %v3225 = vpop.f32.mrf.mxu0
      %3226 = vdwg.mxu0
      %v3227 = vadd.f32 %v3107, %v3221
      %v3228 = vadd.f32 %v3108, %v3224
      %v3229 = vld [vmem:[%s1009] sm:$0xf]
      %v3230 = vld [vmem:[%s1009 + $0x4] sm:$0xf]
      %v3231 = vld [vmem:[%s1009 + $0x8] sm:$0xf]
      %v3232 = vld [vmem:[%s1009 + $0xc] sm:$0xf]
      %v3233 = vld [vmem:[%s1009 + $0x10] sm:$0xf]
      %v3234 = vld [vmem:[%s1009 + $0x14] sm:$0xf]
      %v3235 = vld [vmem:[%s1009 + $0x18] sm:$0xf]
      %v3236 = vld [vmem:[%s1009 + $0x1c] sm:$0xf]
      %v3237 = vld [vmem:[%s1009 + $0x20] sm:$0xf]
      %v3238 = vld [vmem:[%s1009 + $0x24] sm:$0xf]
      %v3239 = vld [vmem:[%s1009 + $0x28] sm:$0xf]
      %v3240 = vld [vmem:[%s1009 + $0x2c] sm:$0xf]
      %v3241 = vld [vmem:[%s1009 + $0x30] sm:$0xf]
      %v3242 = vld [vmem:[%s1009 + $0x34] sm:$0xf]
      %v3243 = vld [vmem:[%s1009 + $0x38] sm:$0xf]
      %v3244 = vld [vmem:[%s1009 + $0x3c] sm:$0xf]
      %v3246 = vunpack.c.l.b16 %v3109
      %v3247 = vpack.c.b16 %v3001, %v3246
      %v3248 = vrot.slane %v3247, 1
      %v3249 = vrot.slane %v3004, 1
      %v3250 = vsel %vm913, %v3248, %v3249
      %v3268 = vunpack.c.l.b16 %v3229
      %v3269 = vunpack.c.l.b16 %v3230
      %v3270 = vunpack.c.l.b16 %v3231
      %v3271 = vunpack.c.l.b16 %v3232
      %v3272 = vunpack.c.l.b16 %v3233
      %v3273 = vunpack.c.l.b16 %v3234
      %v3274 = vunpack.c.l.b16 %v3235
      %v3275 = vunpack.c.l.b16 %v3236
      %v3276 = vunpack.c.l.b16 %v3237
      %v3277 = vunpack.c.l.b16 %v3238
      %v3278 = vunpack.c.l.b16 %v3239
      %v3279 = vunpack.c.l.b16 %v3240
      %v3280 = vunpack.c.l.b16 %v3241
      %v3281 = vunpack.c.l.b16 %v3242
      %v3282 = vunpack.c.l.b16 %v3243
      %v3283 = vunpack.c.l.b16 %v3244
      %v3284 = vpack.c.b16 %v3269, %v3268
      %v3285 = vpack.c.b16 %v3271, %v3270
      %v3286 = vpack.c.b16 %v3273, %v3272
      %v3287 = vpack.c.b16 %v3275, %v3274
      %v3288 = vpack.c.b16 %v3277, %v3276
      %v3289 = vpack.c.b16 %v3279, %v3278
      %v3290 = vpack.c.b16 %v3281, %v3280
      %v3291 = vpack.c.b16 %v3283, %v3282
      %3300 = vmatprep.subr.bf16.mxu0 0
      %3301 = vmatpush1.bf16.msra.mxu0 %v3291
      %3302 = vmatprep.subr.bf16.mxu0 0
      %3303 = vmatpush1.bf16.msra.mxu0 %v3290
      %3304 = vmatprep.subr.bf16.mxu0 0
      %3305 = vmatpush1.bf16.msra.mxu0 %v3289
      %3306 = vmatprep.subr.bf16.mxu0 0
      %3307 = vmatpush1.bf16.msra.mxu0 %v3288
      %3308 = vmatprep.subr.bf16.mxu0 0
      %3309 = vmatpush1.bf16.msra.mxu0 %v3287
      %3310 = vmatprep.subr.bf16.mxu0 0
      %3311 = vmatpush1.bf16.msra.mxu0 %v3286
      %3312 = vmatprep.subr.bf16.mxu0 0
      %3313 = vmatpush1.bf16.msra.mxu0 %v3285
      %3314 = vmatprep.subr.bf16.mxu0 0
      %3315 = vmatpush1.bf16.msra.mxu0 %v3284
      %3316 = vmatprep.subr.bf16.mxu0 0
      %3317 = vmatpush2.bf16.msra.mxu0 0
      %3318 = vmatprep.subr.bf16.mxu0 0
      %3319 = vmatpush2.bf16.msra.mxu0 0
      %3320 = vmatprep.subr.bf16.mxu0 0
      %3321 = vmatpush2.bf16.msra.mxu0 0
      %3322 = vmatprep.subr.bf16.mxu0 0
      %3323 = vmatpush2.bf16.msra.mxu0 0
      %3324 = vmatprep.subr.bf16.mxu0 0
      %3325 = vmatpush2.bf16.msra.mxu0 0
      %3326 = vmatprep.subr.bf16.mxu0 0
      %3327 = vmatpush2.bf16.msra.mxu0 0
      %3328 = vmatprep.subr.bf16.mxu0 0
      %3329 = vmatpush2.bf16.msra.mxu0 0
      %3330 = vmatprep.subr.bf16.mxu0 0
      %3331 = vmatpush2.bf16.msra.mxu0 0
      %3332 = vmatprep.mubr.bf16.mxu0 0
      %3333 = vmatmul.mubr.bf16.gmra.mxu0 %v3250
      %v3334 = vpop.f32.mrf.mxu0
      %v3335 = vadd.f32 0.0, %v3334
      %v3336 = vpop.f32.mrf.mxu0
      %v3337 = vpop.f32.mrf.mxu0
      %v3338 = vadd.f32 0.0, %v3337
      %v3339 = vpop.f32.mrf.mxu0
      %3340 = vdwg.mxu0
      %v3341 = vadd.f32 %v3227, %v3335
      %v3342 = vadd.f32 %v3228, %v3338
      %s3343 = scalar_lea.vmem [#allocation2], 16
      %v3344 = vld [vmem:[%s3343] sm:$0xff]
      %v3345 = vld [vmem:[%s3343 + $0x8] sm:$0xff]
      %v3346 = vadd.f32 %v3344, %v3341
      %v3347 = vadd.f32 %v3345, %v3342
      %3348 = vst [vmem:[%s3343] sm:$0xff] %v3346
      %3349 = vst [vmem:[%s3343 + $0x8] sm:$0xff] %v3347
      // Predicated region
      $region45: #{mds_forward.10} parent=39 // pred_check
        %p3350 = pneg %p375
      $region46: #{mds_forward.10} parent=39 // pred_check_branch
        %3352 = sbr.rel (%p3350) target = $region48
      $region47: #{mds_forward.10} parent=39 // pred_region
        %v3353 = vld [vmem:[#allocation2] sm:$0xff]
        %v3354 = vld [vmem:[#allocation2 + $0x8] sm:$0xff]
        %v3355 = vld [vmem:[#allocation2 + $0x10] sm:$0xff]
        %v3356 = vld [vmem:[#allocation2 + $0x18] sm:$0xff]
        %v3357 = vld [vmem:[%s365] sm:$0x1]
        %v3359 = vlaneseq
        %v3360 = vshrl.u32 %v3359, 7
        %v3361 = vsub.s32 0, %v3360
        %v3362 = vrot.slane %v3357, %v3361
        %v3364 = vadd.f32 %v3353, %v3362
        %v3365 = vadd.f32 %v3354, %v3362
        %v3366 = vadd.f32 %v3355, %v3362
        %v3367 = vadd.f32 %v3356, %v3362
        %v3368 = vmax.f32 %v3364, 0.0
        %v3369 = vmax.f32 %v3365, 0.0
        %v3370 = vmax.f32 %v3366, 0.0
        %v3371 = vmax.f32 %v3367, 0.0
        %3372 = vst [vmem:[%s373] sm:$0xff] %v3368
        %3373 = vst [vmem:[%s373 + $0x8] sm:$0xff] %v3369
        %3374 = vst [vmem:[%s373 + $0x10] sm:$0xff] %v3370
        %3375 = vst [vmem:[%s373 + $0x18] sm:$0xff] %v3371
      $region48: #{mds_forward.10} parent=39 // pred_fallthru
        _
      %p3376 = scmp.lt.s32.totalorder %s21, 1
      %s3377 = scalar_select %p3376, %s21, 1
      %p3378 = scmp.lt.s32.totalorder %s22, 0
      %s3379 = scalar_select %p3378, %s22, 0
      %s3380 = smul.addr %s3377, 4
      %s3381 = sadd.s32 %s3379, %s3380
      %s3382 = smul.addr %s3381, 8
      %s3383 = scalar_lea.vmem %s5, %s3382
      // Predicated region
      $region49: #{mds_forward.10} parent=39 // pred_check
        %p3384 = pneg %p193
      $region50: #{mds_forward.10} parent=39 // pred_check_branch
        %3386 = sbr.rel (%p3384) target = $region52
      $region51: #{mds_forward.10} parent=39 // pred_region
        _
      $region52: #{mds_forward.10} parent=39 // pred_fallthru
        _
    $region40: #{mds_forward.10} parent=5 // pred_fallthru
      _
    %p3387 = scmp.le.s32.totalorder 2, %s11
    // Predicated region
    $region53: #{mds_forward.10} parent=5 // pred_check
      %p3388 = pneg %p3387
    $region54: #{mds_forward.10} parent=5 // pred_check_branch
      %3390 = sbr.rel (%p3388) target = $region56
    $region55: #{mds_forward.10} parent=5 // pred_region
      %s3391 = ssub.s32 %s11, 2
      // Predicated region
      $region57: #{mds_forward.10} parent=55 // pred_check
        %p3392 = pneg %p199
      $region58: #{mds_forward.10} parent=55 // pred_check_branch
        %3394 = sbr.rel (%p3392) target = $region60
      $region59: #{mds_forward.10} parent=55 // pred_region
        %p3395 = scmp.lt.s32.totalorder %s24, 1
        %s3396 = scalar_select %p3395, %s24, 1
        %p3397 = scmp.lt.s32.totalorder %s25, 0
        %s3398 = scalar_select %p3397, %s25, 0
        %s3399 = smul.addr %s3396, 4
        %s3400 = sadd.s32 %s3398, %s3399
        %s3401 = smul.addr %s3400, 8
        %s3402 = scalar_lea.vmem %s5, %s3401
      $region60: #{mds_forward.10} parent=55 // pred_fallthru
        _
    $region56: #{mds_forward.10} parent=5 // pred_fallthru
      _
  $region6: #{mds_forward.10} parent=0 // loop_footer
    %s15 = sadd.s32 1, %s11
  $region7: #{mds_forward.10} parent=0 // loop_footer_branch
    %10 = sbr.rel target = $region3
  $region8: #{mds_forward.10} parent=0 // loop_exit
    _

</llo_original>
